<compile_context>
chip_gen: v5e
topology: v5e:2x2
jax: 0.10.0
libtpu: 0.0.40
codegen_flags: <defaults>
</compile_context>

<pallas_src>
import jax
import jax.numpy as jnp
from jax import lax
from jax.experimental import pallas as pl
from jax.experimental.pallas import tpu as pltpu

NEG_INF = -1e30


# ----------------------------------------------------------------------------
# in-kernel math helpers
# ----------------------------------------------------------------------------
def _masked_softmax_col(scores, valid_len):
    """Softmax over rows of an (N, 1) column; rows >= valid_len are masked out."""
    n = scores.shape[0]
    idx = lax.broadcasted_iota(jnp.int32, (n, 1), 0)
    scores = jnp.where(idx < valid_len, scores, NEG_INF)
    m = jnp.max(scores, keepdims=True)
    e = jnp.exp(scores - m)
    return e / jnp.sum(e, keepdims=True)


def _packed_gru_step(h, gi_r, gi_z, gi_n, whh, bhh):
    """One direction-packed GRU step (PyTorch gate order r, z, n).

    h, gi_*: (1, 2H) with fwd direction in lanes [0:H], bwd in [H:2H].
    whh[g]:  (2H, 2H) block-diagonal -> fwd/bwd recurrences stay independent.
    """
    gh_r = jnp.dot(h, whh[0], preferred_element_type=jnp.float32) + bhh[0]
    gh_z = jnp.dot(h, whh[1], preferred_element_type=jnp.float32) + bhh[1]
    gh_n = jnp.dot(h, whh[2], preferred_element_type=jnp.float32) + bhh[2]
    r = jax.nn.sigmoid(gi_r + gh_r)
    z = jax.nn.sigmoid(gi_z + gh_z)
    n = jnp.tanh(gi_n + r * gh_n)
    return (1.0 - z) * n + z * h


# ----------------------------------------------------------------------------
# the fused HAN kernel (single grid step)
# ----------------------------------------------------------------------------
def han_kernel(
        # scalar prefetch
        lens_ref,                                   # (S,) int32 in SMEM
        # inputs
        x_ref,                                      # (S, T, E)
        w_in_w_ref, b_in_w_ref, w_hh_w_ref, b_hh_w_ref,
        attn_w_w_ref, attn_b_w_ref, ctx_w_w_ref,
        w_in_s_ref, b_in_s_ref, w_hh_s_ref, b_hh_s_ref,
        attn_w_s_ref, attn_b_s_ref, ctx_w_s_ref,
        fc_w_ref, fc_b_ref,
        # outputs
        logits_ref, word_h_ref, sent_h_ref):
    S, T, _ = x_ref.shape
    Dw = word_h_ref.shape[1]            # 2 * word_hidden
    Ds = sent_h_ref.shape[1]            # 2 * sent_hidden
    Hw = Dw // 2
    Hs = Ds // 2

    # iota-derived masks (hoisted; compare-only, no div/mod)
    half_w = lax.broadcasted_iota(jnp.int32, (1, Dw), 1) < Hw      # fwd lanes
    half_s = lax.broadcasted_iota(jnp.int32, (1, Ds), 1) < Hs
    rowT = lax.broadcasted_iota(jnp.int32, (T, Dw), 0)
    laneT_f = lax.broadcasted_iota(jnp.int32, (T, Dw), 1) < Hw
    rowS = lax.broadcasted_iota(jnp.int32, (S, Ds), 0)
    laneS_f = lax.broadcasted_iota(jnp.int32, (S, Ds), 1) < Hs
    rowS_in = lax.broadcasted_iota(jnp.int32, (S, Dw), 0)

    # resident weights, loaded once
    w_in_w = [w_in_w_ref[g] for g in range(3)]
    b_in_w = [b_in_w_ref[g] for g in range(3)]
    w_hh_w = [w_hh_w_ref[g] for g in range(3)]
    b_hh_w = [b_hh_w_ref[g] for g in range(3)]
    attn_w_w = attn_w_w_ref[...]
    attn_b_w = attn_b_w_ref[...]
    ctx_w_w = ctx_w_w_ref[...]

    h_w = jnp.zeros((1, Dw), jnp.float32)       # [h_fwd | h_bwd], carried across sentences
    sent_in = jnp.zeros((S, Dw), jnp.float32)   # pooled sentence vectors

    # ---------------------------- word level ----------------------------
    for i in range(S):
        L = lens_ref[i]
        x_i = x_ref[i]                                              # (T, E)
        # hoisted input->gate projections, directions lane-packed: (T, 2Hw) per gate
        gi = [jnp.dot(x_i, w_in_w[g], preferred_element_type=jnp.float32) + b_in_w[g]
              for g in range(3)]

        F = jnp.zeros((T, Dw), jnp.float32)     # bi-GRU outputs [f(t) | b(t)] per row t
        for k in range(T):
            kb = T - 1 - k
            # fwd lanes consume timestep k, bwd lanes consume timestep kb
            gi_r = jnp.where(half_w, gi[0][k:k + 1, :], gi[0][kb:kb + 1, :])
            gi_z = jnp.where(half_w, gi[1][k:k + 1, :], gi[1][kb:kb + 1, :])
            gi_n = jnp.where(half_w, gi[2][k:k + 1, :], gi[2][kb:kb + 1, :])
            h_new = _packed_gru_step(h_w, gi_r, gi_z, gi_n, w_hh_w, b_hh_w)
            # pack_padded_sequence semantics: freeze each direction past its length
            h_f_side = jnp.where(k < L, h_new, h_w)
            h_b_side = jnp.where(kb < L, h_new, h_w)
            h_w = jnp.where(half_w, h_f_side, h_b_side)
            # register build of F: fwd half -> row k, bwd half -> row kb
            put = ((rowT == k) & laneT_f) | ((rowT == kb) & jnp.logical_not(laneT_f))
            F = jnp.where(put, jnp.broadcast_to(h_w, (T, Dw)), F)

        # word attention over valid timesteps (rows >= L get zero weight)
        u = jnp.tanh(jnp.dot(F, attn_w_w, preferred_element_type=jnp.float32) + attn_b_w)
        scores = jnp.dot(u, ctx_w_w, preferred_element_type=jnp.float32)       # (T, 1)
        a = _masked_softmax_col(scores, L)
        pooled = jnp.sum(a * F, axis=0, keepdims=True)                         # (1, 2Hw)
        sent_in = jnp.where(rowS_in == i, jnp.broadcast_to(pooled, (S, Dw)), sent_in)

    word_h_ref[...] = h_w

    # -------------------------- sentence level --------------------------
    w_in_s = [w_in_s_ref[g] for g in range(3)]
    b_in_s = [b_in_s_ref[g] for g in range(3)]
    w_hh_s = [w_hh_s_ref[g] for g in range(3)]
    b_hh_s = [b_hh_s_ref[g] for g in range(3)]

    gi_s = [jnp.dot(sent_in, w_in_s[g], preferred_element_type=jnp.float32) + b_in_s[g]
            for g in range(3)]                                                  # (S, 2Hs)

    h_s = jnp.zeros((1, Ds), jnp.float32)
    Fs = jnp.zeros((S, Ds), jnp.float32)
    for k in range(S):
        kb = S - 1 - k
        gi_r = jnp.where(half_s, gi_s[0][k:k + 1, :], gi_s[0][kb:kb + 1, :])
        gi_z = jnp.where(half_s, gi_s[1][k:k + 1, :], gi_s[1][kb:kb + 1, :])
        gi_n = jnp.where(half_s, gi_s[2][k:k + 1, :], gi_s[2][kb:kb + 1, :])
        h_s = _packed_gru_step(h_s, gi_r, gi_z, gi_n, w_hh_s, b_hh_s)
        put = ((rowS == k) & laneS_f) | ((rowS == kb) & jnp.logical_not(laneS_f))
        Fs = jnp.where(put, jnp.broadcast_to(h_s, (S, Ds)), Fs)

    u_s = jnp.tanh(jnp.dot(Fs, attn_w_s_ref[...], preferred_element_type=jnp.float32)
                   + attn_b_s_ref[...])
    sc_s = jnp.dot(u_s, ctx_w_s_ref[...], preferred_element_type=jnp.float32)  # (S, 1)
    a_s = _masked_softmax_col(sc_s, S)
    pooled_s = jnp.sum(a_s * Fs, axis=0, keepdims=True)                        # (1, 2Hs)
    logits_ref[...] = (jnp.dot(pooled_s, fc_w_ref[...], preferred_element_type=jnp.float32)
                       + fc_b_ref[...])
    sent_h_ref[...] = h_s


# ----------------------------------------------------------------------------
# wrapper: one pallas_call, single grid step, everything resident in VMEM
# ----------------------------------------------------------------------------
_WEIGHT_ORDER = ('w_in_w', 'b_in_w', 'w_hh_w', 'b_hh_w',
                 'attn_w_w', 'attn_b_w', 'ctx_w_w',
                 'w_in_s', 'b_in_s', 'w_hh_s', 'b_hh_s',
                 'attn_w_s', 'attn_b_s', 'ctx_w_s',
                 'fc_w', 'fc_b')


@jax.jit
def han_forward(kp, x, lens):
    """x: (S, T, E) float32, lens: (S,) int32 ->
       (logits (1,C), word_h (2,Hw), sent_h (2,Hs))."""
    S, T, E = x.shape
    Dw = kp['w_hh_w'].shape[1]          # 2*Hw
    Ds = kp['w_hh_s'].shape[1]          # 2*Hs
    C = kp['fc_w'].shape[1]
    arrs = [kp[name] for name in _WEIGHT_ORDER]

    def cspec(shape):
        nd = len(shape)
        return pl.BlockSpec(shape, lambda i, lens_ref: (0,) * nd)

    grid_spec = pltpu.PrefetchScalarGridSpec(
        num_scalar_prefetch=1,
        grid=(1,),
        in_specs=[cspec(x.shape)] + [cspec(a.shape) for a in arrs],
        out_specs=(cspec((1, C)), cspec((1, Dw)), cspec((1, Ds))),
    )

    logits, word_h, sent_h = pl.pallas_call(
        han_kernel,
        out_shape=(jax.ShapeDtypeStruct((1, C), jnp.float32),
                   jax.ShapeDtypeStruct((1, Dw), jnp.float32),
                   jax.ShapeDtypeStruct((1, Ds), jnp.float32)),
        grid_spec=grid_spec,
        compiler_params=pltpu.CompilerParams(dimension_semantics=("arbitrary",)),
    )(lens, x, *arrs)
    # [h_f | h_b] lane-packed -> (2, H) rows, matching PyTorch's h_output layout
    return logits, word_h.reshape(2, Dw // 2), sent_h.reshape(2, Ds // 2)


# ----------------------------------------------------------------------------
# host-side: fused (PyTorch-layout) -> direction-packed per-gate kernel layout
# ----------------------------------------------------------------------------
def _pack_bigru(wih_f, whh_f, bih_f, bhh_f, wih_b, whh_b, bih_b, bhh_b, H):
    """Fused (in,3H)/(H,3H)/(1,3H) per direction -> per-gate, direction-packed."""
    def split3(a):
        return [a[:, g * H:(g + 1) * H] for g in range(3)]
    wif, wib = split3(wih_f), split3(wih_b)
    bif, bib = split3(bih_f), split3(bih_b)
    whf, whb = split3(whh_f), split3(whh_b)
    bhf, bhb = split3(bhh_f), split3(bhh_b)
    zero = jnp.zeros((H, H), jnp.float32)
    w_in = jnp.stack([jnp.concatenate([wif[g], wib[g]], axis=1) for g in range(3)])
    b_in = jnp.stack([jnp.concatenate([bif[g], bib[g]], axis=1) for g in range(3)])
    w_hh = jnp.stack([
        jnp.concatenate([jnp.concatenate([whf[g], zero], axis=1),
                         jnp.concatenate([zero, whb[g]], axis=1)], axis=0)
        for g in range(3)])                                  # (3, 2H, 2H) block-diagonal
    b_hh = jnp.stack([jnp.concatenate([bhf[g], bhb[g]], axis=1) for g in range(3)])
    return w_in, b_in, w_hh, b_hh


def kernel_params_from_fused(word_p, sent_p, Hw, Hs):
    w_in_w, b_in_w, w_hh_w, b_hh_w = _pack_bigru(
        word_p['wih_f'], word_p['whh_f'], word_p['bih_f'], word_p['bhh_f'],
        word_p['wih_b'], word_p['whh_b'], word_p['bih_b'], word_p['bhh_b'], Hw)
    w_in_s, b_in_s, w_hh_s, b_hh_s = _pack_bigru(
        sent_p['wih_f'], sent_p['whh_f'], sent_p['bih_f'], sent_p['bhh_f'],
        sent_p['wih_b'], sent_p['whh_b'], sent_p['bih_b'], sent_p['bhh_b'], Hs)
    return dict(
        w_in_w=w_in_w, b_in_w=b_in_w, w_hh_w=w_hh_w, b_hh_w=b_hh_w,
        attn_w_w=word_p['attn_w'], attn_b_w=word_p['attn_b'], ctx_w_w=word_p['ctx_w'],
        w_in_s=w_in_s, b_in_s=b_in_s, w_hh_s=w_hh_s, b_hh_s=b_hh_s,
        attn_w_s=sent_p['attn_w'], attn_b_s=sent_p['attn_b'], ctx_w_s=sent_p['ctx_w'],
        fc_w=sent_p['fc_w'], fc_b=sent_p['fc_b'])


# ----------------------------------------------------------------------------
# pure-JAX reference (same math, fused weights) for verification
# ----------------------------------------------------------------------------
def _ref_gru_dir(x, h0, wih, whh, bih, bhh, reverse):
    T = x.shape[0]
    H = h0.shape[1]
    order = range(T - 1, -1, -1) if reverse else range(T)
    h = h0
    outs = [None] * T
    for t in order:
        gi = x[t:t + 1] @ wih + bih
        gh = h @ whh + bhh
        r = jax.nn.sigmoid(gi[:, :H] + gh[:, :H])
        z = jax.nn.sigmoid(gi[:, H:2 * H] + gh[:, H:2 * H])
        n = jnp.tanh(gi[:, 2 * H:] + r * gh[:, 2 * H:])
        h = (1.0 - z) * n + z * h
        outs[t] = h
    return jnp.concatenate(outs, axis=0), h


def _ref_bigru_attention(x, h0, p, L):
    xv = x[:L]
    f_f, h_f = _ref_gru_dir(xv, h0[0:1], p['wih_f'], p['whh_f'], p['bih_f'], p['bhh_f'], False)
    f_b, h_b = _ref_gru_dir(xv, h0[1:2], p['wih_b'], p['whh_b'], p['bih_b'], p['bhh_b'], True)
    f_out = jnp.concatenate([f_f, f_b], axis=1)
    u = jnp.tanh(f_out @ p['attn_w'] + p['attn_b'])
    a = jax.nn.softmax(u @ p['ctx_w'], axis=0)
    pooled = jnp.sum(a * f_out, axis=0, keepdims=True)
    return pooled, jnp.concatenate([h_f, h_b], axis=0)


def han_reference(word_p, sent_p, input_data, lengths, Hw, Hs):
    S = input_data.shape[1]
    word_h = jnp.zeros((2, Hw), jnp.float32)
    outs = []
    for i in range(S):
        o_i, word_h = _ref_bigru_attention(input_data[0, i], word_h, word_p, lengths[i])
        outs.append(o_i)
    sent_in = jnp.concatenate(outs, axis=0)
    sent_h0 = jnp.zeros((2, Hs), jnp.float32)
    pooled, sent_h = _ref_bigru_attention(sent_in, sent_h0, sent_p, S)
    logits = pooled @ sent_p['fc_w'] + sent_p['fc_b']
    return logits, word_h, sent_h


# ----------------------------------------------------------------------------
# deterministic parameter init (fused PyTorch-style layout)
# ----------------------------------------------------------------------------
def _uniform(key, shape, scale):
    return jax.random.uniform(key, shape, jnp.float32, -scale, scale)


def init_params(key, E, Hw, Hs, C):
    keys = iter(jax.random.split(key, 40))
    kw = 1.0 / float(Hw) ** 0.5
    word_p = dict(
        wih_f=_uniform(next(keys), (E, 3 * Hw), kw),
        whh_f=_uniform(next(keys), (Hw, 3 * Hw), kw),
        bih_f=_uniform(next(keys), (1, 3 * Hw), kw),
        bhh_f=_uniform(next(keys), (1, 3 * Hw), kw),
        wih_b=_uniform(next(keys), (E, 3 * Hw), kw),
        whh_b=_uniform(next(keys), (Hw, 3 * Hw), kw),
        bih_b=_uniform(next(keys), (1, 3 * Hw), kw),
        bhh_b=_uniform(next(keys), (1, 3 * Hw), kw),
        attn_w=_uniform(next(keys), (2 * Hw, 2 * Hw), kw),
        attn_b=_uniform(next(keys), (1, 2 * Hw), kw),
        ctx_w=_uniform(next(keys), (2 * Hw, 1), kw),
    )
    ks = 1.0 / float(Hs) ** 0.5
    sent_p = dict(
        wih_f=_uniform(next(keys), (2 * Hw, 3 * Hs), ks),
        whh_f=_uniform(next(keys), (Hs, 3 * Hs), ks),
        bih_f=_uniform(next(keys), (1, 3 * Hs), ks),
        bhh_f=_uniform(next(keys), (1, 3 * Hs), ks),
        wih_b=_uniform(next(keys), (2 * Hw, 3 * Hs), ks),
        whh_b=_uniform(next(keys), (Hs, 3 * Hs), ks),
        bih_b=_uniform(next(keys), (1, 3 * Hs), ks),
        bhh_b=_uniform(next(keys), (1, 3 * Hs), ks),
        attn_w=_uniform(next(keys), (2 * Hs, 2 * Hs), ks),
        attn_b=_uniform(next(keys), (1, 2 * Hs), ks),
        ctx_w=_uniform(next(keys), (2 * Hs, 1), ks),
        fc_w=_uniform(next(keys), (2 * Hs, C), ks),
        fc_b=_uniform(next(keys), (1, C), ks),
    )
    return word_p, sent_p


if __name__ == "__main__":
    E, Hw, Hs = 32, 16, 16          # word_embed_size, word_hidden, sent_hidden
    S, T, C = 4, 8, 8               # num_sentences, num_words (padded), num_classes
    lengths = [8, 6, 7, 5]          # true lengths per sentence (all >= 1)

    key = jax.random.PRNGKey(0)
    k_data, k_param = jax.random.split(key)
    input_data = jax.random.normal(k_data, (1, S, T, E), jnp.float32)

    word_p, sent_p = init_params(k_param, E, Hw, Hs, C)
    kp = kernel_params_from_fused(word_p, sent_p, Hw, Hs)

    x = input_data[0]                                  # (S, T, E)
    lens = jnp.asarray(lengths, dtype=jnp.int32)       # (S,)

    logits, word_h, sent_h = han_forward(kp, x, lens)
    logits = jax.block_until_ready(logits)

    ref_logits, ref_word_h, ref_sent_h = han_reference(
        word_p, sent_p, input_data, lengths, Hw, Hs)

    assert logits.shape == (1, C)
    assert jnp.allclose(logits, ref_logits, atol=1e-3, rtol=1e-3), (logits, ref_logits)
    assert jnp.allclose(word_h, ref_word_h, atol=1e-3, rtol=1e-3)
    assert jnp.allclose(sent_h, ref_sent_h, atol=1e-3, rtol=1e-3)

    print("KERNEL_OK")
</pallas_src>

<mosaic_0001>
module attributes {stable_mosaic.version = 11 : i64} {
  func.func @han_kernel(%arg0: i32, %arg1: memref<4xi32, #tpu.memory_space<smem>>, %arg2: memref<4x8x32xf32, #tpu.memory_space<vmem>>, %arg3: memref<3x32x32xf32, #tpu.memory_space<vmem>>, %arg4: memref<3x1x32xf32, #tpu.memory_space<vmem>>, %arg5: memref<3x32x32xf32, #tpu.memory_space<vmem>>, %arg6: memref<3x1x32xf32, #tpu.memory_space<vmem>>, %arg7: memref<32x32xf32, #tpu.memory_space<vmem>>, %arg8: memref<1x32xf32, #tpu.memory_space<vmem>>, %arg9: memref<32x1xf32, #tpu.memory_space<vmem>>, %arg10: memref<3x32x32xf32, #tpu.memory_space<vmem>>, %arg11: memref<3x1x32xf32, #tpu.memory_space<vmem>>, %arg12: memref<3x32x32xf32, #tpu.memory_space<vmem>>, %arg13: memref<3x1x32xf32, #tpu.memory_space<vmem>>, %arg14: memref<32x32xf32, #tpu.memory_space<vmem>>, %arg15: memref<1x32xf32, #tpu.memory_space<vmem>>, %arg16: memref<32x1xf32, #tpu.memory_space<vmem>>, %arg17: memref<32x8xf32, #tpu.memory_space<vmem>>, %arg18: memref<1x8xf32, #tpu.memory_space<vmem>>, %arg19: memref<1x8xf32, #tpu.memory_space<vmem>>, %arg20: memref<1x32xf32, #tpu.memory_space<vmem>>, %arg21: memref<1x32xf32, #tpu.memory_space<vmem>>) attributes {dimension_semantics = [#tpu.dimension_semantics<arbitrary>], iteration_bounds = array<i64: 1>, scalar_prefetch = 1 : i64, scratch_operands = 0 : i64, tpu.core_type = #tpu.core_type<tc>, window_params = [{pipeline_mode = #tpu.pipeline_mode<synchronous>, transform_indices = @transform_0, window_bounds = array<i64: 4, 8, 32>}, {pipeline_mode = #tpu.pipeline_mode<synchronous>, transform_indices = @transform_1, window_bounds = array<i64: 3, 32, 32>}, {pipeline_mode = #tpu.pipeline_mode<synchronous>, transform_indices = @transform_2, window_bounds = array<i64: 3, 1, 32>}, {pipeline_mode = #tpu.pipeline_mode<synchronous>, transform_indices = @transform_3, window_bounds = array<i64: 3, 32, 32>}, {pipeline_mode = #tpu.pipeline_mode<synchronous>, transform_indices = @transform_4, window_bounds = array<i64: 3, 1, 32>}, {pipeline_mode = #tpu.pipeline_mode<synchronous>, transform_indices = @transform_5, window_bounds = array<i64: 32, 32>}, {pipeline_mode = #tpu.pipeline_mode<synchronous>, transform_indices = @transform_6, window_bounds = array<i64: 1, 32>}, {pipeline_mode = #tpu.pipeline_mode<synchronous>, transform_indices = @transform_7, window_bounds = array<i64: 32, 1>}, {pipeline_mode = #tpu.pipeline_mode<synchronous>, transform_indices = @transform_8, window_bounds = array<i64: 3, 32, 32>}, {pipeline_mode = #tpu.pipeline_mode<synchronous>, transform_indices = @transform_9, window_bounds = array<i64: 3, 1, 32>}, {pipeline_mode = #tpu.pipeline_mode<synchronous>, transform_indices = @transform_10, window_bounds = array<i64: 3, 32, 32>}, {pipeline_mode = #tpu.pipeline_mode<synchronous>, transform_indices = @transform_11, window_bounds = array<i64: 3, 1, 32>}, {pipeline_mode = #tpu.pipeline_mode<synchronous>, transform_indices = @transform_12, window_bounds = array<i64: 32, 32>}, {pipeline_mode = #tpu.pipeline_mode<synchronous>, transform_indices = @transform_13, window_bounds = array<i64: 1, 32>}, {pipeline_mode = #tpu.pipeline_mode<synchronous>, transform_indices = @transform_14, window_bounds = array<i64: 32, 1>}, {pipeline_mode = #tpu.pipeline_mode<synchronous>, transform_indices = @transform_15, window_bounds = array<i64: 32, 8>}, {pipeline_mode = #tpu.pipeline_mode<synchronous>, transform_indices = @transform_16, window_bounds = array<i64: 1, 8>}, {pipeline_mode = #tpu.pipeline_mode<synchronous>, transform_indices = @transform_17, window_bounds = array<i64: 1, 8>}, {pipeline_mode = #tpu.pipeline_mode<synchronous>, transform_indices = @transform_18, window_bounds = array<i64: 1, 32>}, {pipeline_mode = #tpu.pipeline_mode<synchronous>, transform_indices = @transform_19, window_bounds = array<i64: 1, 32>}]} {
    %0 = tpu.iota {dimensions = array<i32: 1>} : vector<1x32xi32>
    %c16_i32 = arith.constant 16 : i32
    %1 = vector.broadcast %c16_i32 : i32 to vector<1x32xi32>
    %2 = arith.cmpi slt, %0, %1 : vector<1x32xi32>
    %3 = tpu.iota {dimensions = array<i32: 1>} : vector<1x32xi32>
    %c16_i32_0 = arith.constant 16 : i32
    %4 = vector.broadcast %c16_i32_0 : i32 to vector<1x32xi32>
    %5 = arith.cmpi slt, %3, %4 : vector<1x32xi32>
    %6 = tpu.iota {dimensions = array<i32: 0>} : vector<8x32xi32>
    %7 = tpu.iota {dimensions = array<i32: 1>} : vector<8x32xi32>
    %c16_i32_1 = arith.constant 16 : i32
    %8 = vector.broadcast %c16_i32_1 : i32 to vector<8x32xi32>
    %9 = arith.cmpi slt, %7, %8 : vector<8x32xi32>
    %10 = tpu.iota {dimensions = array<i32: 0>} : vector<4x32xi32>
    %11 = tpu.iota {dimensions = array<i32: 1>} : vector<4x32xi32>
    %c16_i32_2 = arith.constant 16 : i32
    %12 = vector.broadcast %c16_i32_2 : i32 to vector<4x32xi32>
    %13 = arith.cmpi slt, %11, %12 : vector<4x32xi32>
    %14 = tpu.iota {dimensions = array<i32: 0>} : vector<4x32xi32>
    %c0 = arith.constant 0 : index
    %c0_3 = arith.constant 0 : index
    %c0_4 = arith.constant 0 : index
    %15 = vector.load %arg3[%c0, %c0_3, %c0_4] : memref<3x32x32xf32, #tpu.memory_space<vmem>>, vector<1x32x32xf32>
    %16 = vector.shape_cast %15 : vector<1x32x32xf32> to vector<32x32xf32>
    %c1 = arith.constant 1 : index
    %c0_5 = arith.constant 0 : index
    %c0_6 = arith.constant 0 : index
    %17 = vector.load %arg3[%c1, %c0_5, %c0_6] : memref<3x32x32xf32, #tpu.memory_space<vmem>>, vector<1x32x32xf32>
    %18 = vector.shape_cast %17 : vector<1x32x32xf32> to vector<32x32xf32>
    %c2 = arith.constant 2 : index
    %c0_7 = arith.constant 0 : index
    %c0_8 = arith.constant 0 : index
    %19 = vector.load %arg3[%c2, %c0_7, %c0_8] : memref<3x32x32xf32, #tpu.memory_space<vmem>>, vector<1x32x32xf32>
    %20 = vector.shape_cast %19 : vector<1x32x32xf32> to vector<32x32xf32>
    %c0_9 = arith.constant 0 : index
    %c0_10 = arith.constant 0 : index
    %c0_11 = arith.constant 0 : index
    %21 = vector.load %arg4[%c0_9, %c0_10, %c0_11] : memref<3x1x32xf32, #tpu.memory_space<vmem>>, vector<1x1x32xf32>
    %22 = vector.shape_cast %21 : vector<1x1x32xf32> to vector<1x32xf32>
    %c1_12 = arith.constant 1 : index
    %c0_13 = arith.constant 0 : index
    %c0_14 = arith.constant 0 : index
    %23 = vector.load %arg4[%c1_12, %c0_13, %c0_14] : memref<3x1x32xf32, #tpu.memory_space<vmem>>, vector<1x1x32xf32>
    %24 = vector.shape_cast %23 : vector<1x1x32xf32> to vector<1x32xf32>
    %c2_15 = arith.constant 2 : index
    %c0_16 = arith.constant 0 : index
    %c0_17 = arith.constant 0 : index
    %25 = vector.load %arg4[%c2_15, %c0_16, %c0_17] : memref<3x1x32xf32, #tpu.memory_space<vmem>>, vector<1x1x32xf32>
    %26 = vector.shape_cast %25 : vector<1x1x32xf32> to vector<1x32xf32>
    %c0_18 = arith.constant 0 : index
    %c0_19 = arith.constant 0 : index
    %c0_20 = arith.constant 0 : index
    %27 = vector.load %arg5[%c0_18, %c0_19, %c0_20] : memref<3x32x32xf32, #tpu.memory_space<vmem>>, vector<1x32x32xf32>
    %28 = vector.shape_cast %27 : vector<1x32x32xf32> to vector<32x32xf32>
    %c1_21 = arith.constant 1 : index
    %c0_22 = arith.constant 0 : index
    %c0_23 = arith.constant 0 : index
    %29 = vector.load %arg5[%c1_21, %c0_22, %c0_23] : memref<3x32x32xf32, #tpu.memory_space<vmem>>, vector<1x32x32xf32>
    %30 = vector.shape_cast %29 : vector<1x32x32xf32> to vector<32x32xf32>
    %c2_24 = arith.constant 2 : index
    %c0_25 = arith.constant 0 : index
    %c0_26 = arith.constant 0 : index
    %31 = vector.load %arg5[%c2_24, %c0_25, %c0_26] : memref<3x32x32xf32, #tpu.memory_space<vmem>>, vector<1x32x32xf32>
    %32 = vector.shape_cast %31 : vector<1x32x32xf32> to vector<32x32xf32>
    %c0_27 = arith.constant 0 : index
    %c0_28 = arith.constant 0 : index
    %c0_29 = arith.constant 0 : index
    %33 = vector.load %arg6[%c0_27, %c0_28, %c0_29] : memref<3x1x32xf32, #tpu.memory_space<vmem>>, vector<1x1x32xf32>
    %34 = vector.shape_cast %33 : vector<1x1x32xf32> to vector<1x32xf32>
    %c1_30 = arith.constant 1 : index
    %c0_31 = arith.constant 0 : index
    %c0_32 = arith.constant 0 : index
    %35 = vector.load %arg6[%c1_30, %c0_31, %c0_32] : memref<3x1x32xf32, #tpu.memory_space<vmem>>, vector<1x1x32xf32>
    %36 = vector.shape_cast %35 : vector<1x1x32xf32> to vector<1x32xf32>
    %c2_33 = arith.constant 2 : index
    %c0_34 = arith.constant 0 : index
    %c0_35 = arith.constant 0 : index
    %37 = vector.load %arg6[%c2_33, %c0_34, %c0_35] : memref<3x1x32xf32, #tpu.memory_space<vmem>>, vector<1x1x32xf32>
    %38 = vector.shape_cast %37 : vector<1x1x32xf32> to vector<1x32xf32>
    %c0_36 = arith.constant 0 : index
    %c0_37 = arith.constant 0 : index
    %39 = vector.load %arg7[%c0_36, %c0_37] : memref<32x32xf32, #tpu.memory_space<vmem>>, vector<32x32xf32>
    %c0_38 = arith.constant 0 : index
    %c0_39 = arith.constant 0 : index
    %40 = vector.load %arg8[%c0_38, %c0_39] : memref<1x32xf32, #tpu.memory_space<vmem>>, vector<1x32xf32>
    %c0_40 = arith.constant 0 : index
    %c0_41 = arith.constant 0 : index
    %41 = vector.load %arg9[%c0_40, %c0_41] : memref<32x1xf32, #tpu.memory_space<vmem>>, vector<32x1xf32>
    %cst = arith.constant 0.000000e+00 : f32
    %42 = vector.broadcast %cst : f32 to vector<1x32xf32>
    %cst_42 = arith.constant 0.000000e+00 : f32
    %43 = vector.broadcast %cst_42 : f32 to vector<4x32xf32>
    %c0_43 = arith.constant 0 : index
    %44 = memref.load %arg1[%c0_43] : memref<4xi32, #tpu.memory_space<smem>>
    %c0_44 = arith.constant 0 : index
    %c0_45 = arith.constant 0 : index
    %c0_46 = arith.constant 0 : index
    %45 = vector.load %arg2[%c0_44, %c0_45, %c0_46] : memref<4x8x32xf32, #tpu.memory_space<vmem>>, vector<1x8x32xf32>
    %46 = vector.shape_cast %45 : vector<1x8x32xf32> to vector<8x32xf32>
    %cst_47 = arith.constant dense<0.000000e+00> : vector<8x32xf32>
    %47 = tpu.matmul %46, %16, %cst_47 {dimension_numbers = #tpu.dot_dimension_numbers<[1], [0], [0], [1], [0, 0, 1, 1], [], []>} : vector<8x32xf32>, vector<32x32xf32>, vector<8x32xf32> -> vector<8x32xf32>
    %48 = vector.broadcast %22 : vector<1x32xf32> to vector<8x32xf32>
    %49 = arith.addf %47, %48 : vector<8x32xf32>
    %cst_48 = arith.constant dense<0.000000e+00> : vector<8x32xf32>
    %50 = tpu.matmul %46, %18, %cst_48 {dimension_numbers = #tpu.dot_dimension_numbers<[1], [0], [0], [1], [0, 0, 1, 1], [], []>} : vector<8x32xf32>, vector<32x32xf32>, vector<8x32xf32> -> vector<8x32xf32>
    %51 = vector.broadcast %24 : vector<1x32xf32> to vector<8x32xf32>
    %52 = arith.addf %50, %51 : vector<8x32xf32>
    %cst_49 = arith.constant dense<0.000000e+00> : vector<8x32xf32>
    %53 = tpu.matmul %46, %20, %cst_49 {dimension_numbers = #tpu.dot_dimension_numbers<[1], [0], [0], [1], [0, 0, 1, 1], [], []>} : vector<8x32xf32>, vector<32x32xf32>, vector<8x32xf32> -> vector<8x32xf32>
    %54 = vector.broadcast %26 : vector<1x32xf32> to vector<8x32xf32>
    %55 = arith.addf %53, %54 : vector<8x32xf32>
    %cst_50 = arith.constant 0.000000e+00 : f32
    %56 = vector.broadcast %cst_50 : f32 to vector<8x32xf32>
    %57 = vector.extract_strided_slice %49 {offsets = [0, 0], sizes = [1, 32], strides = [1, 1]} : vector<8x32xf32> to vector<1x32xf32>
    %58 = vector.extract_strided_slice %49 {offsets = [7, 0], sizes = [1, 32], strides = [1, 1]} : vector<8x32xf32> to vector<1x32xf32>
    %59 = arith.select %2, %57, %58 : vector<1x32xi1>, vector<1x32xf32>
    %60 = vector.extract_strided_slice %52 {offsets = [0, 0], sizes = [1, 32], strides = [1, 1]} : vector<8x32xf32> to vector<1x32xf32>
    %61 = vector.extract_strided_slice %52 {offsets = [7, 0], sizes = [1, 32], strides = [1, 1]} : vector<8x32xf32> to vector<1x32xf32>
    %62 = arith.select %2, %60, %61 : vector<1x32xi1>, vector<1x32xf32>
    %63 = vector.extract_strided_slice %55 {offsets = [0, 0], sizes = [1, 32], strides = [1, 1]} : vector<8x32xf32> to vector<1x32xf32>
    %64 = vector.extract_strided_slice %55 {offsets = [7, 0], sizes = [1, 32], strides = [1, 1]} : vector<8x32xf32> to vector<1x32xf32>
    %65 = arith.select %2, %63, %64 : vector<1x32xi1>, vector<1x32xf32>
    %cst_51 = arith.constant dense<0.000000e+00> : vector<1x32xf32>
    %66 = tpu.matmul %42, %28, %cst_51 {dimension_numbers = #tpu.dot_dimension_numbers<[1], [0], [0], [1], [0, 0, 1, 1], [], []>} : vector<1x32xf32>, vector<32x32xf32>, vector<1x32xf32> -> vector<1x32xf32>
    %67 = arith.addf %66, %34 : vector<1x32xf32>
    %cst_52 = arith.constant dense<0.000000e+00> : vector<1x32xf32>
    %68 = tpu.matmul %42, %30, %cst_52 {dimension_numbers = #tpu.dot_dimension_numbers<[1], [0], [0], [1], [0, 0, 1, 1], [], []>} : vector<1x32xf32>, vector<32x32xf32>, vector<1x32xf32> -> vector<1x32xf32>
    %69 = arith.addf %68, %36 : vector<1x32xf32>
    %cst_53 = arith.constant dense<0.000000e+00> : vector<1x32xf32>
    %70 = tpu.matmul %42, %32, %cst_53 {dimension_numbers = #tpu.dot_dimension_numbers<[1], [0], [0], [1], [0, 0, 1, 1], [], []>} : vector<1x32xf32>, vector<32x32xf32>, vector<1x32xf32> -> vector<1x32xf32>
    %71 = arith.addf %70, %38 : vector<1x32xf32>
    %72 = arith.addf %59, %67 : vector<1x32xf32>
    %73 = arith.negf %72 : vector<1x32xf32>
    %74 = math.exp %73 : vector<1x32xf32>
    %cst_54 = arith.constant 1.000000e+00 : f32
    %75 = vector.broadcast %cst_54 : f32 to vector<1x32xf32>
    %76 = arith.addf %75, %74 : vector<1x32xf32>
    %77 = arith.divf %75, %76 : vector<1x32xf32>
    %78 = arith.addf %62, %69 : vector<1x32xf32>
    %79 = arith.negf %78 : vector<1x32xf32>
    %80 = math.exp %79 : vector<1x32xf32>
    %cst_55 = arith.constant 1.000000e+00 : f32
    %81 = vector.broadcast %cst_55 : f32 to vector<1x32xf32>
    %82 = arith.addf %81, %80 : vector<1x32xf32>
    %83 = arith.divf %81, %82 : vector<1x32xf32>
    %84 = arith.mulf %77, %71 : vector<1x32xf32>
    %85 = arith.addf %65, %84 : vector<1x32xf32>
    %86 = math.tanh %85 : vector<1x32xf32>
    %cst_56 = arith.constant 1.000000e+00 : f32
    %87 = vector.broadcast %cst_56 : f32 to vector<1x32xf32>
    %88 = arith.subf %87, %83 : vector<1x32xf32>
    %89 = arith.mulf %88, %86 : vector<1x32xf32>
    %90 = arith.mulf %83, %42 : vector<1x32xf32>
    %91 = arith.addf %89, %90 : vector<1x32xf32>
    %c0_i32 = arith.constant 0 : i32
    %92 = arith.cmpi sgt, %44, %c0_i32 : i32
    %93 = arith.select %92, %91, %42 : vector<1x32xf32>
    %c7_i32 = arith.constant 7 : i32
    %94 = arith.cmpi sgt, %44, %c7_i32 : i32
    %95 = arith.select %94, %91, %42 : vector<1x32xf32>
    %96 = arith.select %2, %93, %95 : vector<1x32xi1>, vector<1x32xf32>
    %c0_i32_57 = arith.constant 0 : i32
    %97 = vector.broadcast %c0_i32_57 : i32 to vector<8x32xi32>
    %98 = arith.cmpi eq, %6, %97 : vector<8x32xi32>
    %99 = arith.andi %98, %9 : vector<8x32xi1>
    %c7_i32_58 = arith.constant 7 : i32
    %100 = vector.broadcast %c7_i32_58 : i32 to vector<8x32xi32>
    %101 = arith.cmpi eq, %6, %100 : vector<8x32xi32>
    %cst_59 = arith.constant dense<true> : vector<8x32xi1>
    %102 = arith.xori %9, %cst_59 : vector<8x32xi1>
    %103 = arith.andi %101, %102 : vector<8x32xi1>
    %104 = arith.ori %99, %103 : vector<8x32xi1>
    %105 = vector.shape_cast %96 : vector<1x32xf32> to vector<1x32xf32>
    %106 = vector.broadcast %105 : vector<1x32xf32> to vector<8x32xf32>
    %107 = arith.select %104, %106, %56 : vector<8x32xi1>, vector<8x32xf32>
    %108 = vector.extract_strided_slice %49 {offsets = [1, 0], sizes = [1, 32], strides = [1, 1]} : vector<8x32xf32> to vector<1x32xf32>
    %109 = vector.extract_strided_slice %49 {offsets = [6, 0], sizes = [1, 32], strides = [1, 1]} : vector<8x32xf32> to vector<1x32xf32>
    %110 = arith.select %2, %108, %109 : vector<1x32xi1>, vector<1x32xf32>
    %111 = vector.extract_strided_slice %52 {offsets = [1, 0], sizes = [1, 32], strides = [1, 1]} : vector<8x32xf32> to vector<1x32xf32>
    %112 = vector.extract_strided_slice %52 {offsets = [6, 0], sizes = [1, 32], strides = [1, 1]} : vector<8x32xf32> to vector<1x32xf32>
    %113 = arith.select %2, %111, %112 : vector<1x32xi1>, vector<1x32xf32>
    %114 = vector.extract_strided_slice %55 {offsets = [1, 0], sizes = [1, 32], strides = [1, 1]} : vector<8x32xf32> to vector<1x32xf32>
    %115 = vector.extract_strided_slice %55 {offsets = [6, 0], sizes = [1, 32], strides = [1, 1]} : vector<8x32xf32> to vector<1x32xf32>
    %116 = arith.select %2, %114, %115 : vector<1x32xi1>, vector<1x32xf32>
    %cst_60 = arith.constant dense<0.000000e+00> : vector<1x32xf32>
    %117 = tpu.matmul %96, %28, %cst_60 {dimension_numbers = #tpu.dot_dimension_numbers<[1], [0], [0], [1], [0, 0, 1, 1], [], []>} : vector<1x32xf32>, vector<32x32xf32>, vector<1x32xf32> -> vector<1x32xf32>
    %118 = arith.addf %117, %34 : vector<1x32xf32>
    %cst_61 = arith.constant dense<0.000000e+00> : vector<1x32xf32>
    %119 = tpu.matmul %96, %30, %cst_61 {dimension_numbers = #tpu.dot_dimension_numbers<[1], [0], [0], [1], [0, 0, 1, 1], [], []>} : vector<1x32xf32>, vector<32x32xf32>, vector<1x32xf32> -> vector<1x32xf32>
    %120 = arith.addf %119, %36 : vector<1x32xf32>
    %cst_62 = arith.constant dense<0.000000e+00> : vector<1x32xf32>
    %121 = tpu.matmul %96, %32, %cst_62 {dimension_numbers = #tpu.dot_dimension_numbers<[1], [0], [0], [1], [0, 0, 1, 1], [], []>} : vector<1x32xf32>, vector<32x32xf32>, vector<1x32xf32> -> vector<1x32xf32>
    %122 = arith.addf %121, %38 : vector<1x32xf32>
    %123 = arith.addf %110, %118 : vector<1x32xf32>
    %124 = arith.negf %123 : vector<1x32xf32>
    %125 = math.exp %124 : vector<1x32xf32>
    %cst_63 = arith.constant 1.000000e+00 : f32
    %126 = vector.broadcast %cst_63 : f32 to vector<1x32xf32>
    %127 = arith.addf %126, %125 : vector<1x32xf32>
    %128 = arith.divf %126, %127 : vector<1x32xf32>
    %129 = arith.addf %113, %120 : vector<1x32xf32>
    %130 = arith.negf %129 : vector<1x32xf32>
    %131 = math.exp %130 : vector<1x32xf32>
    %cst_64 = arith.constant 1.000000e+00 : f32
    %132 = vector.broadcast %cst_64 : f32 to vector<1x32xf32>
    %133 = arith.addf %132, %131 : vector<1x32xf32>
    %134 = arith.divf %132, %133 : vector<1x32xf32>
    %135 = arith.mulf %128, %122 : vector<1x32xf32>
    %136 = arith.addf %116, %135 : vector<1x32xf32>
    %137 = math.tanh %136 : vector<1x32xf32>
    %cst_65 = arith.constant 1.000000e+00 : f32
    %138 = vector.broadcast %cst_65 : f32 to vector<1x32xf32>
    %139 = arith.subf %138, %134 : vector<1x32xf32>
    %140 = arith.mulf %139, %137 : vector<1x32xf32>
    %141 = arith.mulf %134, %96 : vector<1x32xf32>
    %142 = arith.addf %140, %141 : vector<1x32xf32>
    %c1_i32 = arith.constant 1 : i32
    %143 = arith.cmpi sgt, %44, %c1_i32 : i32
    %144 = arith.select %143, %142, %96 : vector<1x32xf32>
    %c6_i32 = arith.constant 6 : i32
    %145 = arith.cmpi sgt, %44, %c6_i32 : i32
    %146 = arith.select %145, %142, %96 : vector<1x32xf32>
    %147 = arith.select %2, %144, %146 : vector<1x32xi1>, vector<1x32xf32>
    %c1_i32_66 = arith.constant 1 : i32
    %148 = vector.broadcast %c1_i32_66 : i32 to vector<8x32xi32>
    %149 = arith.cmpi eq, %6, %148 : vector<8x32xi32>
    %150 = arith.andi %149, %9 : vector<8x32xi1>
    %c6_i32_67 = arith.constant 6 : i32
    %151 = vector.broadcast %c6_i32_67 : i32 to vector<8x32xi32>
    %152 = arith.cmpi eq, %6, %151 : vector<8x32xi32>
    %cst_68 = arith.constant dense<true> : vector<8x32xi1>
    %153 = arith.xori %9, %cst_68 : vector<8x32xi1>
    %154 = arith.andi %152, %153 : vector<8x32xi1>
    %155 = arith.ori %150, %154 : vector<8x32xi1>
    %156 = vector.shape_cast %147 : vector<1x32xf32> to vector<1x32xf32>
    %157 = vector.broadcast %156 : vector<1x32xf32> to vector<8x32xf32>
    %158 = arith.select %155, %157, %107 : vector<8x32xi1>, vector<8x32xf32>
    %159 = vector.extract_strided_slice %49 {offsets = [2, 0], sizes = [1, 32], strides = [1, 1]} : vector<8x32xf32> to vector<1x32xf32>
    %160 = vector.extract_strided_slice %49 {offsets = [5, 0], sizes = [1, 32], strides = [1, 1]} : vector<8x32xf32> to vector<1x32xf32>
    %161 = arith.select %2, %159, %160 : vector<1x32xi1>, vector<1x32xf32>
    %162 = vector.extract_strided_slice %52 {offsets = [2, 0], sizes = [1, 32], strides = [1, 1]} : vector<8x32xf32> to vector<1x32xf32>
    %163 = vector.extract_strided_slice %52 {offsets = [5, 0], sizes = [1, 32], strides = [1, 1]} : vector<8x32xf32> to vector<1x32xf32>
    %164 = arith.select %2, %162, %163 : vector<1x32xi1>, vector<1x32xf32>
    %165 = vector.extract_strided_slice %55 {offsets = [2, 0], sizes = [1, 32], strides = [1, 1]} : vector<8x32xf32> to vector<1x32xf32>
    %166 = vector.extract_strided_slice %55 {offsets = [5, 0], sizes = [1, 32], strides = [1, 1]} : vector<8x32xf32> to vector<1x32xf32>
    %167 = arith.select %2, %165, %166 : vector<1x32xi1>, vector<1x32xf32>
    %cst_69 = arith.constant dense<0.000000e+00> : vector<1x32xf32>
    %168 = tpu.matmul %147, %28, %cst_69 {dimension_numbers = #tpu.dot_dimension_numbers<[1], [0], [0], [1], [0, 0, 1, 1], [], []>} : vector<1x32xf32>, vector<32x32xf32>, vector<1x32xf32> -> vector<1x32xf32>
    %169 = arith.addf %168, %34 : vector<1x32xf32>
    %cst_70 = arith.constant dense<0.000000e+00> : vector<1x32xf32>
    %170 = tpu.matmul %147, %30, %cst_70 {dimension_numbers = #tpu.dot_dimension_numbers<[1], [0], [0], [1], [0, 0, 1, 1], [], []>} : vector<1x32xf32>, vector<32x32xf32>, vector<1x32xf32> -> vector<1x32xf32>
    %171 = arith.addf %170, %36 : vector<1x32xf32>
    %cst_71 = arith.constant dense<0.000000e+00> : vector<1x32xf32>
    %172 = tpu.matmul %147, %32, %cst_71 {dimension_numbers = #tpu.dot_dimension_numbers<[1], [0], [0], [1], [0, 0, 1, 1], [], []>} : vector<1x32xf32>, vector<32x32xf32>, vector<1x32xf32> -> vector<1x32xf32>
    %173 = arith.addf %172, %38 : vector<1x32xf32>
    %174 = arith.addf %161, %169 : vector<1x32xf32>
    %175 = arith.negf %174 : vector<1x32xf32>
    %176 = math.exp %175 : vector<1x32xf32>
    %cst_72 = arith.constant 1.000000e+00 : f32
    %177 = vector.broadcast %cst_72 : f32 to vector<1x32xf32>
    %178 = arith.addf %177, %176 : vector<1x32xf32>
    %179 = arith.divf %177, %178 : vector<1x32xf32>
    %180 = arith.addf %164, %171 : vector<1x32xf32>
    %181 = arith.negf %180 : vector<1x32xf32>
    %182 = math.exp %181 : vector<1x32xf32>
    %cst_73 = arith.constant 1.000000e+00 : f32
    %183 = vector.broadcast %cst_73 : f32 to vector<1x32xf32>
    %184 = arith.addf %183, %182 : vector<1x32xf32>
    %185 = arith.divf %183, %184 : vector<1x32xf32>
    %186 = arith.mulf %179, %173 : vector<1x32xf32>
    %187 = arith.addf %167, %186 : vector<1x32xf32>
    %188 = math.tanh %187 : vector<1x32xf32>
    %cst_74 = arith.constant 1.000000e+00 : f32
    %189 = vector.broadcast %cst_74 : f32 to vector<1x32xf32>
    %190 = arith.subf %189, %185 : vector<1x32xf32>
    %191 = arith.mulf %190, %188 : vector<1x32xf32>
    %192 = arith.mulf %185, %147 : vector<1x32xf32>
    %193 = arith.addf %191, %192 : vector<1x32xf32>
    %c2_i32 = arith.constant 2 : i32
    %194 = arith.cmpi sgt, %44, %c2_i32 : i32
    %195 = arith.select %194, %193, %147 : vector<1x32xf32>
    %c5_i32 = arith.constant 5 : i32
    %196 = arith.cmpi sgt, %44, %c5_i32 : i32
    %197 = arith.select %196, %193, %147 : vector<1x32xf32>
    %198 = arith.select %2, %195, %197 : vector<1x32xi1>, vector<1x32xf32>
    %c2_i32_75 = arith.constant 2 : i32
    %199 = vector.broadcast %c2_i32_75 : i32 to vector<8x32xi32>
    %200 = arith.cmpi eq, %6, %199 : vector<8x32xi32>
    %201 = arith.andi %200, %9 : vector<8x32xi1>
    %c5_i32_76 = arith.constant 5 : i32
    %202 = vector.broadcast %c5_i32_76 : i32 to vector<8x32xi32>
    %203 = arith.cmpi eq, %6, %202 : vector<8x32xi32>
    %cst_77 = arith.constant dense<true> : vector<8x32xi1>
    %204 = arith.xori %9, %cst_77 : vector<8x32xi1>
    %205 = arith.andi %203, %204 : vector<8x32xi1>
    %206 = arith.ori %201, %205 : vector<8x32xi1>
    %207 = vector.shape_cast %198 : vector<1x32xf32> to vector<1x32xf32>
    %208 = vector.broadcast %207 : vector<1x32xf32> to vector<8x32xf32>
    %209 = arith.select %206, %208, %158 : vector<8x32xi1>, vector<8x32xf32>
    %210 = vector.extract_strided_slice %49 {offsets = [3, 0], sizes = [1, 32], strides = [1, 1]} : vector<8x32xf32> to vector<1x32xf32>
    %211 = vector.extract_strided_slice %49 {offsets = [4, 0], sizes = [1, 32], strides = [1, 1]} : vector<8x32xf32> to vector<1x32xf32>
    %212 = arith.select %2, %210, %211 : vector<1x32xi1>, vector<1x32xf32>
    %213 = vector.extract_strided_slice %52 {offsets = [3, 0], sizes = [1, 32], strides = [1, 1]} : vector<8x32xf32> to vector<1x32xf32>
    %214 = vector.extract_strided_slice %52 {offsets = [4, 0], sizes = [1, 32], strides = [1, 1]} : vector<8x32xf32> to vector<1x32xf32>
    %215 = arith.select %2, %213, %214 : vector<1x32xi1>, vector<1x32xf32>
    %216 = vector.extract_strided_slice %55 {offsets = [3, 0], sizes = [1, 32], strides = [1, 1]} : vector<8x32xf32> to vector<1x32xf32>
    %217 = vector.extract_strided_slice %55 {offsets = [4, 0], sizes = [1, 32], strides = [1, 1]} : vector<8x32xf32> to vector<1x32xf32>
    %218 = arith.select %2, %216, %217 : vector<1x32xi1>, vector<1x32xf32>
    %cst_78 = arith.constant dense<0.000000e+00> : vector<1x32xf32>
    %219 = tpu.matmul %198, %28, %cst_78 {dimension_numbers = #tpu.dot_dimension_numbers<[1], [0], [0], [1], [0, 0, 1, 1], [], []>} : vector<1x32xf32>, vector<32x32xf32>, vector<1x32xf32> -> vector<1x32xf32>
    %220 = arith.addf %219, %34 : vector<1x32xf32>
    %cst_79 = arith.constant dense<0.000000e+00> : vector<1x32xf32>
    %221 = tpu.matmul %198, %30, %cst_79 {dimension_numbers = #tpu.dot_dimension_numbers<[1], [0], [0], [1], [0, 0, 1, 1], [], []>} : vector<1x32xf32>, vector<32x32xf32>, vector<1x32xf32> -> vector<1x32xf32>
    %222 = arith.addf %221, %36 : vector<1x32xf32>
    %cst_80 = arith.constant dense<0.000000e+00> : vector<1x32xf32>
    %223 = tpu.matmul %198, %32, %cst_80 {dimension_numbers = #tpu.dot_dimension_numbers<[1], [0], [0], [1], [0, 0, 1, 1], [], []>} : vector<1x32xf32>, vector<32x32xf32>, vector<1x32xf32> -> vector<1x32xf32>
    %224 = arith.addf %223, %38 : vector<1x32xf32>
    %225 = arith.addf %212, %220 : vector<1x32xf32>
    %226 = arith.negf %225 : vector<1x32xf32>
    %227 = math.exp %226 : vector<1x32xf32>
    %cst_81 = arith.constant 1.000000e+00 : f32
    %228 = vector.broadcast %cst_81 : f32 to vector<1x32xf32>
    %229 = arith.addf %228, %227 : vector<1x32xf32>
    %230 = arith.divf %228, %229 : vector<1x32xf32>
    %231 = arith.addf %215, %222 : vector<1x32xf32>
    %232 = arith.negf %231 : vector<1x32xf32>
    %233 = math.exp %232 : vector<1x32xf32>
    %cst_82 = arith.constant 1.000000e+00 : f32
    %234 = vector.broadcast %cst_82 : f32 to vector<1x32xf32>
    %235 = arith.addf %234, %233 : vector<1x32xf32>
    %236 = arith.divf %234, %235 : vector<1x32xf32>
    %237 = arith.mulf %230, %224 : vector<1x32xf32>
    %238 = arith.addf %218, %237 : vector<1x32xf32>
    %239 = math.tanh %238 : vector<1x32xf32>
    %cst_83 = arith.constant 1.000000e+00 : f32
    %240 = vector.broadcast %cst_83 : f32 to vector<1x32xf32>
    %241 = arith.subf %240, %236 : vector<1x32xf32>
    %242 = arith.mulf %241, %239 : vector<1x32xf32>
    %243 = arith.mulf %236, %198 : vector<1x32xf32>
    %244 = arith.addf %242, %243 : vector<1x32xf32>
    %c3_i32 = arith.constant 3 : i32
    %245 = arith.cmpi sgt, %44, %c3_i32 : i32
    %246 = arith.select %245, %244, %198 : vector<1x32xf32>
    %c4_i32 = arith.constant 4 : i32
    %247 = arith.cmpi sgt, %44, %c4_i32 : i32
    %248 = arith.select %247, %244, %198 : vector<1x32xf32>
    %249 = arith.select %2, %246, %248 : vector<1x32xi1>, vector<1x32xf32>
    %c3_i32_84 = arith.constant 3 : i32
    %250 = vector.broadcast %c3_i32_84 : i32 to vector<8x32xi32>
    %251 = arith.cmpi eq, %6, %250 : vector<8x32xi32>
    %252 = arith.andi %251, %9 : vector<8x32xi1>
    %c4_i32_85 = arith.constant 4 : i32
    %253 = vector.broadcast %c4_i32_85 : i32 to vector<8x32xi32>
    %254 = arith.cmpi eq, %6, %253 : vector<8x32xi32>
    %cst_86 = arith.constant dense<true> : vector<8x32xi1>
    %255 = arith.xori %9, %cst_86 : vector<8x32xi1>
    %256 = arith.andi %254, %255 : vector<8x32xi1>
    %257 = arith.ori %252, %256 : vector<8x32xi1>
    %258 = vector.shape_cast %249 : vector<1x32xf32> to vector<1x32xf32>
    %259 = vector.broadcast %258 : vector<1x32xf32> to vector<8x32xf32>
    %260 = arith.select %257, %259, %209 : vector<8x32xi1>, vector<8x32xf32>
    %261 = vector.extract_strided_slice %49 {offsets = [4, 0], sizes = [1, 32], strides = [1, 1]} : vector<8x32xf32> to vector<1x32xf32>
    %262 = vector.extract_strided_slice %49 {offsets = [3, 0], sizes = [1, 32], strides = [1, 1]} : vector<8x32xf32> to vector<1x32xf32>
    %263 = arith.select %2, %261, %262 : vector<1x32xi1>, vector<1x32xf32>
    %264 = vector.extract_strided_slice %52 {offsets = [4, 0], sizes = [1, 32], strides = [1, 1]} : vector<8x32xf32> to vector<1x32xf32>
    %265 = vector.extract_strided_slice %52 {offsets = [3, 0], sizes = [1, 32], strides = [1, 1]} : vector<8x32xf32> to vector<1x32xf32>
    %266 = arith.select %2, %264, %265 : vector<1x32xi1>, vector<1x32xf32>
    %267 = vector.extract_strided_slice %55 {offsets = [4, 0], sizes = [1, 32], strides = [1, 1]} : vector<8x32xf32> to vector<1x32xf32>
    %268 = vector.extract_strided_slice %55 {offsets = [3, 0], sizes = [1, 32], strides = [1, 1]} : vector<8x32xf32> to vector<1x32xf32>
    %269 = arith.select %2, %267, %268 : vector<1x32xi1>, vector<1x32xf32>
    %cst_87 = arith.constant dense<0.000000e+00> : vector<1x32xf32>
    %270 = tpu.matmul %249, %28, %cst_87 {dimension_numbers = #tpu.dot_dimension_numbers<[1], [0], [0], [1], [0, 0, 1, 1], [], []>} : vector<1x32xf32>, vector<32x32xf32>, vector<1x32xf32> -> vector<1x32xf32>
    %271 = arith.addf %270, %34 : vector<1x32xf32>
    %cst_88 = arith.constant dense<0.000000e+00> : vector<1x32xf32>
    %272 = tpu.matmul %249, %30, %cst_88 {dimension_numbers = #tpu.dot_dimension_numbers<[1], [0], [0], [1], [0, 0, 1, 1], [], []>} : vector<1x32xf32>, vector<32x32xf32>, vector<1x32xf32> -> vector<1x32xf32>
    %273 = arith.addf %272, %36 : vector<1x32xf32>
    %cst_89 = arith.constant dense<0.000000e+00> : vector<1x32xf32>
    %274 = tpu.matmul %249, %32, %cst_89 {dimension_numbers = #tpu.dot_dimension_numbers<[1], [0], [0], [1], [0, 0, 1, 1], [], []>} : vector<1x32xf32>, vector<32x32xf32>, vector<1x32xf32> -> vector<1x32xf32>
    %275 = arith.addf %274, %38 : vector<1x32xf32>
    %276 = arith.addf %263, %271 : vector<1x32xf32>
    %277 = arith.negf %276 : vector<1x32xf32>
    %278 = math.exp %277 : vector<1x32xf32>
    %cst_90 = arith.constant 1.000000e+00 : f32
    %279 = vector.broadcast %cst_90 : f32 to vector<1x32xf32>
    %280 = arith.addf %279, %278 : vector<1x32xf32>
    %281 = arith.divf %279, %280 : vector<1x32xf32>
    %282 = arith.addf %266, %273 : vector<1x32xf32>
    %283 = arith.negf %282 : vector<1x32xf32>
    %284 = math.exp %283 : vector<1x32xf32>
    %cst_91 = arith.constant 1.000000e+00 : f32
    %285 = vector.broadcast %cst_91 : f32 to vector<1x32xf32>
    %286 = arith.addf %285, %284 : vector<1x32xf32>
    %287 = arith.divf %285, %286 : vector<1x32xf32>
    %288 = arith.mulf %281, %275 : vector<1x32xf32>
    %289 = arith.addf %269, %288 : vector<1x32xf32>
    %290 = math.tanh %289 : vector<1x32xf32>
    %cst_92 = arith.constant 1.000000e+00 : f32
    %291 = vector.broadcast %cst_92 : f32 to vector<1x32xf32>
    %292 = arith.subf %291, %287 : vector<1x32xf32>
    %293 = arith.mulf %292, %290 : vector<1x32xf32>
    %294 = arith.mulf %287, %249 : vector<1x32xf32>
    %295 = arith.addf %293, %294 : vector<1x32xf32>
    %c4_i32_93 = arith.constant 4 : i32
    %296 = arith.cmpi sgt, %44, %c4_i32_93 : i32
    %297 = arith.select %296, %295, %249 : vector<1x32xf32>
    %c3_i32_94 = arith.constant 3 : i32
    %298 = arith.cmpi sgt, %44, %c3_i32_94 : i32
    %299 = arith.select %298, %295, %249 : vector<1x32xf32>
    %300 = arith.select %2, %297, %299 : vector<1x32xi1>, vector<1x32xf32>
    %c4_i32_95 = arith.constant 4 : i32
    %301 = vector.broadcast %c4_i32_95 : i32 to vector<8x32xi32>
    %302 = arith.cmpi eq, %6, %301 : vector<8x32xi32>
    %303 = arith.andi %302, %9 : vector<8x32xi1>
    %c3_i32_96 = arith.constant 3 : i32
    %304 = vector.broadcast %c3_i32_96 : i32 to vector<8x32xi32>
    %305 = arith.cmpi eq, %6, %304 : vector<8x32xi32>
    %cst_97 = arith.constant dense<true> : vector<8x32xi1>
    %306 = arith.xori %9, %cst_97 : vector<8x32xi1>
    %307 = arith.andi %305, %306 : vector<8x32xi1>
    %308 = arith.ori %303, %307 : vector<8x32xi1>
    %309 = vector.shape_cast %300 : vector<1x32xf32> to vector<1x32xf32>
    %310 = vector.broadcast %309 : vector<1x32xf32> to vector<8x32xf32>
    %311 = arith.select %308, %310, %260 : vector<8x32xi1>, vector<8x32xf32>
    %312 = vector.extract_strided_slice %49 {offsets = [5, 0], sizes = [1, 32], strides = [1, 1]} : vector<8x32xf32> to vector<1x32xf32>
    %313 = vector.extract_strided_slice %49 {offsets = [2, 0], sizes = [1, 32], strides = [1, 1]} : vector<8x32xf32> to vector<1x32xf32>
    %314 = arith.select %2, %312, %313 : vector<1x32xi1>, vector<1x32xf32>
    %315 = vector.extract_strided_slice %52 {offsets = [5, 0], sizes = [1, 32], strides = [1, 1]} : vector<8x32xf32> to vector<1x32xf32>
    %316 = vector.extract_strided_slice %52 {offsets = [2, 0], sizes = [1, 32], strides = [1, 1]} : vector<8x32xf32> to vector<1x32xf32>
    %317 = arith.select %2, %315, %316 : vector<1x32xi1>, vector<1x32xf32>
    %318 = vector.extract_strided_slice %55 {offsets = [5, 0], sizes = [1, 32], strides = [1, 1]} : vector<8x32xf32> to vector<1x32xf32>
    %319 = vector.extract_strided_slice %55 {offsets = [2, 0], sizes = [1, 32], strides = [1, 1]} : vector<8x32xf32> to vector<1x32xf32>
    %320 = arith.select %2, %318, %319 : vector<1x32xi1>, vector<1x32xf32>
    %cst_98 = arith.constant dense<0.000000e+00> : vector<1x32xf32>
    %321 = tpu.matmul %300, %28, %cst_98 {dimension_numbers = #tpu.dot_dimension_numbers<[1], [0], [0], [1], [0, 0, 1, 1], [], []>} : vector<1x32xf32>, vector<32x32xf32>, vector<1x32xf32> -> vector<1x32xf32>
    %322 = arith.addf %321, %34 : vector<1x32xf32>
    %cst_99 = arith.constant dense<0.000000e+00> : vector<1x32xf32>
    %323 = tpu.matmul %300, %30, %cst_99 {dimension_numbers = #tpu.dot_dimension_numbers<[1], [0], [0], [1], [0, 0, 1, 1], [], []>} : vector<1x32xf32>, vector<32x32xf32>, vector<1x32xf32> -> vector<1x32xf32>
    %324 = arith.addf %323, %36 : vector<1x32xf32>
    %cst_100 = arith.constant dense<0.000000e+00> : vector<1x32xf32>
    %325 = tpu.matmul %300, %32, %cst_100 {dimension_numbers = #tpu.dot_dimension_numbers<[1], [0], [0], [1], [0, 0, 1, 1], [], []>} : vector<1x32xf32>, vector<32x32xf32>, vector<1x32xf32> -> vector<1x32xf32>
    %326 = arith.addf %325, %38 : vector<1x32xf32>
    %327 = arith.addf %314, %322 : vector<1x32xf32>
    %328 = arith.negf %327 : vector<1x32xf32>
    %329 = math.exp %328 : vector<1x32xf32>
    %cst_101 = arith.constant 1.000000e+00 : f32
    %330 = vector.broadcast %cst_101 : f32 to vector<1x32xf32>
    %331 = arith.addf %330, %329 : vector<1x32xf32>
    %332 = arith.divf %330, %331 : vector<1x32xf32>
    %333 = arith.addf %317, %324 : vector<1x32xf32>
    %334 = arith.negf %333 : vector<1x32xf32>
    %335 = math.exp %334 : vector<1x32xf32>
    %cst_102 = arith.constant 1.000000e+00 : f32
    %336 = vector.broadcast %cst_102 : f32 to vector<1x32xf32>
    %337 = arith.addf %336, %335 : vector<1x32xf32>
    %338 = arith.divf %336, %337 : vector<1x32xf32>
    %339 = arith.mulf %332, %326 : vector<1x32xf32>
    %340 = arith.addf %320, %339 : vector<1x32xf32>
    %341 = math.tanh %340 : vector<1x32xf32>
    %cst_103 = arith.constant 1.000000e+00 : f32
    %342 = vector.broadcast %cst_103 : f32 to vector<1x32xf32>
    %343 = arith.subf %342, %338 : vector<1x32xf32>
    %344 = arith.mulf %343, %341 : vector<1x32xf32>
    %345 = arith.mulf %338, %300 : vector<1x32xf32>
    %346 = arith.addf %344, %345 : vector<1x32xf32>
    %c5_i32_104 = arith.constant 5 : i32
    %347 = arith.cmpi sgt, %44, %c5_i32_104 : i32
    %348 = arith.select %347, %346, %300 : vector<1x32xf32>
    %c2_i32_105 = arith.constant 2 : i32
    %349 = arith.cmpi sgt, %44, %c2_i32_105 : i32
    %350 = arith.select %349, %346, %300 : vector<1x32xf32>
    %351 = arith.select %2, %348, %350 : vector<1x32xi1>, vector<1x32xf32>
    %c5_i32_106 = arith.constant 5 : i32
    %352 = vector.broadcast %c5_i32_106 : i32 to vector<8x32xi32>
    %353 = arith.cmpi eq, %6, %352 : vector<8x32xi32>
    %354 = arith.andi %353, %9 : vector<8x32xi1>
    %c2_i32_107 = arith.constant 2 : i32
    %355 = vector.broadcast %c2_i32_107 : i32 to vector<8x32xi32>
    %356 = arith.cmpi eq, %6, %355 : vector<8x32xi32>
    %cst_108 = arith.constant dense<true> : vector<8x32xi1>
    %357 = arith.xori %9, %cst_108 : vector<8x32xi1>
    %358 = arith.andi %356, %357 : vector<8x32xi1>
    %359 = arith.ori %354, %358 : vector<8x32xi1>
    %360 = vector.shape_cast %351 : vector<1x32xf32> to vector<1x32xf32>
    %361 = vector.broadcast %360 : vector<1x32xf32> to vector<8x32xf32>
    %362 = arith.select %359, %361, %311 : vector<8x32xi1>, vector<8x32xf32>
    %363 = vector.extract_strided_slice %49 {offsets = [6, 0], sizes = [1, 32], strides = [1, 1]} : vector<8x32xf32> to vector<1x32xf32>
    %364 = vector.extract_strided_slice %49 {offsets = [1, 0], sizes = [1, 32], strides = [1, 1]} : vector<8x32xf32> to vector<1x32xf32>
    %365 = arith.select %2, %363, %364 : vector<1x32xi1>, vector<1x32xf32>
    %366 = vector.extract_strided_slice %52 {offsets = [6, 0], sizes = [1, 32], strides = [1, 1]} : vector<8x32xf32> to vector<1x32xf32>
    %367 = vector.extract_strided_slice %52 {offsets = [1, 0], sizes = [1, 32], strides = [1, 1]} : vector<8x32xf32> to vector<1x32xf32>
    %368 = arith.select %2, %366, %367 : vector<1x32xi1>, vector<1x32xf32>
    %369 = vector.extract_strided_slice %55 {offsets = [6, 0], sizes = [1, 32], strides = [1, 1]} : vector<8x32xf32> to vector<1x32xf32>
    %370 = vector.extract_strided_slice %55 {offsets = [1, 0], sizes = [1, 32], strides = [1, 1]} : vector<8x32xf32> to vector<1x32xf32>
    %371 = arith.select %2, %369, %370 : vector<1x32xi1>, vector<1x32xf32>
    %cst_109 = arith.constant dense<0.000000e+00> : vector<1x32xf32>
    %372 = tpu.matmul %351, %28, %cst_109 {dimension_numbers = #tpu.dot_dimension_numbers<[1], [0], [0], [1], [0, 0, 1, 1], [], []>} : vector<1x32xf32>, vector<32x32xf32>, vector<1x32xf32> -> vector<1x32xf32>
    %373 = arith.addf %372, %34 : vector<1x32xf32>
    %cst_110 = arith.constant dense<0.000000e+00> : vector<1x32xf32>
    %374 = tpu.matmul %351, %30, %cst_110 {dimension_numbers = #tpu.dot_dimension_numbers<[1], [0], [0], [1], [0, 0, 1, 1], [], []>} : vector<1x32xf32>, vector<32x32xf32>, vector<1x32xf32> -> vector<1x32xf32>
    %375 = arith.addf %374, %36 : vector<1x32xf32>
    %cst_111 = arith.constant dense<0.000000e+00> : vector<1x32xf32>
    %376 = tpu.matmul %351, %32, %cst_111 {dimension_numbers = #tpu.dot_dimension_numbers<[1], [0], [0], [1], [0, 0, 1, 1], [], []>} : vector<1x32xf32>, vector<32x32xf32>, vector<1x32xf32> -> vector<1x32xf32>
    %377 = arith.addf %376, %38 : vector<1x32xf32>
    %378 = arith.addf %365, %373 : vector<1x32xf32>
    %379 = arith.negf %378 : vector<1x32xf32>
    %380 = math.exp %379 : vector<1x32xf32>
    %cst_112 = arith.constant 1.000000e+00 : f32
    %381 = vector.broadcast %cst_112 : f32 to vector<1x32xf32>
    %382 = arith.addf %381, %380 : vector<1x32xf32>
    %383 = arith.divf %381, %382 : vector<1x32xf32>
    %384 = arith.addf %368, %375 : vector<1x32xf32>
    %385 = arith.negf %384 : vector<1x32xf32>
    %386 = math.exp %385 : vector<1x32xf32>
    %cst_113 = arith.constant 1.000000e+00 : f32
    %387 = vector.broadcast %cst_113 : f32 to vector<1x32xf32>
    %388 = arith.addf %387, %386 : vector<1x32xf32>
    %389 = arith.divf %387, %388 : vector<1x32xf32>
    %390 = arith.mulf %383, %377 : vector<1x32xf32>
    %391 = arith.addf %371, %390 : vector<1x32xf32>
    %392 = math.tanh %391 : vector<1x32xf32>
    %cst_114 = arith.constant 1.000000e+00 : f32
    %393 = vector.broadcast %cst_114 : f32 to vector<1x32xf32>
    %394 = arith.subf %393, %389 : vector<1x32xf32>
    %395 = arith.mulf %394, %392 : vector<1x32xf32>
    %396 = arith.mulf %389, %351 : vector<1x32xf32>
    %397 = arith.addf %395, %396 : vector<1x32xf32>
    %c6_i32_115 = arith.constant 6 : i32
    %398 = arith.cmpi sgt, %44, %c6_i32_115 : i32
    %399 = arith.select %398, %397, %351 : vector<1x32xf32>
    %c1_i32_116 = arith.constant 1 : i32
    %400 = arith.cmpi sgt, %44, %c1_i32_116 : i32
    %401 = arith.select %400, %397, %351 : vector<1x32xf32>
    %402 = arith.select %2, %399, %401 : vector<1x32xi1>, vector<1x32xf32>
    %c6_i32_117 = arith.constant 6 : i32
    %403 = vector.broadcast %c6_i32_117 : i32 to vector<8x32xi32>
    %404 = arith.cmpi eq, %6, %403 : vector<8x32xi32>
    %405 = arith.andi %404, %9 : vector<8x32xi1>
    %c1_i32_118 = arith.constant 1 : i32
    %406 = vector.broadcast %c1_i32_118 : i32 to vector<8x32xi32>
    %407 = arith.cmpi eq, %6, %406 : vector<8x32xi32>
    %cst_119 = arith.constant dense<true> : vector<8x32xi1>
    %408 = arith.xori %9, %cst_119 : vector<8x32xi1>
    %409 = arith.andi %407, %408 : vector<8x32xi1>
    %410 = arith.ori %405, %409 : vector<8x32xi1>
    %411 = vector.shape_cast %402 : vector<1x32xf32> to vector<1x32xf32>
    %412 = vector.broadcast %411 : vector<1x32xf32> to vector<8x32xf32>
    %413 = arith.select %410, %412, %362 : vector<8x32xi1>, vector<8x32xf32>
    %414 = vector.extract_strided_slice %49 {offsets = [7, 0], sizes = [1, 32], strides = [1, 1]} : vector<8x32xf32> to vector<1x32xf32>
    %415 = vector.extract_strided_slice %49 {offsets = [0, 0], sizes = [1, 32], strides = [1, 1]} : vector<8x32xf32> to vector<1x32xf32>
    %416 = arith.select %2, %414, %415 : vector<1x32xi1>, vector<1x32xf32>
    %417 = vector.extract_strided_slice %52 {offsets = [7, 0], sizes = [1, 32], strides = [1, 1]} : vector<8x32xf32> to vector<1x32xf32>
    %418 = vector.extract_strided_slice %52 {offsets = [0, 0], sizes = [1, 32], strides = [1, 1]} : vector<8x32xf32> to vector<1x32xf32>
    %419 = arith.select %2, %417, %418 : vector<1x32xi1>, vector<1x32xf32>
    %420 = vector.extract_strided_slice %55 {offsets = [7, 0], sizes = [1, 32], strides = [1, 1]} : vector<8x32xf32> to vector<1x32xf32>
    %421 = vector.extract_strided_slice %55 {offsets = [0, 0], sizes = [1, 32], strides = [1, 1]} : vector<8x32xf32> to vector<1x32xf32>
    %422 = arith.select %2, %420, %421 : vector<1x32xi1>, vector<1x32xf32>
    %cst_120 = arith.constant dense<0.000000e+00> : vector<1x32xf32>
    %423 = tpu.matmul %402, %28, %cst_120 {dimension_numbers = #tpu.dot_dimension_numbers<[1], [0], [0], [1], [0, 0, 1, 1], [], []>} : vector<1x32xf32>, vector<32x32xf32>, vector<1x32xf32> -> vector<1x32xf32>
    %424 = arith.addf %423, %34 : vector<1x32xf32>
    %cst_121 = arith.constant dense<0.000000e+00> : vector<1x32xf32>
    %425 = tpu.matmul %402, %30, %cst_121 {dimension_numbers = #tpu.dot_dimension_numbers<[1], [0], [0], [1], [0, 0, 1, 1], [], []>} : vector<1x32xf32>, vector<32x32xf32>, vector<1x32xf32> -> vector<1x32xf32>
    %426 = arith.addf %425, %36 : vector<1x32xf32>
    %cst_122 = arith.constant dense<0.000000e+00> : vector<1x32xf32>
    %427 = tpu.matmul %402, %32, %cst_122 {dimension_numbers = #tpu.dot_dimension_numbers<[1], [0], [0], [1], [0, 0, 1, 1], [], []>} : vector<1x32xf32>, vector<32x32xf32>, vector<1x32xf32> -> vector<1x32xf32>
    %428 = arith.addf %427, %38 : vector<1x32xf32>
    %429 = arith.addf %416, %424 : vector<1x32xf32>
    %430 = arith.negf %429 : vector<1x32xf32>
    %431 = math.exp %430 : vector<1x32xf32>
    %cst_123 = arith.constant 1.000000e+00 : f32
    %432 = vector.broadcast %cst_123 : f32 to vector<1x32xf32>
    %433 = arith.addf %432, %431 : vector<1x32xf32>
    %434 = arith.divf %432, %433 : vector<1x32xf32>
    %435 = arith.addf %419, %426 : vector<1x32xf32>
    %436 = arith.negf %435 : vector<1x32xf32>
    %437 = math.exp %436 : vector<1x32xf32>
    %cst_124 = arith.constant 1.000000e+00 : f32
    %438 = vector.broadcast %cst_124 : f32 to vector<1x32xf32>
    %439 = arith.addf %438, %437 : vector<1x32xf32>
    %440 = arith.divf %438, %439 : vector<1x32xf32>
    %441 = arith.mulf %434, %428 : vector<1x32xf32>
    %442 = arith.addf %422, %441 : vector<1x32xf32>
    %443 = math.tanh %442 : vector<1x32xf32>
    %cst_125 = arith.constant 1.000000e+00 : f32
    %444 = vector.broadcast %cst_125 : f32 to vector<1x32xf32>
    %445 = arith.subf %444, %440 : vector<1x32xf32>
    %446 = arith.mulf %445, %443 : vector<1x32xf32>
    %447 = arith.mulf %440, %402 : vector<1x32xf32>
    %448 = arith.addf %446, %447 : vector<1x32xf32>
    %c7_i32_126 = arith.constant 7 : i32
    %449 = arith.cmpi sgt, %44, %c7_i32_126 : i32
    %450 = arith.select %449, %448, %402 : vector<1x32xf32>
    %c0_i32_127 = arith.constant 0 : i32
    %451 = arith.cmpi sgt, %44, %c0_i32_127 : i32
    %452 = arith.select %451, %448, %402 : vector<1x32xf32>
    %453 = arith.select %2, %450, %452 : vector<1x32xi1>, vector<1x32xf32>
    %c7_i32_128 = arith.constant 7 : i32
    %454 = vector.broadcast %c7_i32_128 : i32 to vector<8x32xi32>
    %455 = arith.cmpi eq, %6, %454 : vector<8x32xi32>
    %456 = arith.andi %455, %9 : vector<8x32xi1>
    %c0_i32_129 = arith.constant 0 : i32
    %457 = vector.broadcast %c0_i32_129 : i32 to vector<8x32xi32>
    %458 = arith.cmpi eq, %6, %457 : vector<8x32xi32>
    %cst_130 = arith.constant dense<true> : vector<8x32xi1>
    %459 = arith.xori %9, %cst_130 : vector<8x32xi1>
    %460 = arith.andi %458, %459 : vector<8x32xi1>
    %461 = arith.ori %456, %460 : vector<8x32xi1>
    %462 = vector.shape_cast %453 : vector<1x32xf32> to vector<1x32xf32>
    %463 = vector.broadcast %462 : vector<1x32xf32> to vector<8x32xf32>
    %464 = arith.select %461, %463, %413 : vector<8x32xi1>, vector<8x32xf32>
    %cst_131 = arith.constant dense<0.000000e+00> : vector<8x32xf32>
    %465 = tpu.matmul %464, %39, %cst_131 {dimension_numbers = #tpu.dot_dimension_numbers<[1], [0], [0], [1], [0, 0, 1, 1], [], []>} : vector<8x32xf32>, vector<32x32xf32>, vector<8x32xf32> -> vector<8x32xf32>
    %466 = vector.broadcast %40 : vector<1x32xf32> to vector<8x32xf32>
    %467 = arith.addf %465, %466 : vector<8x32xf32>
    %468 = math.tanh %467 : vector<8x32xf32>
    %cst_132 = arith.constant dense<0.000000e+00> : vector<8x1xf32>
    %469 = tpu.matmul %468, %41, %cst_132 {dimension_numbers = #tpu.dot_dimension_numbers<[1], [0], [0], [1], [0, 0, 1, 1], [], []>} : vector<8x32xf32>, vector<32x1xf32>, vector<8x1xf32> -> vector<8x1xf32>
    %470 = tpu.iota {dimensions = array<i32: 0>} : vector<8x1xi32>
    %471 = vector.broadcast %44 : i32 to vector<8x1xi32>
    %472 = arith.cmpi slt, %470, %471 : vector<8x1xi32>
    %cst_133 = arith.constant -1.000000e+30 : f32
    %473 = vector.broadcast %cst_133 : f32 to vector<8x1xf32>
    %474 = arith.select %472, %469, %473 : vector<8x1xi1>, vector<8x1xf32>
    %475 = vector.shape_cast %474 : vector<8x1xf32> to vector<1x8x1xf32>
    %cst_134 = arith.constant dense<0xFF800000> : vector<1xf32>
    %476 = vector.multi_reduction <maximumf>, %475, %cst_134 [1, 2] : vector<1x8x1xf32> to vector<1xf32>
    %477 = vector.shape_cast %476 : vector<1xf32> to vector<1x1x1xf32>
    %478 = vector.extract %477[0, 0, 0] : f32 from vector<1x1x1xf32>
    %479 = vector.broadcast %478 : f32 to vector<1x1xf32>
    %480 = vector.broadcast %479 : vector<1x1xf32> to vector<8x1xf32>
    %481 = arith.subf %474, %480 : vector<8x1xf32>
    %482 = math.exp %481 : vector<8x1xf32>
    %483 = vector.shape_cast %482 : vector<8x1xf32> to vector<1x8x1xf32>
    %cst_135 = arith.constant dense<0.000000e+00> : vector<1xf32>
    %484 = vector.multi_reduction <add>, %483, %cst_135 [1, 2] : vector<1x8x1xf32> to vector<1xf32>
    %485 = vector.shape_cast %484 : vector<1xf32> to vector<1x1x1xf32>
    %486 = vector.extract %485[0, 0, 0] : f32 from vector<1x1x1xf32>
    %487 = vector.broadcast %486 : f32 to vector<1x1xf32>
    %488 = vector.broadcast %487 : vector<1x1xf32> to vector<8x1xf32>
    %489 = arith.divf %482, %488 : vector<8x1xf32>
    %490 = vector.broadcast %489 : vector<8x1xf32> to vector<8x32xf32>
    %491 = arith.mulf %490, %464 : vector<8x32xf32>
    %cst_136 = arith.constant dense<0.000000e+00> : vector<32xf32>
    %492 = vector.multi_reduction <add>, %491, %cst_136 [0] : vector<8x32xf32> to vector<32xf32>
    %493 = vector.shape_cast %492 : vector<32xf32> to vector<1x32xf32>
    %c0_i32_137 = arith.constant 0 : i32
    %494 = vector.broadcast %c0_i32_137 : i32 to vector<4x32xi32>
    %495 = arith.cmpi eq, %14, %494 : vector<4x32xi32>
    %496 = vector.shape_cast %493 : vector<1x32xf32> to vector<1x32xf32>
    %497 = vector.broadcast %496 : vector<1x32xf32> to vector<4x32xf32>
    %498 = arith.select %495, %497, %43 : vector<4x32xi1>, vector<4x32xf32>
    %c1_138 = arith.constant 1 : index
    %499 = memref.load %arg1[%c1_138] : memref<4xi32, #tpu.memory_space<smem>>
    %c1_139 = arith.constant 1 : index
    %c0_140 = arith.constant 0 : index
    %c0_141 = arith.constant 0 : index
    %500 = vector.load %arg2[%c1_139, %c0_140, %c0_141] : memref<4x8x32xf32, #tpu.memory_space<vmem>>, vector<1x8x32xf32>
    %501 = vector.shape_cast %500 : vector<1x8x32xf32> to vector<8x32xf32>
    %cst_142 = arith.constant dense<0.000000e+00> : vector<8x32xf32>
    %502 = tpu.matmul %501, %16, %cst_142 {dimension_numbers = #tpu.dot_dimension_numbers<[1], [0], [0], [1], [0, 0, 1, 1], [], []>} : vector<8x32xf32>, vector<32x32xf32>, vector<8x32xf32> -> vector<8x32xf32>
    %503 = vector.broadcast %22 : vector<1x32xf32> to vector<8x32xf32>
    %504 = arith.addf %502, %503 : vector<8x32xf32>
    %cst_143 = arith.constant dense<0.000000e+00> : vector<8x32xf32>
    %505 = tpu.matmul %501, %18, %cst_143 {dimension_numbers = #tpu.dot_dimension_numbers<[1], [0], [0], [1], [0, 0, 1, 1], [], []>} : vector<8x32xf32>, vector<32x32xf32>, vector<8x32xf32> -> vector<8x32xf32>
    %506 = vector.broadcast %24 : vector<1x32xf32> to vector<8x32xf32>
    %507 = arith.addf %505, %506 : vector<8x32xf32>
    %cst_144 = arith.constant dense<0.000000e+00> : vector<8x32xf32>
    %508 = tpu.matmul %501, %20, %cst_144 {dimension_numbers = #tpu.dot_dimension_numbers<[1], [0], [0], [1], [0, 0, 1, 1], [], []>} : vector<8x32xf32>, vector<32x32xf32>, vector<8x32xf32> -> vector<8x32xf32>
    %509 = vector.broadcast %26 : vector<1x32xf32> to vector<8x32xf32>
    %510 = arith.addf %508, %509 : vector<8x32xf32>
    %cst_145 = arith.constant 0.000000e+00 : f32
    %511 = vector.broadcast %cst_145 : f32 to vector<8x32xf32>
    %512 = vector.extract_strided_slice %504 {offsets = [0, 0], sizes = [1, 32], strides = [1, 1]} : vector<8x32xf32> to vector<1x32xf32>
    %513 = vector.extract_strided_slice %504 {offsets = [7, 0], sizes = [1, 32], strides = [1, 1]} : vector<8x32xf32> to vector<1x32xf32>
    %514 = arith.select %2, %512, %513 : vector<1x32xi1>, vector<1x32xf32>
    %515 = vector.extract_strided_slice %507 {offsets = [0, 0], sizes = [1, 32], strides = [1, 1]} : vector<8x32xf32> to vector<1x32xf32>
    %516 = vector.extract_strided_slice %507 {offsets = [7, 0], sizes = [1, 32], strides = [1, 1]} : vector<8x32xf32> to vector<1x32xf32>
    %517 = arith.select %2, %515, %516 : vector<1x32xi1>, vector<1x32xf32>
    %518 = vector.extract_strided_slice %510 {offsets = [0, 0], sizes = [1, 32], strides = [1, 1]} : vector<8x32xf32> to vector<1x32xf32>
    %519 = vector.extract_strided_slice %510 {offsets = [7, 0], sizes = [1, 32], strides = [1, 1]} : vector<8x32xf32> to vector<1x32xf32>
    %520 = arith.select %2, %518, %519 : vector<1x32xi1>, vector<1x32xf32>
    %cst_146 = arith.constant dense<0.000000e+00> : vector<1x32xf32>
    %521 = tpu.matmul %453, %28, %cst_146 {dimension_numbers = #tpu.dot_dimension_numbers<[1], [0], [0], [1], [0, 0, 1, 1], [], []>} : vector<1x32xf32>, vector<32x32xf32>, vector<1x32xf32> -> vector<1x32xf32>
    %522 = arith.addf %521, %34 : vector<1x32xf32>
    %cst_147 = arith.constant dense<0.000000e+00> : vector<1x32xf32>
    %523 = tpu.matmul %453, %30, %cst_147 {dimension_numbers = #tpu.dot_dimension_numbers<[1], [0], [0], [1], [0, 0, 1, 1], [], []>} : vector<1x32xf32>, vector<32x32xf32>, vector<1x32xf32> -> vector<1x32xf32>
    %524 = arith.addf %523, %36 : vector<1x32xf32>
    %cst_148 = arith.constant dense<0.000000e+00> : vector<1x32xf32>
    %525 = tpu.matmul %453, %32, %cst_148 {dimension_numbers = #tpu.dot_dimension_numbers<[1], [0], [0], [1], [0, 0, 1, 1], [], []>} : vector<1x32xf32>, vector<32x32xf32>, vector<1x32xf32> -> vector<1x32xf32>
    %526 = arith.addf %525, %38 : vector<1x32xf32>
    %527 = arith.addf %514, %522 : vector<1x32xf32>
    %528 = arith.negf %527 : vector<1x32xf32>
    %529 = math.exp %528 : vector<1x32xf32>
    %cst_149 = arith.constant 1.000000e+00 : f32
    %530 = vector.broadcast %cst_149 : f32 to vector<1x32xf32>
    %531 = arith.addf %530, %529 : vector<1x32xf32>
    %532 = arith.divf %530, %531 : vector<1x32xf32>
    %533 = arith.addf %517, %524 : vector<1x32xf32>
    %534 = arith.negf %533 : vector<1x32xf32>
    %535 = math.exp %534 : vector<1x32xf32>
    %cst_150 = arith.constant 1.000000e+00 : f32
    %536 = vector.broadcast %cst_150 : f32 to vector<1x32xf32>
    %537 = arith.addf %536, %535 : vector<1x32xf32>
    %538 = arith.divf %536, %537 : vector<1x32xf32>
    %539 = arith.mulf %532, %526 : vector<1x32xf32>
    %540 = arith.addf %520, %539 : vector<1x32xf32>
    %541 = math.tanh %540 : vector<1x32xf32>
    %cst_151 = arith.constant 1.000000e+00 : f32
    %542 = vector.broadcast %cst_151 : f32 to vector<1x32xf32>
    %543 = arith.subf %542, %538 : vector<1x32xf32>
    %544 = arith.mulf %543, %541 : vector<1x32xf32>
    %545 = arith.mulf %538, %453 : vector<1x32xf32>
    %546 = arith.addf %544, %545 : vector<1x32xf32>
    %c0_i32_152 = arith.constant 0 : i32
    %547 = arith.cmpi sgt, %499, %c0_i32_152 : i32
    %548 = arith.select %547, %546, %453 : vector<1x32xf32>
    %c7_i32_153 = arith.constant 7 : i32
    %549 = arith.cmpi sgt, %499, %c7_i32_153 : i32
    %550 = arith.select %549, %546, %453 : vector<1x32xf32>
    %551 = arith.select %2, %548, %550 : vector<1x32xi1>, vector<1x32xf32>
    %c0_i32_154 = arith.constant 0 : i32
    %552 = vector.broadcast %c0_i32_154 : i32 to vector<8x32xi32>
    %553 = arith.cmpi eq, %6, %552 : vector<8x32xi32>
    %554 = arith.andi %553, %9 : vector<8x32xi1>
    %c7_i32_155 = arith.constant 7 : i32
    %555 = vector.broadcast %c7_i32_155 : i32 to vector<8x32xi32>
    %556 = arith.cmpi eq, %6, %555 : vector<8x32xi32>
    %cst_156 = arith.constant dense<true> : vector<8x32xi1>
    %557 = arith.xori %9, %cst_156 : vector<8x32xi1>
    %558 = arith.andi %556, %557 : vector<8x32xi1>
    %559 = arith.ori %554, %558 : vector<8x32xi1>
    %560 = vector.shape_cast %551 : vector<1x32xf32> to vector<1x32xf32>
    %561 = vector.broadcast %560 : vector<1x32xf32> to vector<8x32xf32>
    %562 = arith.select %559, %561, %511 : vector<8x32xi1>, vector<8x32xf32>
    %563 = vector.extract_strided_slice %504 {offsets = [1, 0], sizes = [1, 32], strides = [1, 1]} : vector<8x32xf32> to vector<1x32xf32>
    %564 = vector.extract_strided_slice %504 {offsets = [6, 0], sizes = [1, 32], strides = [1, 1]} : vector<8x32xf32> to vector<1x32xf32>
    %565 = arith.select %2, %563, %564 : vector<1x32xi1>, vector<1x32xf32>
    %566 = vector.extract_strided_slice %507 {offsets = [1, 0], sizes = [1, 32], strides = [1, 1]} : vector<8x32xf32> to vector<1x32xf32>
    %567 = vector.extract_strided_slice %507 {offsets = [6, 0], sizes = [1, 32], strides = [1, 1]} : vector<8x32xf32> to vector<1x32xf32>
    %568 = arith.select %2, %566, %567 : vector<1x32xi1>, vector<1x32xf32>
    %569 = vector.extract_strided_slice %510 {offsets = [1, 0], sizes = [1, 32], strides = [1, 1]} : vector<8x32xf32> to vector<1x32xf32>
    %570 = vector.extract_strided_slice %510 {offsets = [6, 0], sizes = [1, 32], strides = [1, 1]} : vector<8x32xf32> to vector<1x32xf32>
    %571 = arith.select %2, %569, %570 : vector<1x32xi1>, vector<1x32xf32>
    %cst_157 = arith.constant dense<0.000000e+00> : vector<1x32xf32>
    %572 = tpu.matmul %551, %28, %cst_157 {dimension_numbers = #tpu.dot_dimension_numbers<[1], [0], [0], [1], [0, 0, 1, 1], [], []>} : vector<1x32xf32>, vector<32x32xf32>, vector<1x32xf32> -> vector<1x32xf32>
    %573 = arith.addf %572, %34 : vector<1x32xf32>
    %cst_158 = arith.constant dense<0.000000e+00> : vector<1x32xf32>
    %574 = tpu.matmul %551, %30, %cst_158 {dimension_numbers = #tpu.dot_dimension_numbers<[1], [0], [0], [1], [0, 0, 1, 1], [], []>} : vector<1x32xf32>, vector<32x32xf32>, vector<1x32xf32> -> vector<1x32xf32>
    %575 = arith.addf %574, %36 : vector<1x32xf32>
    %cst_159 = arith.constant dense<0.000000e+00> : vector<1x32xf32>
    %576 = tpu.matmul %551, %32, %cst_159 {dimension_numbers = #tpu.dot_dimension_numbers<[1], [0], [0], [1], [0, 0, 1, 1], [], []>} : vector<1x32xf32>, vector<32x32xf32>, vector<1x32xf32> -> vector<1x32xf32>
    %577 = arith.addf %576, %38 : vector<1x32xf32>
    %578 = arith.addf %565, %573 : vector<1x32xf32>
    %579 = arith.negf %578 : vector<1x32xf32>
    %580 = math.exp %579 : vector<1x32xf32>
    %cst_160 = arith.constant 1.000000e+00 : f32
    %581 = vector.broadcast %cst_160 : f32 to vector<1x32xf32>
    %582 = arith.addf %581, %580 : vector<1x32xf32>
    %583 = arith.divf %581, %582 : vector<1x32xf32>
    %584 = arith.addf %568, %575 : vector<1x32xf32>
    %585 = arith.negf %584 : vector<1x32xf32>
    %586 = math.exp %585 : vector<1x32xf32>
    %cst_161 = arith.constant 1.000000e+00 : f32
    %587 = vector.broadcast %cst_161 : f32 to vector<1x32xf32>
    %588 = arith.addf %587, %586 : vector<1x32xf32>
    %589 = arith.divf %587, %588 : vector<1x32xf32>
    %590 = arith.mulf %583, %577 : vector<1x32xf32>
    %591 = arith.addf %571, %590 : vector<1x32xf32>
    %592 = math.tanh %591 : vector<1x32xf32>
    %cst_162 = arith.constant 1.000000e+00 : f32
    %593 = vector.broadcast %cst_162 : f32 to vector<1x32xf32>
    %594 = arith.subf %593, %589 : vector<1x32xf32>
    %595 = arith.mulf %594, %592 : vector<1x32xf32>
    %596 = arith.mulf %589, %551 : vector<1x32xf32>
    %597 = arith.addf %595, %596 : vector<1x32xf32>
    %c1_i32_163 = arith.constant 1 : i32
    %598 = arith.cmpi sgt, %499, %c1_i32_163 : i32
    %599 = arith.select %598, %597, %551 : vector<1x32xf32>
    %c6_i32_164 = arith.constant 6 : i32
    %600 = arith.cmpi sgt, %499, %c6_i32_164 : i32
    %601 = arith.select %600, %597, %551 : vector<1x32xf32>
    %602 = arith.select %2, %599, %601 : vector<1x32xi1>, vector<1x32xf32>
    %c1_i32_165 = arith.constant 1 : i32
    %603 = vector.broadcast %c1_i32_165 : i32 to vector<8x32xi32>
    %604 = arith.cmpi eq, %6, %603 : vector<8x32xi32>
    %605 = arith.andi %604, %9 : vector<8x32xi1>
    %c6_i32_166 = arith.constant 6 : i32
    %606 = vector.broadcast %c6_i32_166 : i32 to vector<8x32xi32>
    %607 = arith.cmpi eq, %6, %606 : vector<8x32xi32>
    %cst_167 = arith.constant dense<true> : vector<8x32xi1>
    %608 = arith.xori %9, %cst_167 : vector<8x32xi1>
    %609 = arith.andi %607, %608 : vector<8x32xi1>
    %610 = arith.ori %605, %609 : vector<8x32xi1>
    %611 = vector.shape_cast %602 : vector<1x32xf32> to vector<1x32xf32>
    %612 = vector.broadcast %611 : vector<1x32xf32> to vector<8x32xf32>
    %613 = arith.select %610, %612, %562 : vector<8x32xi1>, vector<8x32xf32>
    %614 = vector.extract_strided_slice %504 {offsets = [2, 0], sizes = [1, 32], strides = [1, 1]} : vector<8x32xf32> to vector<1x32xf32>
    %615 = vector.extract_strided_slice %504 {offsets = [5, 0], sizes = [1, 32], strides = [1, 1]} : vector<8x32xf32> to vector<1x32xf32>
    %616 = arith.select %2, %614, %615 : vector<1x32xi1>, vector<1x32xf32>
    %617 = vector.extract_strided_slice %507 {offsets = [2, 0], sizes = [1, 32], strides = [1, 1]} : vector<8x32xf32> to vector<1x32xf32>
    %618 = vector.extract_strided_slice %507 {offsets = [5, 0], sizes = [1, 32], strides = [1, 1]} : vector<8x32xf32> to vector<1x32xf32>
    %619 = arith.select %2, %617, %618 : vector<1x32xi1>, vector<1x32xf32>
    %620 = vector.extract_strided_slice %510 {offsets = [2, 0], sizes = [1, 32], strides = [1, 1]} : vector<8x32xf32> to vector<1x32xf32>
    %621 = vector.extract_strided_slice %510 {offsets = [5, 0], sizes = [1, 32], strides = [1, 1]} : vector<8x32xf32> to vector<1x32xf32>
    %622 = arith.select %2, %620, %621 : vector<1x32xi1>, vector<1x32xf32>
    %cst_168 = arith.constant dense<0.000000e+00> : vector<1x32xf32>
    %623 = tpu.matmul %602, %28, %cst_168 {dimension_numbers = #tpu.dot_dimension_numbers<[1], [0], [0], [1], [0, 0, 1, 1], [], []>} : vector<1x32xf32>, vector<32x32xf32>, vector<1x32xf32> -> vector<1x32xf32>
    %624 = arith.addf %623, %34 : vector<1x32xf32>
    %cst_169 = arith.constant dense<0.000000e+00> : vector<1x32xf32>
    %625 = tpu.matmul %602, %30, %cst_169 {dimension_numbers = #tpu.dot_dimension_numbers<[1], [0], [0], [1], [0, 0, 1, 1], [], []>} : vector<1x32xf32>, vector<32x32xf32>, vector<1x32xf32> -> vector<1x32xf32>
    %626 = arith.addf %625, %36 : vector<1x32xf32>
    %cst_170 = arith.constant dense<0.000000e+00> : vector<1x32xf32>
    %627 = tpu.matmul %602, %32, %cst_170 {dimension_numbers = #tpu.dot_dimension_numbers<[1], [0], [0], [1], [0, 0, 1, 1], [], []>} : vector<1x32xf32>, vector<32x32xf32>, vector<1x32xf32> -> vector<1x32xf32>
    %628 = arith.addf %627, %38 : vector<1x32xf32>
    %629 = arith.addf %616, %624 : vector<1x32xf32>
    %630 = arith.negf %629 : vector<1x32xf32>
    %631 = math.exp %630 : vector<1x32xf32>
    %cst_171 = arith.constant 1.000000e+00 : f32
    %632 = vector.broadcast %cst_171 : f32 to vector<1x32xf32>
    %633 = arith.addf %632, %631 : vector<1x32xf32>
    %634 = arith.divf %632, %633 : vector<1x32xf32>
    %635 = arith.addf %619, %626 : vector<1x32xf32>
    %636 = arith.negf %635 : vector<1x32xf32>
    %637 = math.exp %636 : vector<1x32xf32>
    %cst_172 = arith.constant 1.000000e+00 : f32
    %638 = vector.broadcast %cst_172 : f32 to vector<1x32xf32>
    %639 = arith.addf %638, %637 : vector<1x32xf32>
    %640 = arith.divf %638, %639 : vector<1x32xf32>
    %641 = arith.mulf %634, %628 : vector<1x32xf32>
    %642 = arith.addf %622, %641 : vector<1x32xf32>
    %643 = math.tanh %642 : vector<1x32xf32>
    %cst_173 = arith.constant 1.000000e+00 : f32
    %644 = vector.broadcast %cst_173 : f32 to vector<1x32xf32>
    %645 = arith.subf %644, %640 : vector<1x32xf32>
    %646 = arith.mulf %645, %643 : vector<1x32xf32>
    %647 = arith.mulf %640, %602 : vector<1x32xf32>
    %648 = arith.addf %646, %647 : vector<1x32xf32>
    %c2_i32_174 = arith.constant 2 : i32
    %649 = arith.cmpi sgt, %499, %c2_i32_174 : i32
    %650 = arith.select %649, %648, %602 : vector<1x32xf32>
    %c5_i32_175 = arith.constant 5 : i32
    %651 = arith.cmpi sgt, %499, %c5_i32_175 : i32
    %652 = arith.select %651, %648, %602 : vector<1x32xf32>
    %653 = arith.select %2, %650, %652 : vector<1x32xi1>, vector<1x32xf32>
    %c2_i32_176 = arith.constant 2 : i32
    %654 = vector.broadcast %c2_i32_176 : i32 to vector<8x32xi32>
    %655 = arith.cmpi eq, %6, %654 : vector<8x32xi32>
    %656 = arith.andi %655, %9 : vector<8x32xi1>
    %c5_i32_177 = arith.constant 5 : i32
    %657 = vector.broadcast %c5_i32_177 : i32 to vector<8x32xi32>
    %658 = arith.cmpi eq, %6, %657 : vector<8x32xi32>
    %cst_178 = arith.constant dense<true> : vector<8x32xi1>
    %659 = arith.xori %9, %cst_178 : vector<8x32xi1>
    %660 = arith.andi %658, %659 : vector<8x32xi1>
    %661 = arith.ori %656, %660 : vector<8x32xi1>
    %662 = vector.shape_cast %653 : vector<1x32xf32> to vector<1x32xf32>
    %663 = vector.broadcast %662 : vector<1x32xf32> to vector<8x32xf32>
    %664 = arith.select %661, %663, %613 : vector<8x32xi1>, vector<8x32xf32>
    %665 = vector.extract_strided_slice %504 {offsets = [3, 0], sizes = [1, 32], strides = [1, 1]} : vector<8x32xf32> to vector<1x32xf32>
    %666 = vector.extract_strided_slice %504 {offsets = [4, 0], sizes = [1, 32], strides = [1, 1]} : vector<8x32xf32> to vector<1x32xf32>
    %667 = arith.select %2, %665, %666 : vector<1x32xi1>, vector<1x32xf32>
    %668 = vector.extract_strided_slice %507 {offsets = [3, 0], sizes = [1, 32], strides = [1, 1]} : vector<8x32xf32> to vector<1x32xf32>
    %669 = vector.extract_strided_slice %507 {offsets = [4, 0], sizes = [1, 32], strides = [1, 1]} : vector<8x32xf32> to vector<1x32xf32>
    %670 = arith.select %2, %668, %669 : vector<1x32xi1>, vector<1x32xf32>
    %671 = vector.extract_strided_slice %510 {offsets = [3, 0], sizes = [1, 32], strides = [1, 1]} : vector<8x32xf32> to vector<1x32xf32>
    %672 = vector.extract_strided_slice %510 {offsets = [4, 0], sizes = [1, 32], strides = [1, 1]} : vector<8x32xf32> to vector<1x32xf32>
    %673 = arith.select %2, %671, %672 : vector<1x32xi1>, vector<1x32xf32>
    %cst_179 = arith.constant dense<0.000000e+00> : vector<1x32xf32>
    %674 = tpu.matmul %653, %28, %cst_179 {dimension_numbers = #tpu.dot_dimension_numbers<[1], [0], [0], [1], [0, 0, 1, 1], [], []>} : vector<1x32xf32>, vector<32x32xf32>, vector<1x32xf32> -> vector<1x32xf32>
    %675 = arith.addf %674, %34 : vector<1x32xf32>
    %cst_180 = arith.constant dense<0.000000e+00> : vector<1x32xf32>
    %676 = tpu.matmul %653, %30, %cst_180 {dimension_numbers = #tpu.dot_dimension_numbers<[1], [0], [0], [1], [0, 0, 1, 1], [], []>} : vector<1x32xf32>, vector<32x32xf32>, vector<1x32xf32> -> vector<1x32xf32>
    %677 = arith.addf %676, %36 : vector<1x32xf32>
    %cst_181 = arith.constant dense<0.000000e+00> : vector<1x32xf32>
    %678 = tpu.matmul %653, %32, %cst_181 {dimension_numbers = #tpu.dot_dimension_numbers<[1], [0], [0], [1], [0, 0, 1, 1], [], []>} : vector<1x32xf32>, vector<32x32xf32>, vector<1x32xf32> -> vector<1x32xf32>
    %679 = arith.addf %678, %38 : vector<1x32xf32>
    %680 = arith.addf %667, %675 : vector<1x32xf32>
    %681 = arith.negf %680 : vector<1x32xf32>
    %682 = math.exp %681 : vector<1x32xf32>
    %cst_182 = arith.constant 1.000000e+00 : f32
    %683 = vector.broadcast %cst_182 : f32 to vector<1x32xf32>
    %684 = arith.addf %683, %682 : vector<1x32xf32>
    %685 = arith.divf %683, %684 : vector<1x32xf32>
    %686 = arith.addf %670, %677 : vector<1x32xf32>
    %687 = arith.negf %686 : vector<1x32xf32>
    %688 = math.exp %687 : vector<1x32xf32>
    %cst_183 = arith.constant 1.000000e+00 : f32
    %689 = vector.broadcast %cst_183 : f32 to vector<1x32xf32>
    %690 = arith.addf %689, %688 : vector<1x32xf32>
    %691 = arith.divf %689, %690 : vector<1x32xf32>
    %692 = arith.mulf %685, %679 : vector<1x32xf32>
    %693 = arith.addf %673, %692 : vector<1x32xf32>
    %694 = math.tanh %693 : vector<1x32xf32>
    %cst_184 = arith.constant 1.000000e+00 : f32
    %695 = vector.broadcast %cst_184 : f32 to vector<1x32xf32>
    %696 = arith.subf %695, %691 : vector<1x32xf32>
    %697 = arith.mulf %696, %694 : vector<1x32xf32>
    %698 = arith.mulf %691, %653 : vector<1x32xf32>
    %699 = arith.addf %697, %698 : vector<1x32xf32>
    %c3_i32_185 = arith.constant 3 : i32
    %700 = arith.cmpi sgt, %499, %c3_i32_185 : i32
    %701 = arith.select %700, %699, %653 : vector<1x32xf32>
    %c4_i32_186 = arith.constant 4 : i32
    %702 = arith.cmpi sgt, %499, %c4_i32_186 : i32
    %703 = arith.select %702, %699, %653 : vector<1x32xf32>
    %704 = arith.select %2, %701, %703 : vector<1x32xi1>, vector<1x32xf32>
    %c3_i32_187 = arith.constant 3 : i32
    %705 = vector.broadcast %c3_i32_187 : i32 to vector<8x32xi32>
    %706 = arith.cmpi eq, %6, %705 : vector<8x32xi32>
    %707 = arith.andi %706, %9 : vector<8x32xi1>
    %c4_i32_188 = arith.constant 4 : i32
    %708 = vector.broadcast %c4_i32_188 : i32 to vector<8x32xi32>
    %709 = arith.cmpi eq, %6, %708 : vector<8x32xi32>
    %cst_189 = arith.constant dense<true> : vector<8x32xi1>
    %710 = arith.xori %9, %cst_189 : vector<8x32xi1>
    %711 = arith.andi %709, %710 : vector<8x32xi1>
    %712 = arith.ori %707, %711 : vector<8x32xi1>
    %713 = vector.shape_cast %704 : vector<1x32xf32> to vector<1x32xf32>
    %714 = vector.broadcast %713 : vector<1x32xf32> to vector<8x32xf32>
    %715 = arith.select %712, %714, %664 : vector<8x32xi1>, vector<8x32xf32>
    %716 = vector.extract_strided_slice %504 {offsets = [4, 0], sizes = [1, 32], strides = [1, 1]} : vector<8x32xf32> to vector<1x32xf32>
    %717 = vector.extract_strided_slice %504 {offsets = [3, 0], sizes = [1, 32], strides = [1, 1]} : vector<8x32xf32> to vector<1x32xf32>
    %718 = arith.select %2, %716, %717 : vector<1x32xi1>, vector<1x32xf32>
    %719 = vector.extract_strided_slice %507 {offsets = [4, 0], sizes = [1, 32], strides = [1, 1]} : vector<8x32xf32> to vector<1x32xf32>
    %720 = vector.extract_strided_slice %507 {offsets = [3, 0], sizes = [1, 32], strides = [1, 1]} : vector<8x32xf32> to vector<1x32xf32>
    %721 = arith.select %2, %719, %720 : vector<1x32xi1>, vector<1x32xf32>
    %722 = vector.extract_strided_slice %510 {offsets = [4, 0], sizes = [1, 32], strides = [1, 1]} : vector<8x32xf32> to vector<1x32xf32>
    %723 = vector.extract_strided_slice %510 {offsets = [3, 0], sizes = [1, 32], strides = [1, 1]} : vector<8x32xf32> to vector<1x32xf32>
    %724 = arith.select %2, %722, %723 : vector<1x32xi1>, vector<1x32xf32>
    %cst_190 = arith.constant dense<0.000000e+00> : vector<1x32xf32>
    %725 = tpu.matmul %704, %28, %cst_190 {dimension_numbers = #tpu.dot_dimension_numbers<[1], [0], [0], [1], [0, 0, 1, 1], [], []>} : vector<1x32xf32>, vector<32x32xf32>, vector<1x32xf32> -> vector<1x32xf32>
    %726 = arith.addf %725, %34 : vector<1x32xf32>
    %cst_191 = arith.constant dense<0.000000e+00> : vector<1x32xf32>
    %727 = tpu.matmul %704, %30, %cst_191 {dimension_numbers = #tpu.dot_dimension_numbers<[1], [0], [0], [1], [0, 0, 1, 1], [], []>} : vector<1x32xf32>, vector<32x32xf32>, vector<1x32xf32> -> vector<1x32xf32>
    %728 = arith.addf %727, %36 : vector<1x32xf32>
    %cst_192 = arith.constant dense<0.000000e+00> : vector<1x32xf32>
    %729 = tpu.matmul %704, %32, %cst_192 {dimension_numbers = #tpu.dot_dimension_numbers<[1], [0], [0], [1], [0, 0, 1, 1], [], []>} : vector<1x32xf32>, vector<32x32xf32>, vector<1x32xf32> -> vector<1x32xf32>
    %730 = arith.addf %729, %38 : vector<1x32xf32>
    %731 = arith.addf %718, %726 : vector<1x32xf32>
    %732 = arith.negf %731 : vector<1x32xf32>
    %733 = math.exp %732 : vector<1x32xf32>
    %cst_193 = arith.constant 1.000000e+00 : f32
    %734 = vector.broadcast %cst_193 : f32 to vector<1x32xf32>
    %735 = arith.addf %734, %733 : vector<1x32xf32>
    %736 = arith.divf %734, %735 : vector<1x32xf32>
    %737 = arith.addf %721, %728 : vector<1x32xf32>
    %738 = arith.negf %737 : vector<1x32xf32>
    %739 = math.exp %738 : vector<1x32xf32>
    %cst_194 = arith.constant 1.000000e+00 : f32
    %740 = vector.broadcast %cst_194 : f32 to vector<1x32xf32>
    %741 = arith.addf %740, %739 : vector<1x32xf32>
    %742 = arith.divf %740, %741 : vector<1x32xf32>
    %743 = arith.mulf %736, %730 : vector<1x32xf32>
    %744 = arith.addf %724, %743 : vector<1x32xf32>
    %745 = math.tanh %744 : vector<1x32xf32>
    %cst_195 = arith.constant 1.000000e+00 : f32
    %746 = vector.broadcast %cst_195 : f32 to vector<1x32xf32>
    %747 = arith.subf %746, %742 : vector<1x32xf32>
    %748 = arith.mulf %747, %745 : vector<1x32xf32>
    %749 = arith.mulf %742, %704 : vector<1x32xf32>
    %750 = arith.addf %748, %749 : vector<1x32xf32>
    %c4_i32_196 = arith.constant 4 : i32
    %751 = arith.cmpi sgt, %499, %c4_i32_196 : i32
    %752 = arith.select %751, %750, %704 : vector<1x32xf32>
    %c3_i32_197 = arith.constant 3 : i32
    %753 = arith.cmpi sgt, %499, %c3_i32_197 : i32
    %754 = arith.select %753, %750, %704 : vector<1x32xf32>
    %755 = arith.select %2, %752, %754 : vector<1x32xi1>, vector<1x32xf32>
    %c4_i32_198 = arith.constant 4 : i32
    %756 = vector.broadcast %c4_i32_198 : i32 to vector<8x32xi32>
    %757 = arith.cmpi eq, %6, %756 : vector<8x32xi32>
    %758 = arith.andi %757, %9 : vector<8x32xi1>
    %c3_i32_199 = arith.constant 3 : i32
    %759 = vector.broadcast %c3_i32_199 : i32 to vector<8x32xi32>
    %760 = arith.cmpi eq, %6, %759 : vector<8x32xi32>
    %cst_200 = arith.constant dense<true> : vector<8x32xi1>
    %761 = arith.xori %9, %cst_200 : vector<8x32xi1>
    %762 = arith.andi %760, %761 : vector<8x32xi1>
    %763 = arith.ori %758, %762 : vector<8x32xi1>
    %764 = vector.shape_cast %755 : vector<1x32xf32> to vector<1x32xf32>
    %765 = vector.broadcast %764 : vector<1x32xf32> to vector<8x32xf32>
    %766 = arith.select %763, %765, %715 : vector<8x32xi1>, vector<8x32xf32>
    %767 = vector.extract_strided_slice %504 {offsets = [5, 0], sizes = [1, 32], strides = [1, 1]} : vector<8x32xf32> to vector<1x32xf32>
    %768 = vector.extract_strided_slice %504 {offsets = [2, 0], sizes = [1, 32], strides = [1, 1]} : vector<8x32xf32> to vector<1x32xf32>
    %769 = arith.select %2, %767, %768 : vector<1x32xi1>, vector<1x32xf32>
    %770 = vector.extract_strided_slice %507 {offsets = [5, 0], sizes = [1, 32], strides = [1, 1]} : vector<8x32xf32> to vector<1x32xf32>
    %771 = vector.extract_strided_slice %507 {offsets = [2, 0], sizes = [1, 32], strides = [1, 1]} : vector<8x32xf32> to vector<1x32xf32>
    %772 = arith.select %2, %770, %771 : vector<1x32xi1>, vector<1x32xf32>
    %773 = vector.extract_strided_slice %510 {offsets = [5, 0], sizes = [1, 32], strides = [1, 1]} : vector<8x32xf32> to vector<1x32xf32>
    %774 = vector.extract_strided_slice %510 {offsets = [2, 0], sizes = [1, 32], strides = [1, 1]} : vector<8x32xf32> to vector<1x32xf32>
    %775 = arith.select %2, %773, %774 : vector<1x32xi1>, vector<1x32xf32>
    %cst_201 = arith.constant dense<0.000000e+00> : vector<1x32xf32>
    %776 = tpu.matmul %755, %28, %cst_201 {dimension_numbers = #tpu.dot_dimension_numbers<[1], [0], [0], [1], [0, 0, 1, 1], [], []>} : vector<1x32xf32>, vector<32x32xf32>, vector<1x32xf32> -> vector<1x32xf32>
    %777 = arith.addf %776, %34 : vector<1x32xf32>
    %cst_202 = arith.constant dense<0.000000e+00> : vector<1x32xf32>
    %778 = tpu.matmul %755, %30, %cst_202 {dimension_numbers = #tpu.dot_dimension_numbers<[1], [0], [0], [1], [0, 0, 1, 1], [], []>} : vector<1x32xf32>, vector<32x32xf32>, vector<1x32xf32> -> vector<1x32xf32>
    %779 = arith.addf %778, %36 : vector<1x32xf32>
    %cst_203 = arith.constant dense<0.000000e+00> : vector<1x32xf32>
    %780 = tpu.matmul %755, %32, %cst_203 {dimension_numbers = #tpu.dot_dimension_numbers<[1], [0], [0], [1], [0, 0, 1, 1], [], []>} : vector<1x32xf32>, vector<32x32xf32>, vector<1x32xf32> -> vector<1x32xf32>
    %781 = arith.addf %780, %38 : vector<1x32xf32>
    %782 = arith.addf %769, %777 : vector<1x32xf32>
    %783 = arith.negf %782 : vector<1x32xf32>
    %784 = math.exp %783 : vector<1x32xf32>
    %cst_204 = arith.constant 1.000000e+00 : f32
    %785 = vector.broadcast %cst_204 : f32 to vector<1x32xf32>
    %786 = arith.addf %785, %784 : vector<1x32xf32>
    %787 = arith.divf %785, %786 : vector<1x32xf32>
    %788 = arith.addf %772, %779 : vector<1x32xf32>
    %789 = arith.negf %788 : vector<1x32xf32>
    %790 = math.exp %789 : vector<1x32xf32>
    %cst_205 = arith.constant 1.000000e+00 : f32
    %791 = vector.broadcast %cst_205 : f32 to vector<1x32xf32>
    %792 = arith.addf %791, %790 : vector<1x32xf32>
    %793 = arith.divf %791, %792 : vector<1x32xf32>
    %794 = arith.mulf %787, %781 : vector<1x32xf32>
    %795 = arith.addf %775, %794 : vector<1x32xf32>
    %796 = math.tanh %795 : vector<1x32xf32>
    %cst_206 = arith.constant 1.000000e+00 : f32
    %797 = vector.broadcast %cst_206 : f32 to vector<1x32xf32>
    %798 = arith.subf %797, %793 : vector<1x32xf32>
    %799 = arith.mulf %798, %796 : vector<1x32xf32>
    %800 = arith.mulf %793, %755 : vector<1x32xf32>
    %801 = arith.addf %799, %800 : vector<1x32xf32>
    %c5_i32_207 = arith.constant 5 : i32
    %802 = arith.cmpi sgt, %499, %c5_i32_207 : i32
    %803 = arith.select %802, %801, %755 : vector<1x32xf32>
    %c2_i32_208 = arith.constant 2 : i32
    %804 = arith.cmpi sgt, %499, %c2_i32_208 : i32
    %805 = arith.select %804, %801, %755 : vector<1x32xf32>
    %806 = arith.select %2, %803, %805 : vector<1x32xi1>, vector<1x32xf32>
    %c5_i32_209 = arith.constant 5 : i32
    %807 = vector.broadcast %c5_i32_209 : i32 to vector<8x32xi32>
    %808 = arith.cmpi eq, %6, %807 : vector<8x32xi32>
    %809 = arith.andi %808, %9 : vector<8x32xi1>
    %c2_i32_210 = arith.constant 2 : i32
    %810 = vector.broadcast %c2_i32_210 : i32 to vector<8x32xi32>
    %811 = arith.cmpi eq, %6, %810 : vector<8x32xi32>
    %cst_211 = arith.constant dense<true> : vector<8x32xi1>
    %812 = arith.xori %9, %cst_211 : vector<8x32xi1>
    %813 = arith.andi %811, %812 : vector<8x32xi1>
    %814 = arith.ori %809, %813 : vector<8x32xi1>
    %815 = vector.shape_cast %806 : vector<1x32xf32> to vector<1x32xf32>
    %816 = vector.broadcast %815 : vector<1x32xf32> to vector<8x32xf32>
    %817 = arith.select %814, %816, %766 : vector<8x32xi1>, vector<8x32xf32>
    %818 = vector.extract_strided_slice %504 {offsets = [6, 0], sizes = [1, 32], strides = [1, 1]} : vector<8x32xf32> to vector<1x32xf32>
    %819 = vector.extract_strided_slice %504 {offsets = [1, 0], sizes = [1, 32], strides = [1, 1]} : vector<8x32xf32> to vector<1x32xf32>
    %820 = arith.select %2, %818, %819 : vector<1x32xi1>, vector<1x32xf32>
    %821 = vector.extract_strided_slice %507 {offsets = [6, 0], sizes = [1, 32], strides = [1, 1]} : vector<8x32xf32> to vector<1x32xf32>
    %822 = vector.extract_strided_slice %507 {offsets = [1, 0], sizes = [1, 32], strides = [1, 1]} : vector<8x32xf32> to vector<1x32xf32>
    %823 = arith.select %2, %821, %822 : vector<1x32xi1>, vector<1x32xf32>
    %824 = vector.extract_strided_slice %510 {offsets = [6, 0], sizes = [1, 32], strides = [1, 1]} : vector<8x32xf32> to vector<1x32xf32>
    %825 = vector.extract_strided_slice %510 {offsets = [1, 0], sizes = [1, 32], strides = [1, 1]} : vector<8x32xf32> to vector<1x32xf32>
    %826 = arith.select %2, %824, %825 : vector<1x32xi1>, vector<1x32xf32>
    %cst_212 = arith.constant dense<0.000000e+00> : vector<1x32xf32>
    %827 = tpu.matmul %806, %28, %cst_212 {dimension_numbers = #tpu.dot_dimension_numbers<[1], [0], [0], [1], [0, 0, 1, 1], [], []>} : vector<1x32xf32>, vector<32x32xf32>, vector<1x32xf32> -> vector<1x32xf32>
    %828 = arith.addf %827, %34 : vector<1x32xf32>
    %cst_213 = arith.constant dense<0.000000e+00> : vector<1x32xf32>
    %829 = tpu.matmul %806, %30, %cst_213 {dimension_numbers = #tpu.dot_dimension_numbers<[1], [0], [0], [1], [0, 0, 1, 1], [], []>} : vector<1x32xf32>, vector<32x32xf32>, vector<1x32xf32> -> vector<1x32xf32>
    %830 = arith.addf %829, %36 : vector<1x32xf32>
    %cst_214 = arith.constant dense<0.000000e+00> : vector<1x32xf32>
    %831 = tpu.matmul %806, %32, %cst_214 {dimension_numbers = #tpu.dot_dimension_numbers<[1], [0], [0], [1], [0, 0, 1, 1], [], []>} : vector<1x32xf32>, vector<32x32xf32>, vector<1x32xf32> -> vector<1x32xf32>
    %832 = arith.addf %831, %38 : vector<1x32xf32>
    %833 = arith.addf %820, %828 : vector<1x32xf32>
    %834 = arith.negf %833 : vector<1x32xf32>
    %835 = math.exp %834 : vector<1x32xf32>
    %cst_215 = arith.constant 1.000000e+00 : f32
    %836 = vector.broadcast %cst_215 : f32 to vector<1x32xf32>
    %837 = arith.addf %836, %835 : vector<1x32xf32>
    %838 = arith.divf %836, %837 : vector<1x32xf32>
    %839 = arith.addf %823, %830 : vector<1x32xf32>
    %840 = arith.negf %839 : vector<1x32xf32>
    %841 = math.exp %840 : vector<1x32xf32>
    %cst_216 = arith.constant 1.000000e+00 : f32
    %842 = vector.broadcast %cst_216 : f32 to vector<1x32xf32>
    %843 = arith.addf %842, %841 : vector<1x32xf32>
    %844 = arith.divf %842, %843 : vector<1x32xf32>
    %845 = arith.mulf %838, %832 : vector<1x32xf32>
    %846 = arith.addf %826, %845 : vector<1x32xf32>
    %847 = math.tanh %846 : vector<1x32xf32>
    %cst_217 = arith.constant 1.000000e+00 : f32
    %848 = vector.broadcast %cst_217 : f32 to vector<1x32xf32>
    %849 = arith.subf %848, %844 : vector<1x32xf32>
    %850 = arith.mulf %849, %847 : vector<1x32xf32>
    %851 = arith.mulf %844, %806 : vector<1x32xf32>
    %852 = arith.addf %850, %851 : vector<1x32xf32>
    %c6_i32_218 = arith.constant 6 : i32
    %853 = arith.cmpi sgt, %499, %c6_i32_218 : i32
    %854 = arith.select %853, %852, %806 : vector<1x32xf32>
    %c1_i32_219 = arith.constant 1 : i32
    %855 = arith.cmpi sgt, %499, %c1_i32_219 : i32
    %856 = arith.select %855, %852, %806 : vector<1x32xf32>
    %857 = arith.select %2, %854, %856 : vector<1x32xi1>, vector<1x32xf32>
    %c6_i32_220 = arith.constant 6 : i32
    %858 = vector.broadcast %c6_i32_220 : i32 to vector<8x32xi32>
    %859 = arith.cmpi eq, %6, %858 : vector<8x32xi32>
    %860 = arith.andi %859, %9 : vector<8x32xi1>
    %c1_i32_221 = arith.constant 1 : i32
    %861 = vector.broadcast %c1_i32_221 : i32 to vector<8x32xi32>
    %862 = arith.cmpi eq, %6, %861 : vector<8x32xi32>
    %cst_222 = arith.constant dense<true> : vector<8x32xi1>
    %863 = arith.xori %9, %cst_222 : vector<8x32xi1>
    %864 = arith.andi %862, %863 : vector<8x32xi1>
    %865 = arith.ori %860, %864 : vector<8x32xi1>
    %866 = vector.shape_cast %857 : vector<1x32xf32> to vector<1x32xf32>
    %867 = vector.broadcast %866 : vector<1x32xf32> to vector<8x32xf32>
    %868 = arith.select %865, %867, %817 : vector<8x32xi1>, vector<8x32xf32>
    %869 = vector.extract_strided_slice %504 {offsets = [7, 0], sizes = [1, 32], strides = [1, 1]} : vector<8x32xf32> to vector<1x32xf32>
    %870 = vector.extract_strided_slice %504 {offsets = [0, 0], sizes = [1, 32], strides = [1, 1]} : vector<8x32xf32> to vector<1x32xf32>
    %871 = arith.select %2, %869, %870 : vector<1x32xi1>, vector<1x32xf32>
    %872 = vector.extract_strided_slice %507 {offsets = [7, 0], sizes = [1, 32], strides = [1, 1]} : vector<8x32xf32> to vector<1x32xf32>
    %873 = vector.extract_strided_slice %507 {offsets = [0, 0], sizes = [1, 32], strides = [1, 1]} : vector<8x32xf32> to vector<1x32xf32>
    %874 = arith.select %2, %872, %873 : vector<1x32xi1>, vector<1x32xf32>
    %875 = vector.extract_strided_slice %510 {offsets = [7, 0], sizes = [1, 32], strides = [1, 1]} : vector<8x32xf32> to vector<1x32xf32>
    %876 = vector.extract_strided_slice %510 {offsets = [0, 0], sizes = [1, 32], strides = [1, 1]} : vector<8x32xf32> to vector<1x32xf32>
    %877 = arith.select %2, %875, %876 : vector<1x32xi1>, vector<1x32xf32>
    %cst_223 = arith.constant dense<0.000000e+00> : vector<1x32xf32>
    %878 = tpu.matmul %857, %28, %cst_223 {dimension_numbers = #tpu.dot_dimension_numbers<[1], [0], [0], [1], [0, 0, 1, 1], [], []>} : vector<1x32xf32>, vector<32x32xf32>, vector<1x32xf32> -> vector<1x32xf32>
    %879 = arith.addf %878, %34 : vector<1x32xf32>
    %cst_224 = arith.constant dense<0.000000e+00> : vector<1x32xf32>
    %880 = tpu.matmul %857, %30, %cst_224 {dimension_numbers = #tpu.dot_dimension_numbers<[1], [0], [0], [1], [0, 0, 1, 1], [], []>} : vector<1x32xf32>, vector<32x32xf32>, vector<1x32xf32> -> vector<1x32xf32>
    %881 = arith.addf %880, %36 : vector<1x32xf32>
    %cst_225 = arith.constant dense<0.000000e+00> : vector<1x32xf32>
    %882 = tpu.matmul %857, %32, %cst_225 {dimension_numbers = #tpu.dot_dimension_numbers<[1], [0], [0], [1], [0, 0, 1, 1], [], []>} : vector<1x32xf32>, vector<32x32xf32>, vector<1x32xf32> -> vector<1x32xf32>
    %883 = arith.addf %882, %38 : vector<1x32xf32>
    %884 = arith.addf %871, %879 : vector<1x32xf32>
    %885 = arith.negf %884 : vector<1x32xf32>
    %886 = math.exp %885 : vector<1x32xf32>
    %cst_226 = arith.constant 1.000000e+00 : f32
    %887 = vector.broadcast %cst_226 : f32 to vector<1x32xf32>
    %888 = arith.addf %887, %886 : vector<1x32xf32>
    %889 = arith.divf %887, %888 : vector<1x32xf32>
    %890 = arith.addf %874, %881 : vector<1x32xf32>
    %891 = arith.negf %890 : vector<1x32xf32>
    %892 = math.exp %891 : vector<1x32xf32>
    %cst_227 = arith.constant 1.000000e+00 : f32
    %893 = vector.broadcast %cst_227 : f32 to vector<1x32xf32>
    %894 = arith.addf %893, %892 : vector<1x32xf32>
    %895 = arith.divf %893, %894 : vector<1x32xf32>
    %896 = arith.mulf %889, %883 : vector<1x32xf32>
    %897 = arith.addf %877, %896 : vector<1x32xf32>
    %898 = math.tanh %897 : vector<1x32xf32>
    %cst_228 = arith.constant 1.000000e+00 : f32
    %899 = vector.broadcast %cst_228 : f32 to vector<1x32xf32>
    %900 = arith.subf %899, %895 : vector<1x32xf32>
    %901 = arith.mulf %900, %898 : vector<1x32xf32>
    %902 = arith.mulf %895, %857 : vector<1x32xf32>
    %903 = arith.addf %901, %902 : vector<1x32xf32>
    %c7_i32_229 = arith.constant 7 : i32
    %904 = arith.cmpi sgt, %499, %c7_i32_229 : i32
    %905 = arith.select %904, %903, %857 : vector<1x32xf32>
    %c0_i32_230 = arith.constant 0 : i32
    %906 = arith.cmpi sgt, %499, %c0_i32_230 : i32
    %907 = arith.select %906, %903, %857 : vector<1x32xf32>
    %908 = arith.select %2, %905, %907 : vector<1x32xi1>, vector<1x32xf32>
    %c7_i32_231 = arith.constant 7 : i32
    %909 = vector.broadcast %c7_i32_231 : i32 to vector<8x32xi32>
    %910 = arith.cmpi eq, %6, %909 : vector<8x32xi32>
    %911 = arith.andi %910, %9 : vector<8x32xi1>
    %c0_i32_232 = arith.constant 0 : i32
    %912 = vector.broadcast %c0_i32_232 : i32 to vector<8x32xi32>
    %913 = arith.cmpi eq, %6, %912 : vector<8x32xi32>
    %cst_233 = arith.constant dense<true> : vector<8x32xi1>
    %914 = arith.xori %9, %cst_233 : vector<8x32xi1>
    %915 = arith.andi %913, %914 : vector<8x32xi1>
    %916 = arith.ori %911, %915 : vector<8x32xi1>
    %917 = vector.shape_cast %908 : vector<1x32xf32> to vector<1x32xf32>
    %918 = vector.broadcast %917 : vector<1x32xf32> to vector<8x32xf32>
    %919 = arith.select %916, %918, %868 : vector<8x32xi1>, vector<8x32xf32>
    %cst_234 = arith.constant dense<0.000000e+00> : vector<8x32xf32>
    %920 = tpu.matmul %919, %39, %cst_234 {dimension_numbers = #tpu.dot_dimension_numbers<[1], [0], [0], [1], [0, 0, 1, 1], [], []>} : vector<8x32xf32>, vector<32x32xf32>, vector<8x32xf32> -> vector<8x32xf32>
    %921 = vector.broadcast %40 : vector<1x32xf32> to vector<8x32xf32>
    %922 = arith.addf %920, %921 : vector<8x32xf32>
    %923 = math.tanh %922 : vector<8x32xf32>
    %cst_235 = arith.constant dense<0.000000e+00> : vector<8x1xf32>
    %924 = tpu.matmul %923, %41, %cst_235 {dimension_numbers = #tpu.dot_dimension_numbers<[1], [0], [0], [1], [0, 0, 1, 1], [], []>} : vector<8x32xf32>, vector<32x1xf32>, vector<8x1xf32> -> vector<8x1xf32>
    %925 = tpu.iota {dimensions = array<i32: 0>} : vector<8x1xi32>
    %926 = vector.broadcast %499 : i32 to vector<8x1xi32>
    %927 = arith.cmpi slt, %925, %926 : vector<8x1xi32>
    %cst_236 = arith.constant -1.000000e+30 : f32
    %928 = vector.broadcast %cst_236 : f32 to vector<8x1xf32>
    %929 = arith.select %927, %924, %928 : vector<8x1xi1>, vector<8x1xf32>
    %930 = vector.shape_cast %929 : vector<8x1xf32> to vector<1x8x1xf32>
    %cst_237 = arith.constant dense<0xFF800000> : vector<1xf32>
    %931 = vector.multi_reduction <maximumf>, %930, %cst_237 [1, 2] : vector<1x8x1xf32> to vector<1xf32>
    %932 = vector.shape_cast %931 : vector<1xf32> to vector<1x1x1xf32>
    %933 = vector.extract %932[0, 0, 0] : f32 from vector<1x1x1xf32>
    %934 = vector.broadcast %933 : f32 to vector<1x1xf32>
    %935 = vector.broadcast %934 : vector<1x1xf32> to vector<8x1xf32>
    %936 = arith.subf %929, %935 : vector<8x1xf32>
    %937 = math.exp %936 : vector<8x1xf32>
    %938 = vector.shape_cast %937 : vector<8x1xf32> to vector<1x8x1xf32>
    %cst_238 = arith.constant dense<0.000000e+00> : vector<1xf32>
    %939 = vector.multi_reduction <add>, %938, %cst_238 [1, 2] : vector<1x8x1xf32> to vector<1xf32>
    %940 = vector.shape_cast %939 : vector<1xf32> to vector<1x1x1xf32>
    %941 = vector.extract %940[0, 0, 0] : f32 from vector<1x1x1xf32>
    %942 = vector.broadcast %941 : f32 to vector<1x1xf32>
    %943 = vector.broadcast %942 : vector<1x1xf32> to vector<8x1xf32>
    %944 = arith.divf %937, %943 : vector<8x1xf32>
    %945 = vector.broadcast %944 : vector<8x1xf32> to vector<8x32xf32>
    %946 = arith.mulf %945, %919 : vector<8x32xf32>
    %cst_239 = arith.constant dense<0.000000e+00> : vector<32xf32>
    %947 = vector.multi_reduction <add>, %946, %cst_239 [0] : vector<8x32xf32> to vector<32xf32>
    %948 = vector.shape_cast %947 : vector<32xf32> to vector<1x32xf32>
    %c1_i32_240 = arith.constant 1 : i32
    %949 = vector.broadcast %c1_i32_240 : i32 to vector<4x32xi32>
    %950 = arith.cmpi eq, %14, %949 : vector<4x32xi32>
    %951 = vector.shape_cast %948 : vector<1x32xf32> to vector<1x32xf32>
    %952 = vector.broadcast %951 : vector<1x32xf32> to vector<4x32xf32>
    %953 = arith.select %950, %952, %498 : vector<4x32xi1>, vector<4x32xf32>
    %c2_241 = arith.constant 2 : index
    %954 = memref.load %arg1[%c2_241] : memref<4xi32, #tpu.memory_space<smem>>
    %c2_242 = arith.constant 2 : index
    %c0_243 = arith.constant 0 : index
    %c0_244 = arith.constant 0 : index
    %955 = vector.load %arg2[%c2_242, %c0_243, %c0_244] : memref<4x8x32xf32, #tpu.memory_space<vmem>>, vector<1x8x32xf32>
    %956 = vector.shape_cast %955 : vector<1x8x32xf32> to vector<8x32xf32>
    %cst_245 = arith.constant dense<0.000000e+00> : vector<8x32xf32>
    %957 = tpu.matmul %956, %16, %cst_245 {dimension_numbers = #tpu.dot_dimension_numbers<[1], [0], [0], [1], [0, 0, 1, 1], [], []>} : vector<8x32xf32>, vector<32x32xf32>, vector<8x32xf32> -> vector<8x32xf32>
    %958 = vector.broadcast %22 : vector<1x32xf32> to vector<8x32xf32>
    %959 = arith.addf %957, %958 : vector<8x32xf32>
    %cst_246 = arith.constant dense<0.000000e+00> : vector<8x32xf32>
    %960 = tpu.matmul %956, %18, %cst_246 {dimension_numbers = #tpu.dot_dimension_numbers<[1], [0], [0], [1], [0, 0, 1, 1], [], []>} : vector<8x32xf32>, vector<32x32xf32>, vector<8x32xf32> -> vector<8x32xf32>
    %961 = vector.broadcast %24 : vector<1x32xf32> to vector<8x32xf32>
    %962 = arith.addf %960, %961 : vector<8x32xf32>
    %cst_247 = arith.constant dense<0.000000e+00> : vector<8x32xf32>
    %963 = tpu.matmul %956, %20, %cst_247 {dimension_numbers = #tpu.dot_dimension_numbers<[1], [0], [0], [1], [0, 0, 1, 1], [], []>} : vector<8x32xf32>, vector<32x32xf32>, vector<8x32xf32> -> vector<8x32xf32>
    %964 = vector.broadcast %26 : vector<1x32xf32> to vector<8x32xf32>
    %965 = arith.addf %963, %964 : vector<8x32xf32>
    %cst_248 = arith.constant 0.000000e+00 : f32
    %966 = vector.broadcast %cst_248 : f32 to vector<8x32xf32>
    %967 = vector.extract_strided_slice %959 {offsets = [0, 0], sizes = [1, 32], strides = [1, 1]} : vector<8x32xf32> to vector<1x32xf32>
    %968 = vector.extract_strided_slice %959 {offsets = [7, 0], sizes = [1, 32], strides = [1, 1]} : vector<8x32xf32> to vector<1x32xf32>
    %969 = arith.select %2, %967, %968 : vector<1x32xi1>, vector<1x32xf32>
    %970 = vector.extract_strided_slice %962 {offsets = [0, 0], sizes = [1, 32], strides = [1, 1]} : vector<8x32xf32> to vector<1x32xf32>
    %971 = vector.extract_strided_slice %962 {offsets = [7, 0], sizes = [1, 32], strides = [1, 1]} : vector<8x32xf32> to vector<1x32xf32>
    %972 = arith.select %2, %970, %971 : vector<1x32xi1>, vector<1x32xf32>
    %973 = vector.extract_strided_slice %965 {offsets = [0, 0], sizes = [1, 32], strides = [1, 1]} : vector<8x32xf32> to vector<1x32xf32>
    %974 = vector.extract_strided_slice %965 {offsets = [7, 0], sizes = [1, 32], strides = [1, 1]} : vector<8x32xf32> to vector<1x32xf32>
    %975 = arith.select %2, %973, %974 : vector<1x32xi1>, vector<1x32xf32>
    %cst_249 = arith.constant dense<0.000000e+00> : vector<1x32xf32>
    %976 = tpu.matmul %908, %28, %cst_249 {dimension_numbers = #tpu.dot_dimension_numbers<[1], [0], [0], [1], [0, 0, 1, 1], [], []>} : vector<1x32xf32>, vector<32x32xf32>, vector<1x32xf32> -> vector<1x32xf32>
    %977 = arith.addf %976, %34 : vector<1x32xf32>
    %cst_250 = arith.constant dense<0.000000e+00> : vector<1x32xf32>
    %978 = tpu.matmul %908, %30, %cst_250 {dimension_numbers = #tpu.dot_dimension_numbers<[1], [0], [0], [1], [0, 0, 1, 1], [], []>} : vector<1x32xf32>, vector<32x32xf32>, vector<1x32xf32> -> vector<1x32xf32>
    %979 = arith.addf %978, %36 : vector<1x32xf32>
    %cst_251 = arith.constant dense<0.000000e+00> : vector<1x32xf32>
    %980 = tpu.matmul %908, %32, %cst_251 {dimension_numbers = #tpu.dot_dimension_numbers<[1], [0], [0], [1], [0, 0, 1, 1], [], []>} : vector<1x32xf32>, vector<32x32xf32>, vector<1x32xf32> -> vector<1x32xf32>
    %981 = arith.addf %980, %38 : vector<1x32xf32>
    %982 = arith.addf %969, %977 : vector<1x32xf32>
    %983 = arith.negf %982 : vector<1x32xf32>
    %984 = math.exp %983 : vector<1x32xf32>
    %cst_252 = arith.constant 1.000000e+00 : f32
    %985 = vector.broadcast %cst_252 : f32 to vector<1x32xf32>
    %986 = arith.addf %985, %984 : vector<1x32xf32>
    %987 = arith.divf %985, %986 : vector<1x32xf32>
    %988 = arith.addf %972, %979 : vector<1x32xf32>
    %989 = arith.negf %988 : vector<1x32xf32>
    %990 = math.exp %989 : vector<1x32xf32>
    %cst_253 = arith.constant 1.000000e+00 : f32
    %991 = vector.broadcast %cst_253 : f32 to vector<1x32xf32>
    %992 = arith.addf %991, %990 : vector<1x32xf32>
    %993 = arith.divf %991, %992 : vector<1x32xf32>
    %994 = arith.mulf %987, %981 : vector<1x32xf32>
    %995 = arith.addf %975, %994 : vector<1x32xf32>
    %996 = math.tanh %995 : vector<1x32xf32>
    %cst_254 = arith.constant 1.000000e+00 : f32
    %997 = vector.broadcast %cst_254 : f32 to vector<1x32xf32>
    %998 = arith.subf %997, %993 : vector<1x32xf32>
    %999 = arith.mulf %998, %996 : vector<1x32xf32>
    %1000 = arith.mulf %993, %908 : vector<1x32xf32>
    %1001 = arith.addf %999, %1000 : vector<1x32xf32>
    %c0_i32_255 = arith.constant 0 : i32
    %1002 = arith.cmpi sgt, %954, %c0_i32_255 : i32
    %1003 = arith.select %1002, %1001, %908 : vector<1x32xf32>
    %c7_i32_256 = arith.constant 7 : i32
    %1004 = arith.cmpi sgt, %954, %c7_i32_256 : i32
    %1005 = arith.select %1004, %1001, %908 : vector<1x32xf32>
    %1006 = arith.select %2, %1003, %1005 : vector<1x32xi1>, vector<1x32xf32>
    %c0_i32_257 = arith.constant 0 : i32
    %1007 = vector.broadcast %c0_i32_257 : i32 to vector<8x32xi32>
    %1008 = arith.cmpi eq, %6, %1007 : vector<8x32xi32>
    %1009 = arith.andi %1008, %9 : vector<8x32xi1>
    %c7_i32_258 = arith.constant 7 : i32
    %1010 = vector.broadcast %c7_i32_258 : i32 to vector<8x32xi32>
    %1011 = arith.cmpi eq, %6, %1010 : vector<8x32xi32>
    %cst_259 = arith.constant dense<true> : vector<8x32xi1>
    %1012 = arith.xori %9, %cst_259 : vector<8x32xi1>
    %1013 = arith.andi %1011, %1012 : vector<8x32xi1>
    %1014 = arith.ori %1009, %1013 : vector<8x32xi1>
    %1015 = vector.shape_cast %1006 : vector<1x32xf32> to vector<1x32xf32>
    %1016 = vector.broadcast %1015 : vector<1x32xf32> to vector<8x32xf32>
    %1017 = arith.select %1014, %1016, %966 : vector<8x32xi1>, vector<8x32xf32>
    %1018 = vector.extract_strided_slice %959 {offsets = [1, 0], sizes = [1, 32], strides = [1, 1]} : vector<8x32xf32> to vector<1x32xf32>
    %1019 = vector.extract_strided_slice %959 {offsets = [6, 0], sizes = [1, 32], strides = [1, 1]} : vector<8x32xf32> to vector<1x32xf32>
    %1020 = arith.select %2, %1018, %1019 : vector<1x32xi1>, vector<1x32xf32>
    %1021 = vector.extract_strided_slice %962 {offsets = [1, 0], sizes = [1, 32], strides = [1, 1]} : vector<8x32xf32> to vector<1x32xf32>
    %1022 = vector.extract_strided_slice %962 {offsets = [6, 0], sizes = [1, 32], strides = [1, 1]} : vector<8x32xf32> to vector<1x32xf32>
    %1023 = arith.select %2, %1021, %1022 : vector<1x32xi1>, vector<1x32xf32>
    %1024 = vector.extract_strided_slice %965 {offsets = [1, 0], sizes = [1, 32], strides = [1, 1]} : vector<8x32xf32> to vector<1x32xf32>
    %1025 = vector.extract_strided_slice %965 {offsets = [6, 0], sizes = [1, 32], strides = [1, 1]} : vector<8x32xf32> to vector<1x32xf32>
    %1026 = arith.select %2, %1024, %1025 : vector<1x32xi1>, vector<1x32xf32>
    %cst_260 = arith.constant dense<0.000000e+00> : vector<1x32xf32>
    %1027 = tpu.matmul %1006, %28, %cst_260 {dimension_numbers = #tpu.dot_dimension_numbers<[1], [0], [0], [1], [0, 0, 1, 1], [], []>} : vector<1x32xf32>, vector<32x32xf32>, vector<1x32xf32> -> vector<1x32xf32>
    %1028 = arith.addf %1027, %34 : vector<1x32xf32>
    %cst_261 = arith.constant dense<0.000000e+00> : vector<1x32xf32>
    %1029 = tpu.matmul %1006, %30, %cst_261 {dimension_numbers = #tpu.dot_dimension_numbers<[1], [0], [0], [1], [0, 0, 1, 1], [], []>} : vector<1x32xf32>, vector<32x32xf32>, vector<1x32xf32> -> vector<1x32xf32>
    %1030 = arith.addf %1029, %36 : vector<1x32xf32>
    %cst_262 = arith.constant dense<0.000000e+00> : vector<1x32xf32>
    %1031 = tpu.matmul %1006, %32, %cst_262 {dimension_numbers = #tpu.dot_dimension_numbers<[1], [0], [0], [1], [0, 0, 1, 1], [], []>} : vector<1x32xf32>, vector<32x32xf32>, vector<1x32xf32> -> vector<1x32xf32>
    %1032 = arith.addf %1031, %38 : vector<1x32xf32>
    %1033 = arith.addf %1020, %1028 : vector<1x32xf32>
    %1034 = arith.negf %1033 : vector<1x32xf32>
    %1035 = math.exp %1034 : vector<1x32xf32>
    %cst_263 = arith.constant 1.000000e+00 : f32
    %1036 = vector.broadcast %cst_263 : f32 to vector<1x32xf32>
    %1037 = arith.addf %1036, %1035 : vector<1x32xf32>
    %1038 = arith.divf %1036, %1037 : vector<1x32xf32>
    %1039 = arith.addf %1023, %1030 : vector<1x32xf32>
    %1040 = arith.negf %1039 : vector<1x32xf32>
    %1041 = math.exp %1040 : vector<1x32xf32>
    %cst_264 = arith.constant 1.000000e+00 : f32
    %1042 = vector.broadcast %cst_264 : f32 to vector<1x32xf32>
    %1043 = arith.addf %1042, %1041 : vector<1x32xf32>
    %1044 = arith.divf %1042, %1043 : vector<1x32xf32>
    %1045 = arith.mulf %1038, %1032 : vector<1x32xf32>
    %1046 = arith.addf %1026, %1045 : vector<1x32xf32>
    %1047 = math.tanh %1046 : vector<1x32xf32>
    %cst_265 = arith.constant 1.000000e+00 : f32
    %1048 = vector.broadcast %cst_265 : f32 to vector<1x32xf32>
    %1049 = arith.subf %1048, %1044 : vector<1x32xf32>
    %1050 = arith.mulf %1049, %1047 : vector<1x32xf32>
    %1051 = arith.mulf %1044, %1006 : vector<1x32xf32>
    %1052 = arith.addf %1050, %1051 : vector<1x32xf32>
    %c1_i32_266 = arith.constant 1 : i32
    %1053 = arith.cmpi sgt, %954, %c1_i32_266 : i32
    %1054 = arith.select %1053, %1052, %1006 : vector<1x32xf32>
    %c6_i32_267 = arith.constant 6 : i32
    %1055 = arith.cmpi sgt, %954, %c6_i32_267 : i32
    %1056 = arith.select %1055, %1052, %1006 : vector<1x32xf32>
    %1057 = arith.select %2, %1054, %1056 : vector<1x32xi1>, vector<1x32xf32>
    %c1_i32_268 = arith.constant 1 : i32
    %1058 = vector.broadcast %c1_i32_268 : i32 to vector<8x32xi32>
    %1059 = arith.cmpi eq, %6, %1058 : vector<8x32xi32>
    %1060 = arith.andi %1059, %9 : vector<8x32xi1>
    %c6_i32_269 = arith.constant 6 : i32
    %1061 = vector.broadcast %c6_i32_269 : i32 to vector<8x32xi32>
    %1062 = arith.cmpi eq, %6, %1061 : vector<8x32xi32>
    %cst_270 = arith.constant dense<true> : vector<8x32xi1>
    %1063 = arith.xori %9, %cst_270 : vector<8x32xi1>
    %1064 = arith.andi %1062, %1063 : vector<8x32xi1>
    %1065 = arith.ori %1060, %1064 : vector<8x32xi1>
    %1066 = vector.shape_cast %1057 : vector<1x32xf32> to vector<1x32xf32>
    %1067 = vector.broadcast %1066 : vector<1x32xf32> to vector<8x32xf32>
    %1068 = arith.select %1065, %1067, %1017 : vector<8x32xi1>, vector<8x32xf32>
    %1069 = vector.extract_strided_slice %959 {offsets = [2, 0], sizes = [1, 32], strides = [1, 1]} : vector<8x32xf32> to vector<1x32xf32>
    %1070 = vector.extract_strided_slice %959 {offsets = [5, 0], sizes = [1, 32], strides = [1, 1]} : vector<8x32xf32> to vector<1x32xf32>
    %1071 = arith.select %2, %1069, %1070 : vector<1x32xi1>, vector<1x32xf32>
    %1072 = vector.extract_strided_slice %962 {offsets = [2, 0], sizes = [1, 32], strides = [1, 1]} : vector<8x32xf32> to vector<1x32xf32>
    %1073 = vector.extract_strided_slice %962 {offsets = [5, 0], sizes = [1, 32], strides = [1, 1]} : vector<8x32xf32> to vector<1x32xf32>
    %1074 = arith.select %2, %1072, %1073 : vector<1x32xi1>, vector<1x32xf32>
    %1075 = vector.extract_strided_slice %965 {offsets = [2, 0], sizes = [1, 32], strides = [1, 1]} : vector<8x32xf32> to vector<1x32xf32>
    %1076 = vector.extract_strided_slice %965 {offsets = [5, 0], sizes = [1, 32], strides = [1, 1]} : vector<8x32xf32> to vector<1x32xf32>
    %1077 = arith.select %2, %1075, %1076 : vector<1x32xi1>, vector<1x32xf32>
    %cst_271 = arith.constant dense<0.000000e+00> : vector<1x32xf32>
    %1078 = tpu.matmul %1057, %28, %cst_271 {dimension_numbers = #tpu.dot_dimension_numbers<[1], [0], [0], [1], [0, 0, 1, 1], [], []>} : vector<1x32xf32>, vector<32x32xf32>, vector<1x32xf32> -> vector<1x32xf32>
    %1079 = arith.addf %1078, %34 : vector<1x32xf32>
    %cst_272 = arith.constant dense<0.000000e+00> : vector<1x32xf32>
    %1080 = tpu.matmul %1057, %30, %cst_272 {dimension_numbers = #tpu.dot_dimension_numbers<[1], [0], [0], [1], [0, 0, 1, 1], [], []>} : vector<1x32xf32>, vector<32x32xf32>, vector<1x32xf32> -> vector<1x32xf32>
    %1081 = arith.addf %1080, %36 : vector<1x32xf32>
    %cst_273 = arith.constant dense<0.000000e+00> : vector<1x32xf32>
    %1082 = tpu.matmul %1057, %32, %cst_273 {dimension_numbers = #tpu.dot_dimension_numbers<[1], [0], [0], [1], [0, 0, 1, 1], [], []>} : vector<1x32xf32>, vector<32x32xf32>, vector<1x32xf32> -> vector<1x32xf32>
    %1083 = arith.addf %1082, %38 : vector<1x32xf32>
    %1084 = arith.addf %1071, %1079 : vector<1x32xf32>
    %1085 = arith.negf %1084 : vector<1x32xf32>
    %1086 = math.exp %1085 : vector<1x32xf32>
    %cst_274 = arith.constant 1.000000e+00 : f32
    %1087 = vector.broadcast %cst_274 : f32 to vector<1x32xf32>
    %1088 = arith.addf %1087, %1086 : vector<1x32xf32>
    %1089 = arith.divf %1087, %1088 : vector<1x32xf32>
    %1090 = arith.addf %1074, %1081 : vector<1x32xf32>
    %1091 = arith.negf %1090 : vector<1x32xf32>
    %1092 = math.exp %1091 : vector<1x32xf32>
    %cst_275 = arith.constant 1.000000e+00 : f32
    %1093 = vector.broadcast %cst_275 : f32 to vector<1x32xf32>
    %1094 = arith.addf %1093, %1092 : vector<1x32xf32>
    %1095 = arith.divf %1093, %1094 : vector<1x32xf32>
    %1096 = arith.mulf %1089, %1083 : vector<1x32xf32>
    %1097 = arith.addf %1077, %1096 : vector<1x32xf32>
    %1098 = math.tanh %1097 : vector<1x32xf32>
    %cst_276 = arith.constant 1.000000e+00 : f32
    %1099 = vector.broadcast %cst_276 : f32 to vector<1x32xf32>
    %1100 = arith.subf %1099, %1095 : vector<1x32xf32>
    %1101 = arith.mulf %1100, %1098 : vector<1x32xf32>
    %1102 = arith.mulf %1095, %1057 : vector<1x32xf32>
    %1103 = arith.addf %1101, %1102 : vector<1x32xf32>
    %c2_i32_277 = arith.constant 2 : i32
    %1104 = arith.cmpi sgt, %954, %c2_i32_277 : i32
    %1105 = arith.select %1104, %1103, %1057 : vector<1x32xf32>
    %c5_i32_278 = arith.constant 5 : i32
    %1106 = arith.cmpi sgt, %954, %c5_i32_278 : i32
    %1107 = arith.select %1106, %1103, %1057 : vector<1x32xf32>
    %1108 = arith.select %2, %1105, %1107 : vector<1x32xi1>, vector<1x32xf32>
    %c2_i32_279 = arith.constant 2 : i32
    %1109 = vector.broadcast %c2_i32_279 : i32 to vector<8x32xi32>
    %1110 = arith.cmpi eq, %6, %1109 : vector<8x32xi32>
    %1111 = arith.andi %1110, %9 : vector<8x32xi1>
    %c5_i32_280 = arith.constant 5 : i32
    %1112 = vector.broadcast %c5_i32_280 : i32 to vector<8x32xi32>
    %1113 = arith.cmpi eq, %6, %1112 : vector<8x32xi32>
    %cst_281 = arith.constant dense<true> : vector<8x32xi1>
    %1114 = arith.xori %9, %cst_281 : vector<8x32xi1>
    %1115 = arith.andi %1113, %1114 : vector<8x32xi1>
    %1116 = arith.ori %1111, %1115 : vector<8x32xi1>
    %1117 = vector.shape_cast %1108 : vector<1x32xf32> to vector<1x32xf32>
    %1118 = vector.broadcast %1117 : vector<1x32xf32> to vector<8x32xf32>
    %1119 = arith.select %1116, %1118, %1068 : vector<8x32xi1>, vector<8x32xf32>
    %1120 = vector.extract_strided_slice %959 {offsets = [3, 0], sizes = [1, 32], strides = [1, 1]} : vector<8x32xf32> to vector<1x32xf32>
    %1121 = vector.extract_strided_slice %959 {offsets = [4, 0], sizes = [1, 32], strides = [1, 1]} : vector<8x32xf32> to vector<1x32xf32>
    %1122 = arith.select %2, %1120, %1121 : vector<1x32xi1>, vector<1x32xf32>
    %1123 = vector.extract_strided_slice %962 {offsets = [3, 0], sizes = [1, 32], strides = [1, 1]} : vector<8x32xf32> to vector<1x32xf32>
    %1124 = vector.extract_strided_slice %962 {offsets = [4, 0], sizes = [1, 32], strides = [1, 1]} : vector<8x32xf32> to vector<1x32xf32>
    %1125 = arith.select %2, %1123, %1124 : vector<1x32xi1>, vector<1x32xf32>
    %1126 = vector.extract_strided_slice %965 {offsets = [3, 0], sizes = [1, 32], strides = [1, 1]} : vector<8x32xf32> to vector<1x32xf32>
    %1127 = vector.extract_strided_slice %965 {offsets = [4, 0], sizes = [1, 32], strides = [1, 1]} : vector<8x32xf32> to vector<1x32xf32>
    %1128 = arith.select %2, %1126, %1127 : vector<1x32xi1>, vector<1x32xf32>
    %cst_282 = arith.constant dense<0.000000e+00> : vector<1x32xf32>
    %1129 = tpu.matmul %1108, %28, %cst_282 {dimension_numbers = #tpu.dot_dimension_numbers<[1], [0], [0], [1], [0, 0, 1, 1], [], []>} : vector<1x32xf32>, vector<32x32xf32>, vector<1x32xf32> -> vector<1x32xf32>
    %1130 = arith.addf %1129, %34 : vector<1x32xf32>
    %cst_283 = arith.constant dense<0.000000e+00> : vector<1x32xf32>
    %1131 = tpu.matmul %1108, %30, %cst_283 {dimension_numbers = #tpu.dot_dimension_numbers<[1], [0], [0], [1], [0, 0, 1, 1], [], []>} : vector<1x32xf32>, vector<32x32xf32>, vector<1x32xf32> -> vector<1x32xf32>
    %1132 = arith.addf %1131, %36 : vector<1x32xf32>
    %cst_284 = arith.constant dense<0.000000e+00> : vector<1x32xf32>
    %1133 = tpu.matmul %1108, %32, %cst_284 {dimension_numbers = #tpu.dot_dimension_numbers<[1], [0], [0], [1], [0, 0, 1, 1], [], []>} : vector<1x32xf32>, vector<32x32xf32>, vector<1x32xf32> -> vector<1x32xf32>
    %1134 = arith.addf %1133, %38 : vector<1x32xf32>
    %1135 = arith.addf %1122, %1130 : vector<1x32xf32>
    %1136 = arith.negf %1135 : vector<1x32xf32>
    %1137 = math.exp %1136 : vector<1x32xf32>
    %cst_285 = arith.constant 1.000000e+00 : f32
    %1138 = vector.broadcast %cst_285 : f32 to vector<1x32xf32>
    %1139 = arith.addf %1138, %1137 : vector<1x32xf32>
    %1140 = arith.divf %1138, %1139 : vector<1x32xf32>
    %1141 = arith.addf %1125, %1132 : vector<1x32xf32>
    %1142 = arith.negf %1141 : vector<1x32xf32>
    %1143 = math.exp %1142 : vector<1x32xf32>
    %cst_286 = arith.constant 1.000000e+00 : f32
    %1144 = vector.broadcast %cst_286 : f32 to vector<1x32xf32>
    %1145 = arith.addf %1144, %1143 : vector<1x32xf32>
    %1146 = arith.divf %1144, %1145 : vector<1x32xf32>
    %1147 = arith.mulf %1140, %1134 : vector<1x32xf32>
    %1148 = arith.addf %1128, %1147 : vector<1x32xf32>
    %1149 = math.tanh %1148 : vector<1x32xf32>
    %cst_287 = arith.constant 1.000000e+00 : f32
    %1150 = vector.broadcast %cst_287 : f32 to vector<1x32xf32>
    %1151 = arith.subf %1150, %1146 : vector<1x32xf32>
    %1152 = arith.mulf %1151, %1149 : vector<1x32xf32>
    %1153 = arith.mulf %1146, %1108 : vector<1x32xf32>
    %1154 = arith.addf %1152, %1153 : vector<1x32xf32>
    %c3_i32_288 = arith.constant 3 : i32
    %1155 = arith.cmpi sgt, %954, %c3_i32_288 : i32
    %1156 = arith.select %1155, %1154, %1108 : vector<1x32xf32>
    %c4_i32_289 = arith.constant 4 : i32
    %1157 = arith.cmpi sgt, %954, %c4_i32_289 : i32
    %1158 = arith.select %1157, %1154, %1108 : vector<1x32xf32>
    %1159 = arith.select %2, %1156, %1158 : vector<1x32xi1>, vector<1x32xf32>
    %c3_i32_290 = arith.constant 3 : i32
    %1160 = vector.broadcast %c3_i32_290 : i32 to vector<8x32xi32>
    %1161 = arith.cmpi eq, %6, %1160 : vector<8x32xi32>
    %1162 = arith.andi %1161, %9 : vector<8x32xi1>
    %c4_i32_291 = arith.constant 4 : i32
    %1163 = vector.broadcast %c4_i32_291 : i32 to vector<8x32xi32>
    %1164 = arith.cmpi eq, %6, %1163 : vector<8x32xi32>
    %cst_292 = arith.constant dense<true> : vector<8x32xi1>
    %1165 = arith.xori %9, %cst_292 : vector<8x32xi1>
    %1166 = arith.andi %1164, %1165 : vector<8x32xi1>
    %1167 = arith.ori %1162, %1166 : vector<8x32xi1>
    %1168 = vector.shape_cast %1159 : vector<1x32xf32> to vector<1x32xf32>
    %1169 = vector.broadcast %1168 : vector<1x32xf32> to vector<8x32xf32>
    %1170 = arith.select %1167, %1169, %1119 : vector<8x32xi1>, vector<8x32xf32>
    %1171 = vector.extract_strided_slice %959 {offsets = [4, 0], sizes = [1, 32], strides = [1, 1]} : vector<8x32xf32> to vector<1x32xf32>
    %1172 = vector.extract_strided_slice %959 {offsets = [3, 0], sizes = [1, 32], strides = [1, 1]} : vector<8x32xf32> to vector<1x32xf32>
    %1173 = arith.select %2, %1171, %1172 : vector<1x32xi1>, vector<1x32xf32>
    %1174 = vector.extract_strided_slice %962 {offsets = [4, 0], sizes = [1, 32], strides = [1, 1]} : vector<8x32xf32> to vector<1x32xf32>
    %1175 = vector.extract_strided_slice %962 {offsets = [3, 0], sizes = [1, 32], strides = [1, 1]} : vector<8x32xf32> to vector<1x32xf32>
    %1176 = arith.select %2, %1174, %1175 : vector<1x32xi1>, vector<1x32xf32>
    %1177 = vector.extract_strided_slice %965 {offsets = [4, 0], sizes = [1, 32], strides = [1, 1]} : vector<8x32xf32> to vector<1x32xf32>
    %1178 = vector.extract_strided_slice %965 {offsets = [3, 0], sizes = [1, 32], strides = [1, 1]} : vector<8x32xf32> to vector<1x32xf32>
    %1179 = arith.select %2, %1177, %1178 : vector<1x32xi1>, vector<1x32xf32>
    %cst_293 = arith.constant dense<0.000000e+00> : vector<1x32xf32>
    %1180 = tpu.matmul %1159, %28, %cst_293 {dimension_numbers = #tpu.dot_dimension_numbers<[1], [0], [0], [1], [0, 0, 1, 1], [], []>} : vector<1x32xf32>, vector<32x32xf32>, vector<1x32xf32> -> vector<1x32xf32>
    %1181 = arith.addf %1180, %34 : vector<1x32xf32>
    %cst_294 = arith.constant dense<0.000000e+00> : vector<1x32xf32>
    %1182 = tpu.matmul %1159, %30, %cst_294 {dimension_numbers = #tpu.dot_dimension_numbers<[1], [0], [0], [1], [0, 0, 1, 1], [], []>} : vector<1x32xf32>, vector<32x32xf32>, vector<1x32xf32> -> vector<1x32xf32>
    %1183 = arith.addf %1182, %36 : vector<1x32xf32>
    %cst_295 = arith.constant dense<0.000000e+00> : vector<1x32xf32>
    %1184 = tpu.matmul %1159, %32, %cst_295 {dimension_numbers = #tpu.dot_dimension_numbers<[1], [0], [0], [1], [0, 0, 1, 1], [], []>} : vector<1x32xf32>, vector<32x32xf32>, vector<1x32xf32> -> vector<1x32xf32>
    %1185 = arith.addf %1184, %38 : vector<1x32xf32>
    %1186 = arith.addf %1173, %1181 : vector<1x32xf32>
    %1187 = arith.negf %1186 : vector<1x32xf32>
    %1188 = math.exp %1187 : vector<1x32xf32>
    %cst_296 = arith.constant 1.000000e+00 : f32
    %1189 = vector.broadcast %cst_296 : f32 to vector<1x32xf32>
    %1190 = arith.addf %1189, %1188 : vector<1x32xf32>
    %1191 = arith.divf %1189, %1190 : vector<1x32xf32>
    %1192 = arith.addf %1176, %1183 : vector<1x32xf32>
    %1193 = arith.negf %1192 : vector<1x32xf32>
    %1194 = math.exp %1193 : vector<1x32xf32>
    %cst_297 = arith.constant 1.000000e+00 : f32
    %1195 = vector.broadcast %cst_297 : f32 to vector<1x32xf32>
    %1196 = arith.addf %1195, %1194 : vector<1x32xf32>
    %1197 = arith.divf %1195, %1196 : vector<1x32xf32>
    %1198 = arith.mulf %1191, %1185 : vector<1x32xf32>
    %1199 = arith.addf %1179, %1198 : vector<1x32xf32>
    %1200 = math.tanh %1199 : vector<1x32xf32>
    %cst_298 = arith.constant 1.000000e+00 : f32
    %1201 = vector.broadcast %cst_298 : f32 to vector<1x32xf32>
    %1202 = arith.subf %1201, %1197 : vector<1x32xf32>
    %1203 = arith.mulf %1202, %1200 : vector<1x32xf32>
    %1204 = arith.mulf %1197, %1159 : vector<1x32xf32>
    %1205 = arith.addf %1203, %1204 : vector<1x32xf32>
    %c4_i32_299 = arith.constant 4 : i32
    %1206 = arith.cmpi sgt, %954, %c4_i32_299 : i32
    %1207 = arith.select %1206, %1205, %1159 : vector<1x32xf32>
    %c3_i32_300 = arith.constant 3 : i32
    %1208 = arith.cmpi sgt, %954, %c3_i32_300 : i32
    %1209 = arith.select %1208, %1205, %1159 : vector<1x32xf32>
    %1210 = arith.select %2, %1207, %1209 : vector<1x32xi1>, vector<1x32xf32>
    %c4_i32_301 = arith.constant 4 : i32
    %1211 = vector.broadcast %c4_i32_301 : i32 to vector<8x32xi32>
    %1212 = arith.cmpi eq, %6, %1211 : vector<8x32xi32>
    %1213 = arith.andi %1212, %9 : vector<8x32xi1>
    %c3_i32_302 = arith.constant 3 : i32
    %1214 = vector.broadcast %c3_i32_302 : i32 to vector<8x32xi32>
    %1215 = arith.cmpi eq, %6, %1214 : vector<8x32xi32>
    %cst_303 = arith.constant dense<true> : vector<8x32xi1>
    %1216 = arith.xori %9, %cst_303 : vector<8x32xi1>
    %1217 = arith.andi %1215, %1216 : vector<8x32xi1>
    %1218 = arith.ori %1213, %1217 : vector<8x32xi1>
    %1219 = vector.shape_cast %1210 : vector<1x32xf32> to vector<1x32xf32>
    %1220 = vector.broadcast %1219 : vector<1x32xf32> to vector<8x32xf32>
    %1221 = arith.select %1218, %1220, %1170 : vector<8x32xi1>, vector<8x32xf32>
    %1222 = vector.extract_strided_slice %959 {offsets = [5, 0], sizes = [1, 32], strides = [1, 1]} : vector<8x32xf32> to vector<1x32xf32>
    %1223 = vector.extract_strided_slice %959 {offsets = [2, 0], sizes = [1, 32], strides = [1, 1]} : vector<8x32xf32> to vector<1x32xf32>
    %1224 = arith.select %2, %1222, %1223 : vector<1x32xi1>, vector<1x32xf32>
    %1225 = vector.extract_strided_slice %962 {offsets = [5, 0], sizes = [1, 32], strides = [1, 1]} : vector<8x32xf32> to vector<1x32xf32>
    %1226 = vector.extract_strided_slice %962 {offsets = [2, 0], sizes = [1, 32], strides = [1, 1]} : vector<8x32xf32> to vector<1x32xf32>
    %1227 = arith.select %2, %1225, %1226 : vector<1x32xi1>, vector<1x32xf32>
    %1228 = vector.extract_strided_slice %965 {offsets = [5, 0], sizes = [1, 32], strides = [1, 1]} : vector<8x32xf32> to vector<1x32xf32>
    %1229 = vector.extract_strided_slice %965 {offsets = [2, 0], sizes = [1, 32], strides = [1, 1]} : vector<8x32xf32> to vector<1x32xf32>
    %1230 = arith.select %2, %1228, %1229 : vector<1x32xi1>, vector<1x32xf32>
    %cst_304 = arith.constant dense<0.000000e+00> : vector<1x32xf32>
    %1231 = tpu.matmul %1210, %28, %cst_304 {dimension_numbers = #tpu.dot_dimension_numbers<[1], [0], [0], [1], [0, 0, 1, 1], [], []>} : vector<1x32xf32>, vector<32x32xf32>, vector<1x32xf32> -> vector<1x32xf32>
    %1232 = arith.addf %1231, %34 : vector<1x32xf32>
    %cst_305 = arith.constant dense<0.000000e+00> : vector<1x32xf32>
    %1233 = tpu.matmul %1210, %30, %cst_305 {dimension_numbers = #tpu.dot_dimension_numbers<[1], [0], [0], [1], [0, 0, 1, 1], [], []>} : vector<1x32xf32>, vector<32x32xf32>, vector<1x32xf32> -> vector<1x32xf32>
    %1234 = arith.addf %1233, %36 : vector<1x32xf32>
    %cst_306 = arith.constant dense<0.000000e+00> : vector<1x32xf32>
    %1235 = tpu.matmul %1210, %32, %cst_306 {dimension_numbers = #tpu.dot_dimension_numbers<[1], [0], [0], [1], [0, 0, 1, 1], [], []>} : vector<1x32xf32>, vector<32x32xf32>, vector<1x32xf32> -> vector<1x32xf32>
    %1236 = arith.addf %1235, %38 : vector<1x32xf32>
    %1237 = arith.addf %1224, %1232 : vector<1x32xf32>
    %1238 = arith.negf %1237 : vector<1x32xf32>
    %1239 = math.exp %1238 : vector<1x32xf32>
    %cst_307 = arith.constant 1.000000e+00 : f32
    %1240 = vector.broadcast %cst_307 : f32 to vector<1x32xf32>
    %1241 = arith.addf %1240, %1239 : vector<1x32xf32>
    %1242 = arith.divf %1240, %1241 : vector<1x32xf32>
    %1243 = arith.addf %1227, %1234 : vector<1x32xf32>
    %1244 = arith.negf %1243 : vector<1x32xf32>
    %1245 = math.exp %1244 : vector<1x32xf32>
    %cst_308 = arith.constant 1.000000e+00 : f32
    %1246 = vector.broadcast %cst_308 : f32 to vector<1x32xf32>
    %1247 = arith.addf %1246, %1245 : vector<1x32xf32>
    %1248 = arith.divf %1246, %1247 : vector<1x32xf32>
    %1249 = arith.mulf %1242, %1236 : vector<1x32xf32>
    %1250 = arith.addf %1230, %1249 : vector<1x32xf32>
    %1251 = math.tanh %1250 : vector<1x32xf32>
    %cst_309 = arith.constant 1.000000e+00 : f32
    %1252 = vector.broadcast %cst_309 : f32 to vector<1x32xf32>
    %1253 = arith.subf %1252, %1248 : vector<1x32xf32>
    %1254 = arith.mulf %1253, %1251 : vector<1x32xf32>
    %1255 = arith.mulf %1248, %1210 : vector<1x32xf32>
    %1256 = arith.addf %1254, %1255 : vector<1x32xf32>
    %c5_i32_310 = arith.constant 5 : i32
    %1257 = arith.cmpi sgt, %954, %c5_i32_310 : i32
    %1258 = arith.select %1257, %1256, %1210 : vector<1x32xf32>
    %c2_i32_311 = arith.constant 2 : i32
    %1259 = arith.cmpi sgt, %954, %c2_i32_311 : i32
    %1260 = arith.select %1259, %1256, %1210 : vector<1x32xf32>
    %1261 = arith.select %2, %1258, %1260 : vector<1x32xi1>, vector<1x32xf32>
    %c5_i32_312 = arith.constant 5 : i32
    %1262 = vector.broadcast %c5_i32_312 : i32 to vector<8x32xi32>
    %1263 = arith.cmpi eq, %6, %1262 : vector<8x32xi32>
    %1264 = arith.andi %1263, %9 : vector<8x32xi1>
    %c2_i32_313 = arith.constant 2 : i32
    %1265 = vector.broadcast %c2_i32_313 : i32 to vector<8x32xi32>
    %1266 = arith.cmpi eq, %6, %1265 : vector<8x32xi32>
    %cst_314 = arith.constant dense<true> : vector<8x32xi1>
    %1267 = arith.xori %9, %cst_314 : vector<8x32xi1>
    %1268 = arith.andi %1266, %1267 : vector<8x32xi1>
    %1269 = arith.ori %1264, %1268 : vector<8x32xi1>
    %1270 = vector.shape_cast %1261 : vector<1x32xf32> to vector<1x32xf32>
    %1271 = vector.broadcast %1270 : vector<1x32xf32> to vector<8x32xf32>
    %1272 = arith.select %1269, %1271, %1221 : vector<8x32xi1>, vector<8x32xf32>
    %1273 = vector.extract_strided_slice %959 {offsets = [6, 0], sizes = [1, 32], strides = [1, 1]} : vector<8x32xf32> to vector<1x32xf32>
    %1274 = vector.extract_strided_slice %959 {offsets = [1, 0], sizes = [1, 32], strides = [1, 1]} : vector<8x32xf32> to vector<1x32xf32>
    %1275 = arith.select %2, %1273, %1274 : vector<1x32xi1>, vector<1x32xf32>
    %1276 = vector.extract_strided_slice %962 {offsets = [6, 0], sizes = [1, 32], strides = [1, 1]} : vector<8x32xf32> to vector<1x32xf32>
    %1277 = vector.extract_strided_slice %962 {offsets = [1, 0], sizes = [1, 32], strides = [1, 1]} : vector<8x32xf32> to vector<1x32xf32>
    %1278 = arith.select %2, %1276, %1277 : vector<1x32xi1>, vector<1x32xf32>
    %1279 = vector.extract_strided_slice %965 {offsets = [6, 0], sizes = [1, 32], strides = [1, 1]} : vector<8x32xf32> to vector<1x32xf32>
    %1280 = vector.extract_strided_slice %965 {offsets = [1, 0], sizes = [1, 32], strides = [1, 1]} : vector<8x32xf32> to vector<1x32xf32>
    %1281 = arith.select %2, %1279, %1280 : vector<1x32xi1>, vector<1x32xf32>
    %cst_315 = arith.constant dense<0.000000e+00> : vector<1x32xf32>
    %1282 = tpu.matmul %1261, %28, %cst_315 {dimension_numbers = #tpu.dot_dimension_numbers<[1], [0], [0], [1], [0, 0, 1, 1], [], []>} : vector<1x32xf32>, vector<32x32xf32>, vector<1x32xf32> -> vector<1x32xf32>
    %1283 = arith.addf %1282, %34 : vector<1x32xf32>
    %cst_316 = arith.constant dense<0.000000e+00> : vector<1x32xf32>
    %1284 = tpu.matmul %1261, %30, %cst_316 {dimension_numbers = #tpu.dot_dimension_numbers<[1], [0], [0], [1], [0, 0, 1, 1], [], []>} : vector<1x32xf32>, vector<32x32xf32>, vector<1x32xf32> -> vector<1x32xf32>
    %1285 = arith.addf %1284, %36 : vector<1x32xf32>
    %cst_317 = arith.constant dense<0.000000e+00> : vector<1x32xf32>
    %1286 = tpu.matmul %1261, %32, %cst_317 {dimension_numbers = #tpu.dot_dimension_numbers<[1], [0], [0], [1], [0, 0, 1, 1], [], []>} : vector<1x32xf32>, vector<32x32xf32>, vector<1x32xf32> -> vector<1x32xf32>
    %1287 = arith.addf %1286, %38 : vector<1x32xf32>
    %1288 = arith.addf %1275, %1283 : vector<1x32xf32>
    %1289 = arith.negf %1288 : vector<1x32xf32>
    %1290 = math.exp %1289 : vector<1x32xf32>
    %cst_318 = arith.constant 1.000000e+00 : f32
    %1291 = vector.broadcast %cst_318 : f32 to vector<1x32xf32>
    %1292 = arith.addf %1291, %1290 : vector<1x32xf32>
    %1293 = arith.divf %1291, %1292 : vector<1x32xf32>
    %1294 = arith.addf %1278, %1285 : vector<1x32xf32>
    %1295 = arith.negf %1294 : vector<1x32xf32>
    %1296 = math.exp %1295 : vector<1x32xf32>
    %cst_319 = arith.constant 1.000000e+00 : f32
    %1297 = vector.broadcast %cst_319 : f32 to vector<1x32xf32>
    %1298 = arith.addf %1297, %1296 : vector<1x32xf32>
    %1299 = arith.divf %1297, %1298 : vector<1x32xf32>
    %1300 = arith.mulf %1293, %1287 : vector<1x32xf32>
    %1301 = arith.addf %1281, %1300 : vector<1x32xf32>
    %1302 = math.tanh %1301 : vector<1x32xf32>
    %cst_320 = arith.constant 1.000000e+00 : f32
    %1303 = vector.broadcast %cst_320 : f32 to vector<1x32xf32>
    %1304 = arith.subf %1303, %1299 : vector<1x32xf32>
    %1305 = arith.mulf %1304, %1302 : vector<1x32xf32>
    %1306 = arith.mulf %1299, %1261 : vector<1x32xf32>
    %1307 = arith.addf %1305, %1306 : vector<1x32xf32>
    %c6_i32_321 = arith.constant 6 : i32
    %1308 = arith.cmpi sgt, %954, %c6_i32_321 : i32
    %1309 = arith.select %1308, %1307, %1261 : vector<1x32xf32>
    %c1_i32_322 = arith.constant 1 : i32
    %1310 = arith.cmpi sgt, %954, %c1_i32_322 : i32
    %1311 = arith.select %1310, %1307, %1261 : vector<1x32xf32>
    %1312 = arith.select %2, %1309, %1311 : vector<1x32xi1>, vector<1x32xf32>
    %c6_i32_323 = arith.constant 6 : i32
    %1313 = vector.broadcast %c6_i32_323 : i32 to vector<8x32xi32>
    %1314 = arith.cmpi eq, %6, %1313 : vector<8x32xi32>
    %1315 = arith.andi %1314, %9 : vector<8x32xi1>
    %c1_i32_324 = arith.constant 1 : i32
    %1316 = vector.broadcast %c1_i32_324 : i32 to vector<8x32xi32>
    %1317 = arith.cmpi eq, %6, %1316 : vector<8x32xi32>
    %cst_325 = arith.constant dense<true> : vector<8x32xi1>
    %1318 = arith.xori %9, %cst_325 : vector<8x32xi1>
    %1319 = arith.andi %1317, %1318 : vector<8x32xi1>
    %1320 = arith.ori %1315, %1319 : vector<8x32xi1>
    %1321 = vector.shape_cast %1312 : vector<1x32xf32> to vector<1x32xf32>
    %1322 = vector.broadcast %1321 : vector<1x32xf32> to vector<8x32xf32>
    %1323 = arith.select %1320, %1322, %1272 : vector<8x32xi1>, vector<8x32xf32>
    %1324 = vector.extract_strided_slice %959 {offsets = [7, 0], sizes = [1, 32], strides = [1, 1]} : vector<8x32xf32> to vector<1x32xf32>
    %1325 = vector.extract_strided_slice %959 {offsets = [0, 0], sizes = [1, 32], strides = [1, 1]} : vector<8x32xf32> to vector<1x32xf32>
    %1326 = arith.select %2, %1324, %1325 : vector<1x32xi1>, vector<1x32xf32>
    %1327 = vector.extract_strided_slice %962 {offsets = [7, 0], sizes = [1, 32], strides = [1, 1]} : vector<8x32xf32> to vector<1x32xf32>
    %1328 = vector.extract_strided_slice %962 {offsets = [0, 0], sizes = [1, 32], strides = [1, 1]} : vector<8x32xf32> to vector<1x32xf32>
    %1329 = arith.select %2, %1327, %1328 : vector<1x32xi1>, vector<1x32xf32>
    %1330 = vector.extract_strided_slice %965 {offsets = [7, 0], sizes = [1, 32], strides = [1, 1]} : vector<8x32xf32> to vector<1x32xf32>
    %1331 = vector.extract_strided_slice %965 {offsets = [0, 0], sizes = [1, 32], strides = [1, 1]} : vector<8x32xf32> to vector<1x32xf32>
    %1332 = arith.select %2, %1330, %1331 : vector<1x32xi1>, vector<1x32xf32>
    %cst_326 = arith.constant dense<0.000000e+00> : vector<1x32xf32>
    %1333 = tpu.matmul %1312, %28, %cst_326 {dimension_numbers = #tpu.dot_dimension_numbers<[1], [0], [0], [1], [0, 0, 1, 1], [], []>} : vector<1x32xf32>, vector<32x32xf32>, vector<1x32xf32> -> vector<1x32xf32>
    %1334 = arith.addf %1333, %34 : vector<1x32xf32>
    %cst_327 = arith.constant dense<0.000000e+00> : vector<1x32xf32>
    %1335 = tpu.matmul %1312, %30, %cst_327 {dimension_numbers = #tpu.dot_dimension_numbers<[1], [0], [0], [1], [0, 0, 1, 1], [], []>} : vector<1x32xf32>, vector<32x32xf32>, vector<1x32xf32> -> vector<1x32xf32>
    %1336 = arith.addf %1335, %36 : vector<1x32xf32>
    %cst_328 = arith.constant dense<0.000000e+00> : vector<1x32xf32>
    %1337 = tpu.matmul %1312, %32, %cst_328 {dimension_numbers = #tpu.dot_dimension_numbers<[1], [0], [0], [1], [0, 0, 1, 1], [], []>} : vector<1x32xf32>, vector<32x32xf32>, vector<1x32xf32> -> vector<1x32xf32>
    %1338 = arith.addf %1337, %38 : vector<1x32xf32>
    %1339 = arith.addf %1326, %1334 : vector<1x32xf32>
    %1340 = arith.negf %1339 : vector<1x32xf32>
    %1341 = math.exp %1340 : vector<1x32xf32>
    %cst_329 = arith.constant 1.000000e+00 : f32
    %1342 = vector.broadcast %cst_329 : f32 to vector<1x32xf32>
    %1343 = arith.addf %1342, %1341 : vector<1x32xf32>
    %1344 = arith.divf %1342, %1343 : vector<1x32xf32>
    %1345 = arith.addf %1329, %1336 : vector<1x32xf32>
    %1346 = arith.negf %1345 : vector<1x32xf32>
    %1347 = math.exp %1346 : vector<1x32xf32>
    %cst_330 = arith.constant 1.000000e+00 : f32
    %1348 = vector.broadcast %cst_330 : f32 to vector<1x32xf32>
    %1349 = arith.addf %1348, %1347 : vector<1x32xf32>
    %1350 = arith.divf %1348, %1349 : vector<1x32xf32>
    %1351 = arith.mulf %1344, %1338 : vector<1x32xf32>
    %1352 = arith.addf %1332, %1351 : vector<1x32xf32>
    %1353 = math.tanh %1352 : vector<1x32xf32>
    %cst_331 = arith.constant 1.000000e+00 : f32
    %1354 = vector.broadcast %cst_331 : f32 to vector<1x32xf32>
    %1355 = arith.subf %1354, %1350 : vector<1x32xf32>
    %1356 = arith.mulf %1355, %1353 : vector<1x32xf32>
    %1357 = arith.mulf %1350, %1312 : vector<1x32xf32>
    %1358 = arith.addf %1356, %1357 : vector<1x32xf32>
    %c7_i32_332 = arith.constant 7 : i32
    %1359 = arith.cmpi sgt, %954, %c7_i32_332 : i32
    %1360 = arith.select %1359, %1358, %1312 : vector<1x32xf32>
    %c0_i32_333 = arith.constant 0 : i32
    %1361 = arith.cmpi sgt, %954, %c0_i32_333 : i32
    %1362 = arith.select %1361, %1358, %1312 : vector<1x32xf32>
    %1363 = arith.select %2, %1360, %1362 : vector<1x32xi1>, vector<1x32xf32>
    %c7_i32_334 = arith.constant 7 : i32
    %1364 = vector.broadcast %c7_i32_334 : i32 to vector<8x32xi32>
    %1365 = arith.cmpi eq, %6, %1364 : vector<8x32xi32>
    %1366 = arith.andi %1365, %9 : vector<8x32xi1>
    %c0_i32_335 = arith.constant 0 : i32
    %1367 = vector.broadcast %c0_i32_335 : i32 to vector<8x32xi32>
    %1368 = arith.cmpi eq, %6, %1367 : vector<8x32xi32>
    %cst_336 = arith.constant dense<true> : vector<8x32xi1>
    %1369 = arith.xori %9, %cst_336 : vector<8x32xi1>
    %1370 = arith.andi %1368, %1369 : vector<8x32xi1>
    %1371 = arith.ori %1366, %1370 : vector<8x32xi1>
    %1372 = vector.shape_cast %1363 : vector<1x32xf32> to vector<1x32xf32>
    %1373 = vector.broadcast %1372 : vector<1x32xf32> to vector<8x32xf32>
    %1374 = arith.select %1371, %1373, %1323 : vector<8x32xi1>, vector<8x32xf32>
    %cst_337 = arith.constant dense<0.000000e+00> : vector<8x32xf32>
    %1375 = tpu.matmul %1374, %39, %cst_337 {dimension_numbers = #tpu.dot_dimension_numbers<[1], [0], [0], [1], [0, 0, 1, 1], [], []>} : vector<8x32xf32>, vector<32x32xf32>, vector<8x32xf32> -> vector<8x32xf32>
    %1376 = vector.broadcast %40 : vector<1x32xf32> to vector<8x32xf32>
    %1377 = arith.addf %1375, %1376 : vector<8x32xf32>
    %1378 = math.tanh %1377 : vector<8x32xf32>
    %cst_338 = arith.constant dense<0.000000e+00> : vector<8x1xf32>
    %1379 = tpu.matmul %1378, %41, %cst_338 {dimension_numbers = #tpu.dot_dimension_numbers<[1], [0], [0], [1], [0, 0, 1, 1], [], []>} : vector<8x32xf32>, vector<32x1xf32>, vector<8x1xf32> -> vector<8x1xf32>
    %1380 = tpu.iota {dimensions = array<i32: 0>} : vector<8x1xi32>
    %1381 = vector.broadcast %954 : i32 to vector<8x1xi32>
    %1382 = arith.cmpi slt, %1380, %1381 : vector<8x1xi32>
    %cst_339 = arith.constant -1.000000e+30 : f32
    %1383 = vector.broadcast %cst_339 : f32 to vector<8x1xf32>
    %1384 = arith.select %1382, %1379, %1383 : vector<8x1xi1>, vector<8x1xf32>
    %1385 = vector.shape_cast %1384 : vector<8x1xf32> to vector<1x8x1xf32>
    %cst_340 = arith.constant dense<0xFF800000> : vector<1xf32>
    %1386 = vector.multi_reduction <maximumf>, %1385, %cst_340 [1, 2] : vector<1x8x1xf32> to vector<1xf32>
    %1387 = vector.shape_cast %1386 : vector<1xf32> to vector<1x1x1xf32>
    %1388 = vector.extract %1387[0, 0, 0] : f32 from vector<1x1x1xf32>
    %1389 = vector.broadcast %1388 : f32 to vector<1x1xf32>
    %1390 = vector.broadcast %1389 : vector<1x1xf32> to vector<8x1xf32>
    %1391 = arith.subf %1384, %1390 : vector<8x1xf32>
    %1392 = math.exp %1391 : vector<8x1xf32>
    %1393 = vector.shape_cast %1392 : vector<8x1xf32> to vector<1x8x1xf32>
    %cst_341 = arith.constant dense<0.000000e+00> : vector<1xf32>
    %1394 = vector.multi_reduction <add>, %1393, %cst_341 [1, 2] : vector<1x8x1xf32> to vector<1xf32>
    %1395 = vector.shape_cast %1394 : vector<1xf32> to vector<1x1x1xf32>
    %1396 = vector.extract %1395[0, 0, 0] : f32 from vector<1x1x1xf32>
    %1397 = vector.broadcast %1396 : f32 to vector<1x1xf32>
    %1398 = vector.broadcast %1397 : vector<1x1xf32> to vector<8x1xf32>
    %1399 = arith.divf %1392, %1398 : vector<8x1xf32>
    %1400 = vector.broadcast %1399 : vector<8x1xf32> to vector<8x32xf32>
    %1401 = arith.mulf %1400, %1374 : vector<8x32xf32>
    %cst_342 = arith.constant dense<0.000000e+00> : vector<32xf32>
    %1402 = vector.multi_reduction <add>, %1401, %cst_342 [0] : vector<8x32xf32> to vector<32xf32>
    %1403 = vector.shape_cast %1402 : vector<32xf32> to vector<1x32xf32>
    %c2_i32_343 = arith.constant 2 : i32
    %1404 = vector.broadcast %c2_i32_343 : i32 to vector<4x32xi32>
    %1405 = arith.cmpi eq, %14, %1404 : vector<4x32xi32>
    %1406 = vector.shape_cast %1403 : vector<1x32xf32> to vector<1x32xf32>
    %1407 = vector.broadcast %1406 : vector<1x32xf32> to vector<4x32xf32>
    %1408 = arith.select %1405, %1407, %953 : vector<4x32xi1>, vector<4x32xf32>
    %c3 = arith.constant 3 : index
    %1409 = memref.load %arg1[%c3] : memref<4xi32, #tpu.memory_space<smem>>
    %c3_344 = arith.constant 3 : index
    %c0_345 = arith.constant 0 : index
    %c0_346 = arith.constant 0 : index
    %1410 = vector.load %arg2[%c3_344, %c0_345, %c0_346] : memref<4x8x32xf32, #tpu.memory_space<vmem>>, vector<1x8x32xf32>
    %1411 = vector.shape_cast %1410 : vector<1x8x32xf32> to vector<8x32xf32>
    %cst_347 = arith.constant dense<0.000000e+00> : vector<8x32xf32>
    %1412 = tpu.matmul %1411, %16, %cst_347 {dimension_numbers = #tpu.dot_dimension_numbers<[1], [0], [0], [1], [0, 0, 1, 1], [], []>} : vector<8x32xf32>, vector<32x32xf32>, vector<8x32xf32> -> vector<8x32xf32>
    %1413 = vector.broadcast %22 : vector<1x32xf32> to vector<8x32xf32>
    %1414 = arith.addf %1412, %1413 : vector<8x32xf32>
    %cst_348 = arith.constant dense<0.000000e+00> : vector<8x32xf32>
    %1415 = tpu.matmul %1411, %18, %cst_348 {dimension_numbers = #tpu.dot_dimension_numbers<[1], [0], [0], [1], [0, 0, 1, 1], [], []>} : vector<8x32xf32>, vector<32x32xf32>, vector<8x32xf32> -> vector<8x32xf32>
    %1416 = vector.broadcast %24 : vector<1x32xf32> to vector<8x32xf32>
    %1417 = arith.addf %1415, %1416 : vector<8x32xf32>
    %cst_349 = arith.constant dense<0.000000e+00> : vector<8x32xf32>
    %1418 = tpu.matmul %1411, %20, %cst_349 {dimension_numbers = #tpu.dot_dimension_numbers<[1], [0], [0], [1], [0, 0, 1, 1], [], []>} : vector<8x32xf32>, vector<32x32xf32>, vector<8x32xf32> -> vector<8x32xf32>
    %1419 = vector.broadcast %26 : vector<1x32xf32> to vector<8x32xf32>
    %1420 = arith.addf %1418, %1419 : vector<8x32xf32>
    %cst_350 = arith.constant 0.000000e+00 : f32
    %1421 = vector.broadcast %cst_350 : f32 to vector<8x32xf32>
    %1422 = vector.extract_strided_slice %1414 {offsets = [0, 0], sizes = [1, 32], strides = [1, 1]} : vector<8x32xf32> to vector<1x32xf32>
    %1423 = vector.extract_strided_slice %1414 {offsets = [7, 0], sizes = [1, 32], strides = [1, 1]} : vector<8x32xf32> to vector<1x32xf32>
    %1424 = arith.select %2, %1422, %1423 : vector<1x32xi1>, vector<1x32xf32>
    %1425 = vector.extract_strided_slice %1417 {offsets = [0, 0], sizes = [1, 32], strides = [1, 1]} : vector<8x32xf32> to vector<1x32xf32>
    %1426 = vector.extract_strided_slice %1417 {offsets = [7, 0], sizes = [1, 32], strides = [1, 1]} : vector<8x32xf32> to vector<1x32xf32>
    %1427 = arith.select %2, %1425, %1426 : vector<1x32xi1>, vector<1x32xf32>
    %1428 = vector.extract_strided_slice %1420 {offsets = [0, 0], sizes = [1, 32], strides = [1, 1]} : vector<8x32xf32> to vector<1x32xf32>
    %1429 = vector.extract_strided_slice %1420 {offsets = [7, 0], sizes = [1, 32], strides = [1, 1]} : vector<8x32xf32> to vector<1x32xf32>
    %1430 = arith.select %2, %1428, %1429 : vector<1x32xi1>, vector<1x32xf32>
    %cst_351 = arith.constant dense<0.000000e+00> : vector<1x32xf32>
    %1431 = tpu.matmul %1363, %28, %cst_351 {dimension_numbers = #tpu.dot_dimension_numbers<[1], [0], [0], [1], [0, 0, 1, 1], [], []>} : vector<1x32xf32>, vector<32x32xf32>, vector<1x32xf32> -> vector<1x32xf32>
    %1432 = arith.addf %1431, %34 : vector<1x32xf32>
    %cst_352 = arith.constant dense<0.000000e+00> : vector<1x32xf32>
    %1433 = tpu.matmul %1363, %30, %cst_352 {dimension_numbers = #tpu.dot_dimension_numbers<[1], [0], [0], [1], [0, 0, 1, 1], [], []>} : vector<1x32xf32>, vector<32x32xf32>, vector<1x32xf32> -> vector<1x32xf32>
    %1434 = arith.addf %1433, %36 : vector<1x32xf32>
    %cst_353 = arith.constant dense<0.000000e+00> : vector<1x32xf32>
    %1435 = tpu.matmul %1363, %32, %cst_353 {dimension_numbers = #tpu.dot_dimension_numbers<[1], [0], [0], [1], [0, 0, 1, 1], [], []>} : vector<1x32xf32>, vector<32x32xf32>, vector<1x32xf32> -> vector<1x32xf32>
    %1436 = arith.addf %1435, %38 : vector<1x32xf32>
    %1437 = arith.addf %1424, %1432 : vector<1x32xf32>
    %1438 = arith.negf %1437 : vector<1x32xf32>
    %1439 = math.exp %1438 : vector<1x32xf32>
    %cst_354 = arith.constant 1.000000e+00 : f32
    %1440 = vector.broadcast %cst_354 : f32 to vector<1x32xf32>
    %1441 = arith.addf %1440, %1439 : vector<1x32xf32>
    %1442 = arith.divf %1440, %1441 : vector<1x32xf32>
    %1443 = arith.addf %1427, %1434 : vector<1x32xf32>
    %1444 = arith.negf %1443 : vector<1x32xf32>
    %1445 = math.exp %1444 : vector<1x32xf32>
    %cst_355 = arith.constant 1.000000e+00 : f32
    %1446 = vector.broadcast %cst_355 : f32 to vector<1x32xf32>
    %1447 = arith.addf %1446, %1445 : vector<1x32xf32>
    %1448 = arith.divf %1446, %1447 : vector<1x32xf32>
    %1449 = arith.mulf %1442, %1436 : vector<1x32xf32>
    %1450 = arith.addf %1430, %1449 : vector<1x32xf32>
    %1451 = math.tanh %1450 : vector<1x32xf32>
    %cst_356 = arith.constant 1.000000e+00 : f32
    %1452 = vector.broadcast %cst_356 : f32 to vector<1x32xf32>
    %1453 = arith.subf %1452, %1448 : vector<1x32xf32>
    %1454 = arith.mulf %1453, %1451 : vector<1x32xf32>
    %1455 = arith.mulf %1448, %1363 : vector<1x32xf32>
    %1456 = arith.addf %1454, %1455 : vector<1x32xf32>
    %c0_i32_357 = arith.constant 0 : i32
    %1457 = arith.cmpi sgt, %1409, %c0_i32_357 : i32
    %1458 = arith.select %1457, %1456, %1363 : vector<1x32xf32>
    %c7_i32_358 = arith.constant 7 : i32
    %1459 = arith.cmpi sgt, %1409, %c7_i32_358 : i32
    %1460 = arith.select %1459, %1456, %1363 : vector<1x32xf32>
    %1461 = arith.select %2, %1458, %1460 : vector<1x32xi1>, vector<1x32xf32>
    %c0_i32_359 = arith.constant 0 : i32
    %1462 = vector.broadcast %c0_i32_359 : i32 to vector<8x32xi32>
    %1463 = arith.cmpi eq, %6, %1462 : vector<8x32xi32>
    %1464 = arith.andi %1463, %9 : vector<8x32xi1>
    %c7_i32_360 = arith.constant 7 : i32
    %1465 = vector.broadcast %c7_i32_360 : i32 to vector<8x32xi32>
    %1466 = arith.cmpi eq, %6, %1465 : vector<8x32xi32>
    %cst_361 = arith.constant dense<true> : vector<8x32xi1>
    %1467 = arith.xori %9, %cst_361 : vector<8x32xi1>
    %1468 = arith.andi %1466, %1467 : vector<8x32xi1>
    %1469 = arith.ori %1464, %1468 : vector<8x32xi1>
    %1470 = vector.shape_cast %1461 : vector<1x32xf32> to vector<1x32xf32>
    %1471 = vector.broadcast %1470 : vector<1x32xf32> to vector<8x32xf32>
    %1472 = arith.select %1469, %1471, %1421 : vector<8x32xi1>, vector<8x32xf32>
    %1473 = vector.extract_strided_slice %1414 {offsets = [1, 0], sizes = [1, 32], strides = [1, 1]} : vector<8x32xf32> to vector<1x32xf32>
    %1474 = vector.extract_strided_slice %1414 {offsets = [6, 0], sizes = [1, 32], strides = [1, 1]} : vector<8x32xf32> to vector<1x32xf32>
    %1475 = arith.select %2, %1473, %1474 : vector<1x32xi1>, vector<1x32xf32>
    %1476 = vector.extract_strided_slice %1417 {offsets = [1, 0], sizes = [1, 32], strides = [1, 1]} : vector<8x32xf32> to vector<1x32xf32>
    %1477 = vector.extract_strided_slice %1417 {offsets = [6, 0], sizes = [1, 32], strides = [1, 1]} : vector<8x32xf32> to vector<1x32xf32>
    %1478 = arith.select %2, %1476, %1477 : vector<1x32xi1>, vector<1x32xf32>
    %1479 = vector.extract_strided_slice %1420 {offsets = [1, 0], sizes = [1, 32], strides = [1, 1]} : vector<8x32xf32> to vector<1x32xf32>
    %1480 = vector.extract_strided_slice %1420 {offsets = [6, 0], sizes = [1, 32], strides = [1, 1]} : vector<8x32xf32> to vector<1x32xf32>
    %1481 = arith.select %2, %1479, %1480 : vector<1x32xi1>, vector<1x32xf32>
    %cst_362 = arith.constant dense<0.000000e+00> : vector<1x32xf32>
    %1482 = tpu.matmul %1461, %28, %cst_362 {dimension_numbers = #tpu.dot_dimension_numbers<[1], [0], [0], [1], [0, 0, 1, 1], [], []>} : vector<1x32xf32>, vector<32x32xf32>, vector<1x32xf32> -> vector<1x32xf32>
    %1483 = arith.addf %1482, %34 : vector<1x32xf32>
    %cst_363 = arith.constant dense<0.000000e+00> : vector<1x32xf32>
    %1484 = tpu.matmul %1461, %30, %cst_363 {dimension_numbers = #tpu.dot_dimension_numbers<[1], [0], [0], [1], [0, 0, 1, 1], [], []>} : vector<1x32xf32>, vector<32x32xf32>, vector<1x32xf32> -> vector<1x32xf32>
    %1485 = arith.addf %1484, %36 : vector<1x32xf32>
    %cst_364 = arith.constant dense<0.000000e+00> : vector<1x32xf32>
    %1486 = tpu.matmul %1461, %32, %cst_364 {dimension_numbers = #tpu.dot_dimension_numbers<[1], [0], [0], [1], [0, 0, 1, 1], [], []>} : vector<1x32xf32>, vector<32x32xf32>, vector<1x32xf32> -> vector<1x32xf32>
    %1487 = arith.addf %1486, %38 : vector<1x32xf32>
    %1488 = arith.addf %1475, %1483 : vector<1x32xf32>
    %1489 = arith.negf %1488 : vector<1x32xf32>
    %1490 = math.exp %1489 : vector<1x32xf32>
    %cst_365 = arith.constant 1.000000e+00 : f32
    %1491 = vector.broadcast %cst_365 : f32 to vector<1x32xf32>
    %1492 = arith.addf %1491, %1490 : vector<1x32xf32>
    %1493 = arith.divf %1491, %1492 : vector<1x32xf32>
    %1494 = arith.addf %1478, %1485 : vector<1x32xf32>
    %1495 = arith.negf %1494 : vector<1x32xf32>
    %1496 = math.exp %1495 : vector<1x32xf32>
    %cst_366 = arith.constant 1.000000e+00 : f32
    %1497 = vector.broadcast %cst_366 : f32 to vector<1x32xf32>
    %1498 = arith.addf %1497, %1496 : vector<1x32xf32>
    %1499 = arith.divf %1497, %1498 : vector<1x32xf32>
    %1500 = arith.mulf %1493, %1487 : vector<1x32xf32>
    %1501 = arith.addf %1481, %1500 : vector<1x32xf32>
    %1502 = math.tanh %1501 : vector<1x32xf32>
    %cst_367 = arith.constant 1.000000e+00 : f32
    %1503 = vector.broadcast %cst_367 : f32 to vector<1x32xf32>
    %1504 = arith.subf %1503, %1499 : vector<1x32xf32>
    %1505 = arith.mulf %1504, %1502 : vector<1x32xf32>
    %1506 = arith.mulf %1499, %1461 : vector<1x32xf32>
    %1507 = arith.addf %1505, %1506 : vector<1x32xf32>
    %c1_i32_368 = arith.constant 1 : i32
    %1508 = arith.cmpi sgt, %1409, %c1_i32_368 : i32
    %1509 = arith.select %1508, %1507, %1461 : vector<1x32xf32>
    %c6_i32_369 = arith.constant 6 : i32
    %1510 = arith.cmpi sgt, %1409, %c6_i32_369 : i32
    %1511 = arith.select %1510, %1507, %1461 : vector<1x32xf32>
    %1512 = arith.select %2, %1509, %1511 : vector<1x32xi1>, vector<1x32xf32>
    %c1_i32_370 = arith.constant 1 : i32
    %1513 = vector.broadcast %c1_i32_370 : i32 to vector<8x32xi32>
    %1514 = arith.cmpi eq, %6, %1513 : vector<8x32xi32>
    %1515 = arith.andi %1514, %9 : vector<8x32xi1>
    %c6_i32_371 = arith.constant 6 : i32
    %1516 = vector.broadcast %c6_i32_371 : i32 to vector<8x32xi32>
    %1517 = arith.cmpi eq, %6, %1516 : vector<8x32xi32>
    %cst_372 = arith.constant dense<true> : vector<8x32xi1>
    %1518 = arith.xori %9, %cst_372 : vector<8x32xi1>
    %1519 = arith.andi %1517, %1518 : vector<8x32xi1>
    %1520 = arith.ori %1515, %1519 : vector<8x32xi1>
    %1521 = vector.shape_cast %1512 : vector<1x32xf32> to vector<1x32xf32>
    %1522 = vector.broadcast %1521 : vector<1x32xf32> to vector<8x32xf32>
    %1523 = arith.select %1520, %1522, %1472 : vector<8x32xi1>, vector<8x32xf32>
    %1524 = vector.extract_strided_slice %1414 {offsets = [2, 0], sizes = [1, 32], strides = [1, 1]} : vector<8x32xf32> to vector<1x32xf32>
    %1525 = vector.extract_strided_slice %1414 {offsets = [5, 0], sizes = [1, 32], strides = [1, 1]} : vector<8x32xf32> to vector<1x32xf32>
    %1526 = arith.select %2, %1524, %1525 : vector<1x32xi1>, vector<1x32xf32>
    %1527 = vector.extract_strided_slice %1417 {offsets = [2, 0], sizes = [1, 32], strides = [1, 1]} : vector<8x32xf32> to vector<1x32xf32>
    %1528 = vector.extract_strided_slice %1417 {offsets = [5, 0], sizes = [1, 32], strides = [1, 1]} : vector<8x32xf32> to vector<1x32xf32>
    %1529 = arith.select %2, %1527, %1528 : vector<1x32xi1>, vector<1x32xf32>
    %1530 = vector.extract_strided_slice %1420 {offsets = [2, 0], sizes = [1, 32], strides = [1, 1]} : vector<8x32xf32> to vector<1x32xf32>
    %1531 = vector.extract_strided_slice %1420 {offsets = [5, 0], sizes = [1, 32], strides = [1, 1]} : vector<8x32xf32> to vector<1x32xf32>
    %1532 = arith.select %2, %1530, %1531 : vector<1x32xi1>, vector<1x32xf32>
    %cst_373 = arith.constant dense<0.000000e+00> : vector<1x32xf32>
    %1533 = tpu.matmul %1512, %28, %cst_373 {dimension_numbers = #tpu.dot_dimension_numbers<[1], [0], [0], [1], [0, 0, 1, 1], [], []>} : vector<1x32xf32>, vector<32x32xf32>, vector<1x32xf32> -> vector<1x32xf32>
    %1534 = arith.addf %1533, %34 : vector<1x32xf32>
    %cst_374 = arith.constant dense<0.000000e+00> : vector<1x32xf32>
    %1535 = tpu.matmul %1512, %30, %cst_374 {dimension_numbers = #tpu.dot_dimension_numbers<[1], [0], [0], [1], [0, 0, 1, 1], [], []>} : vector<1x32xf32>, vector<32x32xf32>, vector<1x32xf32> -> vector<1x32xf32>
    %1536 = arith.addf %1535, %36 : vector<1x32xf32>
    %cst_375 = arith.constant dense<0.000000e+00> : vector<1x32xf32>
    %1537 = tpu.matmul %1512, %32, %cst_375 {dimension_numbers = #tpu.dot_dimension_numbers<[1], [0], [0], [1], [0, 0, 1, 1], [], []>} : vector<1x32xf32>, vector<32x32xf32>, vector<1x32xf32> -> vector<1x32xf32>
    %1538 = arith.addf %1537, %38 : vector<1x32xf32>
    %1539 = arith.addf %1526, %1534 : vector<1x32xf32>
    %1540 = arith.negf %1539 : vector<1x32xf32>
    %1541 = math.exp %1540 : vector<1x32xf32>
    %cst_376 = arith.constant 1.000000e+00 : f32
    %1542 = vector.broadcast %cst_376 : f32 to vector<1x32xf32>
    %1543 = arith.addf %1542, %1541 : vector<1x32xf32>
    %1544 = arith.divf %1542, %1543 : vector<1x32xf32>
    %1545 = arith.addf %1529, %1536 : vector<1x32xf32>
    %1546 = arith.negf %1545 : vector<1x32xf32>
    %1547 = math.exp %1546 : vector<1x32xf32>
    %cst_377 = arith.constant 1.000000e+00 : f32
    %1548 = vector.broadcast %cst_377 : f32 to vector<1x32xf32>
    %1549 = arith.addf %1548, %1547 : vector<1x32xf32>
    %1550 = arith.divf %1548, %1549 : vector<1x32xf32>
    %1551 = arith.mulf %1544, %1538 : vector<1x32xf32>
    %1552 = arith.addf %1532, %1551 : vector<1x32xf32>
    %1553 = math.tanh %1552 : vector<1x32xf32>
    %cst_378 = arith.constant 1.000000e+00 : f32
    %1554 = vector.broadcast %cst_378 : f32 to vector<1x32xf32>
    %1555 = arith.subf %1554, %1550 : vector<1x32xf32>
    %1556 = arith.mulf %1555, %1553 : vector<1x32xf32>
    %1557 = arith.mulf %1550, %1512 : vector<1x32xf32>
    %1558 = arith.addf %1556, %1557 : vector<1x32xf32>
    %c2_i32_379 = arith.constant 2 : i32
    %1559 = arith.cmpi sgt, %1409, %c2_i32_379 : i32
    %1560 = arith.select %1559, %1558, %1512 : vector<1x32xf32>
    %c5_i32_380 = arith.constant 5 : i32
    %1561 = arith.cmpi sgt, %1409, %c5_i32_380 : i32
    %1562 = arith.select %1561, %1558, %1512 : vector<1x32xf32>
    %1563 = arith.select %2, %1560, %1562 : vector<1x32xi1>, vector<1x32xf32>
    %c2_i32_381 = arith.constant 2 : i32
    %1564 = vector.broadcast %c2_i32_381 : i32 to vector<8x32xi32>
    %1565 = arith.cmpi eq, %6, %1564 : vector<8x32xi32>
    %1566 = arith.andi %1565, %9 : vector<8x32xi1>
    %c5_i32_382 = arith.constant 5 : i32
    %1567 = vector.broadcast %c5_i32_382 : i32 to vector<8x32xi32>
    %1568 = arith.cmpi eq, %6, %1567 : vector<8x32xi32>
    %cst_383 = arith.constant dense<true> : vector<8x32xi1>
    %1569 = arith.xori %9, %cst_383 : vector<8x32xi1>
    %1570 = arith.andi %1568, %1569 : vector<8x32xi1>
    %1571 = arith.ori %1566, %1570 : vector<8x32xi1>
    %1572 = vector.shape_cast %1563 : vector<1x32xf32> to vector<1x32xf32>
    %1573 = vector.broadcast %1572 : vector<1x32xf32> to vector<8x32xf32>
    %1574 = arith.select %1571, %1573, %1523 : vector<8x32xi1>, vector<8x32xf32>
    %1575 = vector.extract_strided_slice %1414 {offsets = [3, 0], sizes = [1, 32], strides = [1, 1]} : vector<8x32xf32> to vector<1x32xf32>
    %1576 = vector.extract_strided_slice %1414 {offsets = [4, 0], sizes = [1, 32], strides = [1, 1]} : vector<8x32xf32> to vector<1x32xf32>
    %1577 = arith.select %2, %1575, %1576 : vector<1x32xi1>, vector<1x32xf32>
    %1578 = vector.extract_strided_slice %1417 {offsets = [3, 0], sizes = [1, 32], strides = [1, 1]} : vector<8x32xf32> to vector<1x32xf32>
    %1579 = vector.extract_strided_slice %1417 {offsets = [4, 0], sizes = [1, 32], strides = [1, 1]} : vector<8x32xf32> to vector<1x32xf32>
    %1580 = arith.select %2, %1578, %1579 : vector<1x32xi1>, vector<1x32xf32>
    %1581 = vector.extract_strided_slice %1420 {offsets = [3, 0], sizes = [1, 32], strides = [1, 1]} : vector<8x32xf32> to vector<1x32xf32>
    %1582 = vector.extract_strided_slice %1420 {offsets = [4, 0], sizes = [1, 32], strides = [1, 1]} : vector<8x32xf32> to vector<1x32xf32>
    %1583 = arith.select %2, %1581, %1582 : vector<1x32xi1>, vector<1x32xf32>
    %cst_384 = arith.constant dense<0.000000e+00> : vector<1x32xf32>
    %1584 = tpu.matmul %1563, %28, %cst_384 {dimension_numbers = #tpu.dot_dimension_numbers<[1], [0], [0], [1], [0, 0, 1, 1], [], []>} : vector<1x32xf32>, vector<32x32xf32>, vector<1x32xf32> -> vector<1x32xf32>
    %1585 = arith.addf %1584, %34 : vector<1x32xf32>
    %cst_385 = arith.constant dense<0.000000e+00> : vector<1x32xf32>
    %1586 = tpu.matmul %1563, %30, %cst_385 {dimension_numbers = #tpu.dot_dimension_numbers<[1], [0], [0], [1], [0, 0, 1, 1], [], []>} : vector<1x32xf32>, vector<32x32xf32>, vector<1x32xf32> -> vector<1x32xf32>
    %1587 = arith.addf %1586, %36 : vector<1x32xf32>
    %cst_386 = arith.constant dense<0.000000e+00> : vector<1x32xf32>
    %1588 = tpu.matmul %1563, %32, %cst_386 {dimension_numbers = #tpu.dot_dimension_numbers<[1], [0], [0], [1], [0, 0, 1, 1], [], []>} : vector<1x32xf32>, vector<32x32xf32>, vector<1x32xf32> -> vector<1x32xf32>
    %1589 = arith.addf %1588, %38 : vector<1x32xf32>
    %1590 = arith.addf %1577, %1585 : vector<1x32xf32>
    %1591 = arith.negf %1590 : vector<1x32xf32>
    %1592 = math.exp %1591 : vector<1x32xf32>
    %cst_387 = arith.constant 1.000000e+00 : f32
    %1593 = vector.broadcast %cst_387 : f32 to vector<1x32xf32>
    %1594 = arith.addf %1593, %1592 : vector<1x32xf32>
    %1595 = arith.divf %1593, %1594 : vector<1x32xf32>
    %1596 = arith.addf %1580, %1587 : vector<1x32xf32>
    %1597 = arith.negf %1596 : vector<1x32xf32>
    %1598 = math.exp %1597 : vector<1x32xf32>
    %cst_388 = arith.constant 1.000000e+00 : f32
    %1599 = vector.broadcast %cst_388 : f32 to vector<1x32xf32>
    %1600 = arith.addf %1599, %1598 : vector<1x32xf32>
    %1601 = arith.divf %1599, %1600 : vector<1x32xf32>
    %1602 = arith.mulf %1595, %1589 : vector<1x32xf32>
    %1603 = arith.addf %1583, %1602 : vector<1x32xf32>
    %1604 = math.tanh %1603 : vector<1x32xf32>
    %cst_389 = arith.constant 1.000000e+00 : f32
    %1605 = vector.broadcast %cst_389 : f32 to vector<1x32xf32>
    %1606 = arith.subf %1605, %1601 : vector<1x32xf32>
    %1607 = arith.mulf %1606, %1604 : vector<1x32xf32>
    %1608 = arith.mulf %1601, %1563 : vector<1x32xf32>
    %1609 = arith.addf %1607, %1608 : vector<1x32xf32>
    %c3_i32_390 = arith.constant 3 : i32
    %1610 = arith.cmpi sgt, %1409, %c3_i32_390 : i32
    %1611 = arith.select %1610, %1609, %1563 : vector<1x32xf32>
    %c4_i32_391 = arith.constant 4 : i32
    %1612 = arith.cmpi sgt, %1409, %c4_i32_391 : i32
    %1613 = arith.select %1612, %1609, %1563 : vector<1x32xf32>
    %1614 = arith.select %2, %1611, %1613 : vector<1x32xi1>, vector<1x32xf32>
    %c3_i32_392 = arith.constant 3 : i32
    %1615 = vector.broadcast %c3_i32_392 : i32 to vector<8x32xi32>
    %1616 = arith.cmpi eq, %6, %1615 : vector<8x32xi32>
    %1617 = arith.andi %1616, %9 : vector<8x32xi1>
    %c4_i32_393 = arith.constant 4 : i32
    %1618 = vector.broadcast %c4_i32_393 : i32 to vector<8x32xi32>
    %1619 = arith.cmpi eq, %6, %1618 : vector<8x32xi32>
    %cst_394 = arith.constant dense<true> : vector<8x32xi1>
    %1620 = arith.xori %9, %cst_394 : vector<8x32xi1>
    %1621 = arith.andi %1619, %1620 : vector<8x32xi1>
    %1622 = arith.ori %1617, %1621 : vector<8x32xi1>
    %1623 = vector.shape_cast %1614 : vector<1x32xf32> to vector<1x32xf32>
    %1624 = vector.broadcast %1623 : vector<1x32xf32> to vector<8x32xf32>
    %1625 = arith.select %1622, %1624, %1574 : vector<8x32xi1>, vector<8x32xf32>
    %1626 = vector.extract_strided_slice %1414 {offsets = [4, 0], sizes = [1, 32], strides = [1, 1]} : vector<8x32xf32> to vector<1x32xf32>
    %1627 = vector.extract_strided_slice %1414 {offsets = [3, 0], sizes = [1, 32], strides = [1, 1]} : vector<8x32xf32> to vector<1x32xf32>
    %1628 = arith.select %2, %1626, %1627 : vector<1x32xi1>, vector<1x32xf32>
    %1629 = vector.extract_strided_slice %1417 {offsets = [4, 0], sizes = [1, 32], strides = [1, 1]} : vector<8x32xf32> to vector<1x32xf32>
    %1630 = vector.extract_strided_slice %1417 {offsets = [3, 0], sizes = [1, 32], strides = [1, 1]} : vector<8x32xf32> to vector<1x32xf32>
    %1631 = arith.select %2, %1629, %1630 : vector<1x32xi1>, vector<1x32xf32>
    %1632 = vector.extract_strided_slice %1420 {offsets = [4, 0], sizes = [1, 32], strides = [1, 1]} : vector<8x32xf32> to vector<1x32xf32>
    %1633 = vector.extract_strided_slice %1420 {offsets = [3, 0], sizes = [1, 32], strides = [1, 1]} : vector<8x32xf32> to vector<1x32xf32>
    %1634 = arith.select %2, %1632, %1633 : vector<1x32xi1>, vector<1x32xf32>
    %cst_395 = arith.constant dense<0.000000e+00> : vector<1x32xf32>
    %1635 = tpu.matmul %1614, %28, %cst_395 {dimension_numbers = #tpu.dot_dimension_numbers<[1], [0], [0], [1], [0, 0, 1, 1], [], []>} : vector<1x32xf32>, vector<32x32xf32>, vector<1x32xf32> -> vector<1x32xf32>
    %1636 = arith.addf %1635, %34 : vector<1x32xf32>
    %cst_396 = arith.constant dense<0.000000e+00> : vector<1x32xf32>
    %1637 = tpu.matmul %1614, %30, %cst_396 {dimension_numbers = #tpu.dot_dimension_numbers<[1], [0], [0], [1], [0, 0, 1, 1], [], []>} : vector<1x32xf32>, vector<32x32xf32>, vector<1x32xf32> -> vector<1x32xf32>
    %1638 = arith.addf %1637, %36 : vector<1x32xf32>
    %cst_397 = arith.constant dense<0.000000e+00> : vector<1x32xf32>
    %1639 = tpu.matmul %1614, %32, %cst_397 {dimension_numbers = #tpu.dot_dimension_numbers<[1], [0], [0], [1], [0, 0, 1, 1], [], []>} : vector<1x32xf32>, vector<32x32xf32>, vector<1x32xf32> -> vector<1x32xf32>
    %1640 = arith.addf %1639, %38 : vector<1x32xf32>
    %1641 = arith.addf %1628, %1636 : vector<1x32xf32>
    %1642 = arith.negf %1641 : vector<1x32xf32>
    %1643 = math.exp %1642 : vector<1x32xf32>
    %cst_398 = arith.constant 1.000000e+00 : f32
    %1644 = vector.broadcast %cst_398 : f32 to vector<1x32xf32>
    %1645 = arith.addf %1644, %1643 : vector<1x32xf32>
    %1646 = arith.divf %1644, %1645 : vector<1x32xf32>
    %1647 = arith.addf %1631, %1638 : vector<1x32xf32>
    %1648 = arith.negf %1647 : vector<1x32xf32>
    %1649 = math.exp %1648 : vector<1x32xf32>
    %cst_399 = arith.constant 1.000000e+00 : f32
    %1650 = vector.broadcast %cst_399 : f32 to vector<1x32xf32>
    %1651 = arith.addf %1650, %1649 : vector<1x32xf32>
    %1652 = arith.divf %1650, %1651 : vector<1x32xf32>
    %1653 = arith.mulf %1646, %1640 : vector<1x32xf32>
    %1654 = arith.addf %1634, %1653 : vector<1x32xf32>
    %1655 = math.tanh %1654 : vector<1x32xf32>
    %cst_400 = arith.constant 1.000000e+00 : f32
    %1656 = vector.broadcast %cst_400 : f32 to vector<1x32xf32>
    %1657 = arith.subf %1656, %1652 : vector<1x32xf32>
    %1658 = arith.mulf %1657, %1655 : vector<1x32xf32>
    %1659 = arith.mulf %1652, %1614 : vector<1x32xf32>
    %1660 = arith.addf %1658, %1659 : vector<1x32xf32>
    %c4_i32_401 = arith.constant 4 : i32
    %1661 = arith.cmpi sgt, %1409, %c4_i32_401 : i32
    %1662 = arith.select %1661, %1660, %1614 : vector<1x32xf32>
    %c3_i32_402 = arith.constant 3 : i32
    %1663 = arith.cmpi sgt, %1409, %c3_i32_402 : i32
    %1664 = arith.select %1663, %1660, %1614 : vector<1x32xf32>
    %1665 = arith.select %2, %1662, %1664 : vector<1x32xi1>, vector<1x32xf32>
    %c4_i32_403 = arith.constant 4 : i32
    %1666 = vector.broadcast %c4_i32_403 : i32 to vector<8x32xi32>
    %1667 = arith.cmpi eq, %6, %1666 : vector<8x32xi32>
    %1668 = arith.andi %1667, %9 : vector<8x32xi1>
    %c3_i32_404 = arith.constant 3 : i32
    %1669 = vector.broadcast %c3_i32_404 : i32 to vector<8x32xi32>
    %1670 = arith.cmpi eq, %6, %1669 : vector<8x32xi32>
    %cst_405 = arith.constant dense<true> : vector<8x32xi1>
    %1671 = arith.xori %9, %cst_405 : vector<8x32xi1>
    %1672 = arith.andi %1670, %1671 : vector<8x32xi1>
    %1673 = arith.ori %1668, %1672 : vector<8x32xi1>
    %1674 = vector.shape_cast %1665 : vector<1x32xf32> to vector<1x32xf32>
    %1675 = vector.broadcast %1674 : vector<1x32xf32> to vector<8x32xf32>
    %1676 = arith.select %1673, %1675, %1625 : vector<8x32xi1>, vector<8x32xf32>
    %1677 = vector.extract_strided_slice %1414 {offsets = [5, 0], sizes = [1, 32], strides = [1, 1]} : vector<8x32xf32> to vector<1x32xf32>
    %1678 = vector.extract_strided_slice %1414 {offsets = [2, 0], sizes = [1, 32], strides = [1, 1]} : vector<8x32xf32> to vector<1x32xf32>
    %1679 = arith.select %2, %1677, %1678 : vector<1x32xi1>, vector<1x32xf32>
    %1680 = vector.extract_strided_slice %1417 {offsets = [5, 0], sizes = [1, 32], strides = [1, 1]} : vector<8x32xf32> to vector<1x32xf32>
    %1681 = vector.extract_strided_slice %1417 {offsets = [2, 0], sizes = [1, 32], strides = [1, 1]} : vector<8x32xf32> to vector<1x32xf32>
    %1682 = arith.select %2, %1680, %1681 : vector<1x32xi1>, vector<1x32xf32>
    %1683 = vector.extract_strided_slice %1420 {offsets = [5, 0], sizes = [1, 32], strides = [1, 1]} : vector<8x32xf32> to vector<1x32xf32>
    %1684 = vector.extract_strided_slice %1420 {offsets = [2, 0], sizes = [1, 32], strides = [1, 1]} : vector<8x32xf32> to vector<1x32xf32>
    %1685 = arith.select %2, %1683, %1684 : vector<1x32xi1>, vector<1x32xf32>
    %cst_406 = arith.constant dense<0.000000e+00> : vector<1x32xf32>
    %1686 = tpu.matmul %1665, %28, %cst_406 {dimension_numbers = #tpu.dot_dimension_numbers<[1], [0], [0], [1], [0, 0, 1, 1], [], []>} : vector<1x32xf32>, vector<32x32xf32>, vector<1x32xf32> -> vector<1x32xf32>
    %1687 = arith.addf %1686, %34 : vector<1x32xf32>
    %cst_407 = arith.constant dense<0.000000e+00> : vector<1x32xf32>
    %1688 = tpu.matmul %1665, %30, %cst_407 {dimension_numbers = #tpu.dot_dimension_numbers<[1], [0], [0], [1], [0, 0, 1, 1], [], []>} : vector<1x32xf32>, vector<32x32xf32>, vector<1x32xf32> -> vector<1x32xf32>
    %1689 = arith.addf %1688, %36 : vector<1x32xf32>
    %cst_408 = arith.constant dense<0.000000e+00> : vector<1x32xf32>
    %1690 = tpu.matmul %1665, %32, %cst_408 {dimension_numbers = #tpu.dot_dimension_numbers<[1], [0], [0], [1], [0, 0, 1, 1], [], []>} : vector<1x32xf32>, vector<32x32xf32>, vector<1x32xf32> -> vector<1x32xf32>
    %1691 = arith.addf %1690, %38 : vector<1x32xf32>
    %1692 = arith.addf %1679, %1687 : vector<1x32xf32>
    %1693 = arith.negf %1692 : vector<1x32xf32>
    %1694 = math.exp %1693 : vector<1x32xf32>
    %cst_409 = arith.constant 1.000000e+00 : f32
    %1695 = vector.broadcast %cst_409 : f32 to vector<1x32xf32>
    %1696 = arith.addf %1695, %1694 : vector<1x32xf32>
    %1697 = arith.divf %1695, %1696 : vector<1x32xf32>
    %1698 = arith.addf %1682, %1689 : vector<1x32xf32>
    %1699 = arith.negf %1698 : vector<1x32xf32>
    %1700 = math.exp %1699 : vector<1x32xf32>
    %cst_410 = arith.constant 1.000000e+00 : f32
    %1701 = vector.broadcast %cst_410 : f32 to vector<1x32xf32>
    %1702 = arith.addf %1701, %1700 : vector<1x32xf32>
    %1703 = arith.divf %1701, %1702 : vector<1x32xf32>
    %1704 = arith.mulf %1697, %1691 : vector<1x32xf32>
    %1705 = arith.addf %1685, %1704 : vector<1x32xf32>
    %1706 = math.tanh %1705 : vector<1x32xf32>
    %cst_411 = arith.constant 1.000000e+00 : f32
    %1707 = vector.broadcast %cst_411 : f32 to vector<1x32xf32>
    %1708 = arith.subf %1707, %1703 : vector<1x32xf32>
    %1709 = arith.mulf %1708, %1706 : vector<1x32xf32>
    %1710 = arith.mulf %1703, %1665 : vector<1x32xf32>
    %1711 = arith.addf %1709, %1710 : vector<1x32xf32>
    %c5_i32_412 = arith.constant 5 : i32
    %1712 = arith.cmpi sgt, %1409, %c5_i32_412 : i32
    %1713 = arith.select %1712, %1711, %1665 : vector<1x32xf32>
    %c2_i32_413 = arith.constant 2 : i32
    %1714 = arith.cmpi sgt, %1409, %c2_i32_413 : i32
    %1715 = arith.select %1714, %1711, %1665 : vector<1x32xf32>
    %1716 = arith.select %2, %1713, %1715 : vector<1x32xi1>, vector<1x32xf32>
    %c5_i32_414 = arith.constant 5 : i32
    %1717 = vector.broadcast %c5_i32_414 : i32 to vector<8x32xi32>
    %1718 = arith.cmpi eq, %6, %1717 : vector<8x32xi32>
    %1719 = arith.andi %1718, %9 : vector<8x32xi1>
    %c2_i32_415 = arith.constant 2 : i32
    %1720 = vector.broadcast %c2_i32_415 : i32 to vector<8x32xi32>
    %1721 = arith.cmpi eq, %6, %1720 : vector<8x32xi32>
    %cst_416 = arith.constant dense<true> : vector<8x32xi1>
    %1722 = arith.xori %9, %cst_416 : vector<8x32xi1>
    %1723 = arith.andi %1721, %1722 : vector<8x32xi1>
    %1724 = arith.ori %1719, %1723 : vector<8x32xi1>
    %1725 = vector.shape_cast %1716 : vector<1x32xf32> to vector<1x32xf32>
    %1726 = vector.broadcast %1725 : vector<1x32xf32> to vector<8x32xf32>
    %1727 = arith.select %1724, %1726, %1676 : vector<8x32xi1>, vector<8x32xf32>
    %1728 = vector.extract_strided_slice %1414 {offsets = [6, 0], sizes = [1, 32], strides = [1, 1]} : vector<8x32xf32> to vector<1x32xf32>
    %1729 = vector.extract_strided_slice %1414 {offsets = [1, 0], sizes = [1, 32], strides = [1, 1]} : vector<8x32xf32> to vector<1x32xf32>
    %1730 = arith.select %2, %1728, %1729 : vector<1x32xi1>, vector<1x32xf32>
    %1731 = vector.extract_strided_slice %1417 {offsets = [6, 0], sizes = [1, 32], strides = [1, 1]} : vector<8x32xf32> to vector<1x32xf32>
    %1732 = vector.extract_strided_slice %1417 {offsets = [1, 0], sizes = [1, 32], strides = [1, 1]} : vector<8x32xf32> to vector<1x32xf32>
    %1733 = arith.select %2, %1731, %1732 : vector<1x32xi1>, vector<1x32xf32>
    %1734 = vector.extract_strided_slice %1420 {offsets = [6, 0], sizes = [1, 32], strides = [1, 1]} : vector<8x32xf32> to vector<1x32xf32>
    %1735 = vector.extract_strided_slice %1420 {offsets = [1, 0], sizes = [1, 32], strides = [1, 1]} : vector<8x32xf32> to vector<1x32xf32>
    %1736 = arith.select %2, %1734, %1735 : vector<1x32xi1>, vector<1x32xf32>
    %cst_417 = arith.constant dense<0.000000e+00> : vector<1x32xf32>
    %1737 = tpu.matmul %1716, %28, %cst_417 {dimension_numbers = #tpu.dot_dimension_numbers<[1], [0], [0], [1], [0, 0, 1, 1], [], []>} : vector<1x32xf32>, vector<32x32xf32>, vector<1x32xf32> -> vector<1x32xf32>
    %1738 = arith.addf %1737, %34 : vector<1x32xf32>
    %cst_418 = arith.constant dense<0.000000e+00> : vector<1x32xf32>
    %1739 = tpu.matmul %1716, %30, %cst_418 {dimension_numbers = #tpu.dot_dimension_numbers<[1], [0], [0], [1], [0, 0, 1, 1], [], []>} : vector<1x32xf32>, vector<32x32xf32>, vector<1x32xf32> -> vector<1x32xf32>
    %1740 = arith.addf %1739, %36 : vector<1x32xf32>
    %cst_419 = arith.constant dense<0.000000e+00> : vector<1x32xf32>
    %1741 = tpu.matmul %1716, %32, %cst_419 {dimension_numbers = #tpu.dot_dimension_numbers<[1], [0], [0], [1], [0, 0, 1, 1], [], []>} : vector<1x32xf32>, vector<32x32xf32>, vector<1x32xf32> -> vector<1x32xf32>
    %1742 = arith.addf %1741, %38 : vector<1x32xf32>
    %1743 = arith.addf %1730, %1738 : vector<1x32xf32>
    %1744 = arith.negf %1743 : vector<1x32xf32>
    %1745 = math.exp %1744 : vector<1x32xf32>
    %cst_420 = arith.constant 1.000000e+00 : f32
    %1746 = vector.broadcast %cst_420 : f32 to vector<1x32xf32>
    %1747 = arith.addf %1746, %1745 : vector<1x32xf32>
    %1748 = arith.divf %1746, %1747 : vector<1x32xf32>
    %1749 = arith.addf %1733, %1740 : vector<1x32xf32>
    %1750 = arith.negf %1749 : vector<1x32xf32>
    %1751 = math.exp %1750 : vector<1x32xf32>
    %cst_421 = arith.constant 1.000000e+00 : f32
    %1752 = vector.broadcast %cst_421 : f32 to vector<1x32xf32>
    %1753 = arith.addf %1752, %1751 : vector<1x32xf32>
    %1754 = arith.divf %1752, %1753 : vector<1x32xf32>
    %1755 = arith.mulf %1748, %1742 : vector<1x32xf32>
    %1756 = arith.addf %1736, %1755 : vector<1x32xf32>
    %1757 = math.tanh %1756 : vector<1x32xf32>
    %cst_422 = arith.constant 1.000000e+00 : f32
    %1758 = vector.broadcast %cst_422 : f32 to vector<1x32xf32>
    %1759 = arith.subf %1758, %1754 : vector<1x32xf32>
    %1760 = arith.mulf %1759, %1757 : vector<1x32xf32>
    %1761 = arith.mulf %1754, %1716 : vector<1x32xf32>
    %1762 = arith.addf %1760, %1761 : vector<1x32xf32>
    %c6_i32_423 = arith.constant 6 : i32
    %1763 = arith.cmpi sgt, %1409, %c6_i32_423 : i32
    %1764 = arith.select %1763, %1762, %1716 : vector<1x32xf32>
    %c1_i32_424 = arith.constant 1 : i32
    %1765 = arith.cmpi sgt, %1409, %c1_i32_424 : i32
    %1766 = arith.select %1765, %1762, %1716 : vector<1x32xf32>
    %1767 = arith.select %2, %1764, %1766 : vector<1x32xi1>, vector<1x32xf32>
    %c6_i32_425 = arith.constant 6 : i32
    %1768 = vector.broadcast %c6_i32_425 : i32 to vector<8x32xi32>
    %1769 = arith.cmpi eq, %6, %1768 : vector<8x32xi32>
    %1770 = arith.andi %1769, %9 : vector<8x32xi1>
    %c1_i32_426 = arith.constant 1 : i32
    %1771 = vector.broadcast %c1_i32_426 : i32 to vector<8x32xi32>
    %1772 = arith.cmpi eq, %6, %1771 : vector<8x32xi32>
    %cst_427 = arith.constant dense<true> : vector<8x32xi1>
    %1773 = arith.xori %9, %cst_427 : vector<8x32xi1>
    %1774 = arith.andi %1772, %1773 : vector<8x32xi1>
    %1775 = arith.ori %1770, %1774 : vector<8x32xi1>
    %1776 = vector.shape_cast %1767 : vector<1x32xf32> to vector<1x32xf32>
    %1777 = vector.broadcast %1776 : vector<1x32xf32> to vector<8x32xf32>
    %1778 = arith.select %1775, %1777, %1727 : vector<8x32xi1>, vector<8x32xf32>
    %1779 = vector.extract_strided_slice %1414 {offsets = [7, 0], sizes = [1, 32], strides = [1, 1]} : vector<8x32xf32> to vector<1x32xf32>
    %1780 = vector.extract_strided_slice %1414 {offsets = [0, 0], sizes = [1, 32], strides = [1, 1]} : vector<8x32xf32> to vector<1x32xf32>
    %1781 = arith.select %2, %1779, %1780 : vector<1x32xi1>, vector<1x32xf32>
    %1782 = vector.extract_strided_slice %1417 {offsets = [7, 0], sizes = [1, 32], strides = [1, 1]} : vector<8x32xf32> to vector<1x32xf32>
    %1783 = vector.extract_strided_slice %1417 {offsets = [0, 0], sizes = [1, 32], strides = [1, 1]} : vector<8x32xf32> to vector<1x32xf32>
    %1784 = arith.select %2, %1782, %1783 : vector<1x32xi1>, vector<1x32xf32>
    %1785 = vector.extract_strided_slice %1420 {offsets = [7, 0], sizes = [1, 32], strides = [1, 1]} : vector<8x32xf32> to vector<1x32xf32>
    %1786 = vector.extract_strided_slice %1420 {offsets = [0, 0], sizes = [1, 32], strides = [1, 1]} : vector<8x32xf32> to vector<1x32xf32>
    %1787 = arith.select %2, %1785, %1786 : vector<1x32xi1>, vector<1x32xf32>
    %cst_428 = arith.constant dense<0.000000e+00> : vector<1x32xf32>
    %1788 = tpu.matmul %1767, %28, %cst_428 {dimension_numbers = #tpu.dot_dimension_numbers<[1], [0], [0], [1], [0, 0, 1, 1], [], []>} : vector<1x32xf32>, vector<32x32xf32>, vector<1x32xf32> -> vector<1x32xf32>
    %1789 = arith.addf %1788, %34 : vector<1x32xf32>
    %cst_429 = arith.constant dense<0.000000e+00> : vector<1x32xf32>
    %1790 = tpu.matmul %1767, %30, %cst_429 {dimension_numbers = #tpu.dot_dimension_numbers<[1], [0], [0], [1], [0, 0, 1, 1], [], []>} : vector<1x32xf32>, vector<32x32xf32>, vector<1x32xf32> -> vector<1x32xf32>
    %1791 = arith.addf %1790, %36 : vector<1x32xf32>
    %cst_430 = arith.constant dense<0.000000e+00> : vector<1x32xf32>
    %1792 = tpu.matmul %1767, %32, %cst_430 {dimension_numbers = #tpu.dot_dimension_numbers<[1], [0], [0], [1], [0, 0, 1, 1], [], []>} : vector<1x32xf32>, vector<32x32xf32>, vector<1x32xf32> -> vector<1x32xf32>
    %1793 = arith.addf %1792, %38 : vector<1x32xf32>
    %1794 = arith.addf %1781, %1789 : vector<1x32xf32>
    %1795 = arith.negf %1794 : vector<1x32xf32>
    %1796 = math.exp %1795 : vector<1x32xf32>
    %cst_431 = arith.constant 1.000000e+00 : f32
    %1797 = vector.broadcast %cst_431 : f32 to vector<1x32xf32>
    %1798 = arith.addf %1797, %1796 : vector<1x32xf32>
    %1799 = arith.divf %1797, %1798 : vector<1x32xf32>
    %1800 = arith.addf %1784, %1791 : vector<1x32xf32>
    %1801 = arith.negf %1800 : vector<1x32xf32>
    %1802 = math.exp %1801 : vector<1x32xf32>
    %cst_432 = arith.constant 1.000000e+00 : f32
    %1803 = vector.broadcast %cst_432 : f32 to vector<1x32xf32>
    %1804 = arith.addf %1803, %1802 : vector<1x32xf32>
    %1805 = arith.divf %1803, %1804 : vector<1x32xf32>
    %1806 = arith.mulf %1799, %1793 : vector<1x32xf32>
    %1807 = arith.addf %1787, %1806 : vector<1x32xf32>
    %1808 = math.tanh %1807 : vector<1x32xf32>
    %cst_433 = arith.constant 1.000000e+00 : f32
    %1809 = vector.broadcast %cst_433 : f32 to vector<1x32xf32>
    %1810 = arith.subf %1809, %1805 : vector<1x32xf32>
    %1811 = arith.mulf %1810, %1808 : vector<1x32xf32>
    %1812 = arith.mulf %1805, %1767 : vector<1x32xf32>
    %1813 = arith.addf %1811, %1812 : vector<1x32xf32>
    %c7_i32_434 = arith.constant 7 : i32
    %1814 = arith.cmpi sgt, %1409, %c7_i32_434 : i32
    %1815 = arith.select %1814, %1813, %1767 : vector<1x32xf32>
    %c0_i32_435 = arith.constant 0 : i32
    %1816 = arith.cmpi sgt, %1409, %c0_i32_435 : i32
    %1817 = arith.select %1816, %1813, %1767 : vector<1x32xf32>
    %1818 = arith.select %2, %1815, %1817 : vector<1x32xi1>, vector<1x32xf32>
    %c7_i32_436 = arith.constant 7 : i32
    %1819 = vector.broadcast %c7_i32_436 : i32 to vector<8x32xi32>
    %1820 = arith.cmpi eq, %6, %1819 : vector<8x32xi32>
    %1821 = arith.andi %1820, %9 : vector<8x32xi1>
    %c0_i32_437 = arith.constant 0 : i32
    %1822 = vector.broadcast %c0_i32_437 : i32 to vector<8x32xi32>
    %1823 = arith.cmpi eq, %6, %1822 : vector<8x32xi32>
    %cst_438 = arith.constant dense<true> : vector<8x32xi1>
    %1824 = arith.xori %9, %cst_438 : vector<8x32xi1>
    %1825 = arith.andi %1823, %1824 : vector<8x32xi1>
    %1826 = arith.ori %1821, %1825 : vector<8x32xi1>
    %1827 = vector.shape_cast %1818 : vector<1x32xf32> to vector<1x32xf32>
    %1828 = vector.broadcast %1827 : vector<1x32xf32> to vector<8x32xf32>
    %1829 = arith.select %1826, %1828, %1778 : vector<8x32xi1>, vector<8x32xf32>
    %cst_439 = arith.constant dense<0.000000e+00> : vector<8x32xf32>
    %1830 = tpu.matmul %1829, %39, %cst_439 {dimension_numbers = #tpu.dot_dimension_numbers<[1], [0], [0], [1], [0, 0, 1, 1], [], []>} : vector<8x32xf32>, vector<32x32xf32>, vector<8x32xf32> -> vector<8x32xf32>
    %1831 = vector.broadcast %40 : vector<1x32xf32> to vector<8x32xf32>
    %1832 = arith.addf %1830, %1831 : vector<8x32xf32>
    %1833 = math.tanh %1832 : vector<8x32xf32>
    %cst_440 = arith.constant dense<0.000000e+00> : vector<8x1xf32>
    %1834 = tpu.matmul %1833, %41, %cst_440 {dimension_numbers = #tpu.dot_dimension_numbers<[1], [0], [0], [1], [0, 0, 1, 1], [], []>} : vector<8x32xf32>, vector<32x1xf32>, vector<8x1xf32> -> vector<8x1xf32>
    %1835 = tpu.iota {dimensions = array<i32: 0>} : vector<8x1xi32>
    %1836 = vector.broadcast %1409 : i32 to vector<8x1xi32>
    %1837 = arith.cmpi slt, %1835, %1836 : vector<8x1xi32>
    %cst_441 = arith.constant -1.000000e+30 : f32
    %1838 = vector.broadcast %cst_441 : f32 to vector<8x1xf32>
    %1839 = arith.select %1837, %1834, %1838 : vector<8x1xi1>, vector<8x1xf32>
    %1840 = vector.shape_cast %1839 : vector<8x1xf32> to vector<1x8x1xf32>
    %cst_442 = arith.constant dense<0xFF800000> : vector<1xf32>
    %1841 = vector.multi_reduction <maximumf>, %1840, %cst_442 [1, 2] : vector<1x8x1xf32> to vector<1xf32>
    %1842 = vector.shape_cast %1841 : vector<1xf32> to vector<1x1x1xf32>
    %1843 = vector.extract %1842[0, 0, 0] : f32 from vector<1x1x1xf32>
    %1844 = vector.broadcast %1843 : f32 to vector<1x1xf32>
    %1845 = vector.broadcast %1844 : vector<1x1xf32> to vector<8x1xf32>
    %1846 = arith.subf %1839, %1845 : vector<8x1xf32>
    %1847 = math.exp %1846 : vector<8x1xf32>
    %1848 = vector.shape_cast %1847 : vector<8x1xf32> to vector<1x8x1xf32>
    %cst_443 = arith.constant dense<0.000000e+00> : vector<1xf32>
    %1849 = vector.multi_reduction <add>, %1848, %cst_443 [1, 2] : vector<1x8x1xf32> to vector<1xf32>
    %1850 = vector.shape_cast %1849 : vector<1xf32> to vector<1x1x1xf32>
    %1851 = vector.extract %1850[0, 0, 0] : f32 from vector<1x1x1xf32>
    %1852 = vector.broadcast %1851 : f32 to vector<1x1xf32>
    %1853 = vector.broadcast %1852 : vector<1x1xf32> to vector<8x1xf32>
    %1854 = arith.divf %1847, %1853 : vector<8x1xf32>
    %1855 = vector.broadcast %1854 : vector<8x1xf32> to vector<8x32xf32>
    %1856 = arith.mulf %1855, %1829 : vector<8x32xf32>
    %cst_444 = arith.constant dense<0.000000e+00> : vector<32xf32>
    %1857 = vector.multi_reduction <add>, %1856, %cst_444 [0] : vector<8x32xf32> to vector<32xf32>
    %1858 = vector.shape_cast %1857 : vector<32xf32> to vector<1x32xf32>
    %c3_i32_445 = arith.constant 3 : i32
    %1859 = vector.broadcast %c3_i32_445 : i32 to vector<4x32xi32>
    %1860 = arith.cmpi eq, %14, %1859 : vector<4x32xi32>
    %1861 = vector.shape_cast %1858 : vector<1x32xf32> to vector<1x32xf32>
    %1862 = vector.broadcast %1861 : vector<1x32xf32> to vector<4x32xf32>
    %1863 = arith.select %1860, %1862, %1408 : vector<4x32xi1>, vector<4x32xf32>
    %c0_446 = arith.constant 0 : index
    %c0_447 = arith.constant 0 : index
    %1864 = vector.load %arg20[%c0_446, %c0_447] : memref<1x32xf32, #tpu.memory_space<vmem>>, vector<1x32xf32>
    tpu.vector_store %arg20[%c0_446, %c0_447], %1818 {strides = array<i32>} : memref<1x32xf32, #tpu.memory_space<vmem>>, vector<1x32xf32>,
    %c0_448 = arith.constant 0 : index
    %c0_449 = arith.constant 0 : index
    %c0_450 = arith.constant 0 : index
    %1865 = vector.load %arg10[%c0_448, %c0_449, %c0_450] : memref<3x32x32xf32, #tpu.memory_space<vmem>>, vector<1x32x32xf32>
    %1866 = vector.shape_cast %1865 : vector<1x32x32xf32> to vector<32x32xf32>
    %c1_451 = arith.constant 1 : index
    %c0_452 = arith.constant 0 : index
    %c0_453 = arith.constant 0 : index
    %1867 = vector.load %arg10[%c1_451, %c0_452, %c0_453] : memref<3x32x32xf32, #tpu.memory_space<vmem>>, vector<1x32x32xf32>
    %1868 = vector.shape_cast %1867 : vector<1x32x32xf32> to vector<32x32xf32>
    %c2_454 = arith.constant 2 : index
    %c0_455 = arith.constant 0 : index
    %c0_456 = arith.constant 0 : index
    %1869 = vector.load %arg10[%c2_454, %c0_455, %c0_456] : memref<3x32x32xf32, #tpu.memory_space<vmem>>, vector<1x32x32xf32>
    %1870 = vector.shape_cast %1869 : vector<1x32x32xf32> to vector<32x32xf32>
    %c0_457 = arith.constant 0 : index
    %c0_458 = arith.constant 0 : index
    %c0_459 = arith.constant 0 : index
    %1871 = vector.load %arg11[%c0_457, %c0_458, %c0_459] : memref<3x1x32xf32, #tpu.memory_space<vmem>>, vector<1x1x32xf32>
    %1872 = vector.shape_cast %1871 : vector<1x1x32xf32> to vector<1x32xf32>
    %c1_460 = arith.constant 1 : index
    %c0_461 = arith.constant 0 : index
    %c0_462 = arith.constant 0 : index
    %1873 = vector.load %arg11[%c1_460, %c0_461, %c0_462] : memref<3x1x32xf32, #tpu.memory_space<vmem>>, vector<1x1x32xf32>
    %1874 = vector.shape_cast %1873 : vector<1x1x32xf32> to vector<1x32xf32>
    %c2_463 = arith.constant 2 : index
    %c0_464 = arith.constant 0 : index
    %c0_465 = arith.constant 0 : index
    %1875 = vector.load %arg11[%c2_463, %c0_464, %c0_465] : memref<3x1x32xf32, #tpu.memory_space<vmem>>, vector<1x1x32xf32>
    %1876 = vector.shape_cast %1875 : vector<1x1x32xf32> to vector<1x32xf32>
    %c0_466 = arith.constant 0 : index
    %c0_467 = arith.constant 0 : index
    %c0_468 = arith.constant 0 : index
    %1877 = vector.load %arg12[%c0_466, %c0_467, %c0_468] : memref<3x32x32xf32, #tpu.memory_space<vmem>>, vector<1x32x32xf32>
    %1878 = vector.shape_cast %1877 : vector<1x32x32xf32> to vector<32x32xf32>
    %c1_469 = arith.constant 1 : index
    %c0_470 = arith.constant 0 : index
    %c0_471 = arith.constant 0 : index
    %1879 = vector.load %arg12[%c1_469, %c0_470, %c0_471] : memref<3x32x32xf32, #tpu.memory_space<vmem>>, vector<1x32x32xf32>
    %1880 = vector.shape_cast %1879 : vector<1x32x32xf32> to vector<32x32xf32>
    %c2_472 = arith.constant 2 : index
    %c0_473 = arith.constant 0 : index
    %c0_474 = arith.constant 0 : index
    %1881 = vector.load %arg12[%c2_472, %c0_473, %c0_474] : memref<3x32x32xf32, #tpu.memory_space<vmem>>, vector<1x32x32xf32>
    %1882 = vector.shape_cast %1881 : vector<1x32x32xf32> to vector<32x32xf32>
    %c0_475 = arith.constant 0 : index
    %c0_476 = arith.constant 0 : index
    %c0_477 = arith.constant 0 : index
    %1883 = vector.load %arg13[%c0_475, %c0_476, %c0_477] : memref<3x1x32xf32, #tpu.memory_space<vmem>>, vector<1x1x32xf32>
    %1884 = vector.shape_cast %1883 : vector<1x1x32xf32> to vector<1x32xf32>
    %c1_478 = arith.constant 1 : index
    %c0_479 = arith.constant 0 : index
    %c0_480 = arith.constant 0 : index
    %1885 = vector.load %arg13[%c1_478, %c0_479, %c0_480] : memref<3x1x32xf32, #tpu.memory_space<vmem>>, vector<1x1x32xf32>
    %1886 = vector.shape_cast %1885 : vector<1x1x32xf32> to vector<1x32xf32>
    %c2_481 = arith.constant 2 : index
    %c0_482 = arith.constant 0 : index
    %c0_483 = arith.constant 0 : index
    %1887 = vector.load %arg13[%c2_481, %c0_482, %c0_483] : memref<3x1x32xf32, #tpu.memory_space<vmem>>, vector<1x1x32xf32>
    %1888 = vector.shape_cast %1887 : vector<1x1x32xf32> to vector<1x32xf32>
    %cst_484 = arith.constant dense<0.000000e+00> : vector<4x32xf32>
    %1889 = tpu.matmul %1863, %1866, %cst_484 {dimension_numbers = #tpu.dot_dimension_numbers<[1], [0], [0], [1], [0, 0, 1, 1], [], []>} : vector<4x32xf32>, vector<32x32xf32>, vector<4x32xf32> -> vector<4x32xf32>
    %1890 = vector.broadcast %1872 : vector<1x32xf32> to vector<4x32xf32>
    %1891 = arith.addf %1889, %1890 : vector<4x32xf32>
    %cst_485 = arith.constant dense<0.000000e+00> : vector<4x32xf32>
    %1892 = tpu.matmul %1863, %1868, %cst_485 {dimension_numbers = #tpu.dot_dimension_numbers<[1], [0], [0], [1], [0, 0, 1, 1], [], []>} : vector<4x32xf32>, vector<32x32xf32>, vector<4x32xf32> -> vector<4x32xf32>
    %1893 = vector.broadcast %1874 : vector<1x32xf32> to vector<4x32xf32>
    %1894 = arith.addf %1892, %1893 : vector<4x32xf32>
    %cst_486 = arith.constant dense<0.000000e+00> : vector<4x32xf32>
    %1895 = tpu.matmul %1863, %1870, %cst_486 {dimension_numbers = #tpu.dot_dimension_numbers<[1], [0], [0], [1], [0, 0, 1, 1], [], []>} : vector<4x32xf32>, vector<32x32xf32>, vector<4x32xf32> -> vector<4x32xf32>
    %1896 = vector.broadcast %1876 : vector<1x32xf32> to vector<4x32xf32>
    %1897 = arith.addf %1895, %1896 : vector<4x32xf32>
    %cst_487 = arith.constant 0.000000e+00 : f32
    %1898 = vector.broadcast %cst_487 : f32 to vector<1x32xf32>
    %cst_488 = arith.constant 0.000000e+00 : f32
    %1899 = vector.broadcast %cst_488 : f32 to vector<4x32xf32>
    %1900 = vector.extract_strided_slice %1891 {offsets = [0, 0], sizes = [1, 32], strides = [1, 1]} : vector<4x32xf32> to vector<1x32xf32>
    %1901 = vector.extract_strided_slice %1891 {offsets = [3, 0], sizes = [1, 32], strides = [1, 1]} : vector<4x32xf32> to vector<1x32xf32>
    %1902 = arith.select %5, %1900, %1901 : vector<1x32xi1>, vector<1x32xf32>
    %1903 = vector.extract_strided_slice %1894 {offsets = [0, 0], sizes = [1, 32], strides = [1, 1]} : vector<4x32xf32> to vector<1x32xf32>
    %1904 = vector.extract_strided_slice %1894 {offsets = [3, 0], sizes = [1, 32], strides = [1, 1]} : vector<4x32xf32> to vector<1x32xf32>
    %1905 = arith.select %5, %1903, %1904 : vector<1x32xi1>, vector<1x32xf32>
    %1906 = vector.extract_strided_slice %1897 {offsets = [0, 0], sizes = [1, 32], strides = [1, 1]} : vector<4x32xf32> to vector<1x32xf32>
    %1907 = vector.extract_strided_slice %1897 {offsets = [3, 0], sizes = [1, 32], strides = [1, 1]} : vector<4x32xf32> to vector<1x32xf32>
    %1908 = arith.select %5, %1906, %1907 : vector<1x32xi1>, vector<1x32xf32>
    %cst_489 = arith.constant dense<0.000000e+00> : vector<1x32xf32>
    %1909 = tpu.matmul %1898, %1878, %cst_489 {dimension_numbers = #tpu.dot_dimension_numbers<[1], [0], [0], [1], [0, 0, 1, 1], [], []>} : vector<1x32xf32>, vector<32x32xf32>, vector<1x32xf32> -> vector<1x32xf32>
    %1910 = arith.addf %1909, %1884 : vector<1x32xf32>
    %cst_490 = arith.constant dense<0.000000e+00> : vector<1x32xf32>
    %1911 = tpu.matmul %1898, %1880, %cst_490 {dimension_numbers = #tpu.dot_dimension_numbers<[1], [0], [0], [1], [0, 0, 1, 1], [], []>} : vector<1x32xf32>, vector<32x32xf32>, vector<1x32xf32> -> vector<1x32xf32>
    %1912 = arith.addf %1911, %1886 : vector<1x32xf32>
    %cst_491 = arith.constant dense<0.000000e+00> : vector<1x32xf32>
    %1913 = tpu.matmul %1898, %1882, %cst_491 {dimension_numbers = #tpu.dot_dimension_numbers<[1], [0], [0], [1], [0, 0, 1, 1], [], []>} : vector<1x32xf32>, vector<32x32xf32>, vector<1x32xf32> -> vector<1x32xf32>
    %1914 = arith.addf %1913, %1888 : vector<1x32xf32>
    %1915 = arith.addf %1902, %1910 : vector<1x32xf32>
    %1916 = arith.negf %1915 : vector<1x32xf32>
    %1917 = math.exp %1916 : vector<1x32xf32>
    %cst_492 = arith.constant 1.000000e+00 : f32
    %1918 = vector.broadcast %cst_492 : f32 to vector<1x32xf32>
    %1919 = arith.addf %1918, %1917 : vector<1x32xf32>
    %1920 = arith.divf %1918, %1919 : vector<1x32xf32>
    %1921 = arith.addf %1905, %1912 : vector<1x32xf32>
    %1922 = arith.negf %1921 : vector<1x32xf32>
    %1923 = math.exp %1922 : vector<1x32xf32>
    %cst_493 = arith.constant 1.000000e+00 : f32
    %1924 = vector.broadcast %cst_493 : f32 to vector<1x32xf32>
    %1925 = arith.addf %1924, %1923 : vector<1x32xf32>
    %1926 = arith.divf %1924, %1925 : vector<1x32xf32>
    %1927 = arith.mulf %1920, %1914 : vector<1x32xf32>
    %1928 = arith.addf %1908, %1927 : vector<1x32xf32>
    %1929 = math.tanh %1928 : vector<1x32xf32>
    %cst_494 = arith.constant 1.000000e+00 : f32
    %1930 = vector.broadcast %cst_494 : f32 to vector<1x32xf32>
    %1931 = arith.subf %1930, %1926 : vector<1x32xf32>
    %1932 = arith.mulf %1931, %1929 : vector<1x32xf32>
    %1933 = arith.mulf %1926, %1898 : vector<1x32xf32>
    %1934 = arith.addf %1932, %1933 : vector<1x32xf32>
    %c0_i32_495 = arith.constant 0 : i32
    %1935 = vector.broadcast %c0_i32_495 : i32 to vector<4x32xi32>
    %1936 = arith.cmpi eq, %10, %1935 : vector<4x32xi32>
    %1937 = arith.andi %1936, %13 : vector<4x32xi1>
    %c3_i32_496 = arith.constant 3 : i32
    %1938 = vector.broadcast %c3_i32_496 : i32 to vector<4x32xi32>
    %1939 = arith.cmpi eq, %10, %1938 : vector<4x32xi32>
    %cst_497 = arith.constant dense<true> : vector<4x32xi1>
    %1940 = arith.xori %13, %cst_497 : vector<4x32xi1>
    %1941 = arith.andi %1939, %1940 : vector<4x32xi1>
    %1942 = arith.ori %1937, %1941 : vector<4x32xi1>
    %1943 = vector.shape_cast %1934 : vector<1x32xf32> to vector<1x32xf32>
    %1944 = vector.broadcast %1943 : vector<1x32xf32> to vector<4x32xf32>
    %1945 = arith.select %1942, %1944, %1899 : vector<4x32xi1>, vector<4x32xf32>
    %1946 = vector.extract_strided_slice %1891 {offsets = [1, 0], sizes = [1, 32], strides = [1, 1]} : vector<4x32xf32> to vector<1x32xf32>
    %1947 = vector.extract_strided_slice %1891 {offsets = [2, 0], sizes = [1, 32], strides = [1, 1]} : vector<4x32xf32> to vector<1x32xf32>
    %1948 = arith.select %5, %1946, %1947 : vector<1x32xi1>, vector<1x32xf32>
    %1949 = vector.extract_strided_slice %1894 {offsets = [1, 0], sizes = [1, 32], strides = [1, 1]} : vector<4x32xf32> to vector<1x32xf32>
    %1950 = vector.extract_strided_slice %1894 {offsets = [2, 0], sizes = [1, 32], strides = [1, 1]} : vector<4x32xf32> to vector<1x32xf32>
    %1951 = arith.select %5, %1949, %1950 : vector<1x32xi1>, vector<1x32xf32>
    %1952 = vector.extract_strided_slice %1897 {offsets = [1, 0], sizes = [1, 32], strides = [1, 1]} : vector<4x32xf32> to vector<1x32xf32>
    %1953 = vector.extract_strided_slice %1897 {offsets = [2, 0], sizes = [1, 32], strides = [1, 1]} : vector<4x32xf32> to vector<1x32xf32>
    %1954 = arith.select %5, %1952, %1953 : vector<1x32xi1>, vector<1x32xf32>
    %cst_498 = arith.constant dense<0.000000e+00> : vector<1x32xf32>
    %1955 = tpu.matmul %1934, %1878, %cst_498 {dimension_numbers = #tpu.dot_dimension_numbers<[1], [0], [0], [1], [0, 0, 1, 1], [], []>} : vector<1x32xf32>, vector<32x32xf32>, vector<1x32xf32> -> vector<1x32xf32>
    %1956 = arith.addf %1955, %1884 : vector<1x32xf32>
    %cst_499 = arith.constant dense<0.000000e+00> : vector<1x32xf32>
    %1957 = tpu.matmul %1934, %1880, %cst_499 {dimension_numbers = #tpu.dot_dimension_numbers<[1], [0], [0], [1], [0, 0, 1, 1], [], []>} : vector<1x32xf32>, vector<32x32xf32>, vector<1x32xf32> -> vector<1x32xf32>
    %1958 = arith.addf %1957, %1886 : vector<1x32xf32>
    %cst_500 = arith.constant dense<0.000000e+00> : vector<1x32xf32>
    %1959 = tpu.matmul %1934, %1882, %cst_500 {dimension_numbers = #tpu.dot_dimension_numbers<[1], [0], [0], [1], [0, 0, 1, 1], [], []>} : vector<1x32xf32>, vector<32x32xf32>, vector<1x32xf32> -> vector<1x32xf32>
    %1960 = arith.addf %1959, %1888 : vector<1x32xf32>
    %1961 = arith.addf %1948, %1956 : vector<1x32xf32>
    %1962 = arith.negf %1961 : vector<1x32xf32>
    %1963 = math.exp %1962 : vector<1x32xf32>
    %cst_501 = arith.constant 1.000000e+00 : f32
    %1964 = vector.broadcast %cst_501 : f32 to vector<1x32xf32>
    %1965 = arith.addf %1964, %1963 : vector<1x32xf32>
    %1966 = arith.divf %1964, %1965 : vector<1x32xf32>
    %1967 = arith.addf %1951, %1958 : vector<1x32xf32>
    %1968 = arith.negf %1967 : vector<1x32xf32>
    %1969 = math.exp %1968 : vector<1x32xf32>
    %cst_502 = arith.constant 1.000000e+00 : f32
    %1970 = vector.broadcast %cst_502 : f32 to vector<1x32xf32>
    %1971 = arith.addf %1970, %1969 : vector<1x32xf32>
    %1972 = arith.divf %1970, %1971 : vector<1x32xf32>
    %1973 = arith.mulf %1966, %1960 : vector<1x32xf32>
    %1974 = arith.addf %1954, %1973 : vector<1x32xf32>
    %1975 = math.tanh %1974 : vector<1x32xf32>
    %cst_503 = arith.constant 1.000000e+00 : f32
    %1976 = vector.broadcast %cst_503 : f32 to vector<1x32xf32>
    %1977 = arith.subf %1976, %1972 : vector<1x32xf32>
    %1978 = arith.mulf %1977, %1975 : vector<1x32xf32>
    %1979 = arith.mulf %1972, %1934 : vector<1x32xf32>
    %1980 = arith.addf %1978, %1979 : vector<1x32xf32>
    %c1_i32_504 = arith.constant 1 : i32
    %1981 = vector.broadcast %c1_i32_504 : i32 to vector<4x32xi32>
    %1982 = arith.cmpi eq, %10, %1981 : vector<4x32xi32>
    %1983 = arith.andi %1982, %13 : vector<4x32xi1>
    %c2_i32_505 = arith.constant 2 : i32
    %1984 = vector.broadcast %c2_i32_505 : i32 to vector<4x32xi32>
    %1985 = arith.cmpi eq, %10, %1984 : vector<4x32xi32>
    %cst_506 = arith.constant dense<true> : vector<4x32xi1>
    %1986 = arith.xori %13, %cst_506 : vector<4x32xi1>
    %1987 = arith.andi %1985, %1986 : vector<4x32xi1>
    %1988 = arith.ori %1983, %1987 : vector<4x32xi1>
    %1989 = vector.shape_cast %1980 : vector<1x32xf32> to vector<1x32xf32>
    %1990 = vector.broadcast %1989 : vector<1x32xf32> to vector<4x32xf32>
    %1991 = arith.select %1988, %1990, %1945 : vector<4x32xi1>, vector<4x32xf32>
    %1992 = vector.extract_strided_slice %1891 {offsets = [2, 0], sizes = [1, 32], strides = [1, 1]} : vector<4x32xf32> to vector<1x32xf32>
    %1993 = vector.extract_strided_slice %1891 {offsets = [1, 0], sizes = [1, 32], strides = [1, 1]} : vector<4x32xf32> to vector<1x32xf32>
    %1994 = arith.select %5, %1992, %1993 : vector<1x32xi1>, vector<1x32xf32>
    %1995 = vector.extract_strided_slice %1894 {offsets = [2, 0], sizes = [1, 32], strides = [1, 1]} : vector<4x32xf32> to vector<1x32xf32>
    %1996 = vector.extract_strided_slice %1894 {offsets = [1, 0], sizes = [1, 32], strides = [1, 1]} : vector<4x32xf32> to vector<1x32xf32>
    %1997 = arith.select %5, %1995, %1996 : vector<1x32xi1>, vector<1x32xf32>
    %1998 = vector.extract_strided_slice %1897 {offsets = [2, 0], sizes = [1, 32], strides = [1, 1]} : vector<4x32xf32> to vector<1x32xf32>
    %1999 = vector.extract_strided_slice %1897 {offsets = [1, 0], sizes = [1, 32], strides = [1, 1]} : vector<4x32xf32> to vector<1x32xf32>
    %2000 = arith.select %5, %1998, %1999 : vector<1x32xi1>, vector<1x32xf32>
    %cst_507 = arith.constant dense<0.000000e+00> : vector<1x32xf32>
    %2001 = tpu.matmul %1980, %1878, %cst_507 {dimension_numbers = #tpu.dot_dimension_numbers<[1], [0], [0], [1], [0, 0, 1, 1], [], []>} : vector<1x32xf32>, vector<32x32xf32>, vector<1x32xf32> -> vector<1x32xf32>
    %2002 = arith.addf %2001, %1884 : vector<1x32xf32>
    %cst_508 = arith.constant dense<0.000000e+00> : vector<1x32xf32>
    %2003 = tpu.matmul %1980, %1880, %cst_508 {dimension_numbers = #tpu.dot_dimension_numbers<[1], [0], [0], [1], [0, 0, 1, 1], [], []>} : vector<1x32xf32>, vector<32x32xf32>, vector<1x32xf32> -> vector<1x32xf32>
    %2004 = arith.addf %2003, %1886 : vector<1x32xf32>
    %cst_509 = arith.constant dense<0.000000e+00> : vector<1x32xf32>
    %2005 = tpu.matmul %1980, %1882, %cst_509 {dimension_numbers = #tpu.dot_dimension_numbers<[1], [0], [0], [1], [0, 0, 1, 1], [], []>} : vector<1x32xf32>, vector<32x32xf32>, vector<1x32xf32> -> vector<1x32xf32>
    %2006 = arith.addf %2005, %1888 : vector<1x32xf32>
    %2007 = arith.addf %1994, %2002 : vector<1x32xf32>
    %2008 = arith.negf %2007 : vector<1x32xf32>
    %2009 = math.exp %2008 : vector<1x32xf32>
    %cst_510 = arith.constant 1.000000e+00 : f32
    %2010 = vector.broadcast %cst_510 : f32 to vector<1x32xf32>
    %2011 = arith.addf %2010, %2009 : vector<1x32xf32>
    %2012 = arith.divf %2010, %2011 : vector<1x32xf32>
    %2013 = arith.addf %1997, %2004 : vector<1x32xf32>
    %2014 = arith.negf %2013 : vector<1x32xf32>
    %2015 = math.exp %2014 : vector<1x32xf32>
    %cst_511 = arith.constant 1.000000e+00 : f32
    %2016 = vector.broadcast %cst_511 : f32 to vector<1x32xf32>
    %2017 = arith.addf %2016, %2015 : vector<1x32xf32>
    %2018 = arith.divf %2016, %2017 : vector<1x32xf32>
    %2019 = arith.mulf %2012, %2006 : vector<1x32xf32>
    %2020 = arith.addf %2000, %2019 : vector<1x32xf32>
    %2021 = math.tanh %2020 : vector<1x32xf32>
    %cst_512 = arith.constant 1.000000e+00 : f32
    %2022 = vector.broadcast %cst_512 : f32 to vector<1x32xf32>
    %2023 = arith.subf %2022, %2018 : vector<1x32xf32>
    %2024 = arith.mulf %2023, %2021 : vector<1x32xf32>
    %2025 = arith.mulf %2018, %1980 : vector<1x32xf32>
    %2026 = arith.addf %2024, %2025 : vector<1x32xf32>
    %c2_i32_513 = arith.constant 2 : i32
    %2027 = vector.broadcast %c2_i32_513 : i32 to vector<4x32xi32>
    %2028 = arith.cmpi eq, %10, %2027 : vector<4x32xi32>
    %2029 = arith.andi %2028, %13 : vector<4x32xi1>
    %c1_i32_514 = arith.constant 1 : i32
    %2030 = vector.broadcast %c1_i32_514 : i32 to vector<4x32xi32>
    %2031 = arith.cmpi eq, %10, %2030 : vector<4x32xi32>
    %cst_515 = arith.constant dense<true> : vector<4x32xi1>
    %2032 = arith.xori %13, %cst_515 : vector<4x32xi1>
    %2033 = arith.andi %2031, %2032 : vector<4x32xi1>
    %2034 = arith.ori %2029, %2033 : vector<4x32xi1>
    %2035 = vector.shape_cast %2026 : vector<1x32xf32> to vector<1x32xf32>
    %2036 = vector.broadcast %2035 : vector<1x32xf32> to vector<4x32xf32>
    %2037 = arith.select %2034, %2036, %1991 : vector<4x32xi1>, vector<4x32xf32>
    %2038 = vector.extract_strided_slice %1891 {offsets = [3, 0], sizes = [1, 32], strides = [1, 1]} : vector<4x32xf32> to vector<1x32xf32>
    %2039 = vector.extract_strided_slice %1891 {offsets = [0, 0], sizes = [1, 32], strides = [1, 1]} : vector<4x32xf32> to vector<1x32xf32>
    %2040 = arith.select %5, %2038, %2039 : vector<1x32xi1>, vector<1x32xf32>
    %2041 = vector.extract_strided_slice %1894 {offsets = [3, 0], sizes = [1, 32], strides = [1, 1]} : vector<4x32xf32> to vector<1x32xf32>
    %2042 = vector.extract_strided_slice %1894 {offsets = [0, 0], sizes = [1, 32], strides = [1, 1]} : vector<4x32xf32> to vector<1x32xf32>
    %2043 = arith.select %5, %2041, %2042 : vector<1x32xi1>, vector<1x32xf32>
    %2044 = vector.extract_strided_slice %1897 {offsets = [3, 0], sizes = [1, 32], strides = [1, 1]} : vector<4x32xf32> to vector<1x32xf32>
    %2045 = vector.extract_strided_slice %1897 {offsets = [0, 0], sizes = [1, 32], strides = [1, 1]} : vector<4x32xf32> to vector<1x32xf32>
    %2046 = arith.select %5, %2044, %2045 : vector<1x32xi1>, vector<1x32xf32>
    %cst_516 = arith.constant dense<0.000000e+00> : vector<1x32xf32>
    %2047 = tpu.matmul %2026, %1878, %cst_516 {dimension_numbers = #tpu.dot_dimension_numbers<[1], [0], [0], [1], [0, 0, 1, 1], [], []>} : vector<1x32xf32>, vector<32x32xf32>, vector<1x32xf32> -> vector<1x32xf32>
    %2048 = arith.addf %2047, %1884 : vector<1x32xf32>
    %cst_517 = arith.constant dense<0.000000e+00> : vector<1x32xf32>
    %2049 = tpu.matmul %2026, %1880, %cst_517 {dimension_numbers = #tpu.dot_dimension_numbers<[1], [0], [0], [1], [0, 0, 1, 1], [], []>} : vector<1x32xf32>, vector<32x32xf32>, vector<1x32xf32> -> vector<1x32xf32>
    %2050 = arith.addf %2049, %1886 : vector<1x32xf32>
    %cst_518 = arith.constant dense<0.000000e+00> : vector<1x32xf32>
    %2051 = tpu.matmul %2026, %1882, %cst_518 {dimension_numbers = #tpu.dot_dimension_numbers<[1], [0], [0], [1], [0, 0, 1, 1], [], []>} : vector<1x32xf32>, vector<32x32xf32>, vector<1x32xf32> -> vector<1x32xf32>
    %2052 = arith.addf %2051, %1888 : vector<1x32xf32>
    %2053 = arith.addf %2040, %2048 : vector<1x32xf32>
    %2054 = arith.negf %2053 : vector<1x32xf32>
    %2055 = math.exp %2054 : vector<1x32xf32>
    %cst_519 = arith.constant 1.000000e+00 : f32
    %2056 = vector.broadcast %cst_519 : f32 to vector<1x32xf32>
    %2057 = arith.addf %2056, %2055 : vector<1x32xf32>
    %2058 = arith.divf %2056, %2057 : vector<1x32xf32>
    %2059 = arith.addf %2043, %2050 : vector<1x32xf32>
    %2060 = arith.negf %2059 : vector<1x32xf32>
    %2061 = math.exp %2060 : vector<1x32xf32>
    %cst_520 = arith.constant 1.000000e+00 : f32
    %2062 = vector.broadcast %cst_520 : f32 to vector<1x32xf32>
    %2063 = arith.addf %2062, %2061 : vector<1x32xf32>
    %2064 = arith.divf %2062, %2063 : vector<1x32xf32>
    %2065 = arith.mulf %2058, %2052 : vector<1x32xf32>
    %2066 = arith.addf %2046, %2065 : vector<1x32xf32>
    %2067 = math.tanh %2066 : vector<1x32xf32>
    %cst_521 = arith.constant 1.000000e+00 : f32
    %2068 = vector.broadcast %cst_521 : f32 to vector<1x32xf32>
    %2069 = arith.subf %2068, %2064 : vector<1x32xf32>
    %2070 = arith.mulf %2069, %2067 : vector<1x32xf32>
    %2071 = arith.mulf %2064, %2026 : vector<1x32xf32>
    %2072 = arith.addf %2070, %2071 : vector<1x32xf32>
    %c3_i32_522 = arith.constant 3 : i32
    %2073 = vector.broadcast %c3_i32_522 : i32 to vector<4x32xi32>
    %2074 = arith.cmpi eq, %10, %2073 : vector<4x32xi32>
    %2075 = arith.andi %2074, %13 : vector<4x32xi1>
    %c0_i32_523 = arith.constant 0 : i32
    %2076 = vector.broadcast %c0_i32_523 : i32 to vector<4x32xi32>
    %2077 = arith.cmpi eq, %10, %2076 : vector<4x32xi32>
    %cst_524 = arith.constant dense<true> : vector<4x32xi1>
    %2078 = arith.xori %13, %cst_524 : vector<4x32xi1>
    %2079 = arith.andi %2077, %2078 : vector<4x32xi1>
    %2080 = arith.ori %2075, %2079 : vector<4x32xi1>
    %2081 = vector.shape_cast %2072 : vector<1x32xf32> to vector<1x32xf32>
    %2082 = vector.broadcast %2081 : vector<1x32xf32> to vector<4x32xf32>
    %2083 = arith.select %2080, %2082, %2037 : vector<4x32xi1>, vector<4x32xf32>
    %c0_525 = arith.constant 0 : index
    %c0_526 = arith.constant 0 : index
    %2084 = vector.load %arg14[%c0_525, %c0_526] : memref<32x32xf32, #tpu.memory_space<vmem>>, vector<32x32xf32>
    %cst_527 = arith.constant dense<0.000000e+00> : vector<4x32xf32>
    %2085 = tpu.matmul %2083, %2084, %cst_527 {dimension_numbers = #tpu.dot_dimension_numbers<[1], [0], [0], [1], [0, 0, 1, 1], [], []>} : vector<4x32xf32>, vector<32x32xf32>, vector<4x32xf32> -> vector<4x32xf32>
    %c0_528 = arith.constant 0 : index
    %c0_529 = arith.constant 0 : index
    %2086 = vector.load %arg15[%c0_528, %c0_529] : memref<1x32xf32, #tpu.memory_space<vmem>>, vector<1x32xf32>
    %2087 = vector.broadcast %2086 : vector<1x32xf32> to vector<4x32xf32>
    %2088 = arith.addf %2085, %2087 : vector<4x32xf32>
    %2089 = math.tanh %2088 : vector<4x32xf32>
    %c0_530 = arith.constant 0 : index
    %c0_531 = arith.constant 0 : index
    %2090 = vector.load %arg16[%c0_530, %c0_531] : memref<32x1xf32, #tpu.memory_space<vmem>>, vector<32x1xf32>
    %cst_532 = arith.constant dense<0.000000e+00> : vector<4x1xf32>
    %2091 = tpu.matmul %2089, %2090, %cst_532 {dimension_numbers = #tpu.dot_dimension_numbers<[1], [0], [0], [1], [0, 0, 1, 1], [], []>} : vector<4x32xf32>, vector<32x1xf32>, vector<4x1xf32> -> vector<4x1xf32>
    %2092 = tpu.iota {dimensions = array<i32: 0>} : vector<4x1xi32>
    %c4_i32_533 = arith.constant 4 : i32
    %2093 = vector.broadcast %c4_i32_533 : i32 to vector<4x1xi32>
    %2094 = arith.cmpi slt, %2092, %2093 : vector<4x1xi32>
    %cst_534 = arith.constant -1.000000e+30 : f32
    %2095 = vector.broadcast %cst_534 : f32 to vector<4x1xf32>
    %2096 = arith.select %2094, %2091, %2095 : vector<4x1xi1>, vector<4x1xf32>
    %2097 = vector.shape_cast %2096 : vector<4x1xf32> to vector<1x4x1xf32>
    %cst_535 = arith.constant dense<0xFF800000> : vector<1xf32>
    %2098 = vector.multi_reduction <maximumf>, %2097, %cst_535 [1, 2] : vector<1x4x1xf32> to vector<1xf32>
    %2099 = vector.shape_cast %2098 : vector<1xf32> to vector<1x1x1xf32>
    %2100 = vector.extract %2099[0, 0, 0] : f32 from vector<1x1x1xf32>
    %2101 = vector.broadcast %2100 : f32 to vector<1x1xf32>
    %2102 = vector.broadcast %2101 : vector<1x1xf32> to vector<4x1xf32>
    %2103 = arith.subf %2096, %2102 : vector<4x1xf32>
    %2104 = math.exp %2103 : vector<4x1xf32>
    %2105 = vector.shape_cast %2104 : vector<4x1xf32> to vector<1x4x1xf32>
    %cst_536 = arith.constant dense<0.000000e+00> : vector<1xf32>
    %2106 = vector.multi_reduction <add>, %2105, %cst_536 [1, 2] : vector<1x4x1xf32> to vector<1xf32>
    %2107 = vector.shape_cast %2106 : vector<1xf32> to vector<1x1x1xf32>
    %2108 = vector.extract %2107[0, 0, 0] : f32 from vector<1x1x1xf32>
    %2109 = vector.broadcast %2108 : f32 to vector<1x1xf32>
    %2110 = vector.broadcast %2109 : vector<1x1xf32> to vector<4x1xf32>
    %2111 = arith.divf %2104, %2110 : vector<4x1xf32>
    %2112 = vector.broadcast %2111 : vector<4x1xf32> to vector<4x32xf32>
    %2113 = arith.mulf %2112, %2083 : vector<4x32xf32>
    %cst_537 = arith.constant dense<0.000000e+00> : vector<32xf32>
    %2114 = vector.multi_reduction <add>, %2113, %cst_537 [0] : vector<4x32xf32> to vector<32xf32>
    %2115 = vector.shape_cast %2114 : vector<32xf32> to vector<1x32xf32>
    %c0_538 = arith.constant 0 : index
    %c0_539 = arith.constant 0 : index
    %2116 = vector.load %arg17[%c0_538, %c0_539] : memref<32x8xf32, #tpu.memory_space<vmem>>, vector<32x8xf32>
    %cst_540 = arith.constant dense<0.000000e+00> : vector<1x8xf32>
    %2117 = tpu.matmul %2115, %2116, %cst_540 {dimension_numbers = #tpu.dot_dimension_numbers<[1], [0], [0], [1], [0, 0, 1, 1], [], []>} : vector<1x32xf32>, vector<32x8xf32>, vector<1x8xf32> -> vector<1x8xf32>
    %c0_541 = arith.constant 0 : index
    %c0_542 = arith.constant 0 : index
    %2118 = vector.load %arg18[%c0_541, %c0_542] : memref<1x8xf32, #tpu.memory_space<vmem>>, vector<1x8xf32>
    %2119 = arith.addf %2117, %2118 : vector<1x8xf32>
    %c0_543 = arith.constant 0 : index
    %c0_544 = arith.constant 0 : index
    %2120 = vector.load %arg19[%c0_543, %c0_544] : memref<1x8xf32, #tpu.memory_space<vmem>>, vector<1x8xf32>
    tpu.vector_store %arg19[%c0_543, %c0_544], %2119 {strides = array<i32>} : memref<1x8xf32, #tpu.memory_space<vmem>>, vector<1x8xf32>,
    %c0_545 = arith.constant 0 : index
    %c0_546 = arith.constant 0 : index
    %2121 = vector.load %arg21[%c0_545, %c0_546] : memref<1x32xf32, #tpu.memory_space<vmem>>, vector<1x32xf32>
    tpu.vector_store %arg21[%c0_545, %c0_546], %2072 {strides = array<i32>} : memref<1x32xf32, #tpu.memory_space<vmem>>, vector<1x32xf32>,
    return
  }
  func.func @transform_0(%arg0: i32, %arg1: memref<4xi32, #tpu.memory_space<smem>>) -> (i32, i32, i32) {
    %c0_i32 = arith.constant 0 : i32
    %c0_i32_0 = arith.constant 0 : i32
    %c0_i32_1 = arith.constant 0 : i32
    %c0_i32_2 = arith.constant 0 : i32
    return %c0_i32, %c0_i32_0, %c0_i32_1 : i32, i32, i32
  }
  func.func @transform_1(%arg0: i32, %arg1: memref<4xi32, #tpu.memory_space<smem>>) -> (i32, i32, i32) {
    %c0_i32 = arith.constant 0 : i32
    %c0_i32_0 = arith.constant 0 : i32
    %c0_i32_1 = arith.constant 0 : i32
    %c0_i32_2 = arith.constant 0 : i32
    return %c0_i32, %c0_i32_0, %c0_i32_1 : i32, i32, i32
  }
  func.func @transform_2(%arg0: i32, %arg1: memref<4xi32, #tpu.memory_space<smem>>) -> (i32, i32, i32) {
    %c0_i32 = arith.constant 0 : i32
    %c0_i32_0 = arith.constant 0 : i32
    %c0_i32_1 = arith.constant 0 : i32
    %c0_i32_2 = arith.constant 0 : i32
    return %c0_i32, %c0_i32_0, %c0_i32_1 : i32, i32, i32
  }
  func.func @transform_3(%arg0: i32, %arg1: memref<4xi32, #tpu.memory_space<smem>>) -> (i32, i32, i32) {
    %c0_i32 = arith.constant 0 : i32
    %c0_i32_0 = arith.constant 0 : i32
    %c0_i32_1 = arith.constant 0 : i32
    %c0_i32_2 = arith.constant 0 : i32
    return %c0_i32, %c0_i32_0, %c0_i32_1 : i32, i32, i32
  }
  func.func @transform_4(%arg0: i32, %arg1: memref<4xi32, #tpu.memory_space<smem>>) -> (i32, i32, i32) {
    %c0_i32 = arith.constant 0 : i32
    %c0_i32_0 = arith.constant 0 : i32
    %c0_i32_1 = arith.constant 0 : i32
    %c0_i32_2 = arith.constant 0 : i32
    return %c0_i32, %c0_i32_0, %c0_i32_1 : i32, i32, i32
  }
  func.func @transform_5(%arg0: i32, %arg1: memref<4xi32, #tpu.memory_space<smem>>) -> (i32, i32) {
    %c0_i32 = arith.constant 0 : i32
    %c0_i32_0 = arith.constant 0 : i32
    %c0_i32_1 = arith.constant 0 : i32
    return %c0_i32, %c0_i32_0 : i32, i32
  }
  func.func @transform_6(%arg0: i32, %arg1: memref<4xi32, #tpu.memory_space<smem>>) -> (i32, i32) {
    %c0_i32 = arith.constant 0 : i32
    %c0_i32_0 = arith.constant 0 : i32
    %c0_i32_1 = arith.constant 0 : i32
    return %c0_i32, %c0_i32_0 : i32, i32
  }
  func.func @transform_7(%arg0: i32, %arg1: memref<4xi32, #tpu.memory_space<smem>>) -> (i32, i32) {
    %c0_i32 = arith.constant 0 : i32
    %c0_i32_0 = arith.constant 0 : i32
    %c0_i32_1 = arith.constant 0 : i32
    return %c0_i32, %c0_i32_0 : i32, i32
  }
  func.func @transform_8(%arg0: i32, %arg1: memref<4xi32, #tpu.memory_space<smem>>) -> (i32, i32, i32) {
    %c0_i32 = arith.constant 0 : i32
    %c0_i32_0 = arith.constant 0 : i32
    %c0_i32_1 = arith.constant 0 : i32
    %c0_i32_2 = arith.constant 0 : i32
    return %c0_i32, %c0_i32_0, %c0_i32_1 : i32, i32, i32
  }
  func.func @transform_9(%arg0: i32, %arg1: memref<4xi32, #tpu.memory_space<smem>>) -> (i32, i32, i32) {
    %c0_i32 = arith.constant 0 : i32
    %c0_i32_0 = arith.constant 0 : i32
    %c0_i32_1 = arith.constant 0 : i32
    %c0_i32_2 = arith.constant 0 : i32
    return %c0_i32, %c0_i32_0, %c0_i32_1 : i32, i32, i32
  }
  func.func @transform_10(%arg0: i32, %arg1: memref<4xi32, #tpu.memory_space<smem>>) -> (i32, i32, i32) {
    %c0_i32 = arith.constant 0 : i32
    %c0_i32_0 = arith.constant 0 : i32
    %c0_i32_1 = arith.constant 0 : i32
    %c0_i32_2 = arith.constant 0 : i32
    return %c0_i32, %c0_i32_0, %c0_i32_1 : i32, i32, i32
  }
  func.func @transform_11(%arg0: i32, %arg1: memref<4xi32, #tpu.memory_space<smem>>) -> (i32, i32, i32) {
    %c0_i32 = arith.constant 0 : i32
    %c0_i32_0 = arith.constant 0 : i32
    %c0_i32_1 = arith.constant 0 : i32
    %c0_i32_2 = arith.constant 0 : i32
    return %c0_i32, %c0_i32_0, %c0_i32_1 : i32, i32, i32
  }
  func.func @transform_12(%arg0: i32, %arg1: memref<4xi32, #tpu.memory_space<smem>>) -> (i32, i32) {
    %c0_i32 = arith.constant 0 : i32
    %c0_i32_0 = arith.constant 0 : i32
    %c0_i32_1 = arith.constant 0 : i32
    return %c0_i32, %c0_i32_0 : i32, i32
  }
  func.func @transform_13(%arg0: i32, %arg1: memref<4xi32, #tpu.memory_space<smem>>) -> (i32, i32) {
    %c0_i32 = arith.constant 0 : i32
    %c0_i32_0 = arith.constant 0 : i32
    %c0_i32_1 = arith.constant 0 : i32
    return %c0_i32, %c0_i32_0 : i32, i32
  }
  func.func @transform_14(%arg0: i32, %arg1: memref<4xi32, #tpu.memory_space<smem>>) -> (i32, i32) {
    %c0_i32 = arith.constant 0 : i32
    %c0_i32_0 = arith.constant 0 : i32
    %c0_i32_1 = arith.constant 0 : i32
    return %c0_i32, %c0_i32_0 : i32, i32
  }
  func.func @transform_15(%arg0: i32, %arg1: memref<4xi32, #tpu.memory_space<smem>>) -> (i32, i32) {
    %c0_i32 = arith.constant 0 : i32
    %c0_i32_0 = arith.constant 0 : i32
    %c0_i32_1 = arith.constant 0 : i32
    return %c0_i32, %c0_i32_0 : i32, i32
  }
  func.func @transform_16(%arg0: i32, %arg1: memref<4xi32, #tpu.memory_space<smem>>) -> (i32, i32) {
    %c0_i32 = arith.constant 0 : i32
    %c0_i32_0 = arith.constant 0 : i32
    %c0_i32_1 = arith.constant 0 : i32
    return %c0_i32, %c0_i32_0 : i32, i32
  }
  func.func @transform_17(%arg0: i32, %arg1: memref<4xi32, #tpu.memory_space<smem>>) -> (i32, i32) {
    %c0_i32 = arith.constant 0 : i32
    %c0_i32_0 = arith.constant 0 : i32
    %c0_i32_1 = arith.constant 0 : i32
    return %c0_i32, %c0_i32_0 : i32, i32
  }
  func.func @transform_18(%arg0: i32, %arg1: memref<4xi32, #tpu.memory_space<smem>>) -> (i32, i32) {
    %c0_i32 = arith.constant 0 : i32
    %c0_i32_0 = arith.constant 0 : i32
    %c0_i32_1 = arith.constant 0 : i32
    return %c0_i32, %c0_i32_0 : i32, i32
  }
  func.func @transform_19(%arg0: i32, %arg1: memref<4xi32, #tpu.memory_space<smem>>) -> (i32, i32) {
    %c0_i32 = arith.constant 0 : i32
    %c0_i32_0 = arith.constant 0 : i32
    %c0_i32_1 = arith.constant 0 : i32
    return %c0_i32, %c0_i32_0 : i32, i32
  }
}

</mosaic_0001>

<llo_original>
// kernel: han_forward.1
$region0: #{han_forward.1}
  #allocation0 [shape = 'u32[]', space=smem, size = 0x4, offset = 0x4, fixed_abs, tag = 'smem constant byte address 0x4 - core index']
  #allocation1 [shape = 'u32[72,128]{1,0:T(1,128)}', space=vmem, size = 0x9000, scoped, tag = 'internal scratch']
  #allocation2 [shape = 's32[1]{0}', space=sflag, size = 0x4, scoped, tag = 'scoped memory for han_forward.1']
  #allocation3 [shape = 'u8[512]{0}', space=smem, size = 0x200, scoped, tag = 'prefetched SMEM operand 0']
  %s0 = inlined_call_operand.vmem [shape: s32[4], index: 0, kind: input, shape index: {}]
  %s1 = inlined_call_operand.vmem [shape: f32[4,8,32], index: 1, kind: input, shape index: {}]
  %s2 = inlined_call_operand.hbm [shape: f32[3,32,32], index: 2, kind: input, shape index: {}]
  %s3 = inlined_call_operand.vmem [shape: f32[3,1,32], index: 3, kind: input, shape index: {}]
  %s4 = inlined_call_operand.hbm [shape: f32[3,32,32], index: 4, kind: input, shape index: {}]
  %s5 = inlined_call_operand.vmem [shape: f32[3,1,32], index: 5, kind: input, shape index: {}]
  %s6 = inlined_call_operand.vmem [shape: f32[32,32], index: 6, kind: input, shape index: {}]
  %s7 = inlined_call_operand.vmem [shape: f32[1,32], index: 7, kind: input, shape index: {}]
  %s8 = inlined_call_operand.vmem [shape: f32[32,1], index: 8, kind: input, shape index: {}]
  %s9 = inlined_call_operand.hbm [shape: f32[3,32,32], index: 9, kind: input, shape index: {}]
  %s10 = inlined_call_operand.hbm [shape: f32[3,1,32], index: 10, kind: input, shape index: {}]
  %s11 = inlined_call_operand.hbm [shape: f32[3,32,32], index: 11, kind: input, shape index: {}]
  %s12 = inlined_call_operand.hbm [shape: f32[3,1,32], index: 12, kind: input, shape index: {}]
  %s13 = inlined_call_operand.vmem [shape: f32[32,32], index: 13, kind: input, shape index: {}]
  %s14 = inlined_call_operand.vmem [shape: f32[1,32], index: 14, kind: input, shape index: {}]
  %s15 = inlined_call_operand.vmem [shape: f32[32,1], index: 15, kind: input, shape index: {}]
  %s16 = inlined_call_operand.vmem [shape: f32[32,8], index: 16, kind: input, shape index: {}]
  %s17 = inlined_call_operand.hbm [shape: f32[1,8], index: 17, kind: input, shape index: {}]
  %s18 = inlined_call_operand.hbm [shape: f32[1,8], index: 18, kind: output, shape index: {0}]
  %s19 = inlined_call_operand.vmem [shape: f32[1,32], index: 19, kind: output, shape index: {1}]
  %s20 = inlined_call_operand.vmem [shape: f32[1,32], index: 20, kind: output, shape index: {2}]
  %21 = xla_tuple %s18, %s19, %s20
  %s22 = sld [smem:[#allocation0]]
  $region122: #{han_forward.1} parent=0
    _
  %s24 = ssub.s32 1, %s22
  %s25 = scalar_select 0, %s24, %s22
  %s27 = sshll.u32 %s0, 4
  %s28 = int_to_ptr.vmem [resolvable:$true] %s27
  %30 = dma.vmem_to_smem %s28, 16, [#allocation3], [#allocation2]
  %32 = dma.done [#allocation2], 16
  %33 = sfence
  $region1: #{han_forward.1} parent=0
    #allocation4 [shape = 'u8[49152]{0}', space=vmem, size = 0xc000, scoped, tag = 'input window, operand 2, single buffered']
    #allocation5 [shape = 's32[1]{0}', space=sflag, size = 0x4, scoped, tag = 'scoped memory for han_forward.1']
    #allocation6 [shape = 's32[1]{0}', space=sflag, size = 0x4, scoped, tag = 'scoped memory for han_forward.1']
    #allocation7 [shape = 'u8[49152]{0}', space=vmem, size = 0xc000, scoped, tag = 'input window, operand 4, single buffered']
    #allocation8 [shape = 's32[1]{0}', space=sflag, size = 0x4, scoped, tag = 'scoped memory for han_forward.1']
    #allocation9 [shape = 'u8[49152]{0}', space=vmem, size = 0xc000, scoped, tag = 'input window, operand 9, single buffered']
    #allocation10 [shape = 'u8[1536]{0}', space=vmem, size = 0x800, scoped, tag = 'input window, operand 10, single buffered']
    #allocation11 [shape = 's32[1]{0}', space=sflag, size = 0x4, scoped, tag = 'scoped memory for han_forward.1']
    #allocation12 [shape = 'u8[49152]{0}', space=vmem, size = 0xc000, scoped, tag = 'input window, operand 11, single buffered']
    #allocation13 [shape = 'u8[1536]{0}', space=vmem, size = 0x800, scoped, tag = 'input window, operand 12, single buffered']
    #allocation14 [shape = 's32[1]{0}', space=sflag, size = 0x4, scoped, tag = 'scoped memory for han_forward.1']
    #allocation15 [shape = 'u8[512]{0}', space=vmem, size = 0x400, scoped, tag = 'input window, operand 17, single buffered']
    #allocation16 [shape = 'u8[512]{0}', space=vmem, size = 0x400, scoped, tag = 'output window, operand 0, single buffered']
    %34 = vsyncpa [#allocation5], 0
    %35 = vsyncpa [#allocation8], 0
    %36 = vsyncpa [#allocation11], 0
    %37 = vsyncpa [#allocation14], 0
    %38 = vsyncpa [#allocation6], 0
    // Predicated region
    $region2: #{han_forward.1} parent=1 // pred_check
      _
    $region3: #{han_forward.1} parent=1 // pred_check_branch
      %40 = sbr.rel (0) target = $region5
    $region4: #{han_forward.1} parent=1 // pred_region
      _
    $region5: #{han_forward.1} parent=1 // pred_fallthru
      _
    // Predicated region
    $region6: #{han_forward.1} parent=1 // pred_check
      _
    $region7: #{han_forward.1} parent=1 // pred_check_branch
      %42 = sbr.rel (0) target = $region9
    $region8: #{han_forward.1} parent=1 // pred_region
      %44 = vsyncadd [#allocation5], 0
      %s45 = sshll.u32 %s2, 4
      %s46 = int_to_ptr.hbm [resolvable:$true] %s45
      %s47 = sshll.u32 [#allocation4], 4
      %s48 = int_to_ptr.vmem [resolvable:$true] %s47
      %53 = dma.hbm_to_vmem [thread:$0]  %s46, 1536, %s48, [#allocation5], 128, 128, 8
    $region9: #{han_forward.1} parent=1 // pred_fallthru
      _
    // Predicated region
    $region10: #{han_forward.1} parent=1 // pred_check
      _
    $region11: #{han_forward.1} parent=1 // pred_check_branch
      %55 = sbr.rel (0) target = $region13
    $region12: #{han_forward.1} parent=1 // pred_region
      _
    $region13: #{han_forward.1} parent=1 // pred_fallthru
      _
    // Predicated region
    $region14: #{han_forward.1} parent=1 // pred_check
      _
    $region15: #{han_forward.1} parent=1 // pred_check_branch
      %57 = sbr.rel (0) target = $region17
    $region16: #{han_forward.1} parent=1 // pred_region
      %59 = vsyncadd [#allocation8], 0
      %s60 = sshll.u32 %s4, 4
      %s61 = int_to_ptr.hbm [resolvable:$true] %s60
      %s62 = sshll.u32 [#allocation7], 4
      %s63 = int_to_ptr.vmem [resolvable:$true] %s62
      %68 = dma.hbm_to_vmem [thread:$0]  %s61, 1536, %s63, [#allocation8], 128, 128, 8
    $region17: #{han_forward.1} parent=1 // pred_fallthru
      _
    // Predicated region
    $region18: #{han_forward.1} parent=1 // pred_check
      _
    $region19: #{han_forward.1} parent=1 // pred_check_branch
      %70 = sbr.rel (0) target = $region21
    $region20: #{han_forward.1} parent=1 // pred_region
      _
    $region21: #{han_forward.1} parent=1 // pred_fallthru
      _
    // Predicated region
    $region22: #{han_forward.1} parent=1 // pred_check
      _
    $region23: #{han_forward.1} parent=1 // pred_check_branch
      %72 = sbr.rel (0) target = $region25
    $region24: #{han_forward.1} parent=1 // pred_region
      _
    $region25: #{han_forward.1} parent=1 // pred_fallthru
      _
    // Predicated region
    $region26: #{han_forward.1} parent=1 // pred_check
      _
    $region27: #{han_forward.1} parent=1 // pred_check_branch
      %74 = sbr.rel (0) target = $region29
    $region28: #{han_forward.1} parent=1 // pred_region
      _
    $region29: #{han_forward.1} parent=1 // pred_fallthru
      _
    // Predicated region
    $region30: #{han_forward.1} parent=1 // pred_check
      _
    $region31: #{han_forward.1} parent=1 // pred_check_branch
      %76 = sbr.rel (0) target = $region33
    $region32: #{han_forward.1} parent=1 // pred_region
      _
    $region33: #{han_forward.1} parent=1 // pred_fallthru
      _
    // Predicated region
    $region34: #{han_forward.1} parent=1 // pred_check
      _
    $region35: #{han_forward.1} parent=1 // pred_check_branch
      %78 = sbr.rel (0) target = $region37
    $region36: #{han_forward.1} parent=1 // pred_region
      %80 = vsyncadd [#allocation8], 0
      %s81 = sshll.u32 %s9, 4
      %s82 = int_to_ptr.hbm [resolvable:$true] %s81
      %s83 = sshll.u32 [#allocation9], 4
      %s84 = int_to_ptr.vmem [resolvable:$true] %s83
      %89 = dma.hbm_to_vmem [thread:$0]  %s82, 1536, %s84, [#allocation8], 128, 128, 8
    $region37: #{han_forward.1} parent=1 // pred_fallthru
      _
    // Predicated region
    $region38: #{han_forward.1} parent=1 // pred_check
      _
    $region39: #{han_forward.1} parent=1 // pred_check_branch
      %91 = sbr.rel (0) target = $region41
    $region40: #{han_forward.1} parent=1 // pred_region
      %93 = vsyncadd [#allocation11], 0
      %s94 = sshll.u32 %s10, 4
      %s95 = int_to_ptr.hbm [resolvable:$true] %s94
      %s96 = sshll.u32 [#allocation10], 4
      %s97 = int_to_ptr.vmem [resolvable:$true] %s96
      %102 = dma.hbm_to_vmem [thread:$0]  %s95, 48, %s97, [#allocation11], 16, 16, 1
    $region41: #{han_forward.1} parent=1 // pred_fallthru
      _
    // Predicated region
    $region42: #{han_forward.1} parent=1 // pred_check
      _
    $region43: #{han_forward.1} parent=1 // pred_check_branch
      %104 = sbr.rel (0) target = $region45
    $region44: #{han_forward.1} parent=1 // pred_region
      %106 = vsyncadd [#allocation11], 0
      %s107 = sshll.u32 %s11, 4
      %s108 = int_to_ptr.hbm [resolvable:$true] %s107
      %s109 = sshll.u32 [#allocation12], 4
      %s110 = int_to_ptr.vmem [resolvable:$true] %s109
      %115 = dma.hbm_to_vmem [thread:$0]  %s108, 1536, %s110, [#allocation11], 128, 128, 8
    $region45: #{han_forward.1} parent=1 // pred_fallthru
      _
    // Predicated region
    $region46: #{han_forward.1} parent=1 // pred_check
      _
    $region47: #{han_forward.1} parent=1 // pred_check_branch
      %117 = sbr.rel (0) target = $region49
    $region48: #{han_forward.1} parent=1 // pred_region
      %119 = vsyncadd [#allocation14], 0
      %s120 = sshll.u32 %s12, 4
      %s121 = int_to_ptr.hbm [resolvable:$true] %s120
      %s122 = sshll.u32 [#allocation13], 4
      %s123 = int_to_ptr.vmem [resolvable:$true] %s122
      %128 = dma.hbm_to_vmem [thread:$0]  %s121, 48, %s123, [#allocation14], 16, 16, 1
    $region49: #{han_forward.1} parent=1 // pred_fallthru
      _
    // Predicated region
    $region50: #{han_forward.1} parent=1 // pred_check
      _
    $region51: #{han_forward.1} parent=1 // pred_check_branch
      %130 = sbr.rel (0) target = $region53
    $region52: #{han_forward.1} parent=1 // pred_region
      _
    $region53: #{han_forward.1} parent=1 // pred_fallthru
      _
    // Predicated region
    $region54: #{han_forward.1} parent=1 // pred_check
      _
    $region55: #{han_forward.1} parent=1 // pred_check_branch
      %132 = sbr.rel (0) target = $region57
    $region56: #{han_forward.1} parent=1 // pred_region
      _
    $region57: #{han_forward.1} parent=1 // pred_fallthru
      _
    // Predicated region
    $region58: #{han_forward.1} parent=1 // pred_check
      _
    $region59: #{han_forward.1} parent=1 // pred_check_branch
      %134 = sbr.rel (0) target = $region61
    $region60: #{han_forward.1} parent=1 // pred_region
      _
    $region61: #{han_forward.1} parent=1 // pred_fallthru
      _
    // Predicated region
    $region62: #{han_forward.1} parent=1 // pred_check
      _
    $region63: #{han_forward.1} parent=1 // pred_check_branch
      %136 = sbr.rel (0) target = $region65
    $region64: #{han_forward.1} parent=1 // pred_region
      _
    $region65: #{han_forward.1} parent=1 // pred_fallthru
      _
    // Predicated region
    $region66: #{han_forward.1} parent=1 // pred_check
      _
    $region67: #{han_forward.1} parent=1 // pred_check_branch
      %138 = sbr.rel (0) target = $region69
    $region68: #{han_forward.1} parent=1 // pred_region
      %140 = vsyncadd [#allocation14], 0
      %s142 = sshll.u32 %s17, 4
      %s143 = int_to_ptr.hbm [resolvable:$true] %s142
      %s144 = sshll.u32 [#allocation15], 4
      %s145 = int_to_ptr.vmem [resolvable:$true] %s144
      %147 = dma.hbm_to_vmem [thread:$0]  %s143, 16, %s145, [#allocation14]
    $region69: #{han_forward.1} parent=1 // pred_fallthru
      _
    // Predicated region
    $region70: #{han_forward.1} parent=1 // pred_check
      _
    $region71: #{han_forward.1} parent=1 // pred_check_branch
      %149 = sbr.rel (0) target = $region73
    $region72: #{han_forward.1} parent=1 // pred_region
      %151 = dma.done [#allocation5], 1536
    $region73: #{han_forward.1} parent=1 // pred_fallthru
      _
    // Predicated region
    $region74: #{han_forward.1} parent=1 // pred_check
      _
    $region75: #{han_forward.1} parent=1 // pred_check_branch
      %153 = sbr.rel (0) target = $region77
    $region76: #{han_forward.1} parent=1 // pred_region
      %155 = dma.done [#allocation8], 1536
    $region77: #{han_forward.1} parent=1 // pred_fallthru
      _
    // Predicated region
    $region78: #{han_forward.1} parent=1 // pred_check
      _
    $region79: #{han_forward.1} parent=1 // pred_check_branch
      %157 = sbr.rel (0) target = $region81
    $region80: #{han_forward.1} parent=1 // pred_region
      %159 = dma.done [#allocation8], 1536
    $region81: #{han_forward.1} parent=1 // pred_fallthru
      _
    // Predicated region
    $region82: #{han_forward.1} parent=1 // pred_check
      _
    $region83: #{han_forward.1} parent=1 // pred_check_branch
      %161 = sbr.rel (0) target = $region85
    $region84: #{han_forward.1} parent=1 // pred_region
      %163 = dma.done [#allocation11], 48
    $region85: #{han_forward.1} parent=1 // pred_fallthru
      _
    // Predicated region
    $region86: #{han_forward.1} parent=1 // pred_check
      _
    $region87: #{han_forward.1} parent=1 // pred_check_branch
      %165 = sbr.rel (0) target = $region89
    $region88: #{han_forward.1} parent=1 // pred_region
      %167 = dma.done [#allocation11], 1536
    $region89: #{han_forward.1} parent=1 // pred_fallthru
      _
    // Predicated region
    $region90: #{han_forward.1} parent=1 // pred_check
      _
    $region91: #{han_forward.1} parent=1 // pred_check_branch
      %169 = sbr.rel (0) target = $region93
    $region92: #{han_forward.1} parent=1 // pred_region
      %171 = dma.done [#allocation14], 48
    $region93: #{han_forward.1} parent=1 // pred_fallthru
      _
    // Predicated region
    $region94: #{han_forward.1} parent=1 // pred_check
      _
    $region95: #{han_forward.1} parent=1 // pred_check_branch
      %173 = sbr.rel (0) target = $region97
    $region96: #{han_forward.1} parent=1 // pred_region
      %175 = dma.done [#allocation14], 16
    $region97: #{han_forward.1} parent=1 // pred_fallthru
      _
    %v176 = vlaneseq
    %v177 = vand.u32 %v176, 127
    %vm178 = vcmp.lt.s32.totalorder %v177, 16
    %v179 = vlaneseq
    %v180 = vshrl.u32 %v179, 7
    %v181 = vld [vmem:[#allocation4] sm:$0xff]
    %v182 = vld [vmem:[#allocation4 + $0x8] sm:$0xff]
    %v183 = vld [vmem:[#allocation4 + $0x10] sm:$0xff]
    %v184 = vld [vmem:[#allocation4 + $0x18] sm:$0xff]
    %s185 = scalar_lea.vmem [#allocation4], 32
    %v186 = vld [vmem:[%s185] sm:$0xff]
    %v187 = vld [vmem:[%s185 + $0x8] sm:$0xff]
    %v188 = vld [vmem:[%s185 + $0x10] sm:$0xff]
    %v189 = vld [vmem:[%s185 + $0x18] sm:$0xff]
    %s190 = scalar_lea.vmem [#allocation4], 64
    %v191 = vld [vmem:[%s190] sm:$0xff]
    %v192 = vld [vmem:[%s190 + $0x8] sm:$0xff]
    %v193 = vld [vmem:[%s190 + $0x10] sm:$0xff]
    %v194 = vld [vmem:[%s190 + $0x18] sm:$0xff]
    %v195 = vld [vmem:[%s3] sm:$0x1]
    %s196 = scalar_lea.vmem %s3, 1
    %v197 = vld [vmem:[%s196] sm:$0x1]
    %s198 = scalar_lea.vmem %s3, 2
    %v199 = vld [vmem:[%s198] sm:$0x1]
    %v200 = vld [vmem:[#allocation7] sm:$0xff]
    %v201 = vld [vmem:[#allocation7 + $0x8] sm:$0xff]
    %v202 = vld [vmem:[#allocation7 + $0x10] sm:$0xff]
    %v203 = vld [vmem:[#allocation7 + $0x18] sm:$0xff]
    %s204 = scalar_lea.vmem [#allocation7], 32
    %v205 = vld [vmem:[%s204] sm:$0xff]
    %v206 = vld [vmem:[%s204 + $0x8] sm:$0xff]
    %v207 = vld [vmem:[%s204 + $0x10] sm:$0xff]
    %v208 = vld [vmem:[%s204 + $0x18] sm:$0xff]
    %s209 = scalar_lea.vmem [#allocation7], 64
    %v210 = vld [vmem:[%s209] sm:$0xff]
    %v211 = vld [vmem:[%s209 + $0x8] sm:$0xff]
    %v212 = vld [vmem:[%s209 + $0x10] sm:$0xff]
    %v213 = vld [vmem:[%s209 + $0x18] sm:$0xff]
    %v214 = vld [vmem:[%s5] sm:$0x1]
    %s215 = scalar_lea.vmem %s5, 1
    %v216 = vld [vmem:[%s215] sm:$0x1]
    %s217 = scalar_lea.vmem %s5, 2
    %v218 = vld [vmem:[%s217] sm:$0x1]
    %v219 = vld [vmem:[%s6] sm:$0xff]
    %v220 = vld [vmem:[%s6 + $0x8] sm:$0xff]
    %v221 = vld [vmem:[%s6 + $0x10] sm:$0xff]
    %v222 = vld [vmem:[%s6 + $0x18] sm:$0xff]
    %v223 = vld [vmem:[%s7] sm:$0x1]
    %v224 = vld [vmem:[%s8] sm:$0xff]
    %v225 = vld [vmem:[%s8 + $0x8] sm:$0xff]
    %v226 = vld [vmem:[%s8 + $0x10] sm:$0xff]
    %v227 = vld [vmem:[%s8 + $0x18] sm:$0xff]
    %s228 = sld [smem:[#allocation3]]
    %v229 = vld [vmem:[%s1] sm:$0xff]
    %v231 = vperm.slane %v195, 0
    %vm233 = vcmask 261120
    %v235 = vsel %vm233, %v229, 0
    %237 = vmatpush.msra.mxu0 0.0
    %238 = vmatpush.msra.mxu0 0.0
    %239 = vmatpush.msra.mxu0 0.0
    %240 = vmatpush.msra.mxu0 0.0
    %241 = vmatpush.msra.mxu0 0.0
    %242 = vmatpush.msra.mxu0 0.0
    %243 = vmatpush.msra.mxu0 0.0
    %244 = vmatpush.msra.mxu0 0.0
    %245 = vmatpush.msra.mxu0 0.0
    %246 = vmatpush.msra.mxu0 0.0
    %247 = vmatpush.msra.mxu0 0.0
    %248 = vmatpush.msra.mxu0 0.0
    %249 = vmatpush.msra.mxu0 %v184
    %250 = vmatpush.msra.mxu0 %v183
    %251 = vmatpush.msra.mxu0 %v182
    %252 = vmatpush.msra.mxu0 %v181
    %253 = vmatmul.f32.gmra.mxu0 %v235
    %v254 = vpop.f32.mrf.mxu0
    %v255 = vadd.f32 %v231, %v254
    %256 = vdwg.mxu0
    %v258 = vperm.slane %v197, 0
    %260 = vmatpush.msra.mxu0 0.0
    %261 = vmatpush.msra.mxu0 0.0
    %262 = vmatpush.msra.mxu0 0.0
    %263 = vmatpush.msra.mxu0 0.0
    %264 = vmatpush.msra.mxu0 0.0
    %265 = vmatpush.msra.mxu0 0.0
    %266 = vmatpush.msra.mxu0 0.0
    %267 = vmatpush.msra.mxu0 0.0
    %268 = vmatpush.msra.mxu0 0.0
    %269 = vmatpush.msra.mxu0 0.0
    %270 = vmatpush.msra.mxu0 0.0
    %271 = vmatpush.msra.mxu0 0.0
    %272 = vmatpush.msra.mxu0 %v189
    %273 = vmatpush.msra.mxu0 %v188
    %274 = vmatpush.msra.mxu0 %v187
    %275 = vmatpush.msra.mxu0 %v186
    %276 = vmatmul.f32.gmra.mxu0 %v235
    %v277 = vpop.f32.mrf.mxu0
    %v278 = vadd.f32 %v258, %v277
    %279 = vdwg.mxu0
    %v281 = vperm.slane %v199, 0
    %283 = vmatpush.msra.mxu0 0.0
    %284 = vmatpush.msra.mxu0 0.0
    %285 = vmatpush.msra.mxu0 0.0
    %286 = vmatpush.msra.mxu0 0.0
    %287 = vmatpush.msra.mxu0 0.0
    %288 = vmatpush.msra.mxu0 0.0
    %289 = vmatpush.msra.mxu0 0.0
    %290 = vmatpush.msra.mxu0 0.0
    %291 = vmatpush.msra.mxu0 0.0
    %292 = vmatpush.msra.mxu0 0.0
    %293 = vmatpush.msra.mxu0 0.0
    %294 = vmatpush.msra.mxu0 0.0
    %295 = vmatpush.msra.mxu0 %v194
    %296 = vmatpush.msra.mxu0 %v193
    %297 = vmatpush.msra.mxu0 %v192
    %298 = vmatpush.msra.mxu0 %v191
    %299 = vmatmul.f32.gmra.mxu0 %v235
    %v300 = vpop.f32.mrf.mxu0
    %v301 = vadd.f32 %v281, %v300
    %302 = vdwg.mxu0
    %v304 = vrot.slane %v255, 7
    %v306 = vsel %vm178, %v255, %v304
    %v308 = vrot.slane %v278, 7
    %v310 = vsel %vm178, %v278, %v308
    %v312 = vrot.slane %v301, 7
    %v314 = vsel %vm178, %v301, %v312
    %v316 = vsel %vm233, 0.0, 0
    %318 = vmatpush.msra.mxu0 0.0
    %319 = vmatpush.msra.mxu0 0.0
    %320 = vmatpush.msra.mxu0 0.0
    %321 = vmatpush.msra.mxu0 0.0
    %322 = vmatpush.msra.mxu0 0.0
    %323 = vmatpush.msra.mxu0 0.0
    %324 = vmatpush.msra.mxu0 0.0
    %325 = vmatpush.msra.mxu0 0.0
    %326 = vmatpush.msra.mxu0 0.0
    %327 = vmatpush.msra.mxu0 0.0
    %328 = vmatpush.msra.mxu0 0.0
    %329 = vmatpush.msra.mxu0 0.0
    %330 = vmatpush.msra.mxu0 %v203
    %331 = vmatpush.msra.mxu0 %v202
    %332 = vmatpush.msra.mxu0 %v201
    %333 = vmatpush.msra.mxu0 %v200
    %334 = vmatmul.f32.gmra.mxu0 %v316
    %v335 = vpop.f32.mrf.mxu0
    %v336 = vadd.f32 %v214, %v335
    %337 = vdwg.mxu0
    %338 = vmatpush.msra.mxu0 0.0
    %339 = vmatpush.msra.mxu0 0.0
    %340 = vmatpush.msra.mxu0 0.0
    %341 = vmatpush.msra.mxu0 0.0
    %342 = vmatpush.msra.mxu0 0.0
    %343 = vmatpush.msra.mxu0 0.0
    %344 = vmatpush.msra.mxu0 0.0
    %345 = vmatpush.msra.mxu0 0.0
    %346 = vmatpush.msra.mxu0 0.0
    %347 = vmatpush.msra.mxu0 0.0
    %348 = vmatpush.msra.mxu0 0.0
    %349 = vmatpush.msra.mxu0 0.0
    %350 = vmatpush.msra.mxu0 %v208
    %351 = vmatpush.msra.mxu0 %v207
    %352 = vmatpush.msra.mxu0 %v206
    %353 = vmatpush.msra.mxu0 %v205
    %354 = vmatmul.f32.gmra.mxu0 %v316
    %v355 = vpop.f32.mrf.mxu0
    %v356 = vadd.f32 %v216, %v355
    %357 = vdwg.mxu0
    %358 = vmatpush.msra.mxu0 0.0
    %359 = vmatpush.msra.mxu0 0.0
    %360 = vmatpush.msra.mxu0 0.0
    %361 = vmatpush.msra.mxu0 0.0
    %362 = vmatpush.msra.mxu0 0.0
    %363 = vmatpush.msra.mxu0 0.0
    %364 = vmatpush.msra.mxu0 0.0
    %365 = vmatpush.msra.mxu0 0.0
    %366 = vmatpush.msra.mxu0 0.0
    %367 = vmatpush.msra.mxu0 0.0
    %368 = vmatpush.msra.mxu0 0.0
    %369 = vmatpush.msra.mxu0 0.0
    %370 = vmatpush.msra.mxu0 %v213
    %371 = vmatpush.msra.mxu0 %v212
    %372 = vmatpush.msra.mxu0 %v211
    %373 = vmatpush.msra.mxu0 %v210
    %374 = vmatmul.f32.gmra.mxu0 %v316
    %v375 = vpop.f32.mrf.mxu0
    %v376 = vadd.f32 %v218, %v375
    %377 = vdwg.mxu0
    %v378 = vadd.f32 %v306, %v336
    %v379 = vxor.u32 %v378, 2147483648
    %v380 = vmul.f32 %v379, 1.442695
    %v381 = vpow.pop %v380
    %v382 = vadd.f32 %v381, 1.0
    %v383 = vrcp.pop %v382
    %v384 = vmul.f32 %v382, %v383
    %v385 = vsub.f32 1.0, %v384
    %v386 = vmul.f32 %v383, %v385
    %v387 = vadd.f32 %v383, %v386
    %vm388 = vweird.f32 %v382
    %vm389 = vweird.f32 %v383
    %vm390 = vmor %vm388, %vm389
    %v391 = vsel %vm390, %v383, %v387
    %v392 = vand.u32 2147483647, %v382
    %vm393 = vcmp.eq.f32.partialorder %v392, 8.507059e+37
    %v394 = vand.u32 %v382, 2147483648
    %v395 = vor.u32 1.1754944e-38, %v394
    %v396 = vsel %vm393, %v395, %v391
    %v397 = vmul.f32 1.0, %v396
    %v398 = vadd.f32 %v310, %v356
    %v399 = vxor.u32 %v398, 2147483648
    %v400 = vmul.f32 %v399, 1.442695
    %v401 = vpow.pop %v400
    %v402 = vadd.f32 %v401, 1.0
    %v403 = vrcp.pop %v402
    %v404 = vmul.f32 %v402, %v403
    %v405 = vsub.f32 1.0, %v404
    %v406 = vmul.f32 %v403, %v405
    %v407 = vadd.f32 %v403, %v406
    %vm408 = vweird.f32 %v402
    %vm409 = vweird.f32 %v403
    %vm410 = vmor %vm408, %vm409
    %v411 = vsel %vm410, %v403, %v407
    %v412 = vand.u32 2147483647, %v402
    %vm413 = vcmp.eq.f32.partialorder %v412, 8.507059e+37
    %v414 = vand.u32 %v402, 2147483648
    %v415 = vor.u32 1.1754944e-38, %v414
    %v416 = vsel %vm413, %v415, %v411
    %v417 = vmul.f32 1.0, %v416
    %v418 = vmul.f32 %v397, %v376
    %v419 = vadd.f32 %v314, %v418
    %v420 = vtanh.pop %v419
    %v421 = vsub.f32 1.0, %v417
    %v422 = vmul.f32 %v421, %v420
    %v423 = vmul.f32 %v417, 0.0
    %v424 = vadd.f32 %v422, %v423
    %p425 = scmp.gt.s32.totalorder %s228, 0
    %s426 = scalar_select %p425, 1, 0
    %v427 = vstv %s426
    %vm428 = vcmp.eq.s32.totalorder %v427, 1
    %v429 = vsel %vm428, %v424, 0.0
    %p430 = scmp.gt.s32.totalorder %s228, 7
    %s431 = scalar_select %p430, 1, 0
    %v432 = vstv %s431
    %vm433 = vcmp.eq.s32.totalorder %v432, 1
    %v434 = vsel %vm433, %v424, 0.0
    %v435 = vsel %vm178, %v429, %v434
    %vm436 = vcmp.eq.s32.totalorder %v180, 0
    %vm437 = vmand %vm436, %vm178
    %vm438 = vcmp.eq.s32.totalorder %v180, 7
    %vm439 = vmxor %vm178, 1
    %vm440 = vmand %vm438, %vm439
    %vm441 = vmor %vm437, %vm440
    %v442 = vperm.slane %v435, 0
    %v443 = vsel %vm441, %v442, 0.0
    %v444 = vrot.slane %v255, 5
    %v446 = vsel %vm178, %v255, %v444
    %v447 = vrot.slane %v278, 5
    %v449 = vsel %vm178, %v278, %v447
    %v450 = vrot.slane %v301, 5
    %v452 = vsel %vm178, %v301, %v450
    %v454 = vsel %vm233, %v435, 0
    %456 = vmatpush.msra.mxu0 0.0
    %457 = vmatpush.msra.mxu0 0.0
    %458 = vmatpush.msra.mxu0 0.0
    %459 = vmatpush.msra.mxu0 0.0
    %460 = vmatpush.msra.mxu0 0.0
    %461 = vmatpush.msra.mxu0 0.0
    %462 = vmatpush.msra.mxu0 0.0
    %463 = vmatpush.msra.mxu0 0.0
    %464 = vmatpush.msra.mxu0 0.0
    %465 = vmatpush.msra.mxu0 0.0
    %466 = vmatpush.msra.mxu0 0.0
    %467 = vmatpush.msra.mxu0 0.0
    %468 = vmatpush.msra.mxu0 %v203
    %469 = vmatpush.msra.mxu0 %v202
    %470 = vmatpush.msra.mxu0 %v201
    %471 = vmatpush.msra.mxu0 %v200
    %472 = vmatmul.f32.gmra.mxu0 %v454
    %v473 = vpop.f32.mrf.mxu0
    %v474 = vadd.f32 %v214, %v473
    %475 = vdwg.mxu0
    %476 = vmatpush.msra.mxu0 0.0
    %477 = vmatpush.msra.mxu0 0.0
    %478 = vmatpush.msra.mxu0 0.0
    %479 = vmatpush.msra.mxu0 0.0
    %480 = vmatpush.msra.mxu0 0.0
    %481 = vmatpush.msra.mxu0 0.0
    %482 = vmatpush.msra.mxu0 0.0
    %483 = vmatpush.msra.mxu0 0.0
    %484 = vmatpush.msra.mxu0 0.0
    %485 = vmatpush.msra.mxu0 0.0
    %486 = vmatpush.msra.mxu0 0.0
    %487 = vmatpush.msra.mxu0 0.0
    %488 = vmatpush.msra.mxu0 %v208
    %489 = vmatpush.msra.mxu0 %v207
    %490 = vmatpush.msra.mxu0 %v206
    %491 = vmatpush.msra.mxu0 %v205
    %492 = vmatmul.f32.gmra.mxu0 %v454
    %v493 = vpop.f32.mrf.mxu0
    %v494 = vadd.f32 %v216, %v493
    %495 = vdwg.mxu0
    %496 = vmatpush.msra.mxu0 0.0
    %497 = vmatpush.msra.mxu0 0.0
    %498 = vmatpush.msra.mxu0 0.0
    %499 = vmatpush.msra.mxu0 0.0
    %500 = vmatpush.msra.mxu0 0.0
    %501 = vmatpush.msra.mxu0 0.0
    %502 = vmatpush.msra.mxu0 0.0
    %503 = vmatpush.msra.mxu0 0.0
    %504 = vmatpush.msra.mxu0 0.0
    %505 = vmatpush.msra.mxu0 0.0
    %506 = vmatpush.msra.mxu0 0.0
    %507 = vmatpush.msra.mxu0 0.0
    %508 = vmatpush.msra.mxu0 %v213
    %509 = vmatpush.msra.mxu0 %v212
    %510 = vmatpush.msra.mxu0 %v211
    %511 = vmatpush.msra.mxu0 %v210
    %512 = vmatmul.f32.gmra.mxu0 %v454
    %v513 = vpop.f32.mrf.mxu0
    %v514 = vadd.f32 %v218, %v513
    %515 = vdwg.mxu0
    %v517 = vrot.slane %v474, 7
    %v519 = vadd.f32 %v446, %v517
    %v520 = vxor.u32 %v519, 2147483648
    %v521 = vmul.f32 %v520, 1.442695
    %v522 = vpow.pop %v521
    %v523 = vadd.f32 %v522, 1.0
    %v524 = vrcp.pop %v523
    %v525 = vmul.f32 %v523, %v524
    %v526 = vsub.f32 1.0, %v525
    %v527 = vmul.f32 %v524, %v526
    %v528 = vadd.f32 %v524, %v527
    %vm529 = vweird.f32 %v523
    %vm530 = vweird.f32 %v524
    %vm531 = vmor %vm529, %vm530
    %v532 = vsel %vm531, %v524, %v528
    %v533 = vand.u32 2147483647, %v523
    %vm534 = vcmp.eq.f32.partialorder %v533, 8.507059e+37
    %v535 = vand.u32 %v523, 2147483648
    %v536 = vor.u32 1.1754944e-38, %v535
    %v537 = vsel %vm534, %v536, %v532
    %v538 = vmul.f32 1.0, %v537
    %v540 = vrot.slane %v494, 7
    %v542 = vadd.f32 %v449, %v540
    %v543 = vxor.u32 %v542, 2147483648
    %v544 = vmul.f32 %v543, 1.442695
    %v545 = vpow.pop %v544
    %v546 = vadd.f32 %v545, 1.0
    %v547 = vrcp.pop %v546
    %v548 = vmul.f32 %v546, %v547
    %v549 = vsub.f32 1.0, %v548
    %v550 = vmul.f32 %v547, %v549
    %v551 = vadd.f32 %v547, %v550
    %vm552 = vweird.f32 %v546
    %vm553 = vweird.f32 %v547
    %vm554 = vmor %vm552, %vm553
    %v555 = vsel %vm554, %v547, %v551
    %v556 = vand.u32 2147483647, %v546
    %vm557 = vcmp.eq.f32.partialorder %v556, 8.507059e+37
    %v558 = vand.u32 %v546, 2147483648
    %v559 = vor.u32 1.1754944e-38, %v558
    %v560 = vsel %vm557, %v559, %v555
    %v561 = vmul.f32 1.0, %v560
    %v563 = vrot.slane %v514, 7
    %v565 = vmul.f32 %v538, %v563
    %v566 = vadd.f32 %v452, %v565
    %v567 = vtanh.pop %v566
    %v568 = vsub.f32 1.0, %v561
    %v569 = vmul.f32 %v568, %v567
    %v570 = vrot.slane %v435, 7
    %v572 = vmul.f32 %v561, %v570
    %v573 = vadd.f32 %v569, %v572
    %p574 = scmp.gt.s32.totalorder %s228, 1
    %s575 = scalar_select %p574, 1, 0
    %v576 = vstv %s575
    %vm577 = vcmp.eq.s32.totalorder %v576, 1
    %v578 = vsel %vm577, %v573, %v570
    %p579 = scmp.gt.s32.totalorder %s228, 6
    %s580 = scalar_select %p579, 1, 0
    %v581 = vstv %s580
    %vm582 = vcmp.eq.s32.totalorder %v581, 1
    %v583 = vsel %vm582, %v573, %v570
    %v584 = vsel %vm178, %v578, %v583
    %vm585 = vcmp.eq.s32.totalorder %v180, 1
    %vm586 = vmand %vm585, %vm178
    %vm587 = vcmp.eq.s32.totalorder %v180, 6
    %vm588 = vmand %vm587, %vm439
    %vm589 = vmor %vm586, %vm588
    %v590 = vperm.slane %v584, 1
    %v591 = vsel %vm589, %v590, %v443
    %v592 = vrot.slane %v255, 3
    %v594 = vsel %vm178, %v255, %v592
    %v595 = vrot.slane %v278, 3
    %v597 = vsel %vm178, %v278, %v595
    %v598 = vrot.slane %v301, 3
    %v600 = vsel %vm178, %v301, %v598
    %v602 = vrot.slane %v584, 1
    %v603 = vsel %vm233, %v602, 0
    %605 = vmatpush.msra.mxu0 0.0
    %606 = vmatpush.msra.mxu0 0.0
    %607 = vmatpush.msra.mxu0 0.0
    %608 = vmatpush.msra.mxu0 0.0
    %609 = vmatpush.msra.mxu0 0.0
    %610 = vmatpush.msra.mxu0 0.0
    %611 = vmatpush.msra.mxu0 0.0
    %612 = vmatpush.msra.mxu0 0.0
    %613 = vmatpush.msra.mxu0 0.0
    %614 = vmatpush.msra.mxu0 0.0
    %615 = vmatpush.msra.mxu0 0.0
    %616 = vmatpush.msra.mxu0 0.0
    %617 = vmatpush.msra.mxu0 %v203
    %618 = vmatpush.msra.mxu0 %v202
    %619 = vmatpush.msra.mxu0 %v201
    %620 = vmatpush.msra.mxu0 %v200
    %621 = vmatmul.f32.gmra.mxu0 %v603
    %v622 = vpop.f32.mrf.mxu0
    %v623 = vadd.f32 %v214, %v622
    %624 = vdwg.mxu0
    %625 = vmatpush.msra.mxu0 0.0
    %626 = vmatpush.msra.mxu0 0.0
    %627 = vmatpush.msra.mxu0 0.0
    %628 = vmatpush.msra.mxu0 0.0
    %629 = vmatpush.msra.mxu0 0.0
    %630 = vmatpush.msra.mxu0 0.0
    %631 = vmatpush.msra.mxu0 0.0
    %632 = vmatpush.msra.mxu0 0.0
    %633 = vmatpush.msra.mxu0 0.0
    %634 = vmatpush.msra.mxu0 0.0
    %635 = vmatpush.msra.mxu0 0.0
    %636 = vmatpush.msra.mxu0 0.0
    %637 = vmatpush.msra.mxu0 %v208
    %638 = vmatpush.msra.mxu0 %v207
    %639 = vmatpush.msra.mxu0 %v206
    %640 = vmatpush.msra.mxu0 %v205
    %641 = vmatmul.f32.gmra.mxu0 %v603
    %v642 = vpop.f32.mrf.mxu0
    %v643 = vadd.f32 %v216, %v642
    %644 = vdwg.mxu0
    %645 = vmatpush.msra.mxu0 0.0
    %646 = vmatpush.msra.mxu0 0.0
    %647 = vmatpush.msra.mxu0 0.0
    %648 = vmatpush.msra.mxu0 0.0
    %649 = vmatpush.msra.mxu0 0.0
    %650 = vmatpush.msra.mxu0 0.0
    %651 = vmatpush.msra.mxu0 0.0
    %652 = vmatpush.msra.mxu0 0.0
    %653 = vmatpush.msra.mxu0 0.0
    %654 = vmatpush.msra.mxu0 0.0
    %655 = vmatpush.msra.mxu0 0.0
    %656 = vmatpush.msra.mxu0 0.0
    %657 = vmatpush.msra.mxu0 %v213
    %658 = vmatpush.msra.mxu0 %v212
    %659 = vmatpush.msra.mxu0 %v211
    %660 = vmatpush.msra.mxu0 %v210
    %661 = vmatmul.f32.gmra.mxu0 %v603
    %v662 = vpop.f32.mrf.mxu0
    %v663 = vadd.f32 %v218, %v662
    %664 = vdwg.mxu0
    %v666 = vrot.slane %v623, 6
    %v668 = vadd.f32 %v594, %v666
    %v669 = vxor.u32 %v668, 2147483648
    %v670 = vmul.f32 %v669, 1.442695
    %v671 = vpow.pop %v670
    %v672 = vadd.f32 %v671, 1.0
    %v673 = vrcp.pop %v672
    %v674 = vmul.f32 %v672, %v673
    %v675 = vsub.f32 1.0, %v674
    %v676 = vmul.f32 %v673, %v675
    %v677 = vadd.f32 %v673, %v676
    %vm678 = vweird.f32 %v672
    %vm679 = vweird.f32 %v673
    %vm680 = vmor %vm678, %vm679
    %v681 = vsel %vm680, %v673, %v677
    %v682 = vand.u32 2147483647, %v672
    %vm683 = vcmp.eq.f32.partialorder %v682, 8.507059e+37
    %v684 = vand.u32 %v672, 2147483648
    %v685 = vor.u32 1.1754944e-38, %v684
    %v686 = vsel %vm683, %v685, %v681
    %v687 = vmul.f32 1.0, %v686
    %v689 = vrot.slane %v643, 6
    %v691 = vadd.f32 %v597, %v689
    %v692 = vxor.u32 %v691, 2147483648
    %v693 = vmul.f32 %v692, 1.442695
    %v694 = vpow.pop %v693
    %v695 = vadd.f32 %v694, 1.0
    %v696 = vrcp.pop %v695
    %v697 = vmul.f32 %v695, %v696
    %v698 = vsub.f32 1.0, %v697
    %v699 = vmul.f32 %v696, %v698
    %v700 = vadd.f32 %v696, %v699
    %vm701 = vweird.f32 %v695
    %vm702 = vweird.f32 %v696
    %vm703 = vmor %vm701, %vm702
    %v704 = vsel %vm703, %v696, %v700
    %v705 = vand.u32 2147483647, %v695
    %vm706 = vcmp.eq.f32.partialorder %v705, 8.507059e+37
    %v707 = vand.u32 %v695, 2147483648
    %v708 = vor.u32 1.1754944e-38, %v707
    %v709 = vsel %vm706, %v708, %v704
    %v710 = vmul.f32 1.0, %v709
    %v712 = vrot.slane %v663, 6
    %v714 = vmul.f32 %v687, %v712
    %v715 = vadd.f32 %v600, %v714
    %v716 = vtanh.pop %v715
    %v717 = vsub.f32 1.0, %v710
    %v718 = vmul.f32 %v717, %v716
    %v719 = vrot.slane %v584, 7
    %v721 = vmul.f32 %v710, %v719
    %v722 = vadd.f32 %v718, %v721
    %p723 = scmp.gt.s32.totalorder %s228, 2
    %s724 = scalar_select %p723, 1, 0
    %v725 = vstv %s724
    %vm726 = vcmp.eq.s32.totalorder %v725, 1
    %v727 = vsel %vm726, %v722, %v719
    %p728 = scmp.gt.s32.totalorder %s228, 5
    %s729 = scalar_select %p728, 1, 0
    %v730 = vstv %s729
    %vm731 = vcmp.eq.s32.totalorder %v730, 1
    %v732 = vsel %vm731, %v722, %v719
    %v733 = vsel %vm178, %v727, %v732
    %vm734 = vcmp.eq.s32.totalorder %v180, 2
    %vm735 = vmand %vm734, %vm178
    %vm736 = vcmp.eq.s32.totalorder %v180, 5
    %vm737 = vmand %vm736, %vm439
    %vm738 = vmor %vm735, %vm737
    %v739 = vperm.slane %v733, 2
    %v740 = vsel %vm738, %v739, %v591
    %v741 = vrot.slane %v255, 1
    %v743 = vsel %vm178, %v255, %v741
    %v744 = vrot.slane %v278, 1
    %v746 = vsel %vm178, %v278, %v744
    %v747 = vrot.slane %v301, 1
    %v749 = vsel %vm178, %v301, %v747
    %v751 = vrot.slane %v733, 2
    %v752 = vsel %vm233, %v751, 0
    %754 = vmatpush.msra.mxu0 0.0
    %755 = vmatpush.msra.mxu0 0.0
    %756 = vmatpush.msra.mxu0 0.0
    %757 = vmatpush.msra.mxu0 0.0
    %758 = vmatpush.msra.mxu0 0.0
    %759 = vmatpush.msra.mxu0 0.0
    %760 = vmatpush.msra.mxu0 0.0
    %761 = vmatpush.msra.mxu0 0.0
    %762 = vmatpush.msra.mxu0 0.0
    %763 = vmatpush.msra.mxu0 0.0
    %764 = vmatpush.msra.mxu0 0.0
    %765 = vmatpush.msra.mxu0 0.0
    %766 = vmatpush.msra.mxu0 %v203
    %767 = vmatpush.msra.mxu0 %v202
    %768 = vmatpush.msra.mxu0 %v201
    %769 = vmatpush.msra.mxu0 %v200
    %770 = vmatmul.f32.gmra.mxu0 %v752
    %v771 = vpop.f32.mrf.mxu0
    %v772 = vadd.f32 %v214, %v771
    %773 = vdwg.mxu0
    %774 = vmatpush.msra.mxu0 0.0
    %775 = vmatpush.msra.mxu0 0.0
    %776 = vmatpush.msra.mxu0 0.0
    %777 = vmatpush.msra.mxu0 0.0
    %778 = vmatpush.msra.mxu0 0.0
    %779 = vmatpush.msra.mxu0 0.0
    %780 = vmatpush.msra.mxu0 0.0
    %781 = vmatpush.msra.mxu0 0.0
    %782 = vmatpush.msra.mxu0 0.0
    %783 = vmatpush.msra.mxu0 0.0
    %784 = vmatpush.msra.mxu0 0.0
    %785 = vmatpush.msra.mxu0 0.0
    %786 = vmatpush.msra.mxu0 %v208
    %787 = vmatpush.msra.mxu0 %v207
    %788 = vmatpush.msra.mxu0 %v206
    %789 = vmatpush.msra.mxu0 %v205
    %790 = vmatmul.f32.gmra.mxu0 %v752
    %v791 = vpop.f32.mrf.mxu0
    %v792 = vadd.f32 %v216, %v791
    %793 = vdwg.mxu0
    %794 = vmatpush.msra.mxu0 0.0
    %795 = vmatpush.msra.mxu0 0.0
    %796 = vmatpush.msra.mxu0 0.0
    %797 = vmatpush.msra.mxu0 0.0
    %798 = vmatpush.msra.mxu0 0.0
    %799 = vmatpush.msra.mxu0 0.0
    %800 = vmatpush.msra.mxu0 0.0
    %801 = vmatpush.msra.mxu0 0.0
    %802 = vmatpush.msra.mxu0 0.0
    %803 = vmatpush.msra.mxu0 0.0
    %804 = vmatpush.msra.mxu0 0.0
    %805 = vmatpush.msra.mxu0 0.0
    %806 = vmatpush.msra.mxu0 %v213
    %807 = vmatpush.msra.mxu0 %v212
    %808 = vmatpush.msra.mxu0 %v211
    %809 = vmatpush.msra.mxu0 %v210
    %810 = vmatmul.f32.gmra.mxu0 %v752
    %v811 = vpop.f32.mrf.mxu0
    %v812 = vadd.f32 %v218, %v811
    %813 = vdwg.mxu0
    %v815 = vrot.slane %v772, 5
    %v817 = vadd.f32 %v743, %v815
    %v818 = vxor.u32 %v817, 2147483648
    %v819 = vmul.f32 %v818, 1.442695
    %v820 = vpow.pop %v819
    %v821 = vadd.f32 %v820, 1.0
    %v822 = vrcp.pop %v821
    %v823 = vmul.f32 %v821, %v822
    %v824 = vsub.f32 1.0, %v823
    %v825 = vmul.f32 %v822, %v824
    %v826 = vadd.f32 %v822, %v825
    %vm827 = vweird.f32 %v821
    %vm828 = vweird.f32 %v822
    %vm829 = vmor %vm827, %vm828
    %v830 = vsel %vm829, %v822, %v826
    %v831 = vand.u32 2147483647, %v821
    %vm832 = vcmp.eq.f32.partialorder %v831, 8.507059e+37
    %v833 = vand.u32 %v821, 2147483648
    %v834 = vor.u32 1.1754944e-38, %v833
    %v835 = vsel %vm832, %v834, %v830
    %v836 = vmul.f32 1.0, %v835
    %v838 = vrot.slane %v792, 5
    %v840 = vadd.f32 %v746, %v838
    %v841 = vxor.u32 %v840, 2147483648
    %v842 = vmul.f32 %v841, 1.442695
    %v843 = vpow.pop %v842
    %v844 = vadd.f32 %v843, 1.0
    %v845 = vrcp.pop %v844
    %v846 = vmul.f32 %v844, %v845
    %v847 = vsub.f32 1.0, %v846
    %v848 = vmul.f32 %v845, %v847
    %v849 = vadd.f32 %v845, %v848
    %vm850 = vweird.f32 %v844
    %vm851 = vweird.f32 %v845
    %vm852 = vmor %vm850, %vm851
    %v853 = vsel %vm852, %v845, %v849
    %v854 = vand.u32 2147483647, %v844
    %vm855 = vcmp.eq.f32.partialorder %v854, 8.507059e+37
    %v856 = vand.u32 %v844, 2147483648
    %v857 = vor.u32 1.1754944e-38, %v856
    %v858 = vsel %vm855, %v857, %v853
    %v859 = vmul.f32 1.0, %v858
    %v861 = vrot.slane %v812, 5
    %v863 = vmul.f32 %v836, %v861
    %v864 = vadd.f32 %v749, %v863
    %v865 = vtanh.pop %v864
    %v866 = vsub.f32 1.0, %v859
    %v867 = vmul.f32 %v866, %v865
    %v868 = vrot.slane %v733, 7
    %v870 = vmul.f32 %v859, %v868
    %v871 = vadd.f32 %v867, %v870
    %p872 = scmp.gt.s32.totalorder %s228, 3
    %s873 = scalar_select %p872, 1, 0
    %v874 = vstv %s873
    %vm875 = vcmp.eq.s32.totalorder %v874, 1
    %v876 = vsel %vm875, %v871, %v868
    %p877 = scmp.gt.s32.totalorder %s228, 4
    %s878 = scalar_select %p877, 1, 0
    %v879 = vstv %s878
    %vm880 = vcmp.eq.s32.totalorder %v879, 1
    %v881 = vsel %vm880, %v871, %v868
    %v882 = vsel %vm178, %v876, %v881
    %vm883 = vcmp.eq.s32.totalorder %v180, 3
    %vm884 = vmand %vm883, %vm178
    %vm885 = vcmp.eq.s32.totalorder %v180, 4
    %vm886 = vmand %vm885, %vm439
    %vm887 = vmor %vm884, %vm886
    %v888 = vperm.slane %v882, 3
    %v889 = vsel %vm887, %v888, %v740
    %v891 = vrot.slane %v882, 3
    %v892 = vsel %vm233, %v891, 0
    %894 = vmatpush.msra.mxu0 0.0
    %895 = vmatpush.msra.mxu0 0.0
    %896 = vmatpush.msra.mxu0 0.0
    %897 = vmatpush.msra.mxu0 0.0
    %898 = vmatpush.msra.mxu0 0.0
    %899 = vmatpush.msra.mxu0 0.0
    %900 = vmatpush.msra.mxu0 0.0
    %901 = vmatpush.msra.mxu0 0.0
    %902 = vmatpush.msra.mxu0 0.0
    %903 = vmatpush.msra.mxu0 0.0
    %904 = vmatpush.msra.mxu0 0.0
    %905 = vmatpush.msra.mxu0 0.0
    %906 = vmatpush.msra.mxu0 %v203
    %907 = vmatpush.msra.mxu0 %v202
    %908 = vmatpush.msra.mxu0 %v201
    %909 = vmatpush.msra.mxu0 %v200
    %910 = vmatmul.f32.gmra.mxu0 %v892
    %v911 = vpop.f32.mrf.mxu0
    %v912 = vadd.f32 %v214, %v911
    %913 = vdwg.mxu0
    %914 = vmatpush.msra.mxu0 0.0
    %915 = vmatpush.msra.mxu0 0.0
    %916 = vmatpush.msra.mxu0 0.0
    %917 = vmatpush.msra.mxu0 0.0
    %918 = vmatpush.msra.mxu0 0.0
    %919 = vmatpush.msra.mxu0 0.0
    %920 = vmatpush.msra.mxu0 0.0
    %921 = vmatpush.msra.mxu0 0.0
    %922 = vmatpush.msra.mxu0 0.0
    %923 = vmatpush.msra.mxu0 0.0
    %924 = vmatpush.msra.mxu0 0.0
    %925 = vmatpush.msra.mxu0 0.0
    %926 = vmatpush.msra.mxu0 %v208
    %927 = vmatpush.msra.mxu0 %v207
    %928 = vmatpush.msra.mxu0 %v206
    %929 = vmatpush.msra.mxu0 %v205
    %930 = vmatmul.f32.gmra.mxu0 %v892
    %v931 = vpop.f32.mrf.mxu0
    %v932 = vadd.f32 %v216, %v931
    %933 = vdwg.mxu0
    %934 = vmatpush.msra.mxu0 0.0
    %935 = vmatpush.msra.mxu0 0.0
    %936 = vmatpush.msra.mxu0 0.0
    %937 = vmatpush.msra.mxu0 0.0
    %938 = vmatpush.msra.mxu0 0.0
    %939 = vmatpush.msra.mxu0 0.0
    %940 = vmatpush.msra.mxu0 0.0
    %941 = vmatpush.msra.mxu0 0.0
    %942 = vmatpush.msra.mxu0 0.0
    %943 = vmatpush.msra.mxu0 0.0
    %944 = vmatpush.msra.mxu0 0.0
    %945 = vmatpush.msra.mxu0 0.0
    %946 = vmatpush.msra.mxu0 %v213
    %947 = vmatpush.msra.mxu0 %v212
    %948 = vmatpush.msra.mxu0 %v211
    %949 = vmatpush.msra.mxu0 %v210
    %950 = vmatmul.f32.gmra.mxu0 %v892
    %v951 = vpop.f32.mrf.mxu0
    %v952 = vadd.f32 %v218, %v951
    %953 = vdwg.mxu0
    %v955 = vrot.slane %v912, 4
    %v957 = vadd.f32 %v306, %v955
    %v958 = vxor.u32 %v957, 2147483648
    %v959 = vmul.f32 %v958, 1.442695
    %v960 = vpow.pop %v959
    %v961 = vadd.f32 %v960, 1.0
    %v962 = vrcp.pop %v961
    %v963 = vmul.f32 %v961, %v962
    %v964 = vsub.f32 1.0, %v963
    %v965 = vmul.f32 %v962, %v964
    %v966 = vadd.f32 %v962, %v965
    %vm967 = vweird.f32 %v961
    %vm968 = vweird.f32 %v962
    %vm969 = vmor %vm967, %vm968
    %v970 = vsel %vm969, %v962, %v966
    %v971 = vand.u32 2147483647, %v961
    %vm972 = vcmp.eq.f32.partialorder %v971, 8.507059e+37
    %v973 = vand.u32 %v961, 2147483648
    %v974 = vor.u32 1.1754944e-38, %v973
    %v975 = vsel %vm972, %v974, %v970
    %v976 = vmul.f32 1.0, %v975
    %v978 = vrot.slane %v932, 4
    %v980 = vadd.f32 %v310, %v978
    %v981 = vxor.u32 %v980, 2147483648
    %v982 = vmul.f32 %v981, 1.442695
    %v983 = vpow.pop %v982
    %v984 = vadd.f32 %v983, 1.0
    %v985 = vrcp.pop %v984
    %v986 = vmul.f32 %v984, %v985
    %v987 = vsub.f32 1.0, %v986
    %v988 = vmul.f32 %v985, %v987
    %v989 = vadd.f32 %v985, %v988
    %vm990 = vweird.f32 %v984
    %vm991 = vweird.f32 %v985
    %vm992 = vmor %vm990, %vm991
    %v993 = vsel %vm992, %v985, %v989
    %v994 = vand.u32 2147483647, %v984
    %vm995 = vcmp.eq.f32.partialorder %v994, 8.507059e+37
    %v996 = vand.u32 %v984, 2147483648
    %v997 = vor.u32 1.1754944e-38, %v996
    %v998 = vsel %vm995, %v997, %v993
    %v999 = vmul.f32 1.0, %v998
    %v1001 = vrot.slane %v952, 4
    %v1003 = vmul.f32 %v976, %v1001
    %v1004 = vadd.f32 %v314, %v1003
    %v1005 = vtanh.pop %v1004
    %v1006 = vsub.f32 1.0, %v999
    %v1007 = vmul.f32 %v1006, %v1005
    %v1008 = vrot.slane %v882, 7
    %v1010 = vmul.f32 %v999, %v1008
    %v1011 = vadd.f32 %v1007, %v1010
    %v1012 = vsel %vm880, %v1011, %v1008
    %v1013 = vsel %vm875, %v1011, %v1008
    %v1014 = vsel %vm178, %v1012, %v1013
    %vm1015 = vmand %vm885, %vm178
    %vm1016 = vmand %vm883, %vm439
    %vm1017 = vmor %vm1015, %vm1016
    %v1018 = vperm.slane %v1014, 4
    %v1019 = vsel %vm1017, %v1018, %v889
    %v1021 = vrot.slane %v1014, 4
    %v1022 = vsel %vm233, %v1021, 0
    %1024 = vmatpush.msra.mxu0 0.0
    %1025 = vmatpush.msra.mxu0 0.0
    %1026 = vmatpush.msra.mxu0 0.0
    %1027 = vmatpush.msra.mxu0 0.0
    %1028 = vmatpush.msra.mxu0 0.0
    %1029 = vmatpush.msra.mxu0 0.0
    %1030 = vmatpush.msra.mxu0 0.0
    %1031 = vmatpush.msra.mxu0 0.0
    %1032 = vmatpush.msra.mxu0 0.0
    %1033 = vmatpush.msra.mxu0 0.0
    %1034 = vmatpush.msra.mxu0 0.0
    %1035 = vmatpush.msra.mxu0 0.0
    %1036 = vmatpush.msra.mxu0 %v203
    %1037 = vmatpush.msra.mxu0 %v202
    %1038 = vmatpush.msra.mxu0 %v201
    %1039 = vmatpush.msra.mxu0 %v200
    %1040 = vmatmul.f32.gmra.mxu0 %v1022
    %v1041 = vpop.f32.mrf.mxu0
    %v1042 = vadd.f32 %v214, %v1041
    %1043 = vdwg.mxu0
    %1044 = vmatpush.msra.mxu0 0.0
    %1045 = vmatpush.msra.mxu0 0.0
    %1046 = vmatpush.msra.mxu0 0.0
    %1047 = vmatpush.msra.mxu0 0.0
    %1048 = vmatpush.msra.mxu0 0.0
    %1049 = vmatpush.msra.mxu0 0.0
    %1050 = vmatpush.msra.mxu0 0.0
    %1051 = vmatpush.msra.mxu0 0.0
    %1052 = vmatpush.msra.mxu0 0.0
    %1053 = vmatpush.msra.mxu0 0.0
    %1054 = vmatpush.msra.mxu0 0.0
    %1055 = vmatpush.msra.mxu0 0.0
    %1056 = vmatpush.msra.mxu0 %v208
    %1057 = vmatpush.msra.mxu0 %v207
    %1058 = vmatpush.msra.mxu0 %v206
    %1059 = vmatpush.msra.mxu0 %v205
    %1060 = vmatmul.f32.gmra.mxu0 %v1022
    %v1061 = vpop.f32.mrf.mxu0
    %v1062 = vadd.f32 %v216, %v1061
    %1063 = vdwg.mxu0
    %1064 = vmatpush.msra.mxu0 0.0
    %1065 = vmatpush.msra.mxu0 0.0
    %1066 = vmatpush.msra.mxu0 0.0
    %1067 = vmatpush.msra.mxu0 0.0
    %1068 = vmatpush.msra.mxu0 0.0
    %1069 = vmatpush.msra.mxu0 0.0
    %1070 = vmatpush.msra.mxu0 0.0
    %1071 = vmatpush.msra.mxu0 0.0
    %1072 = vmatpush.msra.mxu0 0.0
    %1073 = vmatpush.msra.mxu0 0.0
    %1074 = vmatpush.msra.mxu0 0.0
    %1075 = vmatpush.msra.mxu0 0.0
    %1076 = vmatpush.msra.mxu0 %v213
    %1077 = vmatpush.msra.mxu0 %v212
    %1078 = vmatpush.msra.mxu0 %v211
    %1079 = vmatpush.msra.mxu0 %v210
    %1080 = vmatmul.f32.gmra.mxu0 %v1022
    %v1081 = vpop.f32.mrf.mxu0
    %v1082 = vadd.f32 %v218, %v1081
    %1083 = vdwg.mxu0
    %v1085 = vrot.slane %v1042, 3
    %v1087 = vadd.f32 %v446, %v1085
    %v1088 = vxor.u32 %v1087, 2147483648
    %v1089 = vmul.f32 %v1088, 1.442695
    %v1090 = vpow.pop %v1089
    %v1091 = vadd.f32 %v1090, 1.0
    %v1092 = vrcp.pop %v1091
    %v1093 = vmul.f32 %v1091, %v1092
    %v1094 = vsub.f32 1.0, %v1093
    %v1095 = vmul.f32 %v1092, %v1094
    %v1096 = vadd.f32 %v1092, %v1095
    %vm1097 = vweird.f32 %v1091
    %vm1098 = vweird.f32 %v1092
    %vm1099 = vmor %vm1097, %vm1098
    %v1100 = vsel %vm1099, %v1092, %v1096
    %v1101 = vand.u32 2147483647, %v1091
    %vm1102 = vcmp.eq.f32.partialorder %v1101, 8.507059e+37
    %v1103 = vand.u32 %v1091, 2147483648
    %v1104 = vor.u32 1.1754944e-38, %v1103
    %v1105 = vsel %vm1102, %v1104, %v1100
    %v1106 = vmul.f32 1.0, %v1105
    %v1108 = vrot.slane %v1062, 3
    %v1110 = vadd.f32 %v449, %v1108
    %v1111 = vxor.u32 %v1110, 2147483648
    %v1112 = vmul.f32 %v1111, 1.442695
    %v1113 = vpow.pop %v1112
    %v1114 = vadd.f32 %v1113, 1.0
    %v1115 = vrcp.pop %v1114
    %v1116 = vmul.f32 %v1114, %v1115
    %v1117 = vsub.f32 1.0, %v1116
    %v1118 = vmul.f32 %v1115, %v1117
    %v1119 = vadd.f32 %v1115, %v1118
    %vm1120 = vweird.f32 %v1114
    %vm1121 = vweird.f32 %v1115
    %vm1122 = vmor %vm1120, %vm1121
    %v1123 = vsel %vm1122, %v1115, %v1119
    %v1124 = vand.u32 2147483647, %v1114
    %vm1125 = vcmp.eq.f32.partialorder %v1124, 8.507059e+37
    %v1126 = vand.u32 %v1114, 2147483648
    %v1127 = vor.u32 1.1754944e-38, %v1126
    %v1128 = vsel %vm1125, %v1127, %v1123
    %v1129 = vmul.f32 1.0, %v1128
    %v1131 = vrot.slane %v1082, 3
    %v1133 = vmul.f32 %v1106, %v1131
    %v1134 = vadd.f32 %v452, %v1133
    %v1135 = vtanh.pop %v1134
    %v1136 = vsub.f32 1.0, %v1129
    %v1137 = vmul.f32 %v1136, %v1135
    %v1138 = vrot.slane %v1014, 7
    %v1140 = vmul.f32 %v1129, %v1138
    %v1141 = vadd.f32 %v1137, %v1140
    %v1142 = vsel %vm731, %v1141, %v1138
    %v1143 = vsel %vm726, %v1141, %v1138
    %v1144 = vsel %vm178, %v1142, %v1143
    %vm1145 = vmand %vm736, %vm178
    %vm1146 = vmand %vm734, %vm439
    %vm1147 = vmor %vm1145, %vm1146
    %v1148 = vperm.slane %v1144, 5
    %v1149 = vsel %vm1147, %v1148, %v1019
    %v1151 = vrot.slane %v1144, 5
    %v1152 = vsel %vm233, %v1151, 0
    %1154 = vmatpush.msra.mxu0 0.0
    %1155 = vmatpush.msra.mxu0 0.0
    %1156 = vmatpush.msra.mxu0 0.0
    %1157 = vmatpush.msra.mxu0 0.0
    %1158 = vmatpush.msra.mxu0 0.0
    %1159 = vmatpush.msra.mxu0 0.0
    %1160 = vmatpush.msra.mxu0 0.0
    %1161 = vmatpush.msra.mxu0 0.0
    %1162 = vmatpush.msra.mxu0 0.0
    %1163 = vmatpush.msra.mxu0 0.0
    %1164 = vmatpush.msra.mxu0 0.0
    %1165 = vmatpush.msra.mxu0 0.0
    %1166 = vmatpush.msra.mxu0 %v203
    %1167 = vmatpush.msra.mxu0 %v202
    %1168 = vmatpush.msra.mxu0 %v201
    %1169 = vmatpush.msra.mxu0 %v200
    %1170 = vmatmul.f32.gmra.mxu0 %v1152
    %v1171 = vpop.f32.mrf.mxu0
    %v1172 = vadd.f32 %v214, %v1171
    %1173 = vdwg.mxu0
    %1174 = vmatpush.msra.mxu0 0.0
    %1175 = vmatpush.msra.mxu0 0.0
    %1176 = vmatpush.msra.mxu0 0.0
    %1177 = vmatpush.msra.mxu0 0.0
    %1178 = vmatpush.msra.mxu0 0.0
    %1179 = vmatpush.msra.mxu0 0.0
    %1180 = vmatpush.msra.mxu0 0.0
    %1181 = vmatpush.msra.mxu0 0.0
    %1182 = vmatpush.msra.mxu0 0.0
    %1183 = vmatpush.msra.mxu0 0.0
    %1184 = vmatpush.msra.mxu0 0.0
    %1185 = vmatpush.msra.mxu0 0.0
    %1186 = vmatpush.msra.mxu0 %v208
    %1187 = vmatpush.msra.mxu0 %v207
    %1188 = vmatpush.msra.mxu0 %v206
    %1189 = vmatpush.msra.mxu0 %v205
    %1190 = vmatmul.f32.gmra.mxu0 %v1152
    %v1191 = vpop.f32.mrf.mxu0
    %v1192 = vadd.f32 %v216, %v1191
    %1193 = vdwg.mxu0
    %1194 = vmatpush.msra.mxu0 0.0
    %1195 = vmatpush.msra.mxu0 0.0
    %1196 = vmatpush.msra.mxu0 0.0
    %1197 = vmatpush.msra.mxu0 0.0
    %1198 = vmatpush.msra.mxu0 0.0
    %1199 = vmatpush.msra.mxu0 0.0
    %1200 = vmatpush.msra.mxu0 0.0
    %1201 = vmatpush.msra.mxu0 0.0
    %1202 = vmatpush.msra.mxu0 0.0
    %1203 = vmatpush.msra.mxu0 0.0
    %1204 = vmatpush.msra.mxu0 0.0
    %1205 = vmatpush.msra.mxu0 0.0
    %1206 = vmatpush.msra.mxu0 %v213
    %1207 = vmatpush.msra.mxu0 %v212
    %1208 = vmatpush.msra.mxu0 %v211
    %1209 = vmatpush.msra.mxu0 %v210
    %1210 = vmatmul.f32.gmra.mxu0 %v1152
    %v1211 = vpop.f32.mrf.mxu0
    %v1212 = vadd.f32 %v218, %v1211
    %1213 = vdwg.mxu0
    %v1215 = vrot.slane %v1172, 2
    %v1217 = vadd.f32 %v594, %v1215
    %v1218 = vxor.u32 %v1217, 2147483648
    %v1219 = vmul.f32 %v1218, 1.442695
    %v1220 = vpow.pop %v1219
    %v1221 = vadd.f32 %v1220, 1.0
    %v1222 = vrcp.pop %v1221
    %v1223 = vmul.f32 %v1221, %v1222
    %v1224 = vsub.f32 1.0, %v1223
    %v1225 = vmul.f32 %v1222, %v1224
    %v1226 = vadd.f32 %v1222, %v1225
    %vm1227 = vweird.f32 %v1221
    %vm1228 = vweird.f32 %v1222
    %vm1229 = vmor %vm1227, %vm1228
    %v1230 = vsel %vm1229, %v1222, %v1226
    %v1231 = vand.u32 2147483647, %v1221
    %vm1232 = vcmp.eq.f32.partialorder %v1231, 8.507059e+37
    %v1233 = vand.u32 %v1221, 2147483648
    %v1234 = vor.u32 1.1754944e-38, %v1233
    %v1235 = vsel %vm1232, %v1234, %v1230
    %v1236 = vmul.f32 1.0, %v1235
    %v1238 = vrot.slane %v1192, 2
    %v1240 = vadd.f32 %v597, %v1238
    %v1241 = vxor.u32 %v1240, 2147483648
    %v1242 = vmul.f32 %v1241, 1.442695
    %v1243 = vpow.pop %v1242
    %v1244 = vadd.f32 %v1243, 1.0
    %v1245 = vrcp.pop %v1244
    %v1246 = vmul.f32 %v1244, %v1245
    %v1247 = vsub.f32 1.0, %v1246
    %v1248 = vmul.f32 %v1245, %v1247
    %v1249 = vadd.f32 %v1245, %v1248
    %vm1250 = vweird.f32 %v1244
    %vm1251 = vweird.f32 %v1245
    %vm1252 = vmor %vm1250, %vm1251
    %v1253 = vsel %vm1252, %v1245, %v1249
    %v1254 = vand.u32 2147483647, %v1244
    %vm1255 = vcmp.eq.f32.partialorder %v1254, 8.507059e+37
    %v1256 = vand.u32 %v1244, 2147483648
    %v1257 = vor.u32 1.1754944e-38, %v1256
    %v1258 = vsel %vm1255, %v1257, %v1253
    %v1259 = vmul.f32 1.0, %v1258
    %v1261 = vrot.slane %v1212, 2
    %v1263 = vmul.f32 %v1236, %v1261
    %v1264 = vadd.f32 %v600, %v1263
    %v1265 = vtanh.pop %v1264
    %v1266 = vsub.f32 1.0, %v1259
    %v1267 = vmul.f32 %v1266, %v1265
    %v1268 = vrot.slane %v1144, 7
    %v1270 = vmul.f32 %v1259, %v1268
    %v1271 = vadd.f32 %v1267, %v1270
    %v1272 = vsel %vm582, %v1271, %v1268
    %v1273 = vsel %vm577, %v1271, %v1268
    %v1274 = vsel %vm178, %v1272, %v1273
    %vm1275 = vmand %vm587, %vm178
    %vm1276 = vmand %vm585, %vm439
    %vm1277 = vmor %vm1275, %vm1276
    %v1278 = vperm.slane %v1274, 6
    %v1279 = vsel %vm1277, %v1278, %v1149
    %v1281 = vrot.slane %v1274, 6
    %v1282 = vsel %vm233, %v1281, 0
    %1284 = vmatpush.msra.mxu0 0.0
    %1285 = vmatpush.msra.mxu0 0.0
    %1286 = vmatpush.msra.mxu0 0.0
    %1287 = vmatpush.msra.mxu0 0.0
    %1288 = vmatpush.msra.mxu0 0.0
    %1289 = vmatpush.msra.mxu0 0.0
    %1290 = vmatpush.msra.mxu0 0.0
    %1291 = vmatpush.msra.mxu0 0.0
    %1292 = vmatpush.msra.mxu0 0.0
    %1293 = vmatpush.msra.mxu0 0.0
    %1294 = vmatpush.msra.mxu0 0.0
    %1295 = vmatpush.msra.mxu0 0.0
    %1296 = vmatpush.msra.mxu0 %v203
    %1297 = vmatpush.msra.mxu0 %v202
    %1298 = vmatpush.msra.mxu0 %v201
    %1299 = vmatpush.msra.mxu0 %v200
    %1300 = vmatmul.f32.gmra.mxu0 %v1282
    %v1301 = vpop.f32.mrf.mxu0
    %v1302 = vadd.f32 %v214, %v1301
    %1303 = vdwg.mxu0
    %1304 = vmatpush.msra.mxu0 0.0
    %1305 = vmatpush.msra.mxu0 0.0
    %1306 = vmatpush.msra.mxu0 0.0
    %1307 = vmatpush.msra.mxu0 0.0
    %1308 = vmatpush.msra.mxu0 0.0
    %1309 = vmatpush.msra.mxu0 0.0
    %1310 = vmatpush.msra.mxu0 0.0
    %1311 = vmatpush.msra.mxu0 0.0
    %1312 = vmatpush.msra.mxu0 0.0
    %1313 = vmatpush.msra.mxu0 0.0
    %1314 = vmatpush.msra.mxu0 0.0
    %1315 = vmatpush.msra.mxu0 0.0
    %1316 = vmatpush.msra.mxu0 %v208
    %1317 = vmatpush.msra.mxu0 %v207
    %1318 = vmatpush.msra.mxu0 %v206
    %1319 = vmatpush.msra.mxu0 %v205
    %1320 = vmatmul.f32.gmra.mxu0 %v1282
    %v1321 = vpop.f32.mrf.mxu0
    %v1322 = vadd.f32 %v216, %v1321
    %1323 = vdwg.mxu0
    %1324 = vmatpush.msra.mxu0 0.0
    %1325 = vmatpush.msra.mxu0 0.0
    %1326 = vmatpush.msra.mxu0 0.0
    %1327 = vmatpush.msra.mxu0 0.0
    %1328 = vmatpush.msra.mxu0 0.0
    %1329 = vmatpush.msra.mxu0 0.0
    %1330 = vmatpush.msra.mxu0 0.0
    %1331 = vmatpush.msra.mxu0 0.0
    %1332 = vmatpush.msra.mxu0 0.0
    %1333 = vmatpush.msra.mxu0 0.0
    %1334 = vmatpush.msra.mxu0 0.0
    %1335 = vmatpush.msra.mxu0 0.0
    %1336 = vmatpush.msra.mxu0 %v213
    %1337 = vmatpush.msra.mxu0 %v212
    %1338 = vmatpush.msra.mxu0 %v211
    %1339 = vmatpush.msra.mxu0 %v210
    %1340 = vmatmul.f32.gmra.mxu0 %v1282
    %v1341 = vpop.f32.mrf.mxu0
    %v1342 = vadd.f32 %v218, %v1341
    %1343 = vdwg.mxu0
    %v1345 = vrot.slane %v1302, 1
    %v1347 = vadd.f32 %v743, %v1345
    %v1348 = vxor.u32 %v1347, 2147483648
    %v1349 = vmul.f32 %v1348, 1.442695
    %v1350 = vpow.pop %v1349
    %v1351 = vadd.f32 %v1350, 1.0
    %v1352 = vrcp.pop %v1351
    %v1353 = vmul.f32 %v1351, %v1352
    %v1354 = vsub.f32 1.0, %v1353
    %v1355 = vmul.f32 %v1352, %v1354
    %v1356 = vadd.f32 %v1352, %v1355
    %vm1357 = vweird.f32 %v1351
    %vm1358 = vweird.f32 %v1352
    %vm1359 = vmor %vm1357, %vm1358
    %v1360 = vsel %vm1359, %v1352, %v1356
    %v1361 = vand.u32 2147483647, %v1351
    %vm1362 = vcmp.eq.f32.partialorder %v1361, 8.507059e+37
    %v1363 = vand.u32 %v1351, 2147483648
    %v1364 = vor.u32 1.1754944e-38, %v1363
    %v1365 = vsel %vm1362, %v1364, %v1360
    %v1366 = vmul.f32 1.0, %v1365
    %v1368 = vrot.slane %v1322, 1
    %v1370 = vadd.f32 %v746, %v1368
    %v1371 = vxor.u32 %v1370, 2147483648
    %v1372 = vmul.f32 %v1371, 1.442695
    %v1373 = vpow.pop %v1372
    %v1374 = vadd.f32 %v1373, 1.0
    %v1375 = vrcp.pop %v1374
    %v1376 = vmul.f32 %v1374, %v1375
    %v1377 = vsub.f32 1.0, %v1376
    %v1378 = vmul.f32 %v1375, %v1377
    %v1379 = vadd.f32 %v1375, %v1378
    %vm1380 = vweird.f32 %v1374
    %vm1381 = vweird.f32 %v1375
    %vm1382 = vmor %vm1380, %vm1381
    %v1383 = vsel %vm1382, %v1375, %v1379
    %v1384 = vand.u32 2147483647, %v1374
    %vm1385 = vcmp.eq.f32.partialorder %v1384, 8.507059e+37
    %v1386 = vand.u32 %v1374, 2147483648
    %v1387 = vor.u32 1.1754944e-38, %v1386
    %v1388 = vsel %vm1385, %v1387, %v1383
    %v1389 = vmul.f32 1.0, %v1388
    %v1391 = vrot.slane %v1342, 1
    %v1393 = vmul.f32 %v1366, %v1391
    %v1394 = vadd.f32 %v749, %v1393
    %v1395 = vtanh.pop %v1394
    %v1396 = vsub.f32 1.0, %v1389
    %v1397 = vmul.f32 %v1396, %v1395
    %v1398 = vrot.slane %v1274, 7
    %v1400 = vmul.f32 %v1389, %v1398
    %v1401 = vadd.f32 %v1397, %v1400
    %v1402 = vsel %vm433, %v1401, %v1398
    %v1403 = vsel %vm428, %v1401, %v1398
    %v1404 = vsel %vm178, %v1402, %v1403
    %vm1405 = vmand %vm438, %vm178
    %vm1406 = vmand %vm436, %vm439
    %vm1407 = vmor %vm1405, %vm1406
    %v1408 = vperm.slane %v1404, 7
    %v1409 = vsel %vm1407, %v1408, %v1279
    %v1411 = vperm.slane %v223, 0
    %v1414 = vsel %vm233, %v1409, 0
    %1416 = vmatpush.msra.mxu0 0.0
    %1417 = vmatpush.msra.mxu0 0.0
    %1418 = vmatpush.msra.mxu0 0.0
    %1419 = vmatpush.msra.mxu0 0.0
    %1420 = vmatpush.msra.mxu0 0.0
    %1421 = vmatpush.msra.mxu0 0.0
    %1422 = vmatpush.msra.mxu0 0.0
    %1423 = vmatpush.msra.mxu0 0.0
    %1424 = vmatpush.msra.mxu0 0.0
    %1425 = vmatpush.msra.mxu0 0.0
    %1426 = vmatpush.msra.mxu0 0.0
    %1427 = vmatpush.msra.mxu0 0.0
    %1428 = vmatpush.msra.mxu0 %v222
    %1429 = vmatpush.msra.mxu0 %v221
    %1430 = vmatpush.msra.mxu0 %v220
    %1431 = vmatpush.msra.mxu0 %v219
    %1432 = vmatmul.f32.gmra.mxu0 %v1414
    %v1433 = vpop.f32.mrf.mxu0
    %v1434 = vadd.f32 %v1411, %v1433
    %1435 = vdwg.mxu0
    %v1436 = vtanh.pop %v1434
    %v1438 = vsel %vm233, %v1436, 0
    %1440 = vmatpush.msra.mxu0 0.0
    %1441 = vmatpush.msra.mxu0 0.0
    %1442 = vmatpush.msra.mxu0 0.0
    %1443 = vmatpush.msra.mxu0 0.0
    %1444 = vmatpush.msra.mxu0 0.0
    %1445 = vmatpush.msra.mxu0 0.0
    %1446 = vmatpush.msra.mxu0 0.0
    %1447 = vmatpush.msra.mxu0 0.0
    %1448 = vmatpush.msra.mxu0 0.0
    %1449 = vmatpush.msra.mxu0 0.0
    %1450 = vmatpush.msra.mxu0 0.0
    %1451 = vmatpush.msra.mxu0 0.0
    %1452 = vmatpush.msra.mxu0 %v227
    %1453 = vmatpush.msra.mxu0 %v226
    %1454 = vmatpush.msra.mxu0 %v225
    %1455 = vmatpush.msra.mxu0 %v224
    %1456 = vmatmul.f32.gmra.mxu0 %v1438
    %v1457 = vpop.f32.mrf.mxu0
    %v1458 = vadd.f32 0.0, %v1457
    %1459 = vdwg.mxu0
    %v1460 = vstv %s228
    %vm1461 = vcmp.lt.s32.totalorder %v180, %v1460
    %v1462 = vsel %vm1461, %v1458, -1e+30
    %vm1463 = vcmask 7168
    %v1464 = vsel %vm1463, %v1462, -inf
    %1465 = vmax.xlane.f32.xlu0 %v1464
    %v1466 = vpop.xlane.xlu0 %1465
    %v1467 = vrot.slane %v1466, 4
    %v1468 = vmax.f32 %v1466, %v1467
    %v1469 = vrot.slane %v1468, 2
    %v1470 = vmax.f32 %v1468, %v1469
    %v1471 = vrot.slane %v1470, 1
    %v1472 = vmax.f32 %v1470, %v1471
    %s1473 = vtos %v1472
    %v1474 = vstv %s1473
    %v1475 = vsub.f32 %v1462, %v1474
    %v1476 = vmul.f32 %v1475, 1.442695
    %v1477 = vpow.pop %v1476
    %v1478 = vsel %vm1463, %v1477, 0.0
    %1479 = vadd.xlane.f32.xlu0 %v1478
    %v1480 = vpop.xlane.xlu0 %1479
    %v1481 = vrot.slane %v1480, 4
    %v1482 = vadd.f32 %v1480, %v1481
    %v1483 = vrot.slane %v1482, 2
    %v1484 = vadd.f32 %v1482, %v1483
    %v1485 = vrot.slane %v1484, 1
    %v1486 = vadd.f32 %v1484, %v1485
    %s1487 = vtos %v1486
    %v1488 = vstv %s1487
    %v1489 = vrcp.pop %v1488
    %v1490 = vmul.f32 %v1488, %v1489
    %v1491 = vsub.f32 1.0, %v1490
    %v1492 = vmul.f32 %v1489, %v1491
    %v1493 = vadd.f32 %v1489, %v1492
    %vm1494 = vweird.f32 %v1488
    %vm1495 = vweird.f32 %v1489
    %vm1496 = vmor %vm1494, %vm1495
    %v1497 = vsel %vm1496, %v1489, %v1493
    %v1498 = vand.u32 2147483647, %v1488
    %vm1499 = vcmp.eq.f32.partialorder %v1498, 8.507059e+37
    %v1500 = vand.u32 %v1488, 2147483648
    %v1501 = vor.u32 1.1754944e-38, %v1500
    %v1502 = vsel %vm1499, %v1501, %v1497
    %v1503 = vmul.f32 %v1477, %v1502
    %1505 = vset.pattern.permute.xlu0 0
    %1506 = vperm.xlu0 %1505, %v1503
    %v1507 = vpop.permute.xlu0 %1506
    %v1509 = vmul.f32 %v1507, %v1409
    %v1510 = vsel %vm233, %v1509, 0.0
    %v1511 = vrot.slane %v1510, 4
    %v1512 = vadd.f32 %v1510, %v1511
    %v1513 = vrot.slane %v1512, 2
    %v1514 = vadd.f32 %v1512, %v1513
    %v1515 = vrot.slane %v1514, 1
    %v1516 = vadd.f32 %v1514, %v1515
    %v1517 = vsel %vm436, %v1516, 0.0
    %s1518 = sld [smem:[#allocation3 + $0x1]]
    %s1519 = scalar_lea.vmem %s1, 8
    %v1520 = vld [vmem:[%s1519] sm:$0xff]
    %v1522 = vsel %vm233, %v1520, 0
    %1524 = vmatpush.msra.mxu0 0.0
    %1525 = vmatpush.msra.mxu0 0.0
    %1526 = vmatpush.msra.mxu0 0.0
    %1527 = vmatpush.msra.mxu0 0.0
    %1528 = vmatpush.msra.mxu0 0.0
    %1529 = vmatpush.msra.mxu0 0.0
    %1530 = vmatpush.msra.mxu0 0.0
    %1531 = vmatpush.msra.mxu0 0.0
    %1532 = vmatpush.msra.mxu0 0.0
    %1533 = vmatpush.msra.mxu0 0.0
    %1534 = vmatpush.msra.mxu0 0.0
    %1535 = vmatpush.msra.mxu0 0.0
    %1536 = vmatpush.msra.mxu0 %v184
    %1537 = vmatpush.msra.mxu0 %v183
    %1538 = vmatpush.msra.mxu0 %v182
    %1539 = vmatpush.msra.mxu0 %v181
    %1540 = vmatmul.f32.gmra.mxu0 %v1522
    %v1541 = vpop.f32.mrf.mxu0
    %v1542 = vadd.f32 %v231, %v1541
    %1543 = vdwg.mxu0
    %1544 = vmatpush.msra.mxu0 0.0
    %1545 = vmatpush.msra.mxu0 0.0
    %1546 = vmatpush.msra.mxu0 0.0
    %1547 = vmatpush.msra.mxu0 0.0
    %1548 = vmatpush.msra.mxu0 0.0
    %1549 = vmatpush.msra.mxu0 0.0
    %1550 = vmatpush.msra.mxu0 0.0
    %1551 = vmatpush.msra.mxu0 0.0
    %1552 = vmatpush.msra.mxu0 0.0
    %1553 = vmatpush.msra.mxu0 0.0
    %1554 = vmatpush.msra.mxu0 0.0
    %1555 = vmatpush.msra.mxu0 0.0
    %1556 = vmatpush.msra.mxu0 %v189
    %1557 = vmatpush.msra.mxu0 %v188
    %1558 = vmatpush.msra.mxu0 %v187
    %1559 = vmatpush.msra.mxu0 %v186
    %1560 = vmatmul.f32.gmra.mxu0 %v1522
    %v1561 = vpop.f32.mrf.mxu0
    %v1562 = vadd.f32 %v258, %v1561
    %1563 = vdwg.mxu0
    %1564 = vmatpush.msra.mxu0 0.0
    %1565 = vmatpush.msra.mxu0 0.0
    %1566 = vmatpush.msra.mxu0 0.0
    %1567 = vmatpush.msra.mxu0 0.0
    %1568 = vmatpush.msra.mxu0 0.0
    %1569 = vmatpush.msra.mxu0 0.0
    %1570 = vmatpush.msra.mxu0 0.0
    %1571 = vmatpush.msra.mxu0 0.0
    %1572 = vmatpush.msra.mxu0 0.0
    %1573 = vmatpush.msra.mxu0 0.0
    %1574 = vmatpush.msra.mxu0 0.0
    %1575 = vmatpush.msra.mxu0 0.0
    %1576 = vmatpush.msra.mxu0 %v194
    %1577 = vmatpush.msra.mxu0 %v193
    %1578 = vmatpush.msra.mxu0 %v192
    %1579 = vmatpush.msra.mxu0 %v191
    %1580 = vmatmul.f32.gmra.mxu0 %v1522
    %v1581 = vpop.f32.mrf.mxu0
    %v1582 = vadd.f32 %v281, %v1581
    %1583 = vdwg.mxu0
    %v1585 = vrot.slane %v1542, 7
    %v1587 = vsel %vm178, %v1542, %v1585
    %v1589 = vrot.slane %v1562, 7
    %v1591 = vsel %vm178, %v1562, %v1589
    %v1593 = vrot.slane %v1582, 7
    %v1595 = vsel %vm178, %v1582, %v1593
    %v1597 = vrot.slane %v1404, 7
    %v1598 = vsel %vm233, %v1597, 0
    %1600 = vmatpush.msra.mxu0 0.0
    %1601 = vmatpush.msra.mxu0 0.0
    %1602 = vmatpush.msra.mxu0 0.0
    %1603 = vmatpush.msra.mxu0 0.0
    %1604 = vmatpush.msra.mxu0 0.0
    %1605 = vmatpush.msra.mxu0 0.0
    %1606 = vmatpush.msra.mxu0 0.0
    %1607 = vmatpush.msra.mxu0 0.0
    %1608 = vmatpush.msra.mxu0 0.0
    %1609 = vmatpush.msra.mxu0 0.0
    %1610 = vmatpush.msra.mxu0 0.0
    %1611 = vmatpush.msra.mxu0 0.0
    %1612 = vmatpush.msra.mxu0 %v203
    %1613 = vmatpush.msra.mxu0 %v202
    %1614 = vmatpush.msra.mxu0 %v201
    %1615 = vmatpush.msra.mxu0 %v200
    %1616 = vmatmul.f32.gmra.mxu0 %v1598
    %v1617 = vpop.f32.mrf.mxu0
    %v1618 = vadd.f32 %v214, %v1617
    %1619 = vdwg.mxu0
    %1620 = vmatpush.msra.mxu0 0.0
    %1621 = vmatpush.msra.mxu0 0.0
    %1622 = vmatpush.msra.mxu0 0.0
    %1623 = vmatpush.msra.mxu0 0.0
    %1624 = vmatpush.msra.mxu0 0.0
    %1625 = vmatpush.msra.mxu0 0.0
    %1626 = vmatpush.msra.mxu0 0.0
    %1627 = vmatpush.msra.mxu0 0.0
    %1628 = vmatpush.msra.mxu0 0.0
    %1629 = vmatpush.msra.mxu0 0.0
    %1630 = vmatpush.msra.mxu0 0.0
    %1631 = vmatpush.msra.mxu0 0.0
    %1632 = vmatpush.msra.mxu0 %v208
    %1633 = vmatpush.msra.mxu0 %v207
    %1634 = vmatpush.msra.mxu0 %v206
    %1635 = vmatpush.msra.mxu0 %v205
    %1636 = vmatmul.f32.gmra.mxu0 %v1598
    %v1637 = vpop.f32.mrf.mxu0
    %v1638 = vadd.f32 %v216, %v1637
    %1639 = vdwg.mxu0
    %1640 = vmatpush.msra.mxu0 0.0
    %1641 = vmatpush.msra.mxu0 0.0
    %1642 = vmatpush.msra.mxu0 0.0
    %1643 = vmatpush.msra.mxu0 0.0
    %1644 = vmatpush.msra.mxu0 0.0
    %1645 = vmatpush.msra.mxu0 0.0
    %1646 = vmatpush.msra.mxu0 0.0
    %1647 = vmatpush.msra.mxu0 0.0
    %1648 = vmatpush.msra.mxu0 0.0
    %1649 = vmatpush.msra.mxu0 0.0
    %1650 = vmatpush.msra.mxu0 0.0
    %1651 = vmatpush.msra.mxu0 0.0
    %1652 = vmatpush.msra.mxu0 %v213
    %1653 = vmatpush.msra.mxu0 %v212
    %1654 = vmatpush.msra.mxu0 %v211
    %1655 = vmatpush.msra.mxu0 %v210
    %1656 = vmatmul.f32.gmra.mxu0 %v1598
    %v1657 = vpop.f32.mrf.mxu0
    %v1658 = vadd.f32 %v218, %v1657
    %1659 = vdwg.mxu0
    %v1660 = vadd.f32 %v1587, %v1618
    %v1661 = vxor.u32 %v1660, 2147483648
    %v1662 = vmul.f32 %v1661, 1.442695
    %v1663 = vpow.pop %v1662
    %v1664 = vadd.f32 %v1663, 1.0
    %v1665 = vrcp.pop %v1664
    %v1666 = vmul.f32 %v1664, %v1665
    %v1667 = vsub.f32 1.0, %v1666
    %v1668 = vmul.f32 %v1665, %v1667
    %v1669 = vadd.f32 %v1665, %v1668
    %vm1670 = vweird.f32 %v1664
    %vm1671 = vweird.f32 %v1665
    %vm1672 = vmor %vm1670, %vm1671
    %v1673 = vsel %vm1672, %v1665, %v1669
    %v1674 = vand.u32 2147483647, %v1664
    %vm1675 = vcmp.eq.f32.partialorder %v1674, 8.507059e+37
    %v1676 = vand.u32 %v1664, 2147483648
    %v1677 = vor.u32 1.1754944e-38, %v1676
    %v1678 = vsel %vm1675, %v1677, %v1673
    %v1679 = vmul.f32 1.0, %v1678
    %v1680 = vadd.f32 %v1591, %v1638
    %v1681 = vxor.u32 %v1680, 2147483648
    %v1682 = vmul.f32 %v1681, 1.442695
    %v1683 = vpow.pop %v1682
    %v1684 = vadd.f32 %v1683, 1.0
    %v1685 = vrcp.pop %v1684
    %v1686 = vmul.f32 %v1684, %v1685
    %v1687 = vsub.f32 1.0, %v1686
    %v1688 = vmul.f32 %v1685, %v1687
    %v1689 = vadd.f32 %v1685, %v1688
    %vm1690 = vweird.f32 %v1684
    %vm1691 = vweird.f32 %v1685
    %vm1692 = vmor %vm1690, %vm1691
    %v1693 = vsel %vm1692, %v1685, %v1689
    %v1694 = vand.u32 2147483647, %v1684
    %vm1695 = vcmp.eq.f32.partialorder %v1694, 8.507059e+37
    %v1696 = vand.u32 %v1684, 2147483648
    %v1697 = vor.u32 1.1754944e-38, %v1696
    %v1698 = vsel %vm1695, %v1697, %v1693
    %v1699 = vmul.f32 1.0, %v1698
    %v1700 = vmul.f32 %v1679, %v1658
    %v1701 = vadd.f32 %v1595, %v1700
    %v1702 = vtanh.pop %v1701
    %v1703 = vsub.f32 1.0, %v1699
    %v1704 = vmul.f32 %v1703, %v1702
    %v1706 = vmul.f32 %v1699, %v1597
    %v1707 = vadd.f32 %v1704, %v1706
    %p1708 = scmp.gt.s32.totalorder %s1518, 0
    %s1709 = scalar_select %p1708, 1, 0
    %v1710 = vstv %s1709
    %vm1711 = vcmp.eq.s32.totalorder %v1710, 1
    %v1712 = vsel %vm1711, %v1707, %v1597
    %p1713 = scmp.gt.s32.totalorder %s1518, 7
    %s1714 = scalar_select %p1713, 1, 0
    %v1715 = vstv %s1714
    %vm1716 = vcmp.eq.s32.totalorder %v1715, 1
    %v1717 = vsel %vm1716, %v1707, %v1597
    %v1718 = vsel %vm178, %v1712, %v1717
    %v1719 = vperm.slane %v1718, 0
    %v1720 = vsel %vm441, %v1719, 0.0
    %v1721 = vrot.slane %v1542, 5
    %v1723 = vsel %vm178, %v1542, %v1721
    %v1724 = vrot.slane %v1562, 5
    %v1726 = vsel %vm178, %v1562, %v1724
    %v1727 = vrot.slane %v1582, 5
    %v1729 = vsel %vm178, %v1582, %v1727
    %v1731 = vsel %vm233, %v1718, 0
    %1733 = vmatpush.msra.mxu0 0.0
    %1734 = vmatpush.msra.mxu0 0.0
    %1735 = vmatpush.msra.mxu0 0.0
    %1736 = vmatpush.msra.mxu0 0.0
    %1737 = vmatpush.msra.mxu0 0.0
    %1738 = vmatpush.msra.mxu0 0.0
    %1739 = vmatpush.msra.mxu0 0.0
    %1740 = vmatpush.msra.mxu0 0.0
    %1741 = vmatpush.msra.mxu0 0.0
    %1742 = vmatpush.msra.mxu0 0.0
    %1743 = vmatpush.msra.mxu0 0.0
    %1744 = vmatpush.msra.mxu0 0.0
    %1745 = vmatpush.msra.mxu0 %v203
    %1746 = vmatpush.msra.mxu0 %v202
    %1747 = vmatpush.msra.mxu0 %v201
    %1748 = vmatpush.msra.mxu0 %v200
    %1749 = vmatmul.f32.gmra.mxu0 %v1731
    %v1750 = vpop.f32.mrf.mxu0
    %v1751 = vadd.f32 %v214, %v1750
    %1752 = vdwg.mxu0
    %1753 = vmatpush.msra.mxu0 0.0
    %1754 = vmatpush.msra.mxu0 0.0
    %1755 = vmatpush.msra.mxu0 0.0
    %1756 = vmatpush.msra.mxu0 0.0
    %1757 = vmatpush.msra.mxu0 0.0
    %1758 = vmatpush.msra.mxu0 0.0
    %1759 = vmatpush.msra.mxu0 0.0
    %1760 = vmatpush.msra.mxu0 0.0
    %1761 = vmatpush.msra.mxu0 0.0
    %1762 = vmatpush.msra.mxu0 0.0
    %1763 = vmatpush.msra.mxu0 0.0
    %1764 = vmatpush.msra.mxu0 0.0
    %1765 = vmatpush.msra.mxu0 %v208
    %1766 = vmatpush.msra.mxu0 %v207
    %1767 = vmatpush.msra.mxu0 %v206
    %1768 = vmatpush.msra.mxu0 %v205
    %1769 = vmatmul.f32.gmra.mxu0 %v1731
    %v1770 = vpop.f32.mrf.mxu0
    %v1771 = vadd.f32 %v216, %v1770
    %1772 = vdwg.mxu0
    %1773 = vmatpush.msra.mxu0 0.0
    %1774 = vmatpush.msra.mxu0 0.0
    %1775 = vmatpush.msra.mxu0 0.0
    %1776 = vmatpush.msra.mxu0 0.0
    %1777 = vmatpush.msra.mxu0 0.0
    %1778 = vmatpush.msra.mxu0 0.0
    %1779 = vmatpush.msra.mxu0 0.0
    %1780 = vmatpush.msra.mxu0 0.0
    %1781 = vmatpush.msra.mxu0 0.0
    %1782 = vmatpush.msra.mxu0 0.0
    %1783 = vmatpush.msra.mxu0 0.0
    %1784 = vmatpush.msra.mxu0 0.0
    %1785 = vmatpush.msra.mxu0 %v213
    %1786 = vmatpush.msra.mxu0 %v212
    %1787 = vmatpush.msra.mxu0 %v211
    %1788 = vmatpush.msra.mxu0 %v210
    %1789 = vmatmul.f32.gmra.mxu0 %v1731
    %v1790 = vpop.f32.mrf.mxu0
    %v1791 = vadd.f32 %v218, %v1790
    %1792 = vdwg.mxu0
    %v1794 = vrot.slane %v1751, 7
    %v1796 = vadd.f32 %v1723, %v1794
    %v1797 = vxor.u32 %v1796, 2147483648
    %v1798 = vmul.f32 %v1797, 1.442695
    %v1799 = vpow.pop %v1798
    %v1800 = vadd.f32 %v1799, 1.0
    %v1801 = vrcp.pop %v1800
    %v1802 = vmul.f32 %v1800, %v1801
    %v1803 = vsub.f32 1.0, %v1802
    %v1804 = vmul.f32 %v1801, %v1803
    %v1805 = vadd.f32 %v1801, %v1804
    %vm1806 = vweird.f32 %v1800
    %vm1807 = vweird.f32 %v1801
    %vm1808 = vmor %vm1806, %vm1807
    %v1809 = vsel %vm1808, %v1801, %v1805
    %v1810 = vand.u32 2147483647, %v1800
    %vm1811 = vcmp.eq.f32.partialorder %v1810, 8.507059e+37
    %v1812 = vand.u32 %v1800, 2147483648
    %v1813 = vor.u32 1.1754944e-38, %v1812
    %v1814 = vsel %vm1811, %v1813, %v1809
    %v1815 = vmul.f32 1.0, %v1814
    %v1817 = vrot.slane %v1771, 7
    %v1819 = vadd.f32 %v1726, %v1817
    %v1820 = vxor.u32 %v1819, 2147483648
    %v1821 = vmul.f32 %v1820, 1.442695
    %v1822 = vpow.pop %v1821
    %v1823 = vadd.f32 %v1822, 1.0
    %v1824 = vrcp.pop %v1823
    %v1825 = vmul.f32 %v1823, %v1824
    %v1826 = vsub.f32 1.0, %v1825
    %v1827 = vmul.f32 %v1824, %v1826
    %v1828 = vadd.f32 %v1824, %v1827
    %vm1829 = vweird.f32 %v1823
    %vm1830 = vweird.f32 %v1824
    %vm1831 = vmor %vm1829, %vm1830
    %v1832 = vsel %vm1831, %v1824, %v1828
    %v1833 = vand.u32 2147483647, %v1823
    %vm1834 = vcmp.eq.f32.partialorder %v1833, 8.507059e+37
    %v1835 = vand.u32 %v1823, 2147483648
    %v1836 = vor.u32 1.1754944e-38, %v1835
    %v1837 = vsel %vm1834, %v1836, %v1832
    %v1838 = vmul.f32 1.0, %v1837
    %v1840 = vrot.slane %v1791, 7
    %v1842 = vmul.f32 %v1815, %v1840
    %v1843 = vadd.f32 %v1729, %v1842
    %v1844 = vtanh.pop %v1843
    %v1845 = vsub.f32 1.0, %v1838
    %v1846 = vmul.f32 %v1845, %v1844
    %v1847 = vrot.slane %v1718, 7
    %v1849 = vmul.f32 %v1838, %v1847
    %v1850 = vadd.f32 %v1846, %v1849
    %p1851 = scmp.gt.s32.totalorder %s1518, 1
    %s1852 = scalar_select %p1851, 1, 0
    %v1853 = vstv %s1852
    %vm1854 = vcmp.eq.s32.totalorder %v1853, 1
    %v1855 = vsel %vm1854, %v1850, %v1847
    %p1856 = scmp.gt.s32.totalorder %s1518, 6
    %s1857 = scalar_select %p1856, 1, 0
    %v1858 = vstv %s1857
    %vm1859 = vcmp.eq.s32.totalorder %v1858, 1
    %v1860 = vsel %vm1859, %v1850, %v1847
    %v1861 = vsel %vm178, %v1855, %v1860
    %v1862 = vperm.slane %v1861, 1
    %v1863 = vsel %vm589, %v1862, %v1720
    %v1864 = vrot.slane %v1542, 3
    %v1866 = vsel %vm178, %v1542, %v1864
    %v1867 = vrot.slane %v1562, 3
    %v1869 = vsel %vm178, %v1562, %v1867
    %v1870 = vrot.slane %v1582, 3
    %v1872 = vsel %vm178, %v1582, %v1870
    %v1874 = vrot.slane %v1861, 1
    %v1875 = vsel %vm233, %v1874, 0
    %1877 = vmatpush.msra.mxu0 0.0
    %1878 = vmatpush.msra.mxu0 0.0
    %1879 = vmatpush.msra.mxu0 0.0
    %1880 = vmatpush.msra.mxu0 0.0
    %1881 = vmatpush.msra.mxu0 0.0
    %1882 = vmatpush.msra.mxu0 0.0
    %1883 = vmatpush.msra.mxu0 0.0
    %1884 = vmatpush.msra.mxu0 0.0
    %1885 = vmatpush.msra.mxu0 0.0
    %1886 = vmatpush.msra.mxu0 0.0
    %1887 = vmatpush.msra.mxu0 0.0
    %1888 = vmatpush.msra.mxu0 0.0
    %1889 = vmatpush.msra.mxu0 %v203
    %1890 = vmatpush.msra.mxu0 %v202
    %1891 = vmatpush.msra.mxu0 %v201
    %1892 = vmatpush.msra.mxu0 %v200
    %1893 = vmatmul.f32.gmra.mxu0 %v1875
    %v1894 = vpop.f32.mrf.mxu0
    %v1895 = vadd.f32 %v214, %v1894
    %1896 = vdwg.mxu0
    %1897 = vmatpush.msra.mxu0 0.0
    %1898 = vmatpush.msra.mxu0 0.0
    %1899 = vmatpush.msra.mxu0 0.0
    %1900 = vmatpush.msra.mxu0 0.0
    %1901 = vmatpush.msra.mxu0 0.0
    %1902 = vmatpush.msra.mxu0 0.0
    %1903 = vmatpush.msra.mxu0 0.0
    %1904 = vmatpush.msra.mxu0 0.0
    %1905 = vmatpush.msra.mxu0 0.0
    %1906 = vmatpush.msra.mxu0 0.0
    %1907 = vmatpush.msra.mxu0 0.0
    %1908 = vmatpush.msra.mxu0 0.0
    %1909 = vmatpush.msra.mxu0 %v208
    %1910 = vmatpush.msra.mxu0 %v207
    %1911 = vmatpush.msra.mxu0 %v206
    %1912 = vmatpush.msra.mxu0 %v205
    %1913 = vmatmul.f32.gmra.mxu0 %v1875
    %v1914 = vpop.f32.mrf.mxu0
    %v1915 = vadd.f32 %v216, %v1914
    %1916 = vdwg.mxu0
    %1917 = vmatpush.msra.mxu0 0.0
    %1918 = vmatpush.msra.mxu0 0.0
    %1919 = vmatpush.msra.mxu0 0.0
    %1920 = vmatpush.msra.mxu0 0.0
    %1921 = vmatpush.msra.mxu0 0.0
    %1922 = vmatpush.msra.mxu0 0.0
    %1923 = vmatpush.msra.mxu0 0.0
    %1924 = vmatpush.msra.mxu0 0.0
    %1925 = vmatpush.msra.mxu0 0.0
    %1926 = vmatpush.msra.mxu0 0.0
    %1927 = vmatpush.msra.mxu0 0.0
    %1928 = vmatpush.msra.mxu0 0.0
    %1929 = vmatpush.msra.mxu0 %v213
    %1930 = vmatpush.msra.mxu0 %v212
    %1931 = vmatpush.msra.mxu0 %v211
    %1932 = vmatpush.msra.mxu0 %v210
    %1933 = vmatmul.f32.gmra.mxu0 %v1875
    %v1934 = vpop.f32.mrf.mxu0
    %v1935 = vadd.f32 %v218, %v1934
    %1936 = vdwg.mxu0
    %v1938 = vrot.slane %v1895, 6
    %v1940 = vadd.f32 %v1866, %v1938
    %v1941 = vxor.u32 %v1940, 2147483648
    %v1942 = vmul.f32 %v1941, 1.442695
    %v1943 = vpow.pop %v1942
    %v1944 = vadd.f32 %v1943, 1.0
    %v1945 = vrcp.pop %v1944
    %v1946 = vmul.f32 %v1944, %v1945
    %v1947 = vsub.f32 1.0, %v1946
    %v1948 = vmul.f32 %v1945, %v1947
    %v1949 = vadd.f32 %v1945, %v1948
    %vm1950 = vweird.f32 %v1944
    %vm1951 = vweird.f32 %v1945
    %vm1952 = vmor %vm1950, %vm1951
    %v1953 = vsel %vm1952, %v1945, %v1949
    %v1954 = vand.u32 2147483647, %v1944
    %vm1955 = vcmp.eq.f32.partialorder %v1954, 8.507059e+37
    %v1956 = vand.u32 %v1944, 2147483648
    %v1957 = vor.u32 1.1754944e-38, %v1956
    %v1958 = vsel %vm1955, %v1957, %v1953
    %v1959 = vmul.f32 1.0, %v1958
    %v1961 = vrot.slane %v1915, 6
    %v1963 = vadd.f32 %v1869, %v1961
    %v1964 = vxor.u32 %v1963, 2147483648
    %v1965 = vmul.f32 %v1964, 1.442695
    %v1966 = vpow.pop %v1965
    %v1967 = vadd.f32 %v1966, 1.0
    %v1968 = vrcp.pop %v1967
    %v1969 = vmul.f32 %v1967, %v1968
    %v1970 = vsub.f32 1.0, %v1969
    %v1971 = vmul.f32 %v1968, %v1970
    %v1972 = vadd.f32 %v1968, %v1971
    %vm1973 = vweird.f32 %v1967
    %vm1974 = vweird.f32 %v1968
    %vm1975 = vmor %vm1973, %vm1974
    %v1976 = vsel %vm1975, %v1968, %v1972
    %v1977 = vand.u32 2147483647, %v1967
    %vm1978 = vcmp.eq.f32.partialorder %v1977, 8.507059e+37
    %v1979 = vand.u32 %v1967, 2147483648
    %v1980 = vor.u32 1.1754944e-38, %v1979
    %v1981 = vsel %vm1978, %v1980, %v1976
    %v1982 = vmul.f32 1.0, %v1981
    %v1984 = vrot.slane %v1935, 6
    %v1986 = vmul.f32 %v1959, %v1984
    %v1987 = vadd.f32 %v1872, %v1986
    %v1988 = vtanh.pop %v1987
    %v1989 = vsub.f32 1.0, %v1982
    %v1990 = vmul.f32 %v1989, %v1988
    %v1991 = vrot.slane %v1861, 7
    %v1993 = vmul.f32 %v1982, %v1991
    %v1994 = vadd.f32 %v1990, %v1993
    %p1995 = scmp.gt.s32.totalorder %s1518, 2
    %s1996 = scalar_select %p1995, 1, 0
    %v1997 = vstv %s1996
    %vm1998 = vcmp.eq.s32.totalorder %v1997, 1
    %v1999 = vsel %vm1998, %v1994, %v1991
    %p2000 = scmp.gt.s32.totalorder %s1518, 5
    %s2001 = scalar_select %p2000, 1, 0
    %v2002 = vstv %s2001
    %vm2003 = vcmp.eq.s32.totalorder %v2002, 1
    %v2004 = vsel %vm2003, %v1994, %v1991
    %v2005 = vsel %vm178, %v1999, %v2004
    %v2006 = vperm.slane %v2005, 2
    %v2007 = vsel %vm738, %v2006, %v1863
    %v2008 = vrot.slane %v1542, 1
    %v2010 = vsel %vm178, %v1542, %v2008
    %v2011 = vrot.slane %v1562, 1
    %v2013 = vsel %vm178, %v1562, %v2011
    %v2014 = vrot.slane %v1582, 1
    %v2016 = vsel %vm178, %v1582, %v2014
    %v2018 = vrot.slane %v2005, 2
    %v2019 = vsel %vm233, %v2018, 0
    %2021 = vmatpush.msra.mxu0 0.0
    %2022 = vmatpush.msra.mxu0 0.0
    %2023 = vmatpush.msra.mxu0 0.0
    %2024 = vmatpush.msra.mxu0 0.0
    %2025 = vmatpush.msra.mxu0 0.0
    %2026 = vmatpush.msra.mxu0 0.0
    %2027 = vmatpush.msra.mxu0 0.0
    %2028 = vmatpush.msra.mxu0 0.0
    %2029 = vmatpush.msra.mxu0 0.0
    %2030 = vmatpush.msra.mxu0 0.0
    %2031 = vmatpush.msra.mxu0 0.0
    %2032 = vmatpush.msra.mxu0 0.0
    %2033 = vmatpush.msra.mxu0 %v203
    %2034 = vmatpush.msra.mxu0 %v202
    %2035 = vmatpush.msra.mxu0 %v201
    %2036 = vmatpush.msra.mxu0 %v200
    %2037 = vmatmul.f32.gmra.mxu0 %v2019
    %v2038 = vpop.f32.mrf.mxu0
    %v2039 = vadd.f32 %v214, %v2038
    %2040 = vdwg.mxu0
    %2041 = vmatpush.msra.mxu0 0.0
    %2042 = vmatpush.msra.mxu0 0.0
    %2043 = vmatpush.msra.mxu0 0.0
    %2044 = vmatpush.msra.mxu0 0.0
    %2045 = vmatpush.msra.mxu0 0.0
    %2046 = vmatpush.msra.mxu0 0.0
    %2047 = vmatpush.msra.mxu0 0.0
    %2048 = vmatpush.msra.mxu0 0.0
    %2049 = vmatpush.msra.mxu0 0.0
    %2050 = vmatpush.msra.mxu0 0.0
    %2051 = vmatpush.msra.mxu0 0.0
    %2052 = vmatpush.msra.mxu0 0.0
    %2053 = vmatpush.msra.mxu0 %v208
    %2054 = vmatpush.msra.mxu0 %v207
    %2055 = vmatpush.msra.mxu0 %v206
    %2056 = vmatpush.msra.mxu0 %v205
    %2057 = vmatmul.f32.gmra.mxu0 %v2019
    %v2058 = vpop.f32.mrf.mxu0
    %v2059 = vadd.f32 %v216, %v2058
    %2060 = vdwg.mxu0
    %2061 = vmatpush.msra.mxu0 0.0
    %2062 = vmatpush.msra.mxu0 0.0
    %2063 = vmatpush.msra.mxu0 0.0
    %2064 = vmatpush.msra.mxu0 0.0
    %2065 = vmatpush.msra.mxu0 0.0
    %2066 = vmatpush.msra.mxu0 0.0
    %2067 = vmatpush.msra.mxu0 0.0
    %2068 = vmatpush.msra.mxu0 0.0
    %2069 = vmatpush.msra.mxu0 0.0
    %2070 = vmatpush.msra.mxu0 0.0
    %2071 = vmatpush.msra.mxu0 0.0
    %2072 = vmatpush.msra.mxu0 0.0
    %2073 = vmatpush.msra.mxu0 %v213
    %2074 = vmatpush.msra.mxu0 %v212
    %2075 = vmatpush.msra.mxu0 %v211
    %2076 = vmatpush.msra.mxu0 %v210
    %2077 = vmatmul.f32.gmra.mxu0 %v2019
    %v2078 = vpop.f32.mrf.mxu0
    %v2079 = vadd.f32 %v218, %v2078
    %2080 = vdwg.mxu0
    %v2082 = vrot.slane %v2039, 5
    %v2084 = vadd.f32 %v2010, %v2082
    %v2085 = vxor.u32 %v2084, 2147483648
    %v2086 = vmul.f32 %v2085, 1.442695
    %v2087 = vpow.pop %v2086
    %v2088 = vadd.f32 %v2087, 1.0
    %v2089 = vrcp.pop %v2088
    %v2090 = vmul.f32 %v2088, %v2089
    %v2091 = vsub.f32 1.0, %v2090
    %v2092 = vmul.f32 %v2089, %v2091
    %v2093 = vadd.f32 %v2089, %v2092
    %vm2094 = vweird.f32 %v2088
    %vm2095 = vweird.f32 %v2089
    %vm2096 = vmor %vm2094, %vm2095
    %v2097 = vsel %vm2096, %v2089, %v2093
    %v2098 = vand.u32 2147483647, %v2088
    %vm2099 = vcmp.eq.f32.partialorder %v2098, 8.507059e+37
    %v2100 = vand.u32 %v2088, 2147483648
    %v2101 = vor.u32 1.1754944e-38, %v2100
    %v2102 = vsel %vm2099, %v2101, %v2097
    %v2103 = vmul.f32 1.0, %v2102
    %v2105 = vrot.slane %v2059, 5
    %v2107 = vadd.f32 %v2013, %v2105
    %v2108 = vxor.u32 %v2107, 2147483648
    %v2109 = vmul.f32 %v2108, 1.442695
    %v2110 = vpow.pop %v2109
    %v2111 = vadd.f32 %v2110, 1.0
    %v2112 = vrcp.pop %v2111
    %v2113 = vmul.f32 %v2111, %v2112
    %v2114 = vsub.f32 1.0, %v2113
    %v2115 = vmul.f32 %v2112, %v2114
    %v2116 = vadd.f32 %v2112, %v2115
    %vm2117 = vweird.f32 %v2111
    %vm2118 = vweird.f32 %v2112
    %vm2119 = vmor %vm2117, %vm2118
    %v2120 = vsel %vm2119, %v2112, %v2116
    %v2121 = vand.u32 2147483647, %v2111
    %vm2122 = vcmp.eq.f32.partialorder %v2121, 8.507059e+37
    %v2123 = vand.u32 %v2111, 2147483648
    %v2124 = vor.u32 1.1754944e-38, %v2123
    %v2125 = vsel %vm2122, %v2124, %v2120
    %v2126 = vmul.f32 1.0, %v2125
    %v2128 = vrot.slane %v2079, 5
    %v2130 = vmul.f32 %v2103, %v2128
    %v2131 = vadd.f32 %v2016, %v2130
    %v2132 = vtanh.pop %v2131
    %v2133 = vsub.f32 1.0, %v2126
    %v2134 = vmul.f32 %v2133, %v2132
    %v2135 = vrot.slane %v2005, 7
    %v2137 = vmul.f32 %v2126, %v2135
    %v2138 = vadd.f32 %v2134, %v2137
    %p2139 = scmp.gt.s32.totalorder %s1518, 3
    %s2140 = scalar_select %p2139, 1, 0
    %v2141 = vstv %s2140
    %vm2142 = vcmp.eq.s32.totalorder %v2141, 1
    %v2143 = vsel %vm2142, %v2138, %v2135
    %p2144 = scmp.gt.s32.totalorder %s1518, 4
    %s2145 = scalar_select %p2144, 1, 0
    %v2146 = vstv %s2145
    %vm2147 = vcmp.eq.s32.totalorder %v2146, 1
    %v2148 = vsel %vm2147, %v2138, %v2135
    %v2149 = vsel %vm178, %v2143, %v2148
    %v2150 = vperm.slane %v2149, 3
    %v2151 = vsel %vm887, %v2150, %v2007
    %v2153 = vrot.slane %v2149, 3
    %v2154 = vsel %vm233, %v2153, 0
    %2156 = vmatpush.msra.mxu0 0.0
    %2157 = vmatpush.msra.mxu0 0.0
    %2158 = vmatpush.msra.mxu0 0.0
    %2159 = vmatpush.msra.mxu0 0.0
    %2160 = vmatpush.msra.mxu0 0.0
    %2161 = vmatpush.msra.mxu0 0.0
    %2162 = vmatpush.msra.mxu0 0.0
    %2163 = vmatpush.msra.mxu0 0.0
    %2164 = vmatpush.msra.mxu0 0.0
    %2165 = vmatpush.msra.mxu0 0.0
    %2166 = vmatpush.msra.mxu0 0.0
    %2167 = vmatpush.msra.mxu0 0.0
    %2168 = vmatpush.msra.mxu0 %v203
    %2169 = vmatpush.msra.mxu0 %v202
    %2170 = vmatpush.msra.mxu0 %v201
    %2171 = vmatpush.msra.mxu0 %v200
    %2172 = vmatmul.f32.gmra.mxu0 %v2154
    %v2173 = vpop.f32.mrf.mxu0
    %v2174 = vadd.f32 %v214, %v2173
    %2175 = vdwg.mxu0
    %2176 = vmatpush.msra.mxu0 0.0
    %2177 = vmatpush.msra.mxu0 0.0
    %2178 = vmatpush.msra.mxu0 0.0
    %2179 = vmatpush.msra.mxu0 0.0
    %2180 = vmatpush.msra.mxu0 0.0
    %2181 = vmatpush.msra.mxu0 0.0
    %2182 = vmatpush.msra.mxu0 0.0
    %2183 = vmatpush.msra.mxu0 0.0
    %2184 = vmatpush.msra.mxu0 0.0
    %2185 = vmatpush.msra.mxu0 0.0
    %2186 = vmatpush.msra.mxu0 0.0
    %2187 = vmatpush.msra.mxu0 0.0
    %2188 = vmatpush.msra.mxu0 %v208
    %2189 = vmatpush.msra.mxu0 %v207
    %2190 = vmatpush.msra.mxu0 %v206
    %2191 = vmatpush.msra.mxu0 %v205
    %2192 = vmatmul.f32.gmra.mxu0 %v2154
    %v2193 = vpop.f32.mrf.mxu0
    %v2194 = vadd.f32 %v216, %v2193
    %2195 = vdwg.mxu0
    %2196 = vmatpush.msra.mxu0 0.0
    %2197 = vmatpush.msra.mxu0 0.0
    %2198 = vmatpush.msra.mxu0 0.0
    %2199 = vmatpush.msra.mxu0 0.0
    %2200 = vmatpush.msra.mxu0 0.0
    %2201 = vmatpush.msra.mxu0 0.0
    %2202 = vmatpush.msra.mxu0 0.0
    %2203 = vmatpush.msra.mxu0 0.0
    %2204 = vmatpush.msra.mxu0 0.0
    %2205 = vmatpush.msra.mxu0 0.0
    %2206 = vmatpush.msra.mxu0 0.0
    %2207 = vmatpush.msra.mxu0 0.0
    %2208 = vmatpush.msra.mxu0 %v213
    %2209 = vmatpush.msra.mxu0 %v212
    %2210 = vmatpush.msra.mxu0 %v211
    %2211 = vmatpush.msra.mxu0 %v210
    %2212 = vmatmul.f32.gmra.mxu0 %v2154
    %v2213 = vpop.f32.mrf.mxu0
    %v2214 = vadd.f32 %v218, %v2213
    %2215 = vdwg.mxu0
    %v2217 = vrot.slane %v2174, 4
    %v2219 = vadd.f32 %v1587, %v2217
    %v2220 = vxor.u32 %v2219, 2147483648
    %v2221 = vmul.f32 %v2220, 1.442695
    %v2222 = vpow.pop %v2221
    %v2223 = vadd.f32 %v2222, 1.0
    %v2224 = vrcp.pop %v2223
    %v2225 = vmul.f32 %v2223, %v2224
    %v2226 = vsub.f32 1.0, %v2225
    %v2227 = vmul.f32 %v2224, %v2226
    %v2228 = vadd.f32 %v2224, %v2227
    %vm2229 = vweird.f32 %v2223
    %vm2230 = vweird.f32 %v2224
    %vm2231 = vmor %vm2229, %vm2230
    %v2232 = vsel %vm2231, %v2224, %v2228
    %v2233 = vand.u32 2147483647, %v2223
    %vm2234 = vcmp.eq.f32.partialorder %v2233, 8.507059e+37
    %v2235 = vand.u32 %v2223, 2147483648
    %v2236 = vor.u32 1.1754944e-38, %v2235
    %v2237 = vsel %vm2234, %v2236, %v2232
    %v2238 = vmul.f32 1.0, %v2237
    %v2240 = vrot.slane %v2194, 4
    %v2242 = vadd.f32 %v1591, %v2240
    %v2243 = vxor.u32 %v2242, 2147483648
    %v2244 = vmul.f32 %v2243, 1.442695
    %v2245 = vpow.pop %v2244
    %v2246 = vadd.f32 %v2245, 1.0
    %v2247 = vrcp.pop %v2246
    %v2248 = vmul.f32 %v2246, %v2247
    %v2249 = vsub.f32 1.0, %v2248
    %v2250 = vmul.f32 %v2247, %v2249
    %v2251 = vadd.f32 %v2247, %v2250
    %vm2252 = vweird.f32 %v2246
    %vm2253 = vweird.f32 %v2247
    %vm2254 = vmor %vm2252, %vm2253
    %v2255 = vsel %vm2254, %v2247, %v2251
    %v2256 = vand.u32 2147483647, %v2246
    %vm2257 = vcmp.eq.f32.partialorder %v2256, 8.507059e+37
    %v2258 = vand.u32 %v2246, 2147483648
    %v2259 = vor.u32 1.1754944e-38, %v2258
    %v2260 = vsel %vm2257, %v2259, %v2255
    %v2261 = vmul.f32 1.0, %v2260
    %v2263 = vrot.slane %v2214, 4
    %v2265 = vmul.f32 %v2238, %v2263
    %v2266 = vadd.f32 %v1595, %v2265
    %v2267 = vtanh.pop %v2266
    %v2268 = vsub.f32 1.0, %v2261
    %v2269 = vmul.f32 %v2268, %v2267
    %v2270 = vrot.slane %v2149, 7
    %v2272 = vmul.f32 %v2261, %v2270
    %v2273 = vadd.f32 %v2269, %v2272
    %v2274 = vsel %vm2147, %v2273, %v2270
    %v2275 = vsel %vm2142, %v2273, %v2270
    %v2276 = vsel %vm178, %v2274, %v2275
    %v2277 = vperm.slane %v2276, 4
    %v2278 = vsel %vm1017, %v2277, %v2151
    %v2280 = vrot.slane %v2276, 4
    %v2281 = vsel %vm233, %v2280, 0
    %2283 = vmatpush.msra.mxu0 0.0
    %2284 = vmatpush.msra.mxu0 0.0
    %2285 = vmatpush.msra.mxu0 0.0
    %2286 = vmatpush.msra.mxu0 0.0
    %2287 = vmatpush.msra.mxu0 0.0
    %2288 = vmatpush.msra.mxu0 0.0
    %2289 = vmatpush.msra.mxu0 0.0
    %2290 = vmatpush.msra.mxu0 0.0
    %2291 = vmatpush.msra.mxu0 0.0
    %2292 = vmatpush.msra.mxu0 0.0
    %2293 = vmatpush.msra.mxu0 0.0
    %2294 = vmatpush.msra.mxu0 0.0
    %2295 = vmatpush.msra.mxu0 %v203
    %2296 = vmatpush.msra.mxu0 %v202
    %2297 = vmatpush.msra.mxu0 %v201
    %2298 = vmatpush.msra.mxu0 %v200
    %2299 = vmatmul.f32.gmra.mxu0 %v2281
    %v2300 = vpop.f32.mrf.mxu0
    %v2301 = vadd.f32 %v214, %v2300
    %2302 = vdwg.mxu0
    %2303 = vmatpush.msra.mxu0 0.0
    %2304 = vmatpush.msra.mxu0 0.0
    %2305 = vmatpush.msra.mxu0 0.0
    %2306 = vmatpush.msra.mxu0 0.0
    %2307 = vmatpush.msra.mxu0 0.0
    %2308 = vmatpush.msra.mxu0 0.0
    %2309 = vmatpush.msra.mxu0 0.0
    %2310 = vmatpush.msra.mxu0 0.0
    %2311 = vmatpush.msra.mxu0 0.0
    %2312 = vmatpush.msra.mxu0 0.0
    %2313 = vmatpush.msra.mxu0 0.0
    %2314 = vmatpush.msra.mxu0 0.0
    %2315 = vmatpush.msra.mxu0 %v208
    %2316 = vmatpush.msra.mxu0 %v207
    %2317 = vmatpush.msra.mxu0 %v206
    %2318 = vmatpush.msra.mxu0 %v205
    %2319 = vmatmul.f32.gmra.mxu0 %v2281
    %v2320 = vpop.f32.mrf.mxu0
    %v2321 = vadd.f32 %v216, %v2320
    %2322 = vdwg.mxu0
    %2323 = vmatpush.msra.mxu0 0.0
    %2324 = vmatpush.msra.mxu0 0.0
    %2325 = vmatpush.msra.mxu0 0.0
    %2326 = vmatpush.msra.mxu0 0.0
    %2327 = vmatpush.msra.mxu0 0.0
    %2328 = vmatpush.msra.mxu0 0.0
    %2329 = vmatpush.msra.mxu0 0.0
    %2330 = vmatpush.msra.mxu0 0.0
    %2331 = vmatpush.msra.mxu0 0.0
    %2332 = vmatpush.msra.mxu0 0.0
    %2333 = vmatpush.msra.mxu0 0.0
    %2334 = vmatpush.msra.mxu0 0.0
    %2335 = vmatpush.msra.mxu0 %v213
    %2336 = vmatpush.msra.mxu0 %v212
    %2337 = vmatpush.msra.mxu0 %v211
    %2338 = vmatpush.msra.mxu0 %v210
    %2339 = vmatmul.f32.gmra.mxu0 %v2281
    %v2340 = vpop.f32.mrf.mxu0
    %v2341 = vadd.f32 %v218, %v2340
    %2342 = vdwg.mxu0
    %v2344 = vrot.slane %v2301, 3
    %v2346 = vadd.f32 %v1723, %v2344
    %v2347 = vxor.u32 %v2346, 2147483648
    %v2348 = vmul.f32 %v2347, 1.442695
    %v2349 = vpow.pop %v2348
    %v2350 = vadd.f32 %v2349, 1.0
    %v2351 = vrcp.pop %v2350
    %v2352 = vmul.f32 %v2350, %v2351
    %v2353 = vsub.f32 1.0, %v2352
    %v2354 = vmul.f32 %v2351, %v2353
    %v2355 = vadd.f32 %v2351, %v2354
    %vm2356 = vweird.f32 %v2350
    %vm2357 = vweird.f32 %v2351
    %vm2358 = vmor %vm2356, %vm2357
    %v2359 = vsel %vm2358, %v2351, %v2355
    %v2360 = vand.u32 2147483647, %v2350
    %vm2361 = vcmp.eq.f32.partialorder %v2360, 8.507059e+37
    %v2362 = vand.u32 %v2350, 2147483648
    %v2363 = vor.u32 1.1754944e-38, %v2362
    %v2364 = vsel %vm2361, %v2363, %v2359
    %v2365 = vmul.f32 1.0, %v2364
    %v2367 = vrot.slane %v2321, 3
    %v2369 = vadd.f32 %v1726, %v2367
    %v2370 = vxor.u32 %v2369, 2147483648
    %v2371 = vmul.f32 %v2370, 1.442695
    %v2372 = vpow.pop %v2371
    %v2373 = vadd.f32 %v2372, 1.0
    %v2374 = vrcp.pop %v2373
    %v2375 = vmul.f32 %v2373, %v2374
    %v2376 = vsub.f32 1.0, %v2375
    %v2377 = vmul.f32 %v2374, %v2376
    %v2378 = vadd.f32 %v2374, %v2377
    %vm2379 = vweird.f32 %v2373
    %vm2380 = vweird.f32 %v2374
    %vm2381 = vmor %vm2379, %vm2380
    %v2382 = vsel %vm2381, %v2374, %v2378
    %v2383 = vand.u32 2147483647, %v2373
    %vm2384 = vcmp.eq.f32.partialorder %v2383, 8.507059e+37
    %v2385 = vand.u32 %v2373, 2147483648
    %v2386 = vor.u32 1.1754944e-38, %v2385
    %v2387 = vsel %vm2384, %v2386, %v2382
    %v2388 = vmul.f32 1.0, %v2387
    %v2390 = vrot.slane %v2341, 3
    %v2392 = vmul.f32 %v2365, %v2390
    %v2393 = vadd.f32 %v1729, %v2392
    %v2394 = vtanh.pop %v2393
    %v2395 = vsub.f32 1.0, %v2388
    %v2396 = vmul.f32 %v2395, %v2394
    %v2397 = vrot.slane %v2276, 7
    %v2399 = vmul.f32 %v2388, %v2397
    %v2400 = vadd.f32 %v2396, %v2399
    %v2401 = vsel %vm2003, %v2400, %v2397
    %v2402 = vsel %vm1998, %v2400, %v2397
    %v2403 = vsel %vm178, %v2401, %v2402
    %v2404 = vperm.slane %v2403, 5
    %v2405 = vsel %vm1147, %v2404, %v2278
    %v2407 = vrot.slane %v2403, 5
    %v2408 = vsel %vm233, %v2407, 0
    %2410 = vmatpush.msra.mxu0 0.0
    %2411 = vmatpush.msra.mxu0 0.0
    %2412 = vmatpush.msra.mxu0 0.0
    %2413 = vmatpush.msra.mxu0 0.0
    %2414 = vmatpush.msra.mxu0 0.0
    %2415 = vmatpush.msra.mxu0 0.0
    %2416 = vmatpush.msra.mxu0 0.0
    %2417 = vmatpush.msra.mxu0 0.0
    %2418 = vmatpush.msra.mxu0 0.0
    %2419 = vmatpush.msra.mxu0 0.0
    %2420 = vmatpush.msra.mxu0 0.0
    %2421 = vmatpush.msra.mxu0 0.0
    %2422 = vmatpush.msra.mxu0 %v203
    %2423 = vmatpush.msra.mxu0 %v202
    %2424 = vmatpush.msra.mxu0 %v201
    %2425 = vmatpush.msra.mxu0 %v200
    %2426 = vmatmul.f32.gmra.mxu0 %v2408
    %v2427 = vpop.f32.mrf.mxu0
    %v2428 = vadd.f32 %v214, %v2427
    %2429 = vdwg.mxu0
    %2430 = vmatpush.msra.mxu0 0.0
    %2431 = vmatpush.msra.mxu0 0.0
    %2432 = vmatpush.msra.mxu0 0.0
    %2433 = vmatpush.msra.mxu0 0.0
    %2434 = vmatpush.msra.mxu0 0.0
    %2435 = vmatpush.msra.mxu0 0.0
    %2436 = vmatpush.msra.mxu0 0.0
    %2437 = vmatpush.msra.mxu0 0.0
    %2438 = vmatpush.msra.mxu0 0.0
    %2439 = vmatpush.msra.mxu0 0.0
    %2440 = vmatpush.msra.mxu0 0.0
    %2441 = vmatpush.msra.mxu0 0.0
    %2442 = vmatpush.msra.mxu0 %v208
    %2443 = vmatpush.msra.mxu0 %v207
    %2444 = vmatpush.msra.mxu0 %v206
    %2445 = vmatpush.msra.mxu0 %v205
    %2446 = vmatmul.f32.gmra.mxu0 %v2408
    %v2447 = vpop.f32.mrf.mxu0
    %v2448 = vadd.f32 %v216, %v2447
    %2449 = vdwg.mxu0
    %2450 = vmatpush.msra.mxu0 0.0
    %2451 = vmatpush.msra.mxu0 0.0
    %2452 = vmatpush.msra.mxu0 0.0
    %2453 = vmatpush.msra.mxu0 0.0
    %2454 = vmatpush.msra.mxu0 0.0
    %2455 = vmatpush.msra.mxu0 0.0
    %2456 = vmatpush.msra.mxu0 0.0
    %2457 = vmatpush.msra.mxu0 0.0
    %2458 = vmatpush.msra.mxu0 0.0
    %2459 = vmatpush.msra.mxu0 0.0
    %2460 = vmatpush.msra.mxu0 0.0
    %2461 = vmatpush.msra.mxu0 0.0
    %2462 = vmatpush.msra.mxu0 %v213
    %2463 = vmatpush.msra.mxu0 %v212
    %2464 = vmatpush.msra.mxu0 %v211
    %2465 = vmatpush.msra.mxu0 %v210
    %2466 = vmatmul.f32.gmra.mxu0 %v2408
    %v2467 = vpop.f32.mrf.mxu0
    %v2468 = vadd.f32 %v218, %v2467
    %2469 = vdwg.mxu0
    %v2471 = vrot.slane %v2428, 2
    %v2473 = vadd.f32 %v1866, %v2471
    %v2474 = vxor.u32 %v2473, 2147483648
    %v2475 = vmul.f32 %v2474, 1.442695
    %v2476 = vpow.pop %v2475
    %v2477 = vadd.f32 %v2476, 1.0
    %v2478 = vrcp.pop %v2477
    %v2479 = vmul.f32 %v2477, %v2478
    %v2480 = vsub.f32 1.0, %v2479
    %v2481 = vmul.f32 %v2478, %v2480
    %v2482 = vadd.f32 %v2478, %v2481
    %vm2483 = vweird.f32 %v2477
    %vm2484 = vweird.f32 %v2478
    %vm2485 = vmor %vm2483, %vm2484
    %v2486 = vsel %vm2485, %v2478, %v2482
    %v2487 = vand.u32 2147483647, %v2477
    %vm2488 = vcmp.eq.f32.partialorder %v2487, 8.507059e+37
    %v2489 = vand.u32 %v2477, 2147483648
    %v2490 = vor.u32 1.1754944e-38, %v2489
    %v2491 = vsel %vm2488, %v2490, %v2486
    %v2492 = vmul.f32 1.0, %v2491
    %v2494 = vrot.slane %v2448, 2
    %v2496 = vadd.f32 %v1869, %v2494
    %v2497 = vxor.u32 %v2496, 2147483648
    %v2498 = vmul.f32 %v2497, 1.442695
    %v2499 = vpow.pop %v2498
    %v2500 = vadd.f32 %v2499, 1.0
    %v2501 = vrcp.pop %v2500
    %v2502 = vmul.f32 %v2500, %v2501
    %v2503 = vsub.f32 1.0, %v2502
    %v2504 = vmul.f32 %v2501, %v2503
    %v2505 = vadd.f32 %v2501, %v2504
    %vm2506 = vweird.f32 %v2500
    %vm2507 = vweird.f32 %v2501
    %vm2508 = vmor %vm2506, %vm2507
    %v2509 = vsel %vm2508, %v2501, %v2505
    %v2510 = vand.u32 2147483647, %v2500
    %vm2511 = vcmp.eq.f32.partialorder %v2510, 8.507059e+37
    %v2512 = vand.u32 %v2500, 2147483648
    %v2513 = vor.u32 1.1754944e-38, %v2512
    %v2514 = vsel %vm2511, %v2513, %v2509
    %v2515 = vmul.f32 1.0, %v2514
    %v2517 = vrot.slane %v2468, 2
    %v2519 = vmul.f32 %v2492, %v2517
    %v2520 = vadd.f32 %v1872, %v2519
    %v2521 = vtanh.pop %v2520
    %v2522 = vsub.f32 1.0, %v2515
    %v2523 = vmul.f32 %v2522, %v2521
    %v2524 = vrot.slane %v2403, 7
    %v2526 = vmul.f32 %v2515, %v2524
    %v2527 = vadd.f32 %v2523, %v2526
    %v2528 = vsel %vm1859, %v2527, %v2524
    %v2529 = vsel %vm1854, %v2527, %v2524
    %v2530 = vsel %vm178, %v2528, %v2529
    %v2531 = vperm.slane %v2530, 6
    %v2532 = vsel %vm1277, %v2531, %v2405
    %v2534 = vrot.slane %v2530, 6
    %v2535 = vsel %vm233, %v2534, 0
    %2537 = vmatpush.msra.mxu0 0.0
    %2538 = vmatpush.msra.mxu0 0.0
    %2539 = vmatpush.msra.mxu0 0.0
    %2540 = vmatpush.msra.mxu0 0.0
    %2541 = vmatpush.msra.mxu0 0.0
    %2542 = vmatpush.msra.mxu0 0.0
    %2543 = vmatpush.msra.mxu0 0.0
    %2544 = vmatpush.msra.mxu0 0.0
    %2545 = vmatpush.msra.mxu0 0.0
    %2546 = vmatpush.msra.mxu0 0.0
    %2547 = vmatpush.msra.mxu0 0.0
    %2548 = vmatpush.msra.mxu0 0.0
    %2549 = vmatpush.msra.mxu0 %v203
    %2550 = vmatpush.msra.mxu0 %v202
    %2551 = vmatpush.msra.mxu0 %v201
    %2552 = vmatpush.msra.mxu0 %v200
    %2553 = vmatmul.f32.gmra.mxu0 %v2535
    %v2554 = vpop.f32.mrf.mxu0
    %v2555 = vadd.f32 %v214, %v2554
    %2556 = vdwg.mxu0
    %2557 = vmatpush.msra.mxu0 0.0
    %2558 = vmatpush.msra.mxu0 0.0
    %2559 = vmatpush.msra.mxu0 0.0
    %2560 = vmatpush.msra.mxu0 0.0
    %2561 = vmatpush.msra.mxu0 0.0
    %2562 = vmatpush.msra.mxu0 0.0
    %2563 = vmatpush.msra.mxu0 0.0
    %2564 = vmatpush.msra.mxu0 0.0
    %2565 = vmatpush.msra.mxu0 0.0
    %2566 = vmatpush.msra.mxu0 0.0
    %2567 = vmatpush.msra.mxu0 0.0
    %2568 = vmatpush.msra.mxu0 0.0
    %2569 = vmatpush.msra.mxu0 %v208
    %2570 = vmatpush.msra.mxu0 %v207
    %2571 = vmatpush.msra.mxu0 %v206
    %2572 = vmatpush.msra.mxu0 %v205
    %2573 = vmatmul.f32.gmra.mxu0 %v2535
    %v2574 = vpop.f32.mrf.mxu0
    %v2575 = vadd.f32 %v216, %v2574
    %2576 = vdwg.mxu0
    %2577 = vmatpush.msra.mxu0 0.0
    %2578 = vmatpush.msra.mxu0 0.0
    %2579 = vmatpush.msra.mxu0 0.0
    %2580 = vmatpush.msra.mxu0 0.0
    %2581 = vmatpush.msra.mxu0 0.0
    %2582 = vmatpush.msra.mxu0 0.0
    %2583 = vmatpush.msra.mxu0 0.0
    %2584 = vmatpush.msra.mxu0 0.0
    %2585 = vmatpush.msra.mxu0 0.0
    %2586 = vmatpush.msra.mxu0 0.0
    %2587 = vmatpush.msra.mxu0 0.0
    %2588 = vmatpush.msra.mxu0 0.0
    %2589 = vmatpush.msra.mxu0 %v213
    %2590 = vmatpush.msra.mxu0 %v212
    %2591 = vmatpush.msra.mxu0 %v211
    %2592 = vmatpush.msra.mxu0 %v210
    %2593 = vmatmul.f32.gmra.mxu0 %v2535
    %v2594 = vpop.f32.mrf.mxu0
    %v2595 = vadd.f32 %v218, %v2594
    %2596 = vdwg.mxu0
    %v2598 = vrot.slane %v2555, 1
    %v2600 = vadd.f32 %v2010, %v2598
    %v2601 = vxor.u32 %v2600, 2147483648
    %v2602 = vmul.f32 %v2601, 1.442695
    %v2603 = vpow.pop %v2602
    %v2604 = vadd.f32 %v2603, 1.0
    %v2605 = vrcp.pop %v2604
    %v2606 = vmul.f32 %v2604, %v2605
    %v2607 = vsub.f32 1.0, %v2606
    %v2608 = vmul.f32 %v2605, %v2607
    %v2609 = vadd.f32 %v2605, %v2608
    %vm2610 = vweird.f32 %v2604
    %vm2611 = vweird.f32 %v2605
    %vm2612 = vmor %vm2610, %vm2611
    %v2613 = vsel %vm2612, %v2605, %v2609
    %v2614 = vand.u32 2147483647, %v2604
    %vm2615 = vcmp.eq.f32.partialorder %v2614, 8.507059e+37
    %v2616 = vand.u32 %v2604, 2147483648
    %v2617 = vor.u32 1.1754944e-38, %v2616
    %v2618 = vsel %vm2615, %v2617, %v2613
    %v2619 = vmul.f32 1.0, %v2618
    %v2621 = vrot.slane %v2575, 1
    %v2623 = vadd.f32 %v2013, %v2621
    %v2624 = vxor.u32 %v2623, 2147483648
    %v2625 = vmul.f32 %v2624, 1.442695
    %v2626 = vpow.pop %v2625
    %v2627 = vadd.f32 %v2626, 1.0
    %v2628 = vrcp.pop %v2627
    %v2629 = vmul.f32 %v2627, %v2628
    %v2630 = vsub.f32 1.0, %v2629
    %v2631 = vmul.f32 %v2628, %v2630
    %v2632 = vadd.f32 %v2628, %v2631
    %vm2633 = vweird.f32 %v2627
    %vm2634 = vweird.f32 %v2628
    %vm2635 = vmor %vm2633, %vm2634
    %v2636 = vsel %vm2635, %v2628, %v2632
    %v2637 = vand.u32 2147483647, %v2627
    %vm2638 = vcmp.eq.f32.partialorder %v2637, 8.507059e+37
    %v2639 = vand.u32 %v2627, 2147483648
    %v2640 = vor.u32 1.1754944e-38, %v2639
    %v2641 = vsel %vm2638, %v2640, %v2636
    %v2642 = vmul.f32 1.0, %v2641
    %v2644 = vrot.slane %v2595, 1
    %v2646 = vmul.f32 %v2619, %v2644
    %v2647 = vadd.f32 %v2016, %v2646
    %v2648 = vtanh.pop %v2647
    %v2649 = vsub.f32 1.0, %v2642
    %v2650 = vmul.f32 %v2649, %v2648
    %v2651 = vrot.slane %v2530, 7
    %v2653 = vmul.f32 %v2642, %v2651
    %v2654 = vadd.f32 %v2650, %v2653
    %v2655 = vsel %vm1716, %v2654, %v2651
    %v2656 = vsel %vm1711, %v2654, %v2651
    %v2657 = vsel %vm178, %v2655, %v2656
    %v2658 = vperm.slane %v2657, 7
    %v2659 = vsel %vm1407, %v2658, %v2532
    %v2661 = vsel %vm233, %v2659, 0
    %2663 = vmatpush.msra.mxu0 0.0
    %2664 = vmatpush.msra.mxu0 0.0
    %2665 = vmatpush.msra.mxu0 0.0
    %2666 = vmatpush.msra.mxu0 0.0
    %2667 = vmatpush.msra.mxu0 0.0
    %2668 = vmatpush.msra.mxu0 0.0
    %2669 = vmatpush.msra.mxu0 0.0
    %2670 = vmatpush.msra.mxu0 0.0
    %2671 = vmatpush.msra.mxu0 0.0
    %2672 = vmatpush.msra.mxu0 0.0
    %2673 = vmatpush.msra.mxu0 0.0
    %2674 = vmatpush.msra.mxu0 0.0
    %2675 = vmatpush.msra.mxu0 %v222
    %2676 = vmatpush.msra.mxu0 %v221
    %2677 = vmatpush.msra.mxu0 %v220
    %2678 = vmatpush.msra.mxu0 %v219
    %2679 = vmatmul.f32.gmra.mxu0 %v2661
    %v2680 = vpop.f32.mrf.mxu0
    %v2681 = vadd.f32 %v1411, %v2680
    %2682 = vdwg.mxu0
    %v2683 = vtanh.pop %v2681
    %v2685 = vsel %vm233, %v2683, 0
    %2687 = vmatpush.msra.mxu0 0.0
    %2688 = vmatpush.msra.mxu0 0.0
    %2689 = vmatpush.msra.mxu0 0.0
    %2690 = vmatpush.msra.mxu0 0.0
    %2691 = vmatpush.msra.mxu0 0.0
    %2692 = vmatpush.msra.mxu0 0.0
    %2693 = vmatpush.msra.mxu0 0.0
    %2694 = vmatpush.msra.mxu0 0.0
    %2695 = vmatpush.msra.mxu0 0.0
    %2696 = vmatpush.msra.mxu0 0.0
    %2697 = vmatpush.msra.mxu0 0.0
    %2698 = vmatpush.msra.mxu0 0.0
    %2699 = vmatpush.msra.mxu0 %v227
    %2700 = vmatpush.msra.mxu0 %v226
    %2701 = vmatpush.msra.mxu0 %v225
    %2702 = vmatpush.msra.mxu0 %v224
    %2703 = vmatmul.f32.gmra.mxu0 %v2685
    %v2704 = vpop.f32.mrf.mxu0
    %v2705 = vadd.f32 0.0, %v2704
    %2706 = vdwg.mxu0
    %v2707 = vstv %s1518
    %vm2708 = vcmp.lt.s32.totalorder %v180, %v2707
    %v2709 = vsel %vm2708, %v2705, -1e+30
    %v2710 = vsel %vm1463, %v2709, -inf
    %2711 = vmax.xlane.f32.xlu0 %v2710
    %v2712 = vpop.xlane.xlu0 %2711
    %v2713 = vrot.slane %v2712, 4
    %v2714 = vmax.f32 %v2712, %v2713
    %v2715 = vrot.slane %v2714, 2
    %v2716 = vmax.f32 %v2714, %v2715
    %v2717 = vrot.slane %v2716, 1
    %v2718 = vmax.f32 %v2716, %v2717
    %s2719 = vtos %v2718
    %v2720 = vstv %s2719
    %v2721 = vsub.f32 %v2709, %v2720
    %v2722 = vmul.f32 %v2721, 1.442695
    %v2723 = vpow.pop %v2722
    %v2724 = vsel %vm1463, %v2723, 0.0
    %2725 = vadd.xlane.f32.xlu0 %v2724
    %v2726 = vpop.xlane.xlu0 %2725
    %v2727 = vrot.slane %v2726, 4
    %v2728 = vadd.f32 %v2726, %v2727
    %v2729 = vrot.slane %v2728, 2
    %v2730 = vadd.f32 %v2728, %v2729
    %v2731 = vrot.slane %v2730, 1
    %v2732 = vadd.f32 %v2730, %v2731
    %s2733 = vtos %v2732
    %v2734 = vstv %s2733
    %v2735 = vrcp.pop %v2734
    %v2736 = vmul.f32 %v2734, %v2735
    %v2737 = vsub.f32 1.0, %v2736
    %v2738 = vmul.f32 %v2735, %v2737
    %v2739 = vadd.f32 %v2735, %v2738
    %vm2740 = vweird.f32 %v2734
    %vm2741 = vweird.f32 %v2735
    %vm2742 = vmor %vm2740, %vm2741
    %v2743 = vsel %vm2742, %v2735, %v2739
    %v2744 = vand.u32 2147483647, %v2734
    %vm2745 = vcmp.eq.f32.partialorder %v2744, 8.507059e+37
    %v2746 = vand.u32 %v2734, 2147483648
    %v2747 = vor.u32 1.1754944e-38, %v2746
    %v2748 = vsel %vm2745, %v2747, %v2743
    %v2749 = vmul.f32 %v2723, %v2748
    %2751 = vset.pattern.permute.xlu0 0
    %2752 = vperm.xlu0 %2751, %v2749
    %v2753 = vpop.permute.xlu0 %2752
    %v2755 = vmul.f32 %v2753, %v2659
    %v2756 = vsel %vm233, %v2755, 0.0
    %v2757 = vrot.slane %v2756, 4
    %v2758 = vadd.f32 %v2756, %v2757
    %v2759 = vrot.slane %v2758, 2
    %v2760 = vadd.f32 %v2758, %v2759
    %v2761 = vrot.slane %v2760, 1
    %v2762 = vadd.f32 %v2760, %v2761
    %v2763 = vsel %vm585, %v2762, %v1517
    %s2764 = sld [smem:[#allocation3 + $0x2]]
    %s2765 = scalar_lea.vmem %s1, 16
    %v2766 = vld [vmem:[%s2765] sm:$0xff]
    %v2768 = vsel %vm233, %v2766, 0
    %2770 = vmatpush.msra.mxu0 0.0
    %2771 = vmatpush.msra.mxu0 0.0
    %2772 = vmatpush.msra.mxu0 0.0
    %2773 = vmatpush.msra.mxu0 0.0
    %2774 = vmatpush.msra.mxu0 0.0
    %2775 = vmatpush.msra.mxu0 0.0
    %2776 = vmatpush.msra.mxu0 0.0
    %2777 = vmatpush.msra.mxu0 0.0
    %2778 = vmatpush.msra.mxu0 0.0
    %2779 = vmatpush.msra.mxu0 0.0
    %2780 = vmatpush.msra.mxu0 0.0
    %2781 = vmatpush.msra.mxu0 0.0
    %2782 = vmatpush.msra.mxu0 %v184
    %2783 = vmatpush.msra.mxu0 %v183
    %2784 = vmatpush.msra.mxu0 %v182
    %2785 = vmatpush.msra.mxu0 %v181
    %2786 = vmatmul.f32.gmra.mxu0 %v2768
    %v2787 = vpop.f32.mrf.mxu0
    %v2788 = vadd.f32 %v231, %v2787
    %2789 = vdwg.mxu0
    %2790 = vmatpush.msra.mxu0 0.0
    %2791 = vmatpush.msra.mxu0 0.0
    %2792 = vmatpush.msra.mxu0 0.0
    %2793 = vmatpush.msra.mxu0 0.0
    %2794 = vmatpush.msra.mxu0 0.0
    %2795 = vmatpush.msra.mxu0 0.0
    %2796 = vmatpush.msra.mxu0 0.0
    %2797 = vmatpush.msra.mxu0 0.0
    %2798 = vmatpush.msra.mxu0 0.0
    %2799 = vmatpush.msra.mxu0 0.0
    %2800 = vmatpush.msra.mxu0 0.0
    %2801 = vmatpush.msra.mxu0 0.0
    %2802 = vmatpush.msra.mxu0 %v189
    %2803 = vmatpush.msra.mxu0 %v188
    %2804 = vmatpush.msra.mxu0 %v187
    %2805 = vmatpush.msra.mxu0 %v186
    %2806 = vmatmul.f32.gmra.mxu0 %v2768
    %v2807 = vpop.f32.mrf.mxu0
    %v2808 = vadd.f32 %v258, %v2807
    %2809 = vdwg.mxu0
    %2810 = vmatpush.msra.mxu0 0.0
    %2811 = vmatpush.msra.mxu0 0.0
    %2812 = vmatpush.msra.mxu0 0.0
    %2813 = vmatpush.msra.mxu0 0.0
    %2814 = vmatpush.msra.mxu0 0.0
    %2815 = vmatpush.msra.mxu0 0.0
    %2816 = vmatpush.msra.mxu0 0.0
    %2817 = vmatpush.msra.mxu0 0.0
    %2818 = vmatpush.msra.mxu0 0.0
    %2819 = vmatpush.msra.mxu0 0.0
    %2820 = vmatpush.msra.mxu0 0.0
    %2821 = vmatpush.msra.mxu0 0.0
    %2822 = vmatpush.msra.mxu0 %v194
    %2823 = vmatpush.msra.mxu0 %v193
    %2824 = vmatpush.msra.mxu0 %v192
    %2825 = vmatpush.msra.mxu0 %v191
    %2826 = vmatmul.f32.gmra.mxu0 %v2768
    %v2827 = vpop.f32.mrf.mxu0
    %v2828 = vadd.f32 %v281, %v2827
    %2829 = vdwg.mxu0
    %v2831 = vrot.slane %v2788, 7
    %v2833 = vsel %vm178, %v2788, %v2831
    %v2835 = vrot.slane %v2808, 7
    %v2837 = vsel %vm178, %v2808, %v2835
    %v2839 = vrot.slane %v2828, 7
    %v2841 = vsel %vm178, %v2828, %v2839
    %v2843 = vrot.slane %v2657, 7
    %v2844 = vsel %vm233, %v2843, 0
    %2846 = vmatpush.msra.mxu0 0.0
    %2847 = vmatpush.msra.mxu0 0.0
    %2848 = vmatpush.msra.mxu0 0.0
    %2849 = vmatpush.msra.mxu0 0.0
    %2850 = vmatpush.msra.mxu0 0.0
    %2851 = vmatpush.msra.mxu0 0.0
    %2852 = vmatpush.msra.mxu0 0.0
    %2853 = vmatpush.msra.mxu0 0.0
    %2854 = vmatpush.msra.mxu0 0.0
    %2855 = vmatpush.msra.mxu0 0.0
    %2856 = vmatpush.msra.mxu0 0.0
    %2857 = vmatpush.msra.mxu0 0.0
    %2858 = vmatpush.msra.mxu0 %v203
    %2859 = vmatpush.msra.mxu0 %v202
    %2860 = vmatpush.msra.mxu0 %v201
    %2861 = vmatpush.msra.mxu0 %v200
    %2862 = vmatmul.f32.gmra.mxu0 %v2844
    %v2863 = vpop.f32.mrf.mxu0
    %v2864 = vadd.f32 %v214, %v2863
    %2865 = vdwg.mxu0
    %2866 = vmatpush.msra.mxu0 0.0
    %2867 = vmatpush.msra.mxu0 0.0
    %2868 = vmatpush.msra.mxu0 0.0
    %2869 = vmatpush.msra.mxu0 0.0
    %2870 = vmatpush.msra.mxu0 0.0
    %2871 = vmatpush.msra.mxu0 0.0
    %2872 = vmatpush.msra.mxu0 0.0
    %2873 = vmatpush.msra.mxu0 0.0
    %2874 = vmatpush.msra.mxu0 0.0
    %2875 = vmatpush.msra.mxu0 0.0
    %2876 = vmatpush.msra.mxu0 0.0
    %2877 = vmatpush.msra.mxu0 0.0
    %2878 = vmatpush.msra.mxu0 %v208
    %2879 = vmatpush.msra.mxu0 %v207
    %2880 = vmatpush.msra.mxu0 %v206
    %2881 = vmatpush.msra.mxu0 %v205
    %2882 = vmatmul.f32.gmra.mxu0 %v2844
    %v2883 = vpop.f32.mrf.mxu0
    %v2884 = vadd.f32 %v216, %v2883
    %2885 = vdwg.mxu0
    %2886 = vmatpush.msra.mxu0 0.0
    %2887 = vmatpush.msra.mxu0 0.0
    %2888 = vmatpush.msra.mxu0 0.0
    %2889 = vmatpush.msra.mxu0 0.0
    %2890 = vmatpush.msra.mxu0 0.0
    %2891 = vmatpush.msra.mxu0 0.0
    %2892 = vmatpush.msra.mxu0 0.0
    %2893 = vmatpush.msra.mxu0 0.0
    %2894 = vmatpush.msra.mxu0 0.0
    %2895 = vmatpush.msra.mxu0 0.0
    %2896 = vmatpush.msra.mxu0 0.0
    %2897 = vmatpush.msra.mxu0 0.0
    %2898 = vmatpush.msra.mxu0 %v213
    %2899 = vmatpush.msra.mxu0 %v212
    %2900 = vmatpush.msra.mxu0 %v211
    %2901 = vmatpush.msra.mxu0 %v210
    %2902 = vmatmul.f32.gmra.mxu0 %v2844
    %v2903 = vpop.f32.mrf.mxu0
    %v2904 = vadd.f32 %v218, %v2903
    %2905 = vdwg.mxu0
    %v2906 = vadd.f32 %v2833, %v2864
    %v2907 = vxor.u32 %v2906, 2147483648
    %v2908 = vmul.f32 %v2907, 1.442695
    %v2909 = vpow.pop %v2908
    %v2910 = vadd.f32 %v2909, 1.0
    %v2911 = vrcp.pop %v2910
    %v2912 = vmul.f32 %v2910, %v2911
    %v2913 = vsub.f32 1.0, %v2912
    %v2914 = vmul.f32 %v2911, %v2913
    %v2915 = vadd.f32 %v2911, %v2914
    %vm2916 = vweird.f32 %v2910
    %vm2917 = vweird.f32 %v2911
    %vm2918 = vmor %vm2916, %vm2917
    %v2919 = vsel %vm2918, %v2911, %v2915
    %v2920 = vand.u32 2147483647, %v2910
    %vm2921 = vcmp.eq.f32.partialorder %v2920, 8.507059e+37
    %v2922 = vand.u32 %v2910, 2147483648
    %v2923 = vor.u32 1.1754944e-38, %v2922
    %v2924 = vsel %vm2921, %v2923, %v2919
    %v2925 = vmul.f32 1.0, %v2924
    %v2926 = vadd.f32 %v2837, %v2884
    %v2927 = vxor.u32 %v2926, 2147483648
    %v2928 = vmul.f32 %v2927, 1.442695
    %v2929 = vpow.pop %v2928
    %v2930 = vadd.f32 %v2929, 1.0
    %v2931 = vrcp.pop %v2930
    %v2932 = vmul.f32 %v2930, %v2931
    %v2933 = vsub.f32 1.0, %v2932
    %v2934 = vmul.f32 %v2931, %v2933
    %v2935 = vadd.f32 %v2931, %v2934
    %vm2936 = vweird.f32 %v2930
    %vm2937 = vweird.f32 %v2931
    %vm2938 = vmor %vm2936, %vm2937
    %v2939 = vsel %vm2938, %v2931, %v2935
    %v2940 = vand.u32 2147483647, %v2930
    %vm2941 = vcmp.eq.f32.partialorder %v2940, 8.507059e+37
    %v2942 = vand.u32 %v2930, 2147483648
    %v2943 = vor.u32 1.1754944e-38, %v2942
    %v2944 = vsel %vm2941, %v2943, %v2939
    %v2945 = vmul.f32 1.0, %v2944
    %v2946 = vmul.f32 %v2925, %v2904
    %v2947 = vadd.f32 %v2841, %v2946
    %v2948 = vtanh.pop %v2947
    %v2949 = vsub.f32 1.0, %v2945
    %v2950 = vmul.f32 %v2949, %v2948
    %v2952 = vmul.f32 %v2945, %v2843
    %v2953 = vadd.f32 %v2950, %v2952
    %p2954 = scmp.gt.s32.totalorder %s2764, 0
    %s2955 = scalar_select %p2954, 1, 0
    %v2956 = vstv %s2955
    %vm2957 = vcmp.eq.s32.totalorder %v2956, 1
    %v2958 = vsel %vm2957, %v2953, %v2843
    %p2959 = scmp.gt.s32.totalorder %s2764, 7
    %s2960 = scalar_select %p2959, 1, 0
    %v2961 = vstv %s2960
    %vm2962 = vcmp.eq.s32.totalorder %v2961, 1
    %v2963 = vsel %vm2962, %v2953, %v2843
    %v2964 = vsel %vm178, %v2958, %v2963
    %v2965 = vperm.slane %v2964, 0
    %v2966 = vsel %vm441, %v2965, 0.0
    %v2967 = vrot.slane %v2788, 5
    %v2969 = vsel %vm178, %v2788, %v2967
    %v2970 = vrot.slane %v2808, 5
    %v2972 = vsel %vm178, %v2808, %v2970
    %v2973 = vrot.slane %v2828, 5
    %v2975 = vsel %vm178, %v2828, %v2973
    %v2977 = vsel %vm233, %v2964, 0
    %2979 = vmatpush.msra.mxu0 0.0
    %2980 = vmatpush.msra.mxu0 0.0
    %2981 = vmatpush.msra.mxu0 0.0
    %2982 = vmatpush.msra.mxu0 0.0
    %2983 = vmatpush.msra.mxu0 0.0
    %2984 = vmatpush.msra.mxu0 0.0
    %2985 = vmatpush.msra.mxu0 0.0
    %2986 = vmatpush.msra.mxu0 0.0
    %2987 = vmatpush.msra.mxu0 0.0
    %2988 = vmatpush.msra.mxu0 0.0
    %2989 = vmatpush.msra.mxu0 0.0
    %2990 = vmatpush.msra.mxu0 0.0
    %2991 = vmatpush.msra.mxu0 %v203
    %2992 = vmatpush.msra.mxu0 %v202
    %2993 = vmatpush.msra.mxu0 %v201
    %2994 = vmatpush.msra.mxu0 %v200
    %2995 = vmatmul.f32.gmra.mxu0 %v2977
    %v2996 = vpop.f32.mrf.mxu0
    %v2997 = vadd.f32 %v214, %v2996
    %2998 = vdwg.mxu0
    %2999 = vmatpush.msra.mxu0 0.0
    %3000 = vmatpush.msra.mxu0 0.0
    %3001 = vmatpush.msra.mxu0 0.0
    %3002 = vmatpush.msra.mxu0 0.0
    %3003 = vmatpush.msra.mxu0 0.0
    %3004 = vmatpush.msra.mxu0 0.0
    %3005 = vmatpush.msra.mxu0 0.0
    %3006 = vmatpush.msra.mxu0 0.0
    %3007 = vmatpush.msra.mxu0 0.0
    %3008 = vmatpush.msra.mxu0 0.0
    %3009 = vmatpush.msra.mxu0 0.0
    %3010 = vmatpush.msra.mxu0 0.0
    %3011 = vmatpush.msra.mxu0 %v208
    %3012 = vmatpush.msra.mxu0 %v207
    %3013 = vmatpush.msra.mxu0 %v206
    %3014 = vmatpush.msra.mxu0 %v205
    %3015 = vmatmul.f32.gmra.mxu0 %v2977
    %v3016 = vpop.f32.mrf.mxu0
    %v3017 = vadd.f32 %v216, %v3016
    %3018 = vdwg.mxu0
    %3019 = vmatpush.msra.mxu0 0.0
    %3020 = vmatpush.msra.mxu0 0.0
    %3021 = vmatpush.msra.mxu0 0.0
    %3022 = vmatpush.msra.mxu0 0.0
    %3023 = vmatpush.msra.mxu0 0.0
    %3024 = vmatpush.msra.mxu0 0.0
    %3025 = vmatpush.msra.mxu0 0.0
    %3026 = vmatpush.msra.mxu0 0.0
    %3027 = vmatpush.msra.mxu0 0.0
    %3028 = vmatpush.msra.mxu0 0.0
    %3029 = vmatpush.msra.mxu0 0.0
    %3030 = vmatpush.msra.mxu0 0.0
    %3031 = vmatpush.msra.mxu0 %v213
    %3032 = vmatpush.msra.mxu0 %v212
    %3033 = vmatpush.msra.mxu0 %v211
    %3034 = vmatpush.msra.mxu0 %v210
    %3035 = vmatmul.f32.gmra.mxu0 %v2977
    %v3036 = vpop.f32.mrf.mxu0
    %v3037 = vadd.f32 %v218, %v3036
    %3038 = vdwg.mxu0
    %v3040 = vrot.slane %v2997, 7
    %v3042 = vadd.f32 %v2969, %v3040
    %v3043 = vxor.u32 %v3042, 2147483648
    %v3044 = vmul.f32 %v3043, 1.442695
    %v3045 = vpow.pop %v3044
    %v3046 = vadd.f32 %v3045, 1.0
    %v3047 = vrcp.pop %v3046
    %v3048 = vmul.f32 %v3046, %v3047
    %v3049 = vsub.f32 1.0, %v3048
    %v3050 = vmul.f32 %v3047, %v3049
    %v3051 = vadd.f32 %v3047, %v3050
    %vm3052 = vweird.f32 %v3046
    %vm3053 = vweird.f32 %v3047
    %vm3054 = vmor %vm3052, %vm3053
    %v3055 = vsel %vm3054, %v3047, %v3051
    %v3056 = vand.u32 2147483647, %v3046
    %vm3057 = vcmp.eq.f32.partialorder %v3056, 8.507059e+37
    %v3058 = vand.u32 %v3046, 2147483648
    %v3059 = vor.u32 1.1754944e-38, %v3058
    %v3060 = vsel %vm3057, %v3059, %v3055
    %v3061 = vmul.f32 1.0, %v3060
    %v3063 = vrot.slane %v3017, 7
    %v3065 = vadd.f32 %v2972, %v3063
    %v3066 = vxor.u32 %v3065, 2147483648
    %v3067 = vmul.f32 %v3066, 1.442695
    %v3068 = vpow.pop %v3067
    %v3069 = vadd.f32 %v3068, 1.0
    %v3070 = vrcp.pop %v3069
    %v3071 = vmul.f32 %v3069, %v3070
    %v3072 = vsub.f32 1.0, %v3071
    %v3073 = vmul.f32 %v3070, %v3072
    %v3074 = vadd.f32 %v3070, %v3073
    %vm3075 = vweird.f32 %v3069
    %vm3076 = vweird.f32 %v3070
    %vm3077 = vmor %vm3075, %vm3076
    %v3078 = vsel %vm3077, %v3070, %v3074
    %v3079 = vand.u32 2147483647, %v3069
    %vm3080 = vcmp.eq.f32.partialorder %v3079, 8.507059e+37
    %v3081 = vand.u32 %v3069, 2147483648
    %v3082 = vor.u32 1.1754944e-38, %v3081
    %v3083 = vsel %vm3080, %v3082, %v3078
    %v3084 = vmul.f32 1.0, %v3083
    %v3086 = vrot.slane %v3037, 7
    %v3088 = vmul.f32 %v3061, %v3086
    %v3089 = vadd.f32 %v2975, %v3088
    %v3090 = vtanh.pop %v3089
    %v3091 = vsub.f32 1.0, %v3084
    %v3092 = vmul.f32 %v3091, %v3090
    %v3093 = vrot.slane %v2964, 7
    %v3095 = vmul.f32 %v3084, %v3093
    %v3096 = vadd.f32 %v3092, %v3095
    %p3097 = scmp.gt.s32.totalorder %s2764, 1
    %s3098 = scalar_select %p3097, 1, 0
    %v3099 = vstv %s3098
    %vm3100 = vcmp.eq.s32.totalorder %v3099, 1
    %v3101 = vsel %vm3100, %v3096, %v3093
    %p3102 = scmp.gt.s32.totalorder %s2764, 6
    %s3103 = scalar_select %p3102, 1, 0
    %v3104 = vstv %s3103
    %vm3105 = vcmp.eq.s32.totalorder %v3104, 1
    %v3106 = vsel %vm3105, %v3096, %v3093
    %v3107 = vsel %vm178, %v3101, %v3106
    %v3108 = vperm.slane %v3107, 1
    %v3109 = vsel %vm589, %v3108, %v2966
    %v3110 = vrot.slane %v2788, 3
    %v3112 = vsel %vm178, %v2788, %v3110
    %v3113 = vrot.slane %v2808, 3
    %v3115 = vsel %vm178, %v2808, %v3113
    %v3116 = vrot.slane %v2828, 3
    %v3118 = vsel %vm178, %v2828, %v3116
    %v3120 = vrot.slane %v3107, 1
    %v3121 = vsel %vm233, %v3120, 0
    %3123 = vmatpush.msra.mxu0 0.0
    %3124 = vmatpush.msra.mxu0 0.0
    %3125 = vmatpush.msra.mxu0 0.0
    %3126 = vmatpush.msra.mxu0 0.0
    %3127 = vmatpush.msra.mxu0 0.0
    %3128 = vmatpush.msra.mxu0 0.0
    %3129 = vmatpush.msra.mxu0 0.0
    %3130 = vmatpush.msra.mxu0 0.0
    %3131 = vmatpush.msra.mxu0 0.0
    %3132 = vmatpush.msra.mxu0 0.0
    %3133 = vmatpush.msra.mxu0 0.0
    %3134 = vmatpush.msra.mxu0 0.0
    %3135 = vmatpush.msra.mxu0 %v203
    %3136 = vmatpush.msra.mxu0 %v202
    %3137 = vmatpush.msra.mxu0 %v201
    %3138 = vmatpush.msra.mxu0 %v200
    %3139 = vmatmul.f32.gmra.mxu0 %v3121
    %v3140 = vpop.f32.mrf.mxu0
    %v3141 = vadd.f32 %v214, %v3140
    %3142 = vdwg.mxu0
    %3143 = vmatpush.msra.mxu0 0.0
    %3144 = vmatpush.msra.mxu0 0.0
    %3145 = vmatpush.msra.mxu0 0.0
    %3146 = vmatpush.msra.mxu0 0.0
    %3147 = vmatpush.msra.mxu0 0.0
    %3148 = vmatpush.msra.mxu0 0.0
    %3149 = vmatpush.msra.mxu0 0.0
    %3150 = vmatpush.msra.mxu0 0.0
    %3151 = vmatpush.msra.mxu0 0.0
    %3152 = vmatpush.msra.mxu0 0.0
    %3153 = vmatpush.msra.mxu0 0.0
    %3154 = vmatpush.msra.mxu0 0.0
    %3155 = vmatpush.msra.mxu0 %v208
    %3156 = vmatpush.msra.mxu0 %v207
    %3157 = vmatpush.msra.mxu0 %v206
    %3158 = vmatpush.msra.mxu0 %v205
    %3159 = vmatmul.f32.gmra.mxu0 %v3121
    %v3160 = vpop.f32.mrf.mxu0
    %v3161 = vadd.f32 %v216, %v3160
    %3162 = vdwg.mxu0
    %3163 = vmatpush.msra.mxu0 0.0
    %3164 = vmatpush.msra.mxu0 0.0
    %3165 = vmatpush.msra.mxu0 0.0
    %3166 = vmatpush.msra.mxu0 0.0
    %3167 = vmatpush.msra.mxu0 0.0
    %3168 = vmatpush.msra.mxu0 0.0
    %3169 = vmatpush.msra.mxu0 0.0
    %3170 = vmatpush.msra.mxu0 0.0
    %3171 = vmatpush.msra.mxu0 0.0
    %3172 = vmatpush.msra.mxu0 0.0
    %3173 = vmatpush.msra.mxu0 0.0
    %3174 = vmatpush.msra.mxu0 0.0
    %3175 = vmatpush.msra.mxu0 %v213
    %3176 = vmatpush.msra.mxu0 %v212
    %3177 = vmatpush.msra.mxu0 %v211
    %3178 = vmatpush.msra.mxu0 %v210
    %3179 = vmatmul.f32.gmra.mxu0 %v3121
    %v3180 = vpop.f32.mrf.mxu0
    %v3181 = vadd.f32 %v218, %v3180
    %3182 = vdwg.mxu0
    %v3184 = vrot.slane %v3141, 6
    %v3186 = vadd.f32 %v3112, %v3184
    %v3187 = vxor.u32 %v3186, 2147483648
    %v3188 = vmul.f32 %v3187, 1.442695
    %v3189 = vpow.pop %v3188
    %v3190 = vadd.f32 %v3189, 1.0
    %v3191 = vrcp.pop %v3190
    %v3192 = vmul.f32 %v3190, %v3191
    %v3193 = vsub.f32 1.0, %v3192
    %v3194 = vmul.f32 %v3191, %v3193
    %v3195 = vadd.f32 %v3191, %v3194
    %vm3196 = vweird.f32 %v3190
    %vm3197 = vweird.f32 %v3191
    %vm3198 = vmor %vm3196, %vm3197
    %v3199 = vsel %vm3198, %v3191, %v3195
    %v3200 = vand.u32 2147483647, %v3190
    %vm3201 = vcmp.eq.f32.partialorder %v3200, 8.507059e+37
    %v3202 = vand.u32 %v3190, 2147483648
    %v3203 = vor.u32 1.1754944e-38, %v3202
    %v3204 = vsel %vm3201, %v3203, %v3199
    %v3205 = vmul.f32 1.0, %v3204
    %v3207 = vrot.slane %v3161, 6
    %v3209 = vadd.f32 %v3115, %v3207
    %v3210 = vxor.u32 %v3209, 2147483648
    %v3211 = vmul.f32 %v3210, 1.442695
    %v3212 = vpow.pop %v3211
    %v3213 = vadd.f32 %v3212, 1.0
    %v3214 = vrcp.pop %v3213
    %v3215 = vmul.f32 %v3213, %v3214
    %v3216 = vsub.f32 1.0, %v3215
    %v3217 = vmul.f32 %v3214, %v3216
    %v3218 = vadd.f32 %v3214, %v3217
    %vm3219 = vweird.f32 %v3213
    %vm3220 = vweird.f32 %v3214
    %vm3221 = vmor %vm3219, %vm3220
    %v3222 = vsel %vm3221, %v3214, %v3218
    %v3223 = vand.u32 2147483647, %v3213
    %vm3224 = vcmp.eq.f32.partialorder %v3223, 8.507059e+37
    %v3225 = vand.u32 %v3213, 2147483648
    %v3226 = vor.u32 1.1754944e-38, %v3225
    %v3227 = vsel %vm3224, %v3226, %v3222
    %v3228 = vmul.f32 1.0, %v3227
    %v3230 = vrot.slane %v3181, 6
    %v3232 = vmul.f32 %v3205, %v3230
    %v3233 = vadd.f32 %v3118, %v3232
    %v3234 = vtanh.pop %v3233
    %v3235 = vsub.f32 1.0, %v3228
    %v3236 = vmul.f32 %v3235, %v3234
    %v3237 = vrot.slane %v3107, 7
    %v3239 = vmul.f32 %v3228, %v3237
    %v3240 = vadd.f32 %v3236, %v3239
    %p3241 = scmp.gt.s32.totalorder %s2764, 2
    %s3242 = scalar_select %p3241, 1, 0
    %v3243 = vstv %s3242
    %vm3244 = vcmp.eq.s32.totalorder %v3243, 1
    %v3245 = vsel %vm3244, %v3240, %v3237
    %p3246 = scmp.gt.s32.totalorder %s2764, 5
    %s3247 = scalar_select %p3246, 1, 0
    %v3248 = vstv %s3247
    %vm3249 = vcmp.eq.s32.totalorder %v3248, 1
    %v3250 = vsel %vm3249, %v3240, %v3237
    %v3251 = vsel %vm178, %v3245, %v3250
    %v3252 = vperm.slane %v3251, 2
    %v3253 = vsel %vm738, %v3252, %v3109
    %v3254 = vrot.slane %v2788, 1
    %v3256 = vsel %vm178, %v2788, %v3254
    %v3257 = vrot.slane %v2808, 1
    %v3259 = vsel %vm178, %v2808, %v3257
    %v3260 = vrot.slane %v2828, 1
    %v3262 = vsel %vm178, %v2828, %v3260
    %v3264 = vrot.slane %v3251, 2
    %v3265 = vsel %vm233, %v3264, 0
    %3267 = vmatpush.msra.mxu0 0.0
    %3268 = vmatpush.msra.mxu0 0.0
    %3269 = vmatpush.msra.mxu0 0.0
    %3270 = vmatpush.msra.mxu0 0.0
    %3271 = vmatpush.msra.mxu0 0.0
    %3272 = vmatpush.msra.mxu0 0.0
    %3273 = vmatpush.msra.mxu0 0.0
    %3274 = vmatpush.msra.mxu0 0.0
    %3275 = vmatpush.msra.mxu0 0.0
    %3276 = vmatpush.msra.mxu0 0.0
    %3277 = vmatpush.msra.mxu0 0.0
    %3278 = vmatpush.msra.mxu0 0.0
    %3279 = vmatpush.msra.mxu0 %v203
    %3280 = vmatpush.msra.mxu0 %v202
    %3281 = vmatpush.msra.mxu0 %v201
    %3282 = vmatpush.msra.mxu0 %v200
    %3283 = vmatmul.f32.gmra.mxu0 %v3265
    %v3284 = vpop.f32.mrf.mxu0
    %v3285 = vadd.f32 %v214, %v3284
    %3286 = vdwg.mxu0
    %3287 = vmatpush.msra.mxu0 0.0
    %3288 = vmatpush.msra.mxu0 0.0
    %3289 = vmatpush.msra.mxu0 0.0
    %3290 = vmatpush.msra.mxu0 0.0
    %3291 = vmatpush.msra.mxu0 0.0
    %3292 = vmatpush.msra.mxu0 0.0
    %3293 = vmatpush.msra.mxu0 0.0
    %3294 = vmatpush.msra.mxu0 0.0
    %3295 = vmatpush.msra.mxu0 0.0
    %3296 = vmatpush.msra.mxu0 0.0
    %3297 = vmatpush.msra.mxu0 0.0
    %3298 = vmatpush.msra.mxu0 0.0
    %3299 = vmatpush.msra.mxu0 %v208
    %3300 = vmatpush.msra.mxu0 %v207
    %3301 = vmatpush.msra.mxu0 %v206
    %3302 = vmatpush.msra.mxu0 %v205
    %3303 = vmatmul.f32.gmra.mxu0 %v3265
    %v3304 = vpop.f32.mrf.mxu0
    %v3305 = vadd.f32 %v216, %v3304
    %3306 = vdwg.mxu0
    %3307 = vmatpush.msra.mxu0 0.0
    %3308 = vmatpush.msra.mxu0 0.0
    %3309 = vmatpush.msra.mxu0 0.0
    %3310 = vmatpush.msra.mxu0 0.0
    %3311 = vmatpush.msra.mxu0 0.0
    %3312 = vmatpush.msra.mxu0 0.0
    %3313 = vmatpush.msra.mxu0 0.0
    %3314 = vmatpush.msra.mxu0 0.0
    %3315 = vmatpush.msra.mxu0 0.0
    %3316 = vmatpush.msra.mxu0 0.0
    %3317 = vmatpush.msra.mxu0 0.0
    %3318 = vmatpush.msra.mxu0 0.0
    %3319 = vmatpush.msra.mxu0 %v213
    %3320 = vmatpush.msra.mxu0 %v212
    %3321 = vmatpush.msra.mxu0 %v211
    %3322 = vmatpush.msra.mxu0 %v210
    %3323 = vmatmul.f32.gmra.mxu0 %v3265
    %v3324 = vpop.f32.mrf.mxu0
    %v3325 = vadd.f32 %v218, %v3324
    %3326 = vdwg.mxu0
    %v3328 = vrot.slane %v3285, 5
    %v3330 = vadd.f32 %v3256, %v3328
    %v3331 = vxor.u32 %v3330, 2147483648
    %v3332 = vmul.f32 %v3331, 1.442695
    %v3333 = vpow.pop %v3332
    %v3334 = vadd.f32 %v3333, 1.0
    %v3335 = vrcp.pop %v3334
    %v3336 = vmul.f32 %v3334, %v3335
    %v3337 = vsub.f32 1.0, %v3336
    %v3338 = vmul.f32 %v3335, %v3337
    %v3339 = vadd.f32 %v3335, %v3338
    %vm3340 = vweird.f32 %v3334
    %vm3341 = vweird.f32 %v3335
    %vm3342 = vmor %vm3340, %vm3341
    %v3343 = vsel %vm3342, %v3335, %v3339
    %v3344 = vand.u32 2147483647, %v3334
    %vm3345 = vcmp.eq.f32.partialorder %v3344, 8.507059e+37
    %v3346 = vand.u32 %v3334, 2147483648
    %v3347 = vor.u32 1.1754944e-38, %v3346
    %v3348 = vsel %vm3345, %v3347, %v3343
    %v3349 = vmul.f32 1.0, %v3348
    %v3351 = vrot.slane %v3305, 5
    %v3353 = vadd.f32 %v3259, %v3351
    %v3354 = vxor.u32 %v3353, 2147483648
    %v3355 = vmul.f32 %v3354, 1.442695
    %v3356 = vpow.pop %v3355
    %v3357 = vadd.f32 %v3356, 1.0
    %v3358 = vrcp.pop %v3357
    %v3359 = vmul.f32 %v3357, %v3358
    %v3360 = vsub.f32 1.0, %v3359
    %v3361 = vmul.f32 %v3358, %v3360
    %v3362 = vadd.f32 %v3358, %v3361
    %vm3363 = vweird.f32 %v3357
    %vm3364 = vweird.f32 %v3358
    %vm3365 = vmor %vm3363, %vm3364
    %v3366 = vsel %vm3365, %v3358, %v3362
    %v3367 = vand.u32 2147483647, %v3357
    %vm3368 = vcmp.eq.f32.partialorder %v3367, 8.507059e+37
    %v3369 = vand.u32 %v3357, 2147483648
    %v3370 = vor.u32 1.1754944e-38, %v3369
    %v3371 = vsel %vm3368, %v3370, %v3366
    %v3372 = vmul.f32 1.0, %v3371
    %v3374 = vrot.slane %v3325, 5
    %v3376 = vmul.f32 %v3349, %v3374
    %v3377 = vadd.f32 %v3262, %v3376
    %v3378 = vtanh.pop %v3377
    %v3379 = vsub.f32 1.0, %v3372
    %v3380 = vmul.f32 %v3379, %v3378
    %v3381 = vrot.slane %v3251, 7
    %v3383 = vmul.f32 %v3372, %v3381
    %v3384 = vadd.f32 %v3380, %v3383
    %p3385 = scmp.gt.s32.totalorder %s2764, 3
    %s3386 = scalar_select %p3385, 1, 0
    %v3387 = vstv %s3386
    %vm3388 = vcmp.eq.s32.totalorder %v3387, 1
    %v3389 = vsel %vm3388, %v3384, %v3381
    %p3390 = scmp.gt.s32.totalorder %s2764, 4
    %s3391 = scalar_select %p3390, 1, 0
    %v3392 = vstv %s3391
    %vm3393 = vcmp.eq.s32.totalorder %v3392, 1
    %v3394 = vsel %vm3393, %v3384, %v3381
    %v3395 = vsel %vm178, %v3389, %v3394
    %v3396 = vperm.slane %v3395, 3
    %v3397 = vsel %vm887, %v3396, %v3253
    %v3399 = vrot.slane %v3395, 3
    %v3400 = vsel %vm233, %v3399, 0
    %3402 = vmatpush.msra.mxu0 0.0
    %3403 = vmatpush.msra.mxu0 0.0
    %3404 = vmatpush.msra.mxu0 0.0
    %3405 = vmatpush.msra.mxu0 0.0
    %3406 = vmatpush.msra.mxu0 0.0
    %3407 = vmatpush.msra.mxu0 0.0
    %3408 = vmatpush.msra.mxu0 0.0
    %3409 = vmatpush.msra.mxu0 0.0
    %3410 = vmatpush.msra.mxu0 0.0
    %3411 = vmatpush.msra.mxu0 0.0
    %3412 = vmatpush.msra.mxu0 0.0
    %3413 = vmatpush.msra.mxu0 0.0
    %3414 = vmatpush.msra.mxu0 %v203
    %3415 = vmatpush.msra.mxu0 %v202
    %3416 = vmatpush.msra.mxu0 %v201
    %3417 = vmatpush.msra.mxu0 %v200
    %3418 = vmatmul.f32.gmra.mxu0 %v3400
    %v3419 = vpop.f32.mrf.mxu0
    %v3420 = vadd.f32 %v214, %v3419
    %3421 = vdwg.mxu0
    %3422 = vmatpush.msra.mxu0 0.0
    %3423 = vmatpush.msra.mxu0 0.0
    %3424 = vmatpush.msra.mxu0 0.0
    %3425 = vmatpush.msra.mxu0 0.0
    %3426 = vmatpush.msra.mxu0 0.0
    %3427 = vmatpush.msra.mxu0 0.0
    %3428 = vmatpush.msra.mxu0 0.0
    %3429 = vmatpush.msra.mxu0 0.0
    %3430 = vmatpush.msra.mxu0 0.0
    %3431 = vmatpush.msra.mxu0 0.0
    %3432 = vmatpush.msra.mxu0 0.0
    %3433 = vmatpush.msra.mxu0 0.0
    %3434 = vmatpush.msra.mxu0 %v208
    %3435 = vmatpush.msra.mxu0 %v207
    %3436 = vmatpush.msra.mxu0 %v206
    %3437 = vmatpush.msra.mxu0 %v205
    %3438 = vmatmul.f32.gmra.mxu0 %v3400
    %v3439 = vpop.f32.mrf.mxu0
    %v3440 = vadd.f32 %v216, %v3439
    %3441 = vdwg.mxu0
    %3442 = vmatpush.msra.mxu0 0.0
    %3443 = vmatpush.msra.mxu0 0.0
    %3444 = vmatpush.msra.mxu0 0.0
    %3445 = vmatpush.msra.mxu0 0.0
    %3446 = vmatpush.msra.mxu0 0.0
    %3447 = vmatpush.msra.mxu0 0.0
    %3448 = vmatpush.msra.mxu0 0.0
    %3449 = vmatpush.msra.mxu0 0.0
    %3450 = vmatpush.msra.mxu0 0.0
    %3451 = vmatpush.msra.mxu0 0.0
    %3452 = vmatpush.msra.mxu0 0.0
    %3453 = vmatpush.msra.mxu0 0.0
    %3454 = vmatpush.msra.mxu0 %v213
    %3455 = vmatpush.msra.mxu0 %v212
    %3456 = vmatpush.msra.mxu0 %v211
    %3457 = vmatpush.msra.mxu0 %v210
    %3458 = vmatmul.f32.gmra.mxu0 %v3400
    %v3459 = vpop.f32.mrf.mxu0
    %v3460 = vadd.f32 %v218, %v3459
    %3461 = vdwg.mxu0
    %v3463 = vrot.slane %v3420, 4
    %v3465 = vadd.f32 %v2833, %v3463
    %v3466 = vxor.u32 %v3465, 2147483648
    %v3467 = vmul.f32 %v3466, 1.442695
    %v3468 = vpow.pop %v3467
    %v3469 = vadd.f32 %v3468, 1.0
    %v3470 = vrcp.pop %v3469
    %v3471 = vmul.f32 %v3469, %v3470
    %v3472 = vsub.f32 1.0, %v3471
    %v3473 = vmul.f32 %v3470, %v3472
    %v3474 = vadd.f32 %v3470, %v3473
    %vm3475 = vweird.f32 %v3469
    %vm3476 = vweird.f32 %v3470
    %vm3477 = vmor %vm3475, %vm3476
    %v3478 = vsel %vm3477, %v3470, %v3474
    %v3479 = vand.u32 2147483647, %v3469
    %vm3480 = vcmp.eq.f32.partialorder %v3479, 8.507059e+37
    %v3481 = vand.u32 %v3469, 2147483648
    %v3482 = vor.u32 1.1754944e-38, %v3481
    %v3483 = vsel %vm3480, %v3482, %v3478
    %v3484 = vmul.f32 1.0, %v3483
    %v3486 = vrot.slane %v3440, 4
    %v3488 = vadd.f32 %v2837, %v3486
    %v3489 = vxor.u32 %v3488, 2147483648
    %v3490 = vmul.f32 %v3489, 1.442695
    %v3491 = vpow.pop %v3490
    %v3492 = vadd.f32 %v3491, 1.0
    %v3493 = vrcp.pop %v3492
    %v3494 = vmul.f32 %v3492, %v3493
    %v3495 = vsub.f32 1.0, %v3494
    %v3496 = vmul.f32 %v3493, %v3495
    %v3497 = vadd.f32 %v3493, %v3496
    %vm3498 = vweird.f32 %v3492
    %vm3499 = vweird.f32 %v3493
    %vm3500 = vmor %vm3498, %vm3499
    %v3501 = vsel %vm3500, %v3493, %v3497
    %v3502 = vand.u32 2147483647, %v3492
    %vm3503 = vcmp.eq.f32.partialorder %v3502, 8.507059e+37
    %v3504 = vand.u32 %v3492, 2147483648
    %v3505 = vor.u32 1.1754944e-38, %v3504
    %v3506 = vsel %vm3503, %v3505, %v3501
    %v3507 = vmul.f32 1.0, %v3506
    %v3509 = vrot.slane %v3460, 4
    %v3511 = vmul.f32 %v3484, %v3509
    %v3512 = vadd.f32 %v2841, %v3511
    %v3513 = vtanh.pop %v3512
    %v3514 = vsub.f32 1.0, %v3507
    %v3515 = vmul.f32 %v3514, %v3513
    %v3516 = vrot.slane %v3395, 7
    %v3518 = vmul.f32 %v3507, %v3516
    %v3519 = vadd.f32 %v3515, %v3518
    %v3520 = vsel %vm3393, %v3519, %v3516
    %v3521 = vsel %vm3388, %v3519, %v3516
    %v3522 = vsel %vm178, %v3520, %v3521
    %v3523 = vperm.slane %v3522, 4
    %v3524 = vsel %vm1017, %v3523, %v3397
    %v3526 = vrot.slane %v3522, 4
    %v3527 = vsel %vm233, %v3526, 0
    %3529 = vmatpush.msra.mxu0 0.0
    %3530 = vmatpush.msra.mxu0 0.0
    %3531 = vmatpush.msra.mxu0 0.0
    %3532 = vmatpush.msra.mxu0 0.0
    %3533 = vmatpush.msra.mxu0 0.0
    %3534 = vmatpush.msra.mxu0 0.0
    %3535 = vmatpush.msra.mxu0 0.0
    %3536 = vmatpush.msra.mxu0 0.0
    %3537 = vmatpush.msra.mxu0 0.0
    %3538 = vmatpush.msra.mxu0 0.0
    %3539 = vmatpush.msra.mxu0 0.0
    %3540 = vmatpush.msra.mxu0 0.0
    %3541 = vmatpush.msra.mxu0 %v203
    %3542 = vmatpush.msra.mxu0 %v202
    %3543 = vmatpush.msra.mxu0 %v201
    %3544 = vmatpush.msra.mxu0 %v200
    %3545 = vmatmul.f32.gmra.mxu0 %v3527
    %v3546 = vpop.f32.mrf.mxu0
    %v3547 = vadd.f32 %v214, %v3546
    %3548 = vdwg.mxu0
    %3549 = vmatpush.msra.mxu0 0.0
    %3550 = vmatpush.msra.mxu0 0.0
    %3551 = vmatpush.msra.mxu0 0.0
    %3552 = vmatpush.msra.mxu0 0.0
    %3553 = vmatpush.msra.mxu0 0.0
    %3554 = vmatpush.msra.mxu0 0.0
    %3555 = vmatpush.msra.mxu0 0.0
    %3556 = vmatpush.msra.mxu0 0.0
    %3557 = vmatpush.msra.mxu0 0.0
    %3558 = vmatpush.msra.mxu0 0.0
    %3559 = vmatpush.msra.mxu0 0.0
    %3560 = vmatpush.msra.mxu0 0.0
    %3561 = vmatpush.msra.mxu0 %v208
    %3562 = vmatpush.msra.mxu0 %v207
    %3563 = vmatpush.msra.mxu0 %v206
    %3564 = vmatpush.msra.mxu0 %v205
    %3565 = vmatmul.f32.gmra.mxu0 %v3527
    %v3566 = vpop.f32.mrf.mxu0
    %v3567 = vadd.f32 %v216, %v3566
    %3568 = vdwg.mxu0
    %3569 = vmatpush.msra.mxu0 0.0
    %3570 = vmatpush.msra.mxu0 0.0
    %3571 = vmatpush.msra.mxu0 0.0
    %3572 = vmatpush.msra.mxu0 0.0
    %3573 = vmatpush.msra.mxu0 0.0
    %3574 = vmatpush.msra.mxu0 0.0
    %3575 = vmatpush.msra.mxu0 0.0
    %3576 = vmatpush.msra.mxu0 0.0
    %3577 = vmatpush.msra.mxu0 0.0
    %3578 = vmatpush.msra.mxu0 0.0
    %3579 = vmatpush.msra.mxu0 0.0
    %3580 = vmatpush.msra.mxu0 0.0
    %3581 = vmatpush.msra.mxu0 %v213
    %3582 = vmatpush.msra.mxu0 %v212
    %3583 = vmatpush.msra.mxu0 %v211
    %3584 = vmatpush.msra.mxu0 %v210
    %3585 = vmatmul.f32.gmra.mxu0 %v3527
    %v3586 = vpop.f32.mrf.mxu0
    %v3587 = vadd.f32 %v218, %v3586
    %3588 = vdwg.mxu0
    %v3590 = vrot.slane %v3547, 3
    %v3592 = vadd.f32 %v2969, %v3590
    %v3593 = vxor.u32 %v3592, 2147483648
    %v3594 = vmul.f32 %v3593, 1.442695
    %v3595 = vpow.pop %v3594
    %v3596 = vadd.f32 %v3595, 1.0
    %v3597 = vrcp.pop %v3596
    %v3598 = vmul.f32 %v3596, %v3597
    %v3599 = vsub.f32 1.0, %v3598
    %v3600 = vmul.f32 %v3597, %v3599
    %v3601 = vadd.f32 %v3597, %v3600
    %vm3602 = vweird.f32 %v3596
    %vm3603 = vweird.f32 %v3597
    %vm3604 = vmor %vm3602, %vm3603
    %v3605 = vsel %vm3604, %v3597, %v3601
    %v3606 = vand.u32 2147483647, %v3596
    %vm3607 = vcmp.eq.f32.partialorder %v3606, 8.507059e+37
    %v3608 = vand.u32 %v3596, 2147483648
    %v3609 = vor.u32 1.1754944e-38, %v3608
    %v3610 = vsel %vm3607, %v3609, %v3605
    %v3611 = vmul.f32 1.0, %v3610
    %v3613 = vrot.slane %v3567, 3
    %v3615 = vadd.f32 %v2972, %v3613
    %v3616 = vxor.u32 %v3615, 2147483648
    %v3617 = vmul.f32 %v3616, 1.442695
    %v3618 = vpow.pop %v3617
    %v3619 = vadd.f32 %v3618, 1.0
    %v3620 = vrcp.pop %v3619
    %v3621 = vmul.f32 %v3619, %v3620
    %v3622 = vsub.f32 1.0, %v3621
    %v3623 = vmul.f32 %v3620, %v3622
    %v3624 = vadd.f32 %v3620, %v3623
    %vm3625 = vweird.f32 %v3619
    %vm3626 = vweird.f32 %v3620
    %vm3627 = vmor %vm3625, %vm3626
    %v3628 = vsel %vm3627, %v3620, %v3624
    %v3629 = vand.u32 2147483647, %v3619
    %vm3630 = vcmp.eq.f32.partialorder %v3629, 8.507059e+37
    %v3631 = vand.u32 %v3619, 2147483648
    %v3632 = vor.u32 1.1754944e-38, %v3631
    %v3633 = vsel %vm3630, %v3632, %v3628
    %v3634 = vmul.f32 1.0, %v3633
    %v3636 = vrot.slane %v3587, 3
    %v3638 = vmul.f32 %v3611, %v3636
    %v3639 = vadd.f32 %v2975, %v3638
    %v3640 = vtanh.pop %v3639
    %v3641 = vsub.f32 1.0, %v3634
    %v3642 = vmul.f32 %v3641, %v3640
    %v3643 = vrot.slane %v3522, 7
    %v3645 = vmul.f32 %v3634, %v3643
    %v3646 = vadd.f32 %v3642, %v3645
    %v3647 = vsel %vm3249, %v3646, %v3643
    %v3648 = vsel %vm3244, %v3646, %v3643
    %v3649 = vsel %vm178, %v3647, %v3648
    %v3650 = vperm.slane %v3649, 5
    %v3651 = vsel %vm1147, %v3650, %v3524
    %v3653 = vrot.slane %v3649, 5
    %v3654 = vsel %vm233, %v3653, 0
    %3656 = vmatpush.msra.mxu0 0.0
    %3657 = vmatpush.msra.mxu0 0.0
    %3658 = vmatpush.msra.mxu0 0.0
    %3659 = vmatpush.msra.mxu0 0.0
    %3660 = vmatpush.msra.mxu0 0.0
    %3661 = vmatpush.msra.mxu0 0.0
    %3662 = vmatpush.msra.mxu0 0.0
    %3663 = vmatpush.msra.mxu0 0.0
    %3664 = vmatpush.msra.mxu0 0.0
    %3665 = vmatpush.msra.mxu0 0.0
    %3666 = vmatpush.msra.mxu0 0.0
    %3667 = vmatpush.msra.mxu0 0.0
    %3668 = vmatpush.msra.mxu0 %v203
    %3669 = vmatpush.msra.mxu0 %v202
    %3670 = vmatpush.msra.mxu0 %v201
    %3671 = vmatpush.msra.mxu0 %v200
    %3672 = vmatmul.f32.gmra.mxu0 %v3654
    %v3673 = vpop.f32.mrf.mxu0
    %v3674 = vadd.f32 %v214, %v3673
    %3675 = vdwg.mxu0
    %3676 = vmatpush.msra.mxu0 0.0
    %3677 = vmatpush.msra.mxu0 0.0
    %3678 = vmatpush.msra.mxu0 0.0
    %3679 = vmatpush.msra.mxu0 0.0
    %3680 = vmatpush.msra.mxu0 0.0
    %3681 = vmatpush.msra.mxu0 0.0
    %3682 = vmatpush.msra.mxu0 0.0
    %3683 = vmatpush.msra.mxu0 0.0
    %3684 = vmatpush.msra.mxu0 0.0
    %3685 = vmatpush.msra.mxu0 0.0
    %3686 = vmatpush.msra.mxu0 0.0
    %3687 = vmatpush.msra.mxu0 0.0
    %3688 = vmatpush.msra.mxu0 %v208
    %3689 = vmatpush.msra.mxu0 %v207
    %3690 = vmatpush.msra.mxu0 %v206
    %3691 = vmatpush.msra.mxu0 %v205
    %3692 = vmatmul.f32.gmra.mxu0 %v3654
    %v3693 = vpop.f32.mrf.mxu0
    %v3694 = vadd.f32 %v216, %v3693
    %3695 = vdwg.mxu0
    %3696 = vmatpush.msra.mxu0 0.0
    %3697 = vmatpush.msra.mxu0 0.0
    %3698 = vmatpush.msra.mxu0 0.0
    %3699 = vmatpush.msra.mxu0 0.0
    %3700 = vmatpush.msra.mxu0 0.0
    %3701 = vmatpush.msra.mxu0 0.0
    %3702 = vmatpush.msra.mxu0 0.0
    %3703 = vmatpush.msra.mxu0 0.0
    %3704 = vmatpush.msra.mxu0 0.0
    %3705 = vmatpush.msra.mxu0 0.0
    %3706 = vmatpush.msra.mxu0 0.0
    %3707 = vmatpush.msra.mxu0 0.0
    %3708 = vmatpush.msra.mxu0 %v213
    %3709 = vmatpush.msra.mxu0 %v212
    %3710 = vmatpush.msra.mxu0 %v211
    %3711 = vmatpush.msra.mxu0 %v210
    %3712 = vmatmul.f32.gmra.mxu0 %v3654
    %v3713 = vpop.f32.mrf.mxu0
    %v3714 = vadd.f32 %v218, %v3713
    %3715 = vdwg.mxu0
    %v3717 = vrot.slane %v3674, 2
    %v3719 = vadd.f32 %v3112, %v3717
    %v3720 = vxor.u32 %v3719, 2147483648
    %v3721 = vmul.f32 %v3720, 1.442695
    %v3722 = vpow.pop %v3721
    %v3723 = vadd.f32 %v3722, 1.0
    %v3724 = vrcp.pop %v3723
    %v3725 = vmul.f32 %v3723, %v3724
    %v3726 = vsub.f32 1.0, %v3725
    %v3727 = vmul.f32 %v3724, %v3726
    %v3728 = vadd.f32 %v3724, %v3727
    %vm3729 = vweird.f32 %v3723
    %vm3730 = vweird.f32 %v3724
    %vm3731 = vmor %vm3729, %vm3730
    %v3732 = vsel %vm3731, %v3724, %v3728
    %v3733 = vand.u32 2147483647, %v3723
    %vm3734 = vcmp.eq.f32.partialorder %v3733, 8.507059e+37
    %v3735 = vand.u32 %v3723, 2147483648
    %v3736 = vor.u32 1.1754944e-38, %v3735
    %v3737 = vsel %vm3734, %v3736, %v3732
    %v3738 = vmul.f32 1.0, %v3737
    %v3740 = vrot.slane %v3694, 2
    %v3742 = vadd.f32 %v3115, %v3740
    %v3743 = vxor.u32 %v3742, 2147483648
    %v3744 = vmul.f32 %v3743, 1.442695
    %v3745 = vpow.pop %v3744
    %v3746 = vadd.f32 %v3745, 1.0
    %v3747 = vrcp.pop %v3746
    %v3748 = vmul.f32 %v3746, %v3747
    %v3749 = vsub.f32 1.0, %v3748
    %v3750 = vmul.f32 %v3747, %v3749
    %v3751 = vadd.f32 %v3747, %v3750
    %vm3752 = vweird.f32 %v3746
    %vm3753 = vweird.f32 %v3747
    %vm3754 = vmor %vm3752, %vm3753
    %v3755 = vsel %vm3754, %v3747, %v3751
    %v3756 = vand.u32 2147483647, %v3746
    %vm3757 = vcmp.eq.f32.partialorder %v3756, 8.507059e+37
    %v3758 = vand.u32 %v3746, 2147483648
    %v3759 = vor.u32 1.1754944e-38, %v3758
    %v3760 = vsel %vm3757, %v3759, %v3755
    %v3761 = vmul.f32 1.0, %v3760
    %v3763 = vrot.slane %v3714, 2
    %v3765 = vmul.f32 %v3738, %v3763
    %v3766 = vadd.f32 %v3118, %v3765
    %v3767 = vtanh.pop %v3766
    %v3768 = vsub.f32 1.0, %v3761
    %v3769 = vmul.f32 %v3768, %v3767
    %v3770 = vrot.slane %v3649, 7
    %v3772 = vmul.f32 %v3761, %v3770
    %v3773 = vadd.f32 %v3769, %v3772
    %v3774 = vsel %vm3105, %v3773, %v3770
    %v3775 = vsel %vm3100, %v3773, %v3770
    %v3776 = vsel %vm178, %v3774, %v3775
    %v3777 = vperm.slane %v3776, 6
    %v3778 = vsel %vm1277, %v3777, %v3651
    %v3780 = vrot.slane %v3776, 6
    %v3781 = vsel %vm233, %v3780, 0
    %3783 = vmatpush.msra.mxu0 0.0
    %3784 = vmatpush.msra.mxu0 0.0
    %3785 = vmatpush.msra.mxu0 0.0
    %3786 = vmatpush.msra.mxu0 0.0
    %3787 = vmatpush.msra.mxu0 0.0
    %3788 = vmatpush.msra.mxu0 0.0
    %3789 = vmatpush.msra.mxu0 0.0
    %3790 = vmatpush.msra.mxu0 0.0
    %3791 = vmatpush.msra.mxu0 0.0
    %3792 = vmatpush.msra.mxu0 0.0
    %3793 = vmatpush.msra.mxu0 0.0
    %3794 = vmatpush.msra.mxu0 0.0
    %3795 = vmatpush.msra.mxu0 %v203
    %3796 = vmatpush.msra.mxu0 %v202
    %3797 = vmatpush.msra.mxu0 %v201
    %3798 = vmatpush.msra.mxu0 %v200
    %3799 = vmatmul.f32.gmra.mxu0 %v3781
    %v3800 = vpop.f32.mrf.mxu0
    %v3801 = vadd.f32 %v214, %v3800
    %3802 = vdwg.mxu0
    %3803 = vmatpush.msra.mxu0 0.0
    %3804 = vmatpush.msra.mxu0 0.0
    %3805 = vmatpush.msra.mxu0 0.0
    %3806 = vmatpush.msra.mxu0 0.0
    %3807 = vmatpush.msra.mxu0 0.0
    %3808 = vmatpush.msra.mxu0 0.0
    %3809 = vmatpush.msra.mxu0 0.0
    %3810 = vmatpush.msra.mxu0 0.0
    %3811 = vmatpush.msra.mxu0 0.0
    %3812 = vmatpush.msra.mxu0 0.0
    %3813 = vmatpush.msra.mxu0 0.0
    %3814 = vmatpush.msra.mxu0 0.0
    %3815 = vmatpush.msra.mxu0 %v208
    %3816 = vmatpush.msra.mxu0 %v207
    %3817 = vmatpush.msra.mxu0 %v206
    %3818 = vmatpush.msra.mxu0 %v205
    %3819 = vmatmul.f32.gmra.mxu0 %v3781
    %v3820 = vpop.f32.mrf.mxu0
    %v3821 = vadd.f32 %v216, %v3820
    %3822 = vdwg.mxu0
    %3823 = vmatpush.msra.mxu0 0.0
    %3824 = vmatpush.msra.mxu0 0.0
    %3825 = vmatpush.msra.mxu0 0.0
    %3826 = vmatpush.msra.mxu0 0.0
    %3827 = vmatpush.msra.mxu0 0.0
    %3828 = vmatpush.msra.mxu0 0.0
    %3829 = vmatpush.msra.mxu0 0.0
    %3830 = vmatpush.msra.mxu0 0.0
    %3831 = vmatpush.msra.mxu0 0.0
    %3832 = vmatpush.msra.mxu0 0.0
    %3833 = vmatpush.msra.mxu0 0.0
    %3834 = vmatpush.msra.mxu0 0.0
    %3835 = vmatpush.msra.mxu0 %v213
    %3836 = vmatpush.msra.mxu0 %v212
    %3837 = vmatpush.msra.mxu0 %v211
    %3838 = vmatpush.msra.mxu0 %v210
    %3839 = vmatmul.f32.gmra.mxu0 %v3781
    %v3840 = vpop.f32.mrf.mxu0
    %v3841 = vadd.f32 %v218, %v3840
    %3842 = vdwg.mxu0
    %v3844 = vrot.slane %v3801, 1
    %v3846 = vadd.f32 %v3256, %v3844
    %v3847 = vxor.u32 %v3846, 2147483648
    %v3848 = vmul.f32 %v3847, 1.442695
    %v3849 = vpow.pop %v3848
    %v3850 = vadd.f32 %v3849, 1.0
    %v3851 = vrcp.pop %v3850
    %v3852 = vmul.f32 %v3850, %v3851
    %v3853 = vsub.f32 1.0, %v3852
    %v3854 = vmul.f32 %v3851, %v3853
    %v3855 = vadd.f32 %v3851, %v3854
    %vm3856 = vweird.f32 %v3850
    %vm3857 = vweird.f32 %v3851
    %vm3858 = vmor %vm3856, %vm3857
    %v3859 = vsel %vm3858, %v3851, %v3855
    %v3860 = vand.u32 2147483647, %v3850
    %vm3861 = vcmp.eq.f32.partialorder %v3860, 8.507059e+37
    %v3862 = vand.u32 %v3850, 2147483648
    %v3863 = vor.u32 1.1754944e-38, %v3862
    %v3864 = vsel %vm3861, %v3863, %v3859
    %v3865 = vmul.f32 1.0, %v3864
    %v3867 = vrot.slane %v3821, 1
    %v3869 = vadd.f32 %v3259, %v3867
    %v3870 = vxor.u32 %v3869, 2147483648
    %v3871 = vmul.f32 %v3870, 1.442695
    %v3872 = vpow.pop %v3871
    %v3873 = vadd.f32 %v3872, 1.0
    %v3874 = vrcp.pop %v3873
    %v3875 = vmul.f32 %v3873, %v3874
    %v3876 = vsub.f32 1.0, %v3875
    %v3877 = vmul.f32 %v3874, %v3876
    %v3878 = vadd.f32 %v3874, %v3877
    %vm3879 = vweird.f32 %v3873
    %vm3880 = vweird.f32 %v3874
    %vm3881 = vmor %vm3879, %vm3880
    %v3882 = vsel %vm3881, %v3874, %v3878
    %v3883 = vand.u32 2147483647, %v3873
    %vm3884 = vcmp.eq.f32.partialorder %v3883, 8.507059e+37
    %v3885 = vand.u32 %v3873, 2147483648
    %v3886 = vor.u32 1.1754944e-38, %v3885
    %v3887 = vsel %vm3884, %v3886, %v3882
    %v3888 = vmul.f32 1.0, %v3887
    %v3890 = vrot.slane %v3841, 1
    %v3892 = vmul.f32 %v3865, %v3890
    %v3893 = vadd.f32 %v3262, %v3892
    %v3894 = vtanh.pop %v3893
    %v3895 = vsub.f32 1.0, %v3888
    %v3896 = vmul.f32 %v3895, %v3894
    %v3897 = vrot.slane %v3776, 7
    %v3899 = vmul.f32 %v3888, %v3897
    %v3900 = vadd.f32 %v3896, %v3899
    %v3901 = vsel %vm2962, %v3900, %v3897
    %v3902 = vsel %vm2957, %v3900, %v3897
    %v3903 = vsel %vm178, %v3901, %v3902
    %v3904 = vperm.slane %v3903, 7
    %v3905 = vsel %vm1407, %v3904, %v3778
    %v3907 = vsel %vm233, %v3905, 0
    %3909 = vmatpush.msra.mxu0 0.0
    %3910 = vmatpush.msra.mxu0 0.0
    %3911 = vmatpush.msra.mxu0 0.0
    %3912 = vmatpush.msra.mxu0 0.0
    %3913 = vmatpush.msra.mxu0 0.0
    %3914 = vmatpush.msra.mxu0 0.0
    %3915 = vmatpush.msra.mxu0 0.0
    %3916 = vmatpush.msra.mxu0 0.0
    %3917 = vmatpush.msra.mxu0 0.0
    %3918 = vmatpush.msra.mxu0 0.0
    %3919 = vmatpush.msra.mxu0 0.0
    %3920 = vmatpush.msra.mxu0 0.0
    %3921 = vmatpush.msra.mxu0 %v222
    %3922 = vmatpush.msra.mxu0 %v221
    %3923 = vmatpush.msra.mxu0 %v220
    %3924 = vmatpush.msra.mxu0 %v219
    %3925 = vmatmul.f32.gmra.mxu0 %v3907
    %v3926 = vpop.f32.mrf.mxu0
    %v3927 = vadd.f32 %v1411, %v3926
    %3928 = vdwg.mxu0
    %v3929 = vtanh.pop %v3927
    %v3931 = vsel %vm233, %v3929, 0
    %3933 = vmatpush.msra.mxu0 0.0
    %3934 = vmatpush.msra.mxu0 0.0
    %3935 = vmatpush.msra.mxu0 0.0
    %3936 = vmatpush.msra.mxu0 0.0
    %3937 = vmatpush.msra.mxu0 0.0
    %3938 = vmatpush.msra.mxu0 0.0
    %3939 = vmatpush.msra.mxu0 0.0
    %3940 = vmatpush.msra.mxu0 0.0
    %3941 = vmatpush.msra.mxu0 0.0
    %3942 = vmatpush.msra.mxu0 0.0
    %3943 = vmatpush.msra.mxu0 0.0
    %3944 = vmatpush.msra.mxu0 0.0
    %3945 = vmatpush.msra.mxu0 %v227
    %3946 = vmatpush.msra.mxu0 %v226
    %3947 = vmatpush.msra.mxu0 %v225
    %3948 = vmatpush.msra.mxu0 %v224
    %3949 = vmatmul.f32.gmra.mxu0 %v3931
    %v3950 = vpop.f32.mrf.mxu0
    %v3951 = vadd.f32 0.0, %v3950
    %3952 = vdwg.mxu0
    %v3953 = vstv %s2764
    %vm3954 = vcmp.lt.s32.totalorder %v180, %v3953
    %v3955 = vsel %vm3954, %v3951, -1e+30
    %v3956 = vsel %vm1463, %v3955, -inf
    %3957 = vmax.xlane.f32.xlu0 %v3956
    %v3958 = vpop.xlane.xlu0 %3957
    %v3959 = vrot.slane %v3958, 4
    %v3960 = vmax.f32 %v3958, %v3959
    %v3961 = vrot.slane %v3960, 2
    %v3962 = vmax.f32 %v3960, %v3961
    %v3963 = vrot.slane %v3962, 1
    %v3964 = vmax.f32 %v3962, %v3963
    %s3965 = vtos %v3964
    %v3966 = vstv %s3965
    %v3967 = vsub.f32 %v3955, %v3966
    %v3968 = vmul.f32 %v3967, 1.442695
    %v3969 = vpow.pop %v3968
    %v3970 = vsel %vm1463, %v3969, 0.0
    %3971 = vadd.xlane.f32.xlu0 %v3970
    %v3972 = vpop.xlane.xlu0 %3971
    %v3973 = vrot.slane %v3972, 4
    %v3974 = vadd.f32 %v3972, %v3973
    %v3975 = vrot.slane %v3974, 2
    %v3976 = vadd.f32 %v3974, %v3975
    %v3977 = vrot.slane %v3976, 1
    %v3978 = vadd.f32 %v3976, %v3977
    %s3979 = vtos %v3978
    %v3980 = vstv %s3979
    %v3981 = vrcp.pop %v3980
    %v3982 = vmul.f32 %v3980, %v3981
    %v3983 = vsub.f32 1.0, %v3982
    %v3984 = vmul.f32 %v3981, %v3983
    %v3985 = vadd.f32 %v3981, %v3984
    %vm3986 = vweird.f32 %v3980
    %vm3987 = vweird.f32 %v3981
    %vm3988 = vmor %vm3986, %vm3987
    %v3989 = vsel %vm3988, %v3981, %v3985
    %v3990 = vand.u32 2147483647, %v3980
    %vm3991 = vcmp.eq.f32.partialorder %v3990, 8.507059e+37
    %v3992 = vand.u32 %v3980, 2147483648
    %v3993 = vor.u32 1.1754944e-38, %v3992
    %v3994 = vsel %vm3991, %v3993, %v3989
    %v3995 = vmul.f32 %v3969, %v3994
    %3997 = vset.pattern.permute.xlu0 0
    %3998 = vperm.xlu0 %3997, %v3995
    %v3999 = vpop.permute.xlu0 %3998
    %v4001 = vmul.f32 %v3999, %v3905
    %v4002 = vsel %vm233, %v4001, 0.0
    %v4003 = vrot.slane %v4002, 4
    %v4004 = vadd.f32 %v4002, %v4003
    %v4005 = vrot.slane %v4004, 2
    %v4006 = vadd.f32 %v4004, %v4005
    %v4007 = vrot.slane %v4006, 1
    %v4008 = vadd.f32 %v4006, %v4007
    %v4009 = vsel %vm734, %v4008, %v2763
    %s4010 = sld [smem:[#allocation3 + $0x3]]
    %s4011 = scalar_lea.vmem %s1, 24
    %v4012 = vld [vmem:[%s4011] sm:$0xff]
    %v4014 = vsel %vm233, %v4012, 0
    %4016 = vmatpush.msra.mxu0 0.0
    %4017 = vmatpush.msra.mxu0 0.0
    %4018 = vmatpush.msra.mxu0 0.0
    %4019 = vmatpush.msra.mxu0 0.0
    %4020 = vmatpush.msra.mxu0 0.0
    %4021 = vmatpush.msra.mxu0 0.0
    %4022 = vmatpush.msra.mxu0 0.0
    %4023 = vmatpush.msra.mxu0 0.0
    %4024 = vmatpush.msra.mxu0 0.0
    %4025 = vmatpush.msra.mxu0 0.0
    %4026 = vmatpush.msra.mxu0 0.0
    %4027 = vmatpush.msra.mxu0 0.0
    %4028 = vmatpush.msra.mxu0 %v184
    %4029 = vmatpush.msra.mxu0 %v183
    %4030 = vmatpush.msra.mxu0 %v182
    %4031 = vmatpush.msra.mxu0 %v181
    %4032 = vmatmul.f32.gmra.mxu0 %v4014
    %v4033 = vpop.f32.mrf.mxu0
    %v4034 = vadd.f32 %v231, %v4033
    %4035 = vdwg.mxu0
    %4036 = vmatpush.msra.mxu0 0.0
    %4037 = vmatpush.msra.mxu0 0.0
    %4038 = vmatpush.msra.mxu0 0.0
    %4039 = vmatpush.msra.mxu0 0.0
    %4040 = vmatpush.msra.mxu0 0.0
    %4041 = vmatpush.msra.mxu0 0.0
    %4042 = vmatpush.msra.mxu0 0.0
    %4043 = vmatpush.msra.mxu0 0.0
    %4044 = vmatpush.msra.mxu0 0.0
    %4045 = vmatpush.msra.mxu0 0.0
    %4046 = vmatpush.msra.mxu0 0.0
    %4047 = vmatpush.msra.mxu0 0.0
    %4048 = vmatpush.msra.mxu0 %v189
    %4049 = vmatpush.msra.mxu0 %v188
    %4050 = vmatpush.msra.mxu0 %v187
    %4051 = vmatpush.msra.mxu0 %v186
    %4052 = vmatmul.f32.gmra.mxu0 %v4014
    %v4053 = vpop.f32.mrf.mxu0
    %v4054 = vadd.f32 %v258, %v4053
    %4055 = vdwg.mxu0
    %4056 = vmatpush.msra.mxu0 0.0
    %4057 = vmatpush.msra.mxu0 0.0
    %4058 = vmatpush.msra.mxu0 0.0
    %4059 = vmatpush.msra.mxu0 0.0
    %4060 = vmatpush.msra.mxu0 0.0
    %4061 = vmatpush.msra.mxu0 0.0
    %4062 = vmatpush.msra.mxu0 0.0
    %4063 = vmatpush.msra.mxu0 0.0
    %4064 = vmatpush.msra.mxu0 0.0
    %4065 = vmatpush.msra.mxu0 0.0
    %4066 = vmatpush.msra.mxu0 0.0
    %4067 = vmatpush.msra.mxu0 0.0
    %4068 = vmatpush.msra.mxu0 %v194
    %4069 = vmatpush.msra.mxu0 %v193
    %4070 = vmatpush.msra.mxu0 %v192
    %4071 = vmatpush.msra.mxu0 %v191
    %4072 = vmatmul.f32.gmra.mxu0 %v4014
    %v4073 = vpop.f32.mrf.mxu0
    %v4074 = vadd.f32 %v281, %v4073
    %4075 = vdwg.mxu0
    %v4077 = vrot.slane %v4034, 7
    %v4079 = vsel %vm178, %v4034, %v4077
    %v4081 = vrot.slane %v4054, 7
    %v4083 = vsel %vm178, %v4054, %v4081
    %v4085 = vrot.slane %v4074, 7
    %v4087 = vsel %vm178, %v4074, %v4085
    %v4089 = vrot.slane %v3903, 7
    %v4090 = vsel %vm233, %v4089, 0
    %4092 = vmatpush.msra.mxu0 0.0
    %4093 = vmatpush.msra.mxu0 0.0
    %4094 = vmatpush.msra.mxu0 0.0
    %4095 = vmatpush.msra.mxu0 0.0
    %4096 = vmatpush.msra.mxu0 0.0
    %4097 = vmatpush.msra.mxu0 0.0
    %4098 = vmatpush.msra.mxu0 0.0
    %4099 = vmatpush.msra.mxu0 0.0
    %4100 = vmatpush.msra.mxu0 0.0
    %4101 = vmatpush.msra.mxu0 0.0
    %4102 = vmatpush.msra.mxu0 0.0
    %4103 = vmatpush.msra.mxu0 0.0
    %4104 = vmatpush.msra.mxu0 %v203
    %4105 = vmatpush.msra.mxu0 %v202
    %4106 = vmatpush.msra.mxu0 %v201
    %4107 = vmatpush.msra.mxu0 %v200
    %4108 = vmatmul.f32.gmra.mxu0 %v4090
    %v4109 = vpop.f32.mrf.mxu0
    %v4110 = vadd.f32 %v214, %v4109
    %4111 = vdwg.mxu0
    %4112 = vmatpush.msra.mxu0 0.0
    %4113 = vmatpush.msra.mxu0 0.0
    %4114 = vmatpush.msra.mxu0 0.0
    %4115 = vmatpush.msra.mxu0 0.0
    %4116 = vmatpush.msra.mxu0 0.0
    %4117 = vmatpush.msra.mxu0 0.0
    %4118 = vmatpush.msra.mxu0 0.0
    %4119 = vmatpush.msra.mxu0 0.0
    %4120 = vmatpush.msra.mxu0 0.0
    %4121 = vmatpush.msra.mxu0 0.0
    %4122 = vmatpush.msra.mxu0 0.0
    %4123 = vmatpush.msra.mxu0 0.0
    %4124 = vmatpush.msra.mxu0 %v208
    %4125 = vmatpush.msra.mxu0 %v207
    %4126 = vmatpush.msra.mxu0 %v206
    %4127 = vmatpush.msra.mxu0 %v205
    %4128 = vmatmul.f32.gmra.mxu0 %v4090
    %v4129 = vpop.f32.mrf.mxu0
    %v4130 = vadd.f32 %v216, %v4129
    %4131 = vdwg.mxu0
    %4132 = vmatpush.msra.mxu0 0.0
    %4133 = vmatpush.msra.mxu0 0.0
    %4134 = vmatpush.msra.mxu0 0.0
    %4135 = vmatpush.msra.mxu0 0.0
    %4136 = vmatpush.msra.mxu0 0.0
    %4137 = vmatpush.msra.mxu0 0.0
    %4138 = vmatpush.msra.mxu0 0.0
    %4139 = vmatpush.msra.mxu0 0.0
    %4140 = vmatpush.msra.mxu0 0.0
    %4141 = vmatpush.msra.mxu0 0.0
    %4142 = vmatpush.msra.mxu0 0.0
    %4143 = vmatpush.msra.mxu0 0.0
    %4144 = vmatpush.msra.mxu0 %v213
    %4145 = vmatpush.msra.mxu0 %v212
    %4146 = vmatpush.msra.mxu0 %v211
    %4147 = vmatpush.msra.mxu0 %v210
    %4148 = vmatmul.f32.gmra.mxu0 %v4090
    %v4149 = vpop.f32.mrf.mxu0
    %v4150 = vadd.f32 %v218, %v4149
    %4151 = vdwg.mxu0
    %v4152 = vadd.f32 %v4079, %v4110
    %v4153 = vxor.u32 %v4152, 2147483648
    %v4154 = vmul.f32 %v4153, 1.442695
    %v4155 = vpow.pop %v4154
    %v4156 = vadd.f32 %v4155, 1.0
    %v4157 = vrcp.pop %v4156
    %v4158 = vmul.f32 %v4156, %v4157
    %v4159 = vsub.f32 1.0, %v4158
    %v4160 = vmul.f32 %v4157, %v4159
    %v4161 = vadd.f32 %v4157, %v4160
    %vm4162 = vweird.f32 %v4156
    %vm4163 = vweird.f32 %v4157
    %vm4164 = vmor %vm4162, %vm4163
    %v4165 = vsel %vm4164, %v4157, %v4161
    %v4166 = vand.u32 2147483647, %v4156
    %vm4167 = vcmp.eq.f32.partialorder %v4166, 8.507059e+37
    %v4168 = vand.u32 %v4156, 2147483648
    %v4169 = vor.u32 1.1754944e-38, %v4168
    %v4170 = vsel %vm4167, %v4169, %v4165
    %v4171 = vmul.f32 1.0, %v4170
    %v4172 = vadd.f32 %v4083, %v4130
    %v4173 = vxor.u32 %v4172, 2147483648
    %v4174 = vmul.f32 %v4173, 1.442695
    %v4175 = vpow.pop %v4174
    %v4176 = vadd.f32 %v4175, 1.0
    %v4177 = vrcp.pop %v4176
    %v4178 = vmul.f32 %v4176, %v4177
    %v4179 = vsub.f32 1.0, %v4178
    %v4180 = vmul.f32 %v4177, %v4179
    %v4181 = vadd.f32 %v4177, %v4180
    %vm4182 = vweird.f32 %v4176
    %vm4183 = vweird.f32 %v4177
    %vm4184 = vmor %vm4182, %vm4183
    %v4185 = vsel %vm4184, %v4177, %v4181
    %v4186 = vand.u32 2147483647, %v4176
    %vm4187 = vcmp.eq.f32.partialorder %v4186, 8.507059e+37
    %v4188 = vand.u32 %v4176, 2147483648
    %v4189 = vor.u32 1.1754944e-38, %v4188
    %v4190 = vsel %vm4187, %v4189, %v4185
    %v4191 = vmul.f32 1.0, %v4190
    %v4192 = vmul.f32 %v4171, %v4150
    %v4193 = vadd.f32 %v4087, %v4192
    %v4194 = vtanh.pop %v4193
    %v4195 = vsub.f32 1.0, %v4191
    %v4196 = vmul.f32 %v4195, %v4194
    %v4198 = vmul.f32 %v4191, %v4089
    %v4199 = vadd.f32 %v4196, %v4198
    %p4200 = scmp.gt.s32.totalorder %s4010, 0
    %s4201 = scalar_select %p4200, 1, 0
    %v4202 = vstv %s4201
    %vm4203 = vcmp.eq.s32.totalorder %v4202, 1
    %v4204 = vsel %vm4203, %v4199, %v4089
    %p4205 = scmp.gt.s32.totalorder %s4010, 7
    %s4206 = scalar_select %p4205, 1, 0
    %v4207 = vstv %s4206
    %vm4208 = vcmp.eq.s32.totalorder %v4207, 1
    %v4209 = vsel %vm4208, %v4199, %v4089
    %v4210 = vsel %vm178, %v4204, %v4209
    %v4211 = vperm.slane %v4210, 0
    %v4212 = vsel %vm441, %v4211, 0.0
    %v4213 = vrot.slane %v4034, 5
    %v4215 = vsel %vm178, %v4034, %v4213
    %v4216 = vrot.slane %v4054, 5
    %v4218 = vsel %vm178, %v4054, %v4216
    %v4219 = vrot.slane %v4074, 5
    %v4221 = vsel %vm178, %v4074, %v4219
    %v4223 = vsel %vm233, %v4210, 0
    %4225 = vmatpush.msra.mxu0 0.0
    %4226 = vmatpush.msra.mxu0 0.0
    %4227 = vmatpush.msra.mxu0 0.0
    %4228 = vmatpush.msra.mxu0 0.0
    %4229 = vmatpush.msra.mxu0 0.0
    %4230 = vmatpush.msra.mxu0 0.0
    %4231 = vmatpush.msra.mxu0 0.0
    %4232 = vmatpush.msra.mxu0 0.0
    %4233 = vmatpush.msra.mxu0 0.0
    %4234 = vmatpush.msra.mxu0 0.0
    %4235 = vmatpush.msra.mxu0 0.0
    %4236 = vmatpush.msra.mxu0 0.0
    %4237 = vmatpush.msra.mxu0 %v203
    %4238 = vmatpush.msra.mxu0 %v202
    %4239 = vmatpush.msra.mxu0 %v201
    %4240 = vmatpush.msra.mxu0 %v200
    %4241 = vmatmul.f32.gmra.mxu0 %v4223
    %v4242 = vpop.f32.mrf.mxu0
    %v4243 = vadd.f32 %v214, %v4242
    %4244 = vdwg.mxu0
    %4245 = vmatpush.msra.mxu0 0.0
    %4246 = vmatpush.msra.mxu0 0.0
    %4247 = vmatpush.msra.mxu0 0.0
    %4248 = vmatpush.msra.mxu0 0.0
    %4249 = vmatpush.msra.mxu0 0.0
    %4250 = vmatpush.msra.mxu0 0.0
    %4251 = vmatpush.msra.mxu0 0.0
    %4252 = vmatpush.msra.mxu0 0.0
    %4253 = vmatpush.msra.mxu0 0.0
    %4254 = vmatpush.msra.mxu0 0.0
    %4255 = vmatpush.msra.mxu0 0.0
    %4256 = vmatpush.msra.mxu0 0.0
    %4257 = vmatpush.msra.mxu0 %v208
    %4258 = vmatpush.msra.mxu0 %v207
    %4259 = vmatpush.msra.mxu0 %v206
    %4260 = vmatpush.msra.mxu0 %v205
    %4261 = vmatmul.f32.gmra.mxu0 %v4223
    %v4262 = vpop.f32.mrf.mxu0
    %v4263 = vadd.f32 %v216, %v4262
    %4264 = vdwg.mxu0
    %4265 = vmatpush.msra.mxu0 0.0
    %4266 = vmatpush.msra.mxu0 0.0
    %4267 = vmatpush.msra.mxu0 0.0
    %4268 = vmatpush.msra.mxu0 0.0
    %4269 = vmatpush.msra.mxu0 0.0
    %4270 = vmatpush.msra.mxu0 0.0
    %4271 = vmatpush.msra.mxu0 0.0
    %4272 = vmatpush.msra.mxu0 0.0
    %4273 = vmatpush.msra.mxu0 0.0
    %4274 = vmatpush.msra.mxu0 0.0
    %4275 = vmatpush.msra.mxu0 0.0
    %4276 = vmatpush.msra.mxu0 0.0
    %4277 = vmatpush.msra.mxu0 %v213
    %4278 = vmatpush.msra.mxu0 %v212
    %4279 = vmatpush.msra.mxu0 %v211
    %4280 = vmatpush.msra.mxu0 %v210
    %4281 = vmatmul.f32.gmra.mxu0 %v4223
    %v4282 = vpop.f32.mrf.mxu0
    %v4283 = vadd.f32 %v218, %v4282
    %4284 = vdwg.mxu0
    %v4286 = vrot.slane %v4243, 7
    %v4288 = vadd.f32 %v4215, %v4286
    %v4289 = vxor.u32 %v4288, 2147483648
    %v4290 = vmul.f32 %v4289, 1.442695
    %v4291 = vpow.pop %v4290
    %v4292 = vadd.f32 %v4291, 1.0
    %v4293 = vrcp.pop %v4292
    %v4294 = vmul.f32 %v4292, %v4293
    %v4295 = vsub.f32 1.0, %v4294
    %v4296 = vmul.f32 %v4293, %v4295
    %v4297 = vadd.f32 %v4293, %v4296
    %vm4298 = vweird.f32 %v4292
    %vm4299 = vweird.f32 %v4293
    %vm4300 = vmor %vm4298, %vm4299
    %v4301 = vsel %vm4300, %v4293, %v4297
    %v4302 = vand.u32 2147483647, %v4292
    %vm4303 = vcmp.eq.f32.partialorder %v4302, 8.507059e+37
    %v4304 = vand.u32 %v4292, 2147483648
    %v4305 = vor.u32 1.1754944e-38, %v4304
    %v4306 = vsel %vm4303, %v4305, %v4301
    %v4307 = vmul.f32 1.0, %v4306
    %v4309 = vrot.slane %v4263, 7
    %v4311 = vadd.f32 %v4218, %v4309
    %v4312 = vxor.u32 %v4311, 2147483648
    %v4313 = vmul.f32 %v4312, 1.442695
    %v4314 = vpow.pop %v4313
    %v4315 = vadd.f32 %v4314, 1.0
    %v4316 = vrcp.pop %v4315
    %v4317 = vmul.f32 %v4315, %v4316
    %v4318 = vsub.f32 1.0, %v4317
    %v4319 = vmul.f32 %v4316, %v4318
    %v4320 = vadd.f32 %v4316, %v4319
    %vm4321 = vweird.f32 %v4315
    %vm4322 = vweird.f32 %v4316
    %vm4323 = vmor %vm4321, %vm4322
    %v4324 = vsel %vm4323, %v4316, %v4320
    %v4325 = vand.u32 2147483647, %v4315
    %vm4326 = vcmp.eq.f32.partialorder %v4325, 8.507059e+37
    %v4327 = vand.u32 %v4315, 2147483648
    %v4328 = vor.u32 1.1754944e-38, %v4327
    %v4329 = vsel %vm4326, %v4328, %v4324
    %v4330 = vmul.f32 1.0, %v4329
    %v4332 = vrot.slane %v4283, 7
    %v4334 = vmul.f32 %v4307, %v4332
    %v4335 = vadd.f32 %v4221, %v4334
    %v4336 = vtanh.pop %v4335
    %v4337 = vsub.f32 1.0, %v4330
    %v4338 = vmul.f32 %v4337, %v4336
    %v4339 = vrot.slane %v4210, 7
    %v4341 = vmul.f32 %v4330, %v4339
    %v4342 = vadd.f32 %v4338, %v4341
    %p4343 = scmp.gt.s32.totalorder %s4010, 1
    %s4344 = scalar_select %p4343, 1, 0
    %v4345 = vstv %s4344
    %vm4346 = vcmp.eq.s32.totalorder %v4345, 1
    %v4347 = vsel %vm4346, %v4342, %v4339
    %p4348 = scmp.gt.s32.totalorder %s4010, 6
    %s4349 = scalar_select %p4348, 1, 0
    %v4350 = vstv %s4349
    %vm4351 = vcmp.eq.s32.totalorder %v4350, 1
    %v4352 = vsel %vm4351, %v4342, %v4339
    %v4353 = vsel %vm178, %v4347, %v4352
    %v4354 = vperm.slane %v4353, 1
    %v4355 = vsel %vm589, %v4354, %v4212
    %v4356 = vrot.slane %v4034, 3
    %v4358 = vsel %vm178, %v4034, %v4356
    %v4359 = vrot.slane %v4054, 3
    %v4361 = vsel %vm178, %v4054, %v4359
    %v4362 = vrot.slane %v4074, 3
    %v4364 = vsel %vm178, %v4074, %v4362
    %v4366 = vrot.slane %v4353, 1
    %v4367 = vsel %vm233, %v4366, 0
    %4369 = vmatpush.msra.mxu0 0.0
    %4370 = vmatpush.msra.mxu0 0.0
    %4371 = vmatpush.msra.mxu0 0.0
    %4372 = vmatpush.msra.mxu0 0.0
    %4373 = vmatpush.msra.mxu0 0.0
    %4374 = vmatpush.msra.mxu0 0.0
    %4375 = vmatpush.msra.mxu0 0.0
    %4376 = vmatpush.msra.mxu0 0.0
    %4377 = vmatpush.msra.mxu0 0.0
    %4378 = vmatpush.msra.mxu0 0.0
    %4379 = vmatpush.msra.mxu0 0.0
    %4380 = vmatpush.msra.mxu0 0.0
    %4381 = vmatpush.msra.mxu0 %v203
    %4382 = vmatpush.msra.mxu0 %v202
    %4383 = vmatpush.msra.mxu0 %v201
    %4384 = vmatpush.msra.mxu0 %v200
    %4385 = vmatmul.f32.gmra.mxu0 %v4367
    %v4386 = vpop.f32.mrf.mxu0
    %v4387 = vadd.f32 %v214, %v4386
    %4388 = vdwg.mxu0
    %4389 = vmatpush.msra.mxu0 0.0
    %4390 = vmatpush.msra.mxu0 0.0
    %4391 = vmatpush.msra.mxu0 0.0
    %4392 = vmatpush.msra.mxu0 0.0
    %4393 = vmatpush.msra.mxu0 0.0
    %4394 = vmatpush.msra.mxu0 0.0
    %4395 = vmatpush.msra.mxu0 0.0
    %4396 = vmatpush.msra.mxu0 0.0
    %4397 = vmatpush.msra.mxu0 0.0
    %4398 = vmatpush.msra.mxu0 0.0
    %4399 = vmatpush.msra.mxu0 0.0
    %4400 = vmatpush.msra.mxu0 0.0
    %4401 = vmatpush.msra.mxu0 %v208
    %4402 = vmatpush.msra.mxu0 %v207
    %4403 = vmatpush.msra.mxu0 %v206
    %4404 = vmatpush.msra.mxu0 %v205
    %4405 = vmatmul.f32.gmra.mxu0 %v4367
    %v4406 = vpop.f32.mrf.mxu0
    %v4407 = vadd.f32 %v216, %v4406
    %4408 = vdwg.mxu0
    %4409 = vmatpush.msra.mxu0 0.0
    %4410 = vmatpush.msra.mxu0 0.0
    %4411 = vmatpush.msra.mxu0 0.0
    %4412 = vmatpush.msra.mxu0 0.0
    %4413 = vmatpush.msra.mxu0 0.0
    %4414 = vmatpush.msra.mxu0 0.0
    %4415 = vmatpush.msra.mxu0 0.0
    %4416 = vmatpush.msra.mxu0 0.0
    %4417 = vmatpush.msra.mxu0 0.0
    %4418 = vmatpush.msra.mxu0 0.0
    %4419 = vmatpush.msra.mxu0 0.0
    %4420 = vmatpush.msra.mxu0 0.0
    %4421 = vmatpush.msra.mxu0 %v213
    %4422 = vmatpush.msra.mxu0 %v212
    %4423 = vmatpush.msra.mxu0 %v211
    %4424 = vmatpush.msra.mxu0 %v210
    %4425 = vmatmul.f32.gmra.mxu0 %v4367
    %v4426 = vpop.f32.mrf.mxu0
    %v4427 = vadd.f32 %v218, %v4426
    %4428 = vdwg.mxu0
    %v4430 = vrot.slane %v4387, 6
    %v4432 = vadd.f32 %v4358, %v4430
    %v4433 = vxor.u32 %v4432, 2147483648
    %v4434 = vmul.f32 %v4433, 1.442695
    %v4435 = vpow.pop %v4434
    %v4436 = vadd.f32 %v4435, 1.0
    %v4437 = vrcp.pop %v4436
    %v4438 = vmul.f32 %v4436, %v4437
    %v4439 = vsub.f32 1.0, %v4438
    %v4440 = vmul.f32 %v4437, %v4439
    %v4441 = vadd.f32 %v4437, %v4440
    %vm4442 = vweird.f32 %v4436
    %vm4443 = vweird.f32 %v4437
    %vm4444 = vmor %vm4442, %vm4443
    %v4445 = vsel %vm4444, %v4437, %v4441
    %v4446 = vand.u32 2147483647, %v4436
    %vm4447 = vcmp.eq.f32.partialorder %v4446, 8.507059e+37
    %v4448 = vand.u32 %v4436, 2147483648
    %v4449 = vor.u32 1.1754944e-38, %v4448
    %v4450 = vsel %vm4447, %v4449, %v4445
    %v4451 = vmul.f32 1.0, %v4450
    %v4453 = vrot.slane %v4407, 6
    %v4455 = vadd.f32 %v4361, %v4453
    %v4456 = vxor.u32 %v4455, 2147483648
    %v4457 = vmul.f32 %v4456, 1.442695
    %v4458 = vpow.pop %v4457
    %v4459 = vadd.f32 %v4458, 1.0
    %v4460 = vrcp.pop %v4459
    %v4461 = vmul.f32 %v4459, %v4460
    %v4462 = vsub.f32 1.0, %v4461
    %v4463 = vmul.f32 %v4460, %v4462
    %v4464 = vadd.f32 %v4460, %v4463
    %vm4465 = vweird.f32 %v4459
    %vm4466 = vweird.f32 %v4460
    %vm4467 = vmor %vm4465, %vm4466
    %v4468 = vsel %vm4467, %v4460, %v4464
    %v4469 = vand.u32 2147483647, %v4459
    %vm4470 = vcmp.eq.f32.partialorder %v4469, 8.507059e+37
    %v4471 = vand.u32 %v4459, 2147483648
    %v4472 = vor.u32 1.1754944e-38, %v4471
    %v4473 = vsel %vm4470, %v4472, %v4468
    %v4474 = vmul.f32 1.0, %v4473
    %v4476 = vrot.slane %v4427, 6
    %v4478 = vmul.f32 %v4451, %v4476
    %v4479 = vadd.f32 %v4364, %v4478
    %v4480 = vtanh.pop %v4479
    %v4481 = vsub.f32 1.0, %v4474
    %v4482 = vmul.f32 %v4481, %v4480
    %v4483 = vrot.slane %v4353, 7
    %v4485 = vmul.f32 %v4474, %v4483
    %v4486 = vadd.f32 %v4482, %v4485
    %p4487 = scmp.gt.s32.totalorder %s4010, 2
    %s4488 = scalar_select %p4487, 1, 0
    %v4489 = vstv %s4488
    %vm4490 = vcmp.eq.s32.totalorder %v4489, 1
    %v4491 = vsel %vm4490, %v4486, %v4483
    %p4492 = scmp.gt.s32.totalorder %s4010, 5
    %s4493 = scalar_select %p4492, 1, 0
    %v4494 = vstv %s4493
    %vm4495 = vcmp.eq.s32.totalorder %v4494, 1
    %v4496 = vsel %vm4495, %v4486, %v4483
    %v4497 = vsel %vm178, %v4491, %v4496
    %v4498 = vperm.slane %v4497, 2
    %v4499 = vsel %vm738, %v4498, %v4355
    %v4500 = vrot.slane %v4034, 1
    %v4502 = vsel %vm178, %v4034, %v4500
    %v4503 = vrot.slane %v4054, 1
    %v4505 = vsel %vm178, %v4054, %v4503
    %v4506 = vrot.slane %v4074, 1
    %v4508 = vsel %vm178, %v4074, %v4506
    %v4510 = vrot.slane %v4497, 2
    %v4511 = vsel %vm233, %v4510, 0
    %4513 = vmatpush.msra.mxu0 0.0
    %4514 = vmatpush.msra.mxu0 0.0
    %4515 = vmatpush.msra.mxu0 0.0
    %4516 = vmatpush.msra.mxu0 0.0
    %4517 = vmatpush.msra.mxu0 0.0
    %4518 = vmatpush.msra.mxu0 0.0
    %4519 = vmatpush.msra.mxu0 0.0
    %4520 = vmatpush.msra.mxu0 0.0
    %4521 = vmatpush.msra.mxu0 0.0
    %4522 = vmatpush.msra.mxu0 0.0
    %4523 = vmatpush.msra.mxu0 0.0
    %4524 = vmatpush.msra.mxu0 0.0
    %4525 = vmatpush.msra.mxu0 %v203
    %4526 = vmatpush.msra.mxu0 %v202
    %4527 = vmatpush.msra.mxu0 %v201
    %4528 = vmatpush.msra.mxu0 %v200
    %4529 = vmatmul.f32.gmra.mxu0 %v4511
    %v4530 = vpop.f32.mrf.mxu0
    %v4531 = vadd.f32 %v214, %v4530
    %4532 = vdwg.mxu0
    %4533 = vmatpush.msra.mxu0 0.0
    %4534 = vmatpush.msra.mxu0 0.0
    %4535 = vmatpush.msra.mxu0 0.0
    %4536 = vmatpush.msra.mxu0 0.0
    %4537 = vmatpush.msra.mxu0 0.0
    %4538 = vmatpush.msra.mxu0 0.0
    %4539 = vmatpush.msra.mxu0 0.0
    %4540 = vmatpush.msra.mxu0 0.0
    %4541 = vmatpush.msra.mxu0 0.0
    %4542 = vmatpush.msra.mxu0 0.0
    %4543 = vmatpush.msra.mxu0 0.0
    %4544 = vmatpush.msra.mxu0 0.0
    %4545 = vmatpush.msra.mxu0 %v208
    %4546 = vmatpush.msra.mxu0 %v207
    %4547 = vmatpush.msra.mxu0 %v206
    %4548 = vmatpush.msra.mxu0 %v205
    %4549 = vmatmul.f32.gmra.mxu0 %v4511
    %v4550 = vpop.f32.mrf.mxu0
    %v4551 = vadd.f32 %v216, %v4550
    %4552 = vdwg.mxu0
    %4553 = vmatpush.msra.mxu0 0.0
    %4554 = vmatpush.msra.mxu0 0.0
    %4555 = vmatpush.msra.mxu0 0.0
    %4556 = vmatpush.msra.mxu0 0.0
    %4557 = vmatpush.msra.mxu0 0.0
    %4558 = vmatpush.msra.mxu0 0.0
    %4559 = vmatpush.msra.mxu0 0.0
    %4560 = vmatpush.msra.mxu0 0.0
    %4561 = vmatpush.msra.mxu0 0.0
    %4562 = vmatpush.msra.mxu0 0.0
    %4563 = vmatpush.msra.mxu0 0.0
    %4564 = vmatpush.msra.mxu0 0.0
    %4565 = vmatpush.msra.mxu0 %v213
    %4566 = vmatpush.msra.mxu0 %v212
    %4567 = vmatpush.msra.mxu0 %v211
    %4568 = vmatpush.msra.mxu0 %v210
    %4569 = vmatmul.f32.gmra.mxu0 %v4511
    %v4570 = vpop.f32.mrf.mxu0
    %v4571 = vadd.f32 %v218, %v4570
    %4572 = vdwg.mxu0
    %v4574 = vrot.slane %v4531, 5
    %v4576 = vadd.f32 %v4502, %v4574
    %v4577 = vxor.u32 %v4576, 2147483648
    %v4578 = vmul.f32 %v4577, 1.442695
    %v4579 = vpow.pop %v4578
    %v4580 = vadd.f32 %v4579, 1.0
    %v4581 = vrcp.pop %v4580
    %v4582 = vmul.f32 %v4580, %v4581
    %v4583 = vsub.f32 1.0, %v4582
    %v4584 = vmul.f32 %v4581, %v4583
    %v4585 = vadd.f32 %v4581, %v4584
    %vm4586 = vweird.f32 %v4580
    %vm4587 = vweird.f32 %v4581
    %vm4588 = vmor %vm4586, %vm4587
    %v4589 = vsel %vm4588, %v4581, %v4585
    %v4590 = vand.u32 2147483647, %v4580
    %vm4591 = vcmp.eq.f32.partialorder %v4590, 8.507059e+37
    %v4592 = vand.u32 %v4580, 2147483648
    %v4593 = vor.u32 1.1754944e-38, %v4592
    %v4594 = vsel %vm4591, %v4593, %v4589
    %v4595 = vmul.f32 1.0, %v4594
    %v4597 = vrot.slane %v4551, 5
    %v4599 = vadd.f32 %v4505, %v4597
    %v4600 = vxor.u32 %v4599, 2147483648
    %v4601 = vmul.f32 %v4600, 1.442695
    %v4602 = vpow.pop %v4601
    %v4603 = vadd.f32 %v4602, 1.0
    %v4604 = vrcp.pop %v4603
    %v4605 = vmul.f32 %v4603, %v4604
    %v4606 = vsub.f32 1.0, %v4605
    %v4607 = vmul.f32 %v4604, %v4606
    %v4608 = vadd.f32 %v4604, %v4607
    %vm4609 = vweird.f32 %v4603
    %vm4610 = vweird.f32 %v4604
    %vm4611 = vmor %vm4609, %vm4610
    %v4612 = vsel %vm4611, %v4604, %v4608
    %v4613 = vand.u32 2147483647, %v4603
    %vm4614 = vcmp.eq.f32.partialorder %v4613, 8.507059e+37
    %v4615 = vand.u32 %v4603, 2147483648
    %v4616 = vor.u32 1.1754944e-38, %v4615
    %v4617 = vsel %vm4614, %v4616, %v4612
    %v4618 = vmul.f32 1.0, %v4617
    %v4620 = vrot.slane %v4571, 5
    %v4622 = vmul.f32 %v4595, %v4620
    %v4623 = vadd.f32 %v4508, %v4622
    %v4624 = vtanh.pop %v4623
    %v4625 = vsub.f32 1.0, %v4618
    %v4626 = vmul.f32 %v4625, %v4624
    %v4627 = vrot.slane %v4497, 7
    %v4629 = vmul.f32 %v4618, %v4627
    %v4630 = vadd.f32 %v4626, %v4629
    %p4631 = scmp.gt.s32.totalorder %s4010, 3
    %s4632 = scalar_select %p4631, 1, 0
    %v4633 = vstv %s4632
    %vm4634 = vcmp.eq.s32.totalorder %v4633, 1
    %v4635 = vsel %vm4634, %v4630, %v4627
    %p4636 = scmp.gt.s32.totalorder %s4010, 4
    %s4637 = scalar_select %p4636, 1, 0
    %v4638 = vstv %s4637
    %vm4639 = vcmp.eq.s32.totalorder %v4638, 1
    %v4640 = vsel %vm4639, %v4630, %v4627
    %v4641 = vsel %vm178, %v4635, %v4640
    %v4642 = vperm.slane %v4641, 3
    %v4643 = vsel %vm887, %v4642, %v4499
    %v4645 = vrot.slane %v4641, 3
    %v4646 = vsel %vm233, %v4645, 0
    %4648 = vmatpush.msra.mxu0 0.0
    %4649 = vmatpush.msra.mxu0 0.0
    %4650 = vmatpush.msra.mxu0 0.0
    %4651 = vmatpush.msra.mxu0 0.0
    %4652 = vmatpush.msra.mxu0 0.0
    %4653 = vmatpush.msra.mxu0 0.0
    %4654 = vmatpush.msra.mxu0 0.0
    %4655 = vmatpush.msra.mxu0 0.0
    %4656 = vmatpush.msra.mxu0 0.0
    %4657 = vmatpush.msra.mxu0 0.0
    %4658 = vmatpush.msra.mxu0 0.0
    %4659 = vmatpush.msra.mxu0 0.0
    %4660 = vmatpush.msra.mxu0 %v203
    %4661 = vmatpush.msra.mxu0 %v202
    %4662 = vmatpush.msra.mxu0 %v201
    %4663 = vmatpush.msra.mxu0 %v200
    %4664 = vmatmul.f32.gmra.mxu0 %v4646
    %v4665 = vpop.f32.mrf.mxu0
    %v4666 = vadd.f32 %v214, %v4665
    %4667 = vdwg.mxu0
    %4668 = vmatpush.msra.mxu0 0.0
    %4669 = vmatpush.msra.mxu0 0.0
    %4670 = vmatpush.msra.mxu0 0.0
    %4671 = vmatpush.msra.mxu0 0.0
    %4672 = vmatpush.msra.mxu0 0.0
    %4673 = vmatpush.msra.mxu0 0.0
    %4674 = vmatpush.msra.mxu0 0.0
    %4675 = vmatpush.msra.mxu0 0.0
    %4676 = vmatpush.msra.mxu0 0.0
    %4677 = vmatpush.msra.mxu0 0.0
    %4678 = vmatpush.msra.mxu0 0.0
    %4679 = vmatpush.msra.mxu0 0.0
    %4680 = vmatpush.msra.mxu0 %v208
    %4681 = vmatpush.msra.mxu0 %v207
    %4682 = vmatpush.msra.mxu0 %v206
    %4683 = vmatpush.msra.mxu0 %v205
    %4684 = vmatmul.f32.gmra.mxu0 %v4646
    %v4685 = vpop.f32.mrf.mxu0
    %v4686 = vadd.f32 %v216, %v4685
    %4687 = vdwg.mxu0
    %4688 = vmatpush.msra.mxu0 0.0
    %4689 = vmatpush.msra.mxu0 0.0
    %4690 = vmatpush.msra.mxu0 0.0
    %4691 = vmatpush.msra.mxu0 0.0
    %4692 = vmatpush.msra.mxu0 0.0
    %4693 = vmatpush.msra.mxu0 0.0
    %4694 = vmatpush.msra.mxu0 0.0
    %4695 = vmatpush.msra.mxu0 0.0
    %4696 = vmatpush.msra.mxu0 0.0
    %4697 = vmatpush.msra.mxu0 0.0
    %4698 = vmatpush.msra.mxu0 0.0
    %4699 = vmatpush.msra.mxu0 0.0
    %4700 = vmatpush.msra.mxu0 %v213
    %4701 = vmatpush.msra.mxu0 %v212
    %4702 = vmatpush.msra.mxu0 %v211
    %4703 = vmatpush.msra.mxu0 %v210
    %4704 = vmatmul.f32.gmra.mxu0 %v4646
    %v4705 = vpop.f32.mrf.mxu0
    %v4706 = vadd.f32 %v218, %v4705
    %4707 = vdwg.mxu0
    %v4709 = vrot.slane %v4666, 4
    %v4711 = vadd.f32 %v4079, %v4709
    %v4712 = vxor.u32 %v4711, 2147483648
    %v4713 = vmul.f32 %v4712, 1.442695
    %v4714 = vpow.pop %v4713
    %v4715 = vadd.f32 %v4714, 1.0
    %v4716 = vrcp.pop %v4715
    %v4717 = vmul.f32 %v4715, %v4716
    %v4718 = vsub.f32 1.0, %v4717
    %v4719 = vmul.f32 %v4716, %v4718
    %v4720 = vadd.f32 %v4716, %v4719
    %vm4721 = vweird.f32 %v4715
    %vm4722 = vweird.f32 %v4716
    %vm4723 = vmor %vm4721, %vm4722
    %v4724 = vsel %vm4723, %v4716, %v4720
    %v4725 = vand.u32 2147483647, %v4715
    %vm4726 = vcmp.eq.f32.partialorder %v4725, 8.507059e+37
    %v4727 = vand.u32 %v4715, 2147483648
    %v4728 = vor.u32 1.1754944e-38, %v4727
    %v4729 = vsel %vm4726, %v4728, %v4724
    %v4730 = vmul.f32 1.0, %v4729
    %v4732 = vrot.slane %v4686, 4
    %v4734 = vadd.f32 %v4083, %v4732
    %v4735 = vxor.u32 %v4734, 2147483648
    %v4736 = vmul.f32 %v4735, 1.442695
    %v4737 = vpow.pop %v4736
    %v4738 = vadd.f32 %v4737, 1.0
    %v4739 = vrcp.pop %v4738
    %v4740 = vmul.f32 %v4738, %v4739
    %v4741 = vsub.f32 1.0, %v4740
    %v4742 = vmul.f32 %v4739, %v4741
    %v4743 = vadd.f32 %v4739, %v4742
    %vm4744 = vweird.f32 %v4738
    %vm4745 = vweird.f32 %v4739
    %vm4746 = vmor %vm4744, %vm4745
    %v4747 = vsel %vm4746, %v4739, %v4743
    %v4748 = vand.u32 2147483647, %v4738
    %vm4749 = vcmp.eq.f32.partialorder %v4748, 8.507059e+37
    %v4750 = vand.u32 %v4738, 2147483648
    %v4751 = vor.u32 1.1754944e-38, %v4750
    %v4752 = vsel %vm4749, %v4751, %v4747
    %v4753 = vmul.f32 1.0, %v4752
    %v4755 = vrot.slane %v4706, 4
    %v4757 = vmul.f32 %v4730, %v4755
    %v4758 = vadd.f32 %v4087, %v4757
    %v4759 = vtanh.pop %v4758
    %v4760 = vsub.f32 1.0, %v4753
    %v4761 = vmul.f32 %v4760, %v4759
    %v4762 = vrot.slane %v4641, 7
    %v4764 = vmul.f32 %v4753, %v4762
    %v4765 = vadd.f32 %v4761, %v4764
    %v4766 = vsel %vm4639, %v4765, %v4762
    %v4767 = vsel %vm4634, %v4765, %v4762
    %v4768 = vsel %vm178, %v4766, %v4767
    %v4769 = vperm.slane %v4768, 4
    %v4770 = vsel %vm1017, %v4769, %v4643
    %v4772 = vrot.slane %v4768, 4
    %v4773 = vsel %vm233, %v4772, 0
    %4775 = vmatpush.msra.mxu0 0.0
    %4776 = vmatpush.msra.mxu0 0.0
    %4777 = vmatpush.msra.mxu0 0.0
    %4778 = vmatpush.msra.mxu0 0.0
    %4779 = vmatpush.msra.mxu0 0.0
    %4780 = vmatpush.msra.mxu0 0.0
    %4781 = vmatpush.msra.mxu0 0.0
    %4782 = vmatpush.msra.mxu0 0.0
    %4783 = vmatpush.msra.mxu0 0.0
    %4784 = vmatpush.msra.mxu0 0.0
    %4785 = vmatpush.msra.mxu0 0.0
    %4786 = vmatpush.msra.mxu0 0.0
    %4787 = vmatpush.msra.mxu0 %v203
    %4788 = vmatpush.msra.mxu0 %v202
    %4789 = vmatpush.msra.mxu0 %v201
    %4790 = vmatpush.msra.mxu0 %v200
    %4791 = vmatmul.f32.gmra.mxu0 %v4773
    %v4792 = vpop.f32.mrf.mxu0
    %v4793 = vadd.f32 %v214, %v4792
    %4794 = vdwg.mxu0
    %4795 = vmatpush.msra.mxu0 0.0
    %4796 = vmatpush.msra.mxu0 0.0
    %4797 = vmatpush.msra.mxu0 0.0
    %4798 = vmatpush.msra.mxu0 0.0
    %4799 = vmatpush.msra.mxu0 0.0
    %4800 = vmatpush.msra.mxu0 0.0
    %4801 = vmatpush.msra.mxu0 0.0
    %4802 = vmatpush.msra.mxu0 0.0
    %4803 = vmatpush.msra.mxu0 0.0
    %4804 = vmatpush.msra.mxu0 0.0
    %4805 = vmatpush.msra.mxu0 0.0
    %4806 = vmatpush.msra.mxu0 0.0
    %4807 = vmatpush.msra.mxu0 %v208
    %4808 = vmatpush.msra.mxu0 %v207
    %4809 = vmatpush.msra.mxu0 %v206
    %4810 = vmatpush.msra.mxu0 %v205
    %4811 = vmatmul.f32.gmra.mxu0 %v4773
    %v4812 = vpop.f32.mrf.mxu0
    %v4813 = vadd.f32 %v216, %v4812
    %4814 = vdwg.mxu0
    %4815 = vmatpush.msra.mxu0 0.0
    %4816 = vmatpush.msra.mxu0 0.0
    %4817 = vmatpush.msra.mxu0 0.0
    %4818 = vmatpush.msra.mxu0 0.0
    %4819 = vmatpush.msra.mxu0 0.0
    %4820 = vmatpush.msra.mxu0 0.0
    %4821 = vmatpush.msra.mxu0 0.0
    %4822 = vmatpush.msra.mxu0 0.0
    %4823 = vmatpush.msra.mxu0 0.0
    %4824 = vmatpush.msra.mxu0 0.0
    %4825 = vmatpush.msra.mxu0 0.0
    %4826 = vmatpush.msra.mxu0 0.0
    %4827 = vmatpush.msra.mxu0 %v213
    %4828 = vmatpush.msra.mxu0 %v212
    %4829 = vmatpush.msra.mxu0 %v211
    %4830 = vmatpush.msra.mxu0 %v210
    %4831 = vmatmul.f32.gmra.mxu0 %v4773
    %v4832 = vpop.f32.mrf.mxu0
    %v4833 = vadd.f32 %v218, %v4832
    %4834 = vdwg.mxu0
    %v4836 = vrot.slane %v4793, 3
    %v4838 = vadd.f32 %v4215, %v4836
    %v4839 = vxor.u32 %v4838, 2147483648
    %v4840 = vmul.f32 %v4839, 1.442695
    %v4841 = vpow.pop %v4840
    %v4842 = vadd.f32 %v4841, 1.0
    %v4843 = vrcp.pop %v4842
    %v4844 = vmul.f32 %v4842, %v4843
    %v4845 = vsub.f32 1.0, %v4844
    %v4846 = vmul.f32 %v4843, %v4845
    %v4847 = vadd.f32 %v4843, %v4846
    %vm4848 = vweird.f32 %v4842
    %vm4849 = vweird.f32 %v4843
    %vm4850 = vmor %vm4848, %vm4849
    %v4851 = vsel %vm4850, %v4843, %v4847
    %v4852 = vand.u32 2147483647, %v4842
    %vm4853 = vcmp.eq.f32.partialorder %v4852, 8.507059e+37
    %v4854 = vand.u32 %v4842, 2147483648
    %v4855 = vor.u32 1.1754944e-38, %v4854
    %v4856 = vsel %vm4853, %v4855, %v4851
    %v4857 = vmul.f32 1.0, %v4856
    %v4859 = vrot.slane %v4813, 3
    %v4861 = vadd.f32 %v4218, %v4859
    %v4862 = vxor.u32 %v4861, 2147483648
    %v4863 = vmul.f32 %v4862, 1.442695
    %v4864 = vpow.pop %v4863
    %v4865 = vadd.f32 %v4864, 1.0
    %v4866 = vrcp.pop %v4865
    %v4867 = vmul.f32 %v4865, %v4866
    %v4868 = vsub.f32 1.0, %v4867
    %v4869 = vmul.f32 %v4866, %v4868
    %v4870 = vadd.f32 %v4866, %v4869
    %vm4871 = vweird.f32 %v4865
    %vm4872 = vweird.f32 %v4866
    %vm4873 = vmor %vm4871, %vm4872
    %v4874 = vsel %vm4873, %v4866, %v4870
    %v4875 = vand.u32 2147483647, %v4865
    %vm4876 = vcmp.eq.f32.partialorder %v4875, 8.507059e+37
    %v4877 = vand.u32 %v4865, 2147483648
    %v4878 = vor.u32 1.1754944e-38, %v4877
    %v4879 = vsel %vm4876, %v4878, %v4874
    %v4880 = vmul.f32 1.0, %v4879
    %v4882 = vrot.slane %v4833, 3
    %v4884 = vmul.f32 %v4857, %v4882
    %v4885 = vadd.f32 %v4221, %v4884
    %v4886 = vtanh.pop %v4885
    %v4887 = vsub.f32 1.0, %v4880
    %v4888 = vmul.f32 %v4887, %v4886
    %v4889 = vrot.slane %v4768, 7
    %v4891 = vmul.f32 %v4880, %v4889
    %v4892 = vadd.f32 %v4888, %v4891
    %v4893 = vsel %vm4495, %v4892, %v4889
    %v4894 = vsel %vm4490, %v4892, %v4889
    %v4895 = vsel %vm178, %v4893, %v4894
    %v4896 = vperm.slane %v4895, 5
    %v4897 = vsel %vm1147, %v4896, %v4770
    %v4899 = vrot.slane %v4895, 5
    %v4900 = vsel %vm233, %v4899, 0
    %4902 = vmatpush.msra.mxu0 0.0
    %4903 = vmatpush.msra.mxu0 0.0
    %4904 = vmatpush.msra.mxu0 0.0
    %4905 = vmatpush.msra.mxu0 0.0
    %4906 = vmatpush.msra.mxu0 0.0
    %4907 = vmatpush.msra.mxu0 0.0
    %4908 = vmatpush.msra.mxu0 0.0
    %4909 = vmatpush.msra.mxu0 0.0
    %4910 = vmatpush.msra.mxu0 0.0
    %4911 = vmatpush.msra.mxu0 0.0
    %4912 = vmatpush.msra.mxu0 0.0
    %4913 = vmatpush.msra.mxu0 0.0
    %4914 = vmatpush.msra.mxu0 %v203
    %4915 = vmatpush.msra.mxu0 %v202
    %4916 = vmatpush.msra.mxu0 %v201
    %4917 = vmatpush.msra.mxu0 %v200
    %4918 = vmatmul.f32.gmra.mxu0 %v4900
    %v4919 = vpop.f32.mrf.mxu0
    %v4920 = vadd.f32 %v214, %v4919
    %4921 = vdwg.mxu0
    %4922 = vmatpush.msra.mxu0 0.0
    %4923 = vmatpush.msra.mxu0 0.0
    %4924 = vmatpush.msra.mxu0 0.0
    %4925 = vmatpush.msra.mxu0 0.0
    %4926 = vmatpush.msra.mxu0 0.0
    %4927 = vmatpush.msra.mxu0 0.0
    %4928 = vmatpush.msra.mxu0 0.0
    %4929 = vmatpush.msra.mxu0 0.0
    %4930 = vmatpush.msra.mxu0 0.0
    %4931 = vmatpush.msra.mxu0 0.0
    %4932 = vmatpush.msra.mxu0 0.0
    %4933 = vmatpush.msra.mxu0 0.0
    %4934 = vmatpush.msra.mxu0 %v208
    %4935 = vmatpush.msra.mxu0 %v207
    %4936 = vmatpush.msra.mxu0 %v206
    %4937 = vmatpush.msra.mxu0 %v205
    %4938 = vmatmul.f32.gmra.mxu0 %v4900
    %v4939 = vpop.f32.mrf.mxu0
    %v4940 = vadd.f32 %v216, %v4939
    %4941 = vdwg.mxu0
    %4942 = vmatpush.msra.mxu0 0.0
    %4943 = vmatpush.msra.mxu0 0.0
    %4944 = vmatpush.msra.mxu0 0.0
    %4945 = vmatpush.msra.mxu0 0.0
    %4946 = vmatpush.msra.mxu0 0.0
    %4947 = vmatpush.msra.mxu0 0.0
    %4948 = vmatpush.msra.mxu0 0.0
    %4949 = vmatpush.msra.mxu0 0.0
    %4950 = vmatpush.msra.mxu0 0.0
    %4951 = vmatpush.msra.mxu0 0.0
    %4952 = vmatpush.msra.mxu0 0.0
    %4953 = vmatpush.msra.mxu0 0.0
    %4954 = vmatpush.msra.mxu0 %v213
    %4955 = vmatpush.msra.mxu0 %v212
    %4956 = vmatpush.msra.mxu0 %v211
    %4957 = vmatpush.msra.mxu0 %v210
    %4958 = vmatmul.f32.gmra.mxu0 %v4900
    %v4959 = vpop.f32.mrf.mxu0
    %v4960 = vadd.f32 %v218, %v4959
    %4961 = vdwg.mxu0
    %v4963 = vrot.slane %v4920, 2
    %v4965 = vadd.f32 %v4358, %v4963
    %v4966 = vxor.u32 %v4965, 2147483648
    %v4967 = vmul.f32 %v4966, 1.442695
    %v4968 = vpow.pop %v4967
    %v4969 = vadd.f32 %v4968, 1.0
    %v4970 = vrcp.pop %v4969
    %v4971 = vmul.f32 %v4969, %v4970
    %v4972 = vsub.f32 1.0, %v4971
    %v4973 = vmul.f32 %v4970, %v4972
    %v4974 = vadd.f32 %v4970, %v4973
    %vm4975 = vweird.f32 %v4969
    %vm4976 = vweird.f32 %v4970
    %vm4977 = vmor %vm4975, %vm4976
    %v4978 = vsel %vm4977, %v4970, %v4974
    %v4979 = vand.u32 2147483647, %v4969
    %vm4980 = vcmp.eq.f32.partialorder %v4979, 8.507059e+37
    %v4981 = vand.u32 %v4969, 2147483648
    %v4982 = vor.u32 1.1754944e-38, %v4981
    %v4983 = vsel %vm4980, %v4982, %v4978
    %v4984 = vmul.f32 1.0, %v4983
    %v4986 = vrot.slane %v4940, 2
    %v4988 = vadd.f32 %v4361, %v4986
    %v4989 = vxor.u32 %v4988, 2147483648
    %v4990 = vmul.f32 %v4989, 1.442695
    %v4991 = vpow.pop %v4990
    %v4992 = vadd.f32 %v4991, 1.0
    %v4993 = vrcp.pop %v4992
    %v4994 = vmul.f32 %v4992, %v4993
    %v4995 = vsub.f32 1.0, %v4994
    %v4996 = vmul.f32 %v4993, %v4995
    %v4997 = vadd.f32 %v4993, %v4996
    %vm4998 = vweird.f32 %v4992
    %vm4999 = vweird.f32 %v4993
    %vm5000 = vmor %vm4998, %vm4999
    %v5001 = vsel %vm5000, %v4993, %v4997
    %v5002 = vand.u32 2147483647, %v4992
    %vm5003 = vcmp.eq.f32.partialorder %v5002, 8.507059e+37
    %v5004 = vand.u32 %v4992, 2147483648
    %v5005 = vor.u32 1.1754944e-38, %v5004
    %v5006 = vsel %vm5003, %v5005, %v5001
    %v5007 = vmul.f32 1.0, %v5006
    %v5009 = vrot.slane %v4960, 2
    %v5011 = vmul.f32 %v4984, %v5009
    %v5012 = vadd.f32 %v4364, %v5011
    %v5013 = vtanh.pop %v5012
    %v5014 = vsub.f32 1.0, %v5007
    %v5015 = vmul.f32 %v5014, %v5013
    %v5016 = vrot.slane %v4895, 7
    %v5018 = vmul.f32 %v5007, %v5016
    %v5019 = vadd.f32 %v5015, %v5018
    %v5020 = vsel %vm4351, %v5019, %v5016
    %v5021 = vsel %vm4346, %v5019, %v5016
    %v5022 = vsel %vm178, %v5020, %v5021
    %v5023 = vperm.slane %v5022, 6
    %v5024 = vsel %vm1277, %v5023, %v4897
    %v5026 = vrot.slane %v5022, 6
    %v5027 = vsel %vm233, %v5026, 0
    %5029 = vmatpush.msra.mxu0 0.0
    %5030 = vmatpush.msra.mxu0 0.0
    %5031 = vmatpush.msra.mxu0 0.0
    %5032 = vmatpush.msra.mxu0 0.0
    %5033 = vmatpush.msra.mxu0 0.0
    %5034 = vmatpush.msra.mxu0 0.0
    %5035 = vmatpush.msra.mxu0 0.0
    %5036 = vmatpush.msra.mxu0 0.0
    %5037 = vmatpush.msra.mxu0 0.0
    %5038 = vmatpush.msra.mxu0 0.0
    %5039 = vmatpush.msra.mxu0 0.0
    %5040 = vmatpush.msra.mxu0 0.0
    %5041 = vmatpush.msra.mxu0 %v203
    %5042 = vmatpush.msra.mxu0 %v202
    %5043 = vmatpush.msra.mxu0 %v201
    %5044 = vmatpush.msra.mxu0 %v200
    %5045 = vmatmul.f32.gmra.mxu0 %v5027
    %v5046 = vpop.f32.mrf.mxu0
    %v5047 = vadd.f32 %v214, %v5046
    %5048 = vdwg.mxu0
    %5049 = vmatpush.msra.mxu0 0.0
    %5050 = vmatpush.msra.mxu0 0.0
    %5051 = vmatpush.msra.mxu0 0.0
    %5052 = vmatpush.msra.mxu0 0.0
    %5053 = vmatpush.msra.mxu0 0.0
    %5054 = vmatpush.msra.mxu0 0.0
    %5055 = vmatpush.msra.mxu0 0.0
    %5056 = vmatpush.msra.mxu0 0.0
    %5057 = vmatpush.msra.mxu0 0.0
    %5058 = vmatpush.msra.mxu0 0.0
    %5059 = vmatpush.msra.mxu0 0.0
    %5060 = vmatpush.msra.mxu0 0.0
    %5061 = vmatpush.msra.mxu0 %v208
    %5062 = vmatpush.msra.mxu0 %v207
    %5063 = vmatpush.msra.mxu0 %v206
    %5064 = vmatpush.msra.mxu0 %v205
    %5065 = vmatmul.f32.gmra.mxu0 %v5027
    %v5066 = vpop.f32.mrf.mxu0
    %v5067 = vadd.f32 %v216, %v5066
    %5068 = vdwg.mxu0
    %5069 = vmatpush.msra.mxu0 0.0
    %5070 = vmatpush.msra.mxu0 0.0
    %5071 = vmatpush.msra.mxu0 0.0
    %5072 = vmatpush.msra.mxu0 0.0
    %5073 = vmatpush.msra.mxu0 0.0
    %5074 = vmatpush.msra.mxu0 0.0
    %5075 = vmatpush.msra.mxu0 0.0
    %5076 = vmatpush.msra.mxu0 0.0
    %5077 = vmatpush.msra.mxu0 0.0
    %5078 = vmatpush.msra.mxu0 0.0
    %5079 = vmatpush.msra.mxu0 0.0
    %5080 = vmatpush.msra.mxu0 0.0
    %5081 = vmatpush.msra.mxu0 %v213
    %5082 = vmatpush.msra.mxu0 %v212
    %5083 = vmatpush.msra.mxu0 %v211
    %5084 = vmatpush.msra.mxu0 %v210
    %5085 = vmatmul.f32.gmra.mxu0 %v5027
    %v5086 = vpop.f32.mrf.mxu0
    %v5087 = vadd.f32 %v218, %v5086
    %5088 = vdwg.mxu0
    %v5090 = vrot.slane %v5047, 1
    %v5092 = vadd.f32 %v4502, %v5090
    %v5093 = vxor.u32 %v5092, 2147483648
    %v5094 = vmul.f32 %v5093, 1.442695
    %v5095 = vpow.pop %v5094
    %v5096 = vadd.f32 %v5095, 1.0
    %v5097 = vrcp.pop %v5096
    %v5098 = vmul.f32 %v5096, %v5097
    %v5099 = vsub.f32 1.0, %v5098
    %v5100 = vmul.f32 %v5097, %v5099
    %v5101 = vadd.f32 %v5097, %v5100
    %vm5102 = vweird.f32 %v5096
    %vm5103 = vweird.f32 %v5097
    %vm5104 = vmor %vm5102, %vm5103
    %v5105 = vsel %vm5104, %v5097, %v5101
    %v5106 = vand.u32 2147483647, %v5096
    %vm5107 = vcmp.eq.f32.partialorder %v5106, 8.507059e+37
    %v5108 = vand.u32 %v5096, 2147483648
    %v5109 = vor.u32 1.1754944e-38, %v5108
    %v5110 = vsel %vm5107, %v5109, %v5105
    %v5111 = vmul.f32 1.0, %v5110
    %v5113 = vrot.slane %v5067, 1
    %v5115 = vadd.f32 %v4505, %v5113
    %v5116 = vxor.u32 %v5115, 2147483648
    %v5117 = vmul.f32 %v5116, 1.442695
    %v5118 = vpow.pop %v5117
    %v5119 = vadd.f32 %v5118, 1.0
    %v5120 = vrcp.pop %v5119
    %v5121 = vmul.f32 %v5119, %v5120
    %v5122 = vsub.f32 1.0, %v5121
    %v5123 = vmul.f32 %v5120, %v5122
    %v5124 = vadd.f32 %v5120, %v5123
    %vm5125 = vweird.f32 %v5119
    %vm5126 = vweird.f32 %v5120
    %vm5127 = vmor %vm5125, %vm5126
    %v5128 = vsel %vm5127, %v5120, %v5124
    %v5129 = vand.u32 2147483647, %v5119
    %vm5130 = vcmp.eq.f32.partialorder %v5129, 8.507059e+37
    %v5131 = vand.u32 %v5119, 2147483648
    %v5132 = vor.u32 1.1754944e-38, %v5131
    %v5133 = vsel %vm5130, %v5132, %v5128
    %v5134 = vmul.f32 1.0, %v5133
    %v5136 = vrot.slane %v5087, 1
    %v5138 = vmul.f32 %v5111, %v5136
    %v5139 = vadd.f32 %v4508, %v5138
    %v5140 = vtanh.pop %v5139
    %v5141 = vsub.f32 1.0, %v5134
    %v5142 = vmul.f32 %v5141, %v5140
    %v5143 = vrot.slane %v5022, 7
    %v5145 = vmul.f32 %v5134, %v5143
    %v5146 = vadd.f32 %v5142, %v5145
    %v5147 = vsel %vm4208, %v5146, %v5143
    %v5148 = vsel %vm4203, %v5146, %v5143
    %v5149 = vsel %vm178, %v5147, %v5148
    %v5150 = vperm.slane %v5149, 7
    %v5151 = vsel %vm1407, %v5150, %v5024
    %v5153 = vsel %vm233, %v5151, 0
    %5155 = vmatpush.msra.mxu0 0.0
    %5156 = vmatpush.msra.mxu0 0.0
    %5157 = vmatpush.msra.mxu0 0.0
    %5158 = vmatpush.msra.mxu0 0.0
    %5159 = vmatpush.msra.mxu0 0.0
    %5160 = vmatpush.msra.mxu0 0.0
    %5161 = vmatpush.msra.mxu0 0.0
    %5162 = vmatpush.msra.mxu0 0.0
    %5163 = vmatpush.msra.mxu0 0.0
    %5164 = vmatpush.msra.mxu0 0.0
    %5165 = vmatpush.msra.mxu0 0.0
    %5166 = vmatpush.msra.mxu0 0.0
    %5167 = vmatpush.msra.mxu0 %v222
    %5168 = vmatpush.msra.mxu0 %v221
    %5169 = vmatpush.msra.mxu0 %v220
    %5170 = vmatpush.msra.mxu0 %v219
    %5171 = vmatmul.f32.gmra.mxu0 %v5153
    %v5172 = vpop.f32.mrf.mxu0
    %v5173 = vadd.f32 %v1411, %v5172
    %5174 = vdwg.mxu0
    %v5175 = vtanh.pop %v5173
    %v5177 = vsel %vm233, %v5175, 0
    %5179 = vmatpush.msra.mxu0 0.0
    %5180 = vmatpush.msra.mxu0 0.0
    %5181 = vmatpush.msra.mxu0 0.0
    %5182 = vmatpush.msra.mxu0 0.0
    %5183 = vmatpush.msra.mxu0 0.0
    %5184 = vmatpush.msra.mxu0 0.0
    %5185 = vmatpush.msra.mxu0 0.0
    %5186 = vmatpush.msra.mxu0 0.0
    %5187 = vmatpush.msra.mxu0 0.0
    %5188 = vmatpush.msra.mxu0 0.0
    %5189 = vmatpush.msra.mxu0 0.0
    %5190 = vmatpush.msra.mxu0 0.0
    %5191 = vmatpush.msra.mxu0 %v227
    %5192 = vmatpush.msra.mxu0 %v226
    %5193 = vmatpush.msra.mxu0 %v225
    %5194 = vmatpush.msra.mxu0 %v224
    %5195 = vmatmul.f32.gmra.mxu0 %v5177
    %v5196 = vpop.f32.mrf.mxu0
    %v5197 = vadd.f32 0.0, %v5196
    %5198 = vdwg.mxu0
    %v5199 = vstv %s4010
    %vm5200 = vcmp.lt.s32.totalorder %v180, %v5199
    %v5201 = vsel %vm5200, %v5197, -1e+30
    %v5202 = vsel %vm1463, %v5201, -inf
    %5203 = vmax.xlane.f32.xlu0 %v5202
    %v5204 = vpop.xlane.xlu0 %5203
    %v5205 = vrot.slane %v5204, 4
    %v5206 = vmax.f32 %v5204, %v5205
    %v5207 = vrot.slane %v5206, 2
    %v5208 = vmax.f32 %v5206, %v5207
    %v5209 = vrot.slane %v5208, 1
    %v5210 = vmax.f32 %v5208, %v5209
    %s5211 = vtos %v5210
    %v5212 = vstv %s5211
    %v5213 = vsub.f32 %v5201, %v5212
    %v5214 = vmul.f32 %v5213, 1.442695
    %v5215 = vpow.pop %v5214
    %v5216 = vsel %vm1463, %v5215, 0.0
    %5217 = vadd.xlane.f32.xlu0 %v5216
    %v5218 = vpop.xlane.xlu0 %5217
    %v5219 = vrot.slane %v5218, 4
    %v5220 = vadd.f32 %v5218, %v5219
    %v5221 = vrot.slane %v5220, 2
    %v5222 = vadd.f32 %v5220, %v5221
    %v5223 = vrot.slane %v5222, 1
    %v5224 = vadd.f32 %v5222, %v5223
    %s5225 = vtos %v5224
    %v5226 = vstv %s5225
    %v5227 = vrcp.pop %v5226
    %v5228 = vmul.f32 %v5226, %v5227
    %v5229 = vsub.f32 1.0, %v5228
    %v5230 = vmul.f32 %v5227, %v5229
    %v5231 = vadd.f32 %v5227, %v5230
    %vm5232 = vweird.f32 %v5226
    %vm5233 = vweird.f32 %v5227
    %vm5234 = vmor %vm5232, %vm5233
    %v5235 = vsel %vm5234, %v5227, %v5231
    %v5236 = vand.u32 2147483647, %v5226
    %vm5237 = vcmp.eq.f32.partialorder %v5236, 8.507059e+37
    %v5238 = vand.u32 %v5226, 2147483648
    %v5239 = vor.u32 1.1754944e-38, %v5238
    %v5240 = vsel %vm5237, %v5239, %v5235
    %v5241 = vmul.f32 %v5215, %v5240
    %5243 = vset.pattern.permute.xlu0 0
    %5244 = vperm.xlu0 %5243, %v5241
    %v5245 = vpop.permute.xlu0 %5244
    %v5247 = vmul.f32 %v5245, %v5151
    %v5248 = vsel %vm233, %v5247, 0.0
    %v5249 = vrot.slane %v5248, 4
    %v5250 = vadd.f32 %v5248, %v5249
    %v5251 = vrot.slane %v5250, 2
    %v5252 = vadd.f32 %v5250, %v5251
    %v5253 = vrot.slane %v5252, 1
    %v5254 = vadd.f32 %v5252, %v5253
    %v5255 = vsel %vm883, %v5254, %v4009
    %vm5256 = vcmask 261127
    %5257 = vst.msk [vmem:[%s19 - $0x7] sm:$0x80] %vm5256, %v5149
    %v5258 = vld [vmem:[#allocation9] sm:$0xff]
    %v5259 = vld [vmem:[#allocation9 + $0x8] sm:$0xff]
    %v5260 = vld [vmem:[#allocation9 + $0x10] sm:$0xff]
    %v5261 = vld [vmem:[#allocation9 + $0x18] sm:$0xff]
    %s5262 = scalar_lea.vmem [#allocation9], 32
    %v5263 = vld [vmem:[%s5262] sm:$0xff]
    %v5264 = vld [vmem:[%s5262 + $0x8] sm:$0xff]
    %v5265 = vld [vmem:[%s5262 + $0x10] sm:$0xff]
    %v5266 = vld [vmem:[%s5262 + $0x18] sm:$0xff]
    %s5267 = scalar_lea.vmem [#allocation9], 64
    %v5268 = vld [vmem:[%s5267] sm:$0xff]
    %v5269 = vld [vmem:[%s5267 + $0x8] sm:$0xff]
    %v5270 = vld [vmem:[%s5267 + $0x10] sm:$0xff]
    %v5271 = vld [vmem:[%s5267 + $0x18] sm:$0xff]
    %v5272 = vld [vmem:[#allocation10] sm:$0x1]
    %s5273 = scalar_lea.vmem [#allocation10], 1
    %v5274 = vld [vmem:[%s5273] sm:$0x1]
    %s5275 = scalar_lea.vmem [#allocation10], 2
    %v5276 = vld [vmem:[%s5275] sm:$0x1]
    %v5277 = vld [vmem:[#allocation12] sm:$0xff]
    %v5278 = vld [vmem:[#allocation12 + $0x8] sm:$0xff]
    %v5279 = vld [vmem:[#allocation12 + $0x10] sm:$0xff]
    %v5280 = vld [vmem:[#allocation12 + $0x18] sm:$0xff]
    %s5281 = scalar_lea.vmem [#allocation12], 32
    %v5282 = vld [vmem:[%s5281] sm:$0xff]
    %v5283 = vld [vmem:[%s5281 + $0x8] sm:$0xff]
    %v5284 = vld [vmem:[%s5281 + $0x10] sm:$0xff]
    %v5285 = vld [vmem:[%s5281 + $0x18] sm:$0xff]
    %s5286 = scalar_lea.vmem [#allocation12], 64
    %v5287 = vld [vmem:[%s5286] sm:$0xff]
    %v5288 = vld [vmem:[%s5286 + $0x8] sm:$0xff]
    %v5289 = vld [vmem:[%s5286 + $0x10] sm:$0xff]
    %v5290 = vld [vmem:[%s5286 + $0x18] sm:$0xff]
    %v5291 = vld [vmem:[#allocation13] sm:$0x1]
    %s5292 = scalar_lea.vmem [#allocation13], 1
    %v5293 = vld [vmem:[%s5292] sm:$0x1]
    %s5294 = scalar_lea.vmem [#allocation13], 2
    %v5295 = vld [vmem:[%s5294] sm:$0x1]
    %v5297 = vperm.slane %v5272, 0
    %v5300 = vsel %vm233, %v5255, 0
    %5302 = vmatpush.msra.mxu0 0.0
    %5303 = vmatpush.msra.mxu0 0.0
    %5304 = vmatpush.msra.mxu0 0.0
    %5305 = vmatpush.msra.mxu0 0.0
    %5306 = vmatpush.msra.mxu0 0.0
    %5307 = vmatpush.msra.mxu0 0.0
    %5308 = vmatpush.msra.mxu0 0.0
    %5309 = vmatpush.msra.mxu0 0.0
    %5310 = vmatpush.msra.mxu0 0.0
    %5311 = vmatpush.msra.mxu0 0.0
    %5312 = vmatpush.msra.mxu0 0.0
    %5313 = vmatpush.msra.mxu0 0.0
    %5314 = vmatpush.msra.mxu0 %v5261
    %5315 = vmatpush.msra.mxu0 %v5260
    %5316 = vmatpush.msra.mxu0 %v5259
    %5317 = vmatpush.msra.mxu0 %v5258
    %5318 = vmatmul.f32.gmra.mxu0 %v5300
    %v5319 = vpop.f32.mrf.mxu0
    %v5320 = vadd.f32 %v5297, %v5319
    %5321 = vdwg.mxu0
    %v5323 = vperm.slane %v5274, 0
    %5325 = vmatpush.msra.mxu0 0.0
    %5326 = vmatpush.msra.mxu0 0.0
    %5327 = vmatpush.msra.mxu0 0.0
    %5328 = vmatpush.msra.mxu0 0.0
    %5329 = vmatpush.msra.mxu0 0.0
    %5330 = vmatpush.msra.mxu0 0.0
    %5331 = vmatpush.msra.mxu0 0.0
    %5332 = vmatpush.msra.mxu0 0.0
    %5333 = vmatpush.msra.mxu0 0.0
    %5334 = vmatpush.msra.mxu0 0.0
    %5335 = vmatpush.msra.mxu0 0.0
    %5336 = vmatpush.msra.mxu0 0.0
    %5337 = vmatpush.msra.mxu0 %v5266
    %5338 = vmatpush.msra.mxu0 %v5265
    %5339 = vmatpush.msra.mxu0 %v5264
    %5340 = vmatpush.msra.mxu0 %v5263
    %5341 = vmatmul.f32.gmra.mxu0 %v5300
    %v5342 = vpop.f32.mrf.mxu0
    %v5343 = vadd.f32 %v5323, %v5342
    %5344 = vdwg.mxu0
    %v5346 = vperm.slane %v5276, 0
    %5348 = vmatpush.msra.mxu0 0.0
    %5349 = vmatpush.msra.mxu0 0.0
    %5350 = vmatpush.msra.mxu0 0.0
    %5351 = vmatpush.msra.mxu0 0.0
    %5352 = vmatpush.msra.mxu0 0.0
    %5353 = vmatpush.msra.mxu0 0.0
    %5354 = vmatpush.msra.mxu0 0.0
    %5355 = vmatpush.msra.mxu0 0.0
    %5356 = vmatpush.msra.mxu0 0.0
    %5357 = vmatpush.msra.mxu0 0.0
    %5358 = vmatpush.msra.mxu0 0.0
    %5359 = vmatpush.msra.mxu0 0.0
    %5360 = vmatpush.msra.mxu0 %v5271
    %5361 = vmatpush.msra.mxu0 %v5270
    %5362 = vmatpush.msra.mxu0 %v5269
    %5363 = vmatpush.msra.mxu0 %v5268
    %5364 = vmatmul.f32.gmra.mxu0 %v5300
    %v5365 = vpop.f32.mrf.mxu0
    %v5366 = vadd.f32 %v5346, %v5365
    %5367 = vdwg.mxu0
    %v5369 = vrot.slane %v5320, 3
    %v5371 = vsel %vm178, %v5320, %v5369
    %v5373 = vrot.slane %v5343, 3
    %v5375 = vsel %vm178, %v5343, %v5373
    %v5377 = vrot.slane %v5366, 3
    %v5379 = vsel %vm178, %v5366, %v5377
    %5380 = vmatpush.msra.mxu0 0.0
    %5381 = vmatpush.msra.mxu0 0.0
    %5382 = vmatpush.msra.mxu0 0.0
    %5383 = vmatpush.msra.mxu0 0.0
    %5384 = vmatpush.msra.mxu0 0.0
    %5385 = vmatpush.msra.mxu0 0.0
    %5386 = vmatpush.msra.mxu0 0.0
    %5387 = vmatpush.msra.mxu0 0.0
    %5388 = vmatpush.msra.mxu0 0.0
    %5389 = vmatpush.msra.mxu0 0.0
    %5390 = vmatpush.msra.mxu0 0.0
    %5391 = vmatpush.msra.mxu0 0.0
    %5392 = vmatpush.msra.mxu0 %v5280
    %5393 = vmatpush.msra.mxu0 %v5279
    %5394 = vmatpush.msra.mxu0 %v5278
    %5395 = vmatpush.msra.mxu0 %v5277
    %5396 = vmatmul.f32.gmra.mxu0 %v316
    %v5397 = vpop.f32.mrf.mxu0
    %v5398 = vadd.f32 %v5291, %v5397
    %5399 = vdwg.mxu0
    %5400 = vmatpush.msra.mxu0 0.0
    %5401 = vmatpush.msra.mxu0 0.0
    %5402 = vmatpush.msra.mxu0 0.0
    %5403 = vmatpush.msra.mxu0 0.0
    %5404 = vmatpush.msra.mxu0 0.0
    %5405 = vmatpush.msra.mxu0 0.0
    %5406 = vmatpush.msra.mxu0 0.0
    %5407 = vmatpush.msra.mxu0 0.0
    %5408 = vmatpush.msra.mxu0 0.0
    %5409 = vmatpush.msra.mxu0 0.0
    %5410 = vmatpush.msra.mxu0 0.0
    %5411 = vmatpush.msra.mxu0 0.0
    %5412 = vmatpush.msra.mxu0 %v5285
    %5413 = vmatpush.msra.mxu0 %v5284
    %5414 = vmatpush.msra.mxu0 %v5283
    %5415 = vmatpush.msra.mxu0 %v5282
    %5416 = vmatmul.f32.gmra.mxu0 %v316
    %v5417 = vpop.f32.mrf.mxu0
    %v5418 = vadd.f32 %v5293, %v5417
    %5419 = vdwg.mxu0
    %5420 = vmatpush.msra.mxu0 0.0
    %5421 = vmatpush.msra.mxu0 0.0
    %5422 = vmatpush.msra.mxu0 0.0
    %5423 = vmatpush.msra.mxu0 0.0
    %5424 = vmatpush.msra.mxu0 0.0
    %5425 = vmatpush.msra.mxu0 0.0
    %5426 = vmatpush.msra.mxu0 0.0
    %5427 = vmatpush.msra.mxu0 0.0
    %5428 = vmatpush.msra.mxu0 0.0
    %5429 = vmatpush.msra.mxu0 0.0
    %5430 = vmatpush.msra.mxu0 0.0
    %5431 = vmatpush.msra.mxu0 0.0
    %5432 = vmatpush.msra.mxu0 %v5290
    %5433 = vmatpush.msra.mxu0 %v5289
    %5434 = vmatpush.msra.mxu0 %v5288
    %5435 = vmatpush.msra.mxu0 %v5287
    %5436 = vmatmul.f32.gmra.mxu0 %v316
    %v5437 = vpop.f32.mrf.mxu0
    %v5438 = vadd.f32 %v5295, %v5437
    %5439 = vdwg.mxu0
    %v5440 = vadd.f32 %v5371, %v5398
    %v5441 = vxor.u32 %v5440, 2147483648
    %v5442 = vmul.f32 %v5441, 1.442695
    %v5443 = vpow.pop %v5442
    %v5444 = vadd.f32 %v5443, 1.0
    %v5445 = vrcp.pop %v5444
    %v5446 = vmul.f32 %v5444, %v5445
    %v5447 = vsub.f32 1.0, %v5446
    %v5448 = vmul.f32 %v5445, %v5447
    %v5449 = vadd.f32 %v5445, %v5448
    %vm5450 = vweird.f32 %v5444
    %vm5451 = vweird.f32 %v5445
    %vm5452 = vmor %vm5450, %vm5451
    %v5453 = vsel %vm5452, %v5445, %v5449
    %v5454 = vand.u32 2147483647, %v5444
    %vm5455 = vcmp.eq.f32.partialorder %v5454, 8.507059e+37
    %v5456 = vand.u32 %v5444, 2147483648
    %v5457 = vor.u32 1.1754944e-38, %v5456
    %v5458 = vsel %vm5455, %v5457, %v5453
    %v5459 = vmul.f32 1.0, %v5458
    %v5460 = vadd.f32 %v5375, %v5418
    %v5461 = vxor.u32 %v5460, 2147483648
    %v5462 = vmul.f32 %v5461, 1.442695
    %v5463 = vpow.pop %v5462
    %v5464 = vadd.f32 %v5463, 1.0
    %v5465 = vrcp.pop %v5464
    %v5466 = vmul.f32 %v5464, %v5465
    %v5467 = vsub.f32 1.0, %v5466
    %v5468 = vmul.f32 %v5465, %v5467
    %v5469 = vadd.f32 %v5465, %v5468
    %vm5470 = vweird.f32 %v5464
    %vm5471 = vweird.f32 %v5465
    %vm5472 = vmor %vm5470, %vm5471
    %v5473 = vsel %vm5472, %v5465, %v5469
    %v5474 = vand.u32 2147483647, %v5464
    %vm5475 = vcmp.eq.f32.partialorder %v5474, 8.507059e+37
    %v5476 = vand.u32 %v5464, 2147483648
    %v5477 = vor.u32 1.1754944e-38, %v5476
    %v5478 = vsel %vm5475, %v5477, %v5473
    %v5479 = vmul.f32 1.0, %v5478
    %v5480 = vmul.f32 %v5459, %v5438
    %v5481 = vadd.f32 %v5379, %v5480
    %v5482 = vtanh.pop %v5481
    %v5483 = vsub.f32 1.0, %v5479
    %v5484 = vmul.f32 %v5483, %v5482
    %v5485 = vmul.f32 %v5479, 0.0
    %v5486 = vadd.f32 %v5484, %v5485
    %vm5487 = vmor %vm437, %vm1016
    %v5488 = vperm.slane %v5486, 0
    %v5489 = vsel %vm5487, %v5488, 0.0
    %v5490 = vrot.slane %v5320, 1
    %v5492 = vsel %vm178, %v5320, %v5490
    %v5493 = vrot.slane %v5343, 1
    %v5495 = vsel %vm178, %v5343, %v5493
    %v5496 = vrot.slane %v5366, 1
    %v5498 = vsel %vm178, %v5366, %v5496
    %v5500 = vsel %vm233, %v5486, 0
    %5502 = vmatpush.msra.mxu0 0.0
    %5503 = vmatpush.msra.mxu0 0.0
    %5504 = vmatpush.msra.mxu0 0.0
    %5505 = vmatpush.msra.mxu0 0.0
    %5506 = vmatpush.msra.mxu0 0.0
    %5507 = vmatpush.msra.mxu0 0.0
    %5508 = vmatpush.msra.mxu0 0.0
    %5509 = vmatpush.msra.mxu0 0.0
    %5510 = vmatpush.msra.mxu0 0.0
    %5511 = vmatpush.msra.mxu0 0.0
    %5512 = vmatpush.msra.mxu0 0.0
    %5513 = vmatpush.msra.mxu0 0.0
    %5514 = vmatpush.msra.mxu0 %v5280
    %5515 = vmatpush.msra.mxu0 %v5279
    %5516 = vmatpush.msra.mxu0 %v5278
    %5517 = vmatpush.msra.mxu0 %v5277
    %5518 = vmatmul.f32.gmra.mxu0 %v5500
    %v5519 = vpop.f32.mrf.mxu0
    %v5520 = vadd.f32 %v5291, %v5519
    %5521 = vdwg.mxu0
    %5522 = vmatpush.msra.mxu0 0.0
    %5523 = vmatpush.msra.mxu0 0.0
    %5524 = vmatpush.msra.mxu0 0.0
    %5525 = vmatpush.msra.mxu0 0.0
    %5526 = vmatpush.msra.mxu0 0.0
    %5527 = vmatpush.msra.mxu0 0.0
    %5528 = vmatpush.msra.mxu0 0.0
    %5529 = vmatpush.msra.mxu0 0.0
    %5530 = vmatpush.msra.mxu0 0.0
    %5531 = vmatpush.msra.mxu0 0.0
    %5532 = vmatpush.msra.mxu0 0.0
    %5533 = vmatpush.msra.mxu0 0.0
    %5534 = vmatpush.msra.mxu0 %v5285
    %5535 = vmatpush.msra.mxu0 %v5284
    %5536 = vmatpush.msra.mxu0 %v5283
    %5537 = vmatpush.msra.mxu0 %v5282
    %5538 = vmatmul.f32.gmra.mxu0 %v5500
    %v5539 = vpop.f32.mrf.mxu0
    %v5540 = vadd.f32 %v5293, %v5539
    %5541 = vdwg.mxu0
    %5542 = vmatpush.msra.mxu0 0.0
    %5543 = vmatpush.msra.mxu0 0.0
    %5544 = vmatpush.msra.mxu0 0.0
    %5545 = vmatpush.msra.mxu0 0.0
    %5546 = vmatpush.msra.mxu0 0.0
    %5547 = vmatpush.msra.mxu0 0.0
    %5548 = vmatpush.msra.mxu0 0.0
    %5549 = vmatpush.msra.mxu0 0.0
    %5550 = vmatpush.msra.mxu0 0.0
    %5551 = vmatpush.msra.mxu0 0.0
    %5552 = vmatpush.msra.mxu0 0.0
    %5553 = vmatpush.msra.mxu0 0.0
    %5554 = vmatpush.msra.mxu0 %v5290
    %5555 = vmatpush.msra.mxu0 %v5289
    %5556 = vmatpush.msra.mxu0 %v5288
    %5557 = vmatpush.msra.mxu0 %v5287
    %5558 = vmatmul.f32.gmra.mxu0 %v5500
    %v5559 = vpop.f32.mrf.mxu0
    %v5560 = vadd.f32 %v5295, %v5559
    %5561 = vdwg.mxu0
    %v5563 = vrot.slane %v5520, 7
    %v5565 = vadd.f32 %v5492, %v5563
    %v5566 = vxor.u32 %v5565, 2147483648
    %v5567 = vmul.f32 %v5566, 1.442695
    %v5568 = vpow.pop %v5567
    %v5569 = vadd.f32 %v5568, 1.0
    %v5570 = vrcp.pop %v5569
    %v5571 = vmul.f32 %v5569, %v5570
    %v5572 = vsub.f32 1.0, %v5571
    %v5573 = vmul.f32 %v5570, %v5572
    %v5574 = vadd.f32 %v5570, %v5573
    %vm5575 = vweird.f32 %v5569
    %vm5576 = vweird.f32 %v5570
    %vm5577 = vmor %vm5575, %vm5576
    %v5578 = vsel %vm5577, %v5570, %v5574
    %v5579 = vand.u32 2147483647, %v5569
    %vm5580 = vcmp.eq.f32.partialorder %v5579, 8.507059e+37
    %v5581 = vand.u32 %v5569, 2147483648
    %v5582 = vor.u32 1.1754944e-38, %v5581
    %v5583 = vsel %vm5580, %v5582, %v5578
    %v5584 = vmul.f32 1.0, %v5583
    %v5586 = vrot.slane %v5540, 7
    %v5588 = vadd.f32 %v5495, %v5586
    %v5589 = vxor.u32 %v5588, 2147483648
    %v5590 = vmul.f32 %v5589, 1.442695
    %v5591 = vpow.pop %v5590
    %v5592 = vadd.f32 %v5591, 1.0
    %v5593 = vrcp.pop %v5592
    %v5594 = vmul.f32 %v5592, %v5593
    %v5595 = vsub.f32 1.0, %v5594
    %v5596 = vmul.f32 %v5593, %v5595
    %v5597 = vadd.f32 %v5593, %v5596
    %vm5598 = vweird.f32 %v5592
    %vm5599 = vweird.f32 %v5593
    %vm5600 = vmor %vm5598, %vm5599
    %v5601 = vsel %vm5600, %v5593, %v5597
    %v5602 = vand.u32 2147483647, %v5592
    %vm5603 = vcmp.eq.f32.partialorder %v5602, 8.507059e+37
    %v5604 = vand.u32 %v5592, 2147483648
    %v5605 = vor.u32 1.1754944e-38, %v5604
    %v5606 = vsel %vm5603, %v5605, %v5601
    %v5607 = vmul.f32 1.0, %v5606
    %v5609 = vrot.slane %v5560, 7
    %v5611 = vmul.f32 %v5584, %v5609
    %v5612 = vadd.f32 %v5498, %v5611
    %v5613 = vtanh.pop %v5612
    %v5614 = vsub.f32 1.0, %v5607
    %v5615 = vmul.f32 %v5614, %v5613
    %v5616 = vrot.slane %v5486, 7
    %v5618 = vmul.f32 %v5607, %v5616
    %v5619 = vadd.f32 %v5615, %v5618
    %vm5620 = vmor %vm586, %vm1146
    %v5621 = vperm.slane %v5619, 1
    %v5622 = vsel %vm5620, %v5621, %v5489
    %v5623 = vrot.slane %v5320, 7
    %v5625 = vsel %vm178, %v5320, %v5623
    %v5626 = vrot.slane %v5343, 7
    %v5628 = vsel %vm178, %v5343, %v5626
    %v5629 = vrot.slane %v5366, 7
    %v5631 = vsel %vm178, %v5366, %v5629
    %v5633 = vrot.slane %v5619, 1
    %v5634 = vsel %vm233, %v5633, 0
    %5636 = vmatpush.msra.mxu0 0.0
    %5637 = vmatpush.msra.mxu0 0.0
    %5638 = vmatpush.msra.mxu0 0.0
    %5639 = vmatpush.msra.mxu0 0.0
    %5640 = vmatpush.msra.mxu0 0.0
    %5641 = vmatpush.msra.mxu0 0.0
    %5642 = vmatpush.msra.mxu0 0.0
    %5643 = vmatpush.msra.mxu0 0.0
    %5644 = vmatpush.msra.mxu0 0.0
    %5645 = vmatpush.msra.mxu0 0.0
    %5646 = vmatpush.msra.mxu0 0.0
    %5647 = vmatpush.msra.mxu0 0.0
    %5648 = vmatpush.msra.mxu0 %v5280
    %5649 = vmatpush.msra.mxu0 %v5279
    %5650 = vmatpush.msra.mxu0 %v5278
    %5651 = vmatpush.msra.mxu0 %v5277
    %5652 = vmatmul.f32.gmra.mxu0 %v5634
    %v5653 = vpop.f32.mrf.mxu0
    %v5654 = vadd.f32 %v5291, %v5653
    %5655 = vdwg.mxu0
    %5656 = vmatpush.msra.mxu0 0.0
    %5657 = vmatpush.msra.mxu0 0.0
    %5658 = vmatpush.msra.mxu0 0.0
    %5659 = vmatpush.msra.mxu0 0.0
    %5660 = vmatpush.msra.mxu0 0.0
    %5661 = vmatpush.msra.mxu0 0.0
    %5662 = vmatpush.msra.mxu0 0.0
    %5663 = vmatpush.msra.mxu0 0.0
    %5664 = vmatpush.msra.mxu0 0.0
    %5665 = vmatpush.msra.mxu0 0.0
    %5666 = vmatpush.msra.mxu0 0.0
    %5667 = vmatpush.msra.mxu0 0.0
    %5668 = vmatpush.msra.mxu0 %v5285
    %5669 = vmatpush.msra.mxu0 %v5284
    %5670 = vmatpush.msra.mxu0 %v5283
    %5671 = vmatpush.msra.mxu0 %v5282
    %5672 = vmatmul.f32.gmra.mxu0 %v5634
    %v5673 = vpop.f32.mrf.mxu0
    %v5674 = vadd.f32 %v5293, %v5673
    %5675 = vdwg.mxu0
    %5676 = vmatpush.msra.mxu0 0.0
    %5677 = vmatpush.msra.mxu0 0.0
    %5678 = vmatpush.msra.mxu0 0.0
    %5679 = vmatpush.msra.mxu0 0.0
    %5680 = vmatpush.msra.mxu0 0.0
    %5681 = vmatpush.msra.mxu0 0.0
    %5682 = vmatpush.msra.mxu0 0.0
    %5683 = vmatpush.msra.mxu0 0.0
    %5684 = vmatpush.msra.mxu0 0.0
    %5685 = vmatpush.msra.mxu0 0.0
    %5686 = vmatpush.msra.mxu0 0.0
    %5687 = vmatpush.msra.mxu0 0.0
    %5688 = vmatpush.msra.mxu0 %v5290
    %5689 = vmatpush.msra.mxu0 %v5289
    %5690 = vmatpush.msra.mxu0 %v5288
    %5691 = vmatpush.msra.mxu0 %v5287
    %5692 = vmatmul.f32.gmra.mxu0 %v5634
    %v5693 = vpop.f32.mrf.mxu0
    %v5694 = vadd.f32 %v5295, %v5693
    %5695 = vdwg.mxu0
    %v5697 = vrot.slane %v5654, 6
    %v5699 = vadd.f32 %v5625, %v5697
    %v5700 = vxor.u32 %v5699, 2147483648
    %v5701 = vmul.f32 %v5700, 1.442695
    %v5702 = vpow.pop %v5701
    %v5703 = vadd.f32 %v5702, 1.0
    %v5704 = vrcp.pop %v5703
    %v5705 = vmul.f32 %v5703, %v5704
    %v5706 = vsub.f32 1.0, %v5705
    %v5707 = vmul.f32 %v5704, %v5706
    %v5708 = vadd.f32 %v5704, %v5707
    %vm5709 = vweird.f32 %v5703
    %vm5710 = vweird.f32 %v5704
    %vm5711 = vmor %vm5709, %vm5710
    %v5712 = vsel %vm5711, %v5704, %v5708
    %v5713 = vand.u32 2147483647, %v5703
    %vm5714 = vcmp.eq.f32.partialorder %v5713, 8.507059e+37
    %v5715 = vand.u32 %v5703, 2147483648
    %v5716 = vor.u32 1.1754944e-38, %v5715
    %v5717 = vsel %vm5714, %v5716, %v5712
    %v5718 = vmul.f32 1.0, %v5717
    %v5720 = vrot.slane %v5674, 6
    %v5722 = vadd.f32 %v5628, %v5720
    %v5723 = vxor.u32 %v5722, 2147483648
    %v5724 = vmul.f32 %v5723, 1.442695
    %v5725 = vpow.pop %v5724
    %v5726 = vadd.f32 %v5725, 1.0
    %v5727 = vrcp.pop %v5726
    %v5728 = vmul.f32 %v5726, %v5727
    %v5729 = vsub.f32 1.0, %v5728
    %v5730 = vmul.f32 %v5727, %v5729
    %v5731 = vadd.f32 %v5727, %v5730
    %vm5732 = vweird.f32 %v5726
    %vm5733 = vweird.f32 %v5727
    %vm5734 = vmor %vm5732, %vm5733
    %v5735 = vsel %vm5734, %v5727, %v5731
    %v5736 = vand.u32 2147483647, %v5726
    %vm5737 = vcmp.eq.f32.partialorder %v5736, 8.507059e+37
    %v5738 = vand.u32 %v5726, 2147483648
    %v5739 = vor.u32 1.1754944e-38, %v5738
    %v5740 = vsel %vm5737, %v5739, %v5735
    %v5741 = vmul.f32 1.0, %v5740
    %v5743 = vrot.slane %v5694, 6
    %v5745 = vmul.f32 %v5718, %v5743
    %v5746 = vadd.f32 %v5631, %v5745
    %v5747 = vtanh.pop %v5746
    %v5748 = vsub.f32 1.0, %v5741
    %v5749 = vmul.f32 %v5748, %v5747
    %v5750 = vrot.slane %v5619, 7
    %v5752 = vmul.f32 %v5741, %v5750
    %v5753 = vadd.f32 %v5749, %v5752
    %vm5754 = vmor %vm735, %vm1276
    %v5755 = vperm.slane %v5753, 2
    %v5756 = vsel %vm5754, %v5755, %v5622
    %v5757 = vrot.slane %v5320, 5
    %v5759 = vsel %vm178, %v5320, %v5757
    %v5760 = vrot.slane %v5343, 5
    %v5762 = vsel %vm178, %v5343, %v5760
    %v5763 = vrot.slane %v5366, 5
    %v5765 = vsel %vm178, %v5366, %v5763
    %v5767 = vrot.slane %v5753, 2
    %v5768 = vsel %vm233, %v5767, 0
    %5770 = vmatpush.msra.mxu0 0.0
    %5771 = vmatpush.msra.mxu0 0.0
    %5772 = vmatpush.msra.mxu0 0.0
    %5773 = vmatpush.msra.mxu0 0.0
    %5774 = vmatpush.msra.mxu0 0.0
    %5775 = vmatpush.msra.mxu0 0.0
    %5776 = vmatpush.msra.mxu0 0.0
    %5777 = vmatpush.msra.mxu0 0.0
    %5778 = vmatpush.msra.mxu0 0.0
    %5779 = vmatpush.msra.mxu0 0.0
    %5780 = vmatpush.msra.mxu0 0.0
    %5781 = vmatpush.msra.mxu0 0.0
    %5782 = vmatpush.msra.mxu0 %v5280
    %5783 = vmatpush.msra.mxu0 %v5279
    %5784 = vmatpush.msra.mxu0 %v5278
    %5785 = vmatpush.msra.mxu0 %v5277
    %5786 = vmatmul.f32.gmra.mxu0 %v5768
    %v5787 = vpop.f32.mrf.mxu0
    %v5788 = vadd.f32 %v5291, %v5787
    %5789 = vdwg.mxu0
    %5790 = vmatpush.msra.mxu0 0.0
    %5791 = vmatpush.msra.mxu0 0.0
    %5792 = vmatpush.msra.mxu0 0.0
    %5793 = vmatpush.msra.mxu0 0.0
    %5794 = vmatpush.msra.mxu0 0.0
    %5795 = vmatpush.msra.mxu0 0.0
    %5796 = vmatpush.msra.mxu0 0.0
    %5797 = vmatpush.msra.mxu0 0.0
    %5798 = vmatpush.msra.mxu0 0.0
    %5799 = vmatpush.msra.mxu0 0.0
    %5800 = vmatpush.msra.mxu0 0.0
    %5801 = vmatpush.msra.mxu0 0.0
    %5802 = vmatpush.msra.mxu0 %v5285
    %5803 = vmatpush.msra.mxu0 %v5284
    %5804 = vmatpush.msra.mxu0 %v5283
    %5805 = vmatpush.msra.mxu0 %v5282
    %5806 = vmatmul.f32.gmra.mxu0 %v5768
    %v5807 = vpop.f32.mrf.mxu0
    %v5808 = vadd.f32 %v5293, %v5807
    %5809 = vdwg.mxu0
    %5810 = vmatpush.msra.mxu0 0.0
    %5811 = vmatpush.msra.mxu0 0.0
    %5812 = vmatpush.msra.mxu0 0.0
    %5813 = vmatpush.msra.mxu0 0.0
    %5814 = vmatpush.msra.mxu0 0.0
    %5815 = vmatpush.msra.mxu0 0.0
    %5816 = vmatpush.msra.mxu0 0.0
    %5817 = vmatpush.msra.mxu0 0.0
    %5818 = vmatpush.msra.mxu0 0.0
    %5819 = vmatpush.msra.mxu0 0.0
    %5820 = vmatpush.msra.mxu0 0.0
    %5821 = vmatpush.msra.mxu0 0.0
    %5822 = vmatpush.msra.mxu0 %v5290
    %5823 = vmatpush.msra.mxu0 %v5289
    %5824 = vmatpush.msra.mxu0 %v5288
    %5825 = vmatpush.msra.mxu0 %v5287
    %5826 = vmatmul.f32.gmra.mxu0 %v5768
    %v5827 = vpop.f32.mrf.mxu0
    %v5828 = vadd.f32 %v5295, %v5827
    %5829 = vdwg.mxu0
    %v5831 = vrot.slane %v5788, 5
    %v5833 = vadd.f32 %v5759, %v5831
    %v5834 = vxor.u32 %v5833, 2147483648
    %v5835 = vmul.f32 %v5834, 1.442695
    %v5836 = vpow.pop %v5835
    %v5837 = vadd.f32 %v5836, 1.0
    %v5838 = vrcp.pop %v5837
    %v5839 = vmul.f32 %v5837, %v5838
    %v5840 = vsub.f32 1.0, %v5839
    %v5841 = vmul.f32 %v5838, %v5840
    %v5842 = vadd.f32 %v5838, %v5841
    %vm5843 = vweird.f32 %v5837
    %vm5844 = vweird.f32 %v5838
    %vm5845 = vmor %vm5843, %vm5844
    %v5846 = vsel %vm5845, %v5838, %v5842
    %v5847 = vand.u32 2147483647, %v5837
    %vm5848 = vcmp.eq.f32.partialorder %v5847, 8.507059e+37
    %v5849 = vand.u32 %v5837, 2147483648
    %v5850 = vor.u32 1.1754944e-38, %v5849
    %v5851 = vsel %vm5848, %v5850, %v5846
    %v5852 = vmul.f32 1.0, %v5851
    %v5854 = vrot.slane %v5808, 5
    %v5856 = vadd.f32 %v5762, %v5854
    %v5857 = vxor.u32 %v5856, 2147483648
    %v5858 = vmul.f32 %v5857, 1.442695
    %v5859 = vpow.pop %v5858
    %v5860 = vadd.f32 %v5859, 1.0
    %v5861 = vrcp.pop %v5860
    %v5862 = vmul.f32 %v5860, %v5861
    %v5863 = vsub.f32 1.0, %v5862
    %v5864 = vmul.f32 %v5861, %v5863
    %v5865 = vadd.f32 %v5861, %v5864
    %vm5866 = vweird.f32 %v5860
    %vm5867 = vweird.f32 %v5861
    %vm5868 = vmor %vm5866, %vm5867
    %v5869 = vsel %vm5868, %v5861, %v5865
    %v5870 = vand.u32 2147483647, %v5860
    %vm5871 = vcmp.eq.f32.partialorder %v5870, 8.507059e+37
    %v5872 = vand.u32 %v5860, 2147483648
    %v5873 = vor.u32 1.1754944e-38, %v5872
    %v5874 = vsel %vm5871, %v5873, %v5869
    %v5875 = vmul.f32 1.0, %v5874
    %v5877 = vrot.slane %v5828, 5
    %v5879 = vmul.f32 %v5852, %v5877
    %v5880 = vadd.f32 %v5765, %v5879
    %v5881 = vtanh.pop %v5880
    %v5882 = vsub.f32 1.0, %v5875
    %v5883 = vmul.f32 %v5882, %v5881
    %v5884 = vrot.slane %v5753, 7
    %v5886 = vmul.f32 %v5875, %v5884
    %v5887 = vadd.f32 %v5883, %v5886
    %vm5888 = vmor %vm884, %vm1406
    %v5889 = vperm.slane %v5887, 3
    %v5890 = vsel %vm5888, %v5889, %v5756
    %v5891 = vld [vmem:[%s13] sm:$0xff]
    %v5892 = vld [vmem:[%s13 + $0x8] sm:$0xff]
    %v5893 = vld [vmem:[%s13 + $0x10] sm:$0xff]
    %v5894 = vld [vmem:[%s13 + $0x18] sm:$0xff]
    %v5895 = vld [vmem:[%s14] sm:$0x1]
    %v5897 = vperm.slane %v5895, 0
    %v5900 = vsel %vm233, %v5890, 0
    %5902 = vmatpush.msra.mxu0 0.0
    %5903 = vmatpush.msra.mxu0 0.0
    %5904 = vmatpush.msra.mxu0 0.0
    %5905 = vmatpush.msra.mxu0 0.0
    %5906 = vmatpush.msra.mxu0 0.0
    %5907 = vmatpush.msra.mxu0 0.0
    %5908 = vmatpush.msra.mxu0 0.0
    %5909 = vmatpush.msra.mxu0 0.0
    %5910 = vmatpush.msra.mxu0 0.0
    %5911 = vmatpush.msra.mxu0 0.0
    %5912 = vmatpush.msra.mxu0 0.0
    %5913 = vmatpush.msra.mxu0 0.0
    %5914 = vmatpush.msra.mxu0 %v5894
    %5915 = vmatpush.msra.mxu0 %v5893
    %5916 = vmatpush.msra.mxu0 %v5892
    %5917 = vmatpush.msra.mxu0 %v5891
    %5918 = vmatmul.f32.gmra.mxu0 %v5900
    %v5919 = vpop.f32.mrf.mxu0
    %v5920 = vadd.f32 %v5897, %v5919
    %5921 = vdwg.mxu0
    %v5922 = vtanh.pop %v5920
    %v5923 = vld [vmem:[%s15] sm:$0xff]
    %v5924 = vld [vmem:[%s15 + $0x8] sm:$0xff]
    %v5925 = vld [vmem:[%s15 + $0x10] sm:$0xff]
    %v5926 = vld [vmem:[%s15 + $0x18] sm:$0xff]
    %v5928 = vsel %vm233, %v5922, 0
    %5930 = vmatpush.msra.mxu0 0.0
    %5931 = vmatpush.msra.mxu0 0.0
    %5932 = vmatpush.msra.mxu0 0.0
    %5933 = vmatpush.msra.mxu0 0.0
    %5934 = vmatpush.msra.mxu0 0.0
    %5935 = vmatpush.msra.mxu0 0.0
    %5936 = vmatpush.msra.mxu0 0.0
    %5937 = vmatpush.msra.mxu0 0.0
    %5938 = vmatpush.msra.mxu0 0.0
    %5939 = vmatpush.msra.mxu0 0.0
    %5940 = vmatpush.msra.mxu0 0.0
    %5941 = vmatpush.msra.mxu0 0.0
    %5942 = vmatpush.msra.mxu0 %v5926
    %5943 = vmatpush.msra.mxu0 %v5925
    %5944 = vmatpush.msra.mxu0 %v5924
    %5945 = vmatpush.msra.mxu0 %v5923
    %5946 = vmatmul.f32.gmra.mxu0 %v5928
    %v5947 = vpop.f32.mrf.mxu0
    %v5948 = vadd.f32 0.0, %v5947
    %5949 = vdwg.mxu0
    %vm5950 = vcmp.lt.s32.totalorder %v180, 4
    %v5951 = vsel %vm5950, %v5948, -1e+30
    %vm5952 = vcmask 3072
    %v5953 = vsel %vm5952, %v5951, -inf
    %5954 = vmax.xlane.f32.xlu0 %v5953
    %v5955 = vpop.xlane.xlu0 %5954
    %v5956 = vrot.slane %v5955, 4
    %v5957 = vmax.f32 %v5955, %v5956
    %v5958 = vrot.slane %v5957, 2
    %v5959 = vmax.f32 %v5957, %v5958
    %v5960 = vrot.slane %v5959, 1
    %v5961 = vmax.f32 %v5959, %v5960
    %s5962 = vtos %v5961
    %v5963 = vstv %s5962
    %v5964 = vsub.f32 %v5951, %v5963
    %v5965 = vmul.f32 %v5964, 1.442695
    %v5966 = vpow.pop %v5965
    %v5967 = vsel %vm5952, %v5966, 0.0
    %5968 = vadd.xlane.f32.xlu0 %v5967
    %v5969 = vpop.xlane.xlu0 %5968
    %v5970 = vrot.slane %v5969, 4
    %v5971 = vadd.f32 %v5969, %v5970
    %v5972 = vrot.slane %v5971, 2
    %v5973 = vadd.f32 %v5971, %v5972
    %v5974 = vrot.slane %v5973, 1
    %v5975 = vadd.f32 %v5973, %v5974
    %s5976 = vtos %v5975
    %v5977 = vstv %s5976
    %v5978 = vrcp.pop %v5977
    %v5979 = vmul.f32 %v5977, %v5978
    %v5980 = vsub.f32 1.0, %v5979
    %v5981 = vmul.f32 %v5978, %v5980
    %v5982 = vadd.f32 %v5978, %v5981
    %vm5983 = vweird.f32 %v5977
    %vm5984 = vweird.f32 %v5978
    %vm5985 = vmor %vm5983, %vm5984
    %v5986 = vsel %vm5985, %v5978, %v5982
    %v5987 = vand.u32 2147483647, %v5977
    %vm5988 = vcmp.eq.f32.partialorder %v5987, 8.507059e+37
    %v5989 = vand.u32 %v5977, 2147483648
    %v5990 = vor.u32 1.1754944e-38, %v5989
    %v5991 = vsel %vm5988, %v5990, %v5986
    %v5992 = vmul.f32 %v5966, %v5991
    %5994 = vset.pattern.permute.xlu0 0
    %5995 = vperm.xlu0 %5994, %v5992
    %v5996 = vpop.permute.xlu0 %5995
    %v5998 = vmul.f32 %v5996, %v5890
    %vm5999 = vcmask 257024
    %v6000 = vsel %vm5999, %v5998, 0.0
    %v6001 = vrot.slane %v6000, 4
    %v6002 = vadd.f32 %v6000, %v6001
    %v6003 = vrot.slane %v6002, 2
    %v6004 = vadd.f32 %v6002, %v6003
    %v6005 = vrot.slane %v6004, 1
    %v6006 = vadd.f32 %v6004, %v6005
    %v6007 = vld [vmem:[%s16] sm:$0xff]
    %v6008 = vld [vmem:[%s16 + $0x8] sm:$0xff]
    %v6009 = vld [vmem:[%s16 + $0x10] sm:$0xff]
    %v6010 = vld [vmem:[%s16 + $0x18] sm:$0xff]
    %v6011 = vld [vmem:[#allocation15] sm:$0x1]
    %v6013 = vsel %vm233, %v6006, 0
    %6015 = vmatpush.msra.mxu0 0.0
    %6016 = vmatpush.msra.mxu0 0.0
    %6017 = vmatpush.msra.mxu0 0.0
    %6018 = vmatpush.msra.mxu0 0.0
    %6019 = vmatpush.msra.mxu0 0.0
    %6020 = vmatpush.msra.mxu0 0.0
    %6021 = vmatpush.msra.mxu0 0.0
    %6022 = vmatpush.msra.mxu0 0.0
    %6023 = vmatpush.msra.mxu0 0.0
    %6024 = vmatpush.msra.mxu0 0.0
    %6025 = vmatpush.msra.mxu0 0.0
    %6026 = vmatpush.msra.mxu0 0.0
    %6027 = vmatpush.msra.mxu0 %v6010
    %6028 = vmatpush.msra.mxu0 %v6009
    %6029 = vmatpush.msra.mxu0 %v6008
    %6030 = vmatpush.msra.mxu0 %v6007
    %6031 = vmatmul.f32.gmra.mxu0 %v6013
    %v6032 = vpop.f32.mrf.mxu0
    %v6033 = vadd.f32 %v6011, %v6032
    %6034 = vdwg.mxu0
    %vm6035 = vcmask 57344
    %6036 = vst.msk [vmem:[#allocation16] sm:$0x1] %vm6035, %v6033
    %vm6037 = vcmask 257027
    %6038 = vst.msk [vmem:[%s20 - $0x3] sm:$0x8] %vm6037, %v5887
    // Predicated region
    $region98: #{han_forward.1} parent=1 // pred_check
      _
    $region99: #{han_forward.1} parent=1 // pred_check_branch
      %6040 = sbr.rel (0) target = $region101
    $region100: #{han_forward.1} parent=1 // pred_region
      %6042 = vsyncadd [#allocation6], 0
      %s6044 = sshll.u32 [#allocation16], 4
      %s6045 = int_to_ptr.vmem [resolvable:$true] %s6044
      %s6046 = sshll.u32 %s18, 4
      %s6047 = int_to_ptr.hbm [resolvable:$true] %s6046
      %6049 = dma.vmem_to_hbm [thread:$0]  %s6045, 16, %s6047, [#allocation6]
    $region101: #{han_forward.1} parent=1 // pred_fallthru
      _
    // Predicated region
    $region102: #{han_forward.1} parent=1 // pred_check
      _
    $region103: #{han_forward.1} parent=1 // pred_check_branch
      %6051 = sbr.rel (0) target = $region105
    $region104: #{han_forward.1} parent=1 // pred_region
      _
    $region105: #{han_forward.1} parent=1 // pred_fallthru
      _
    // Predicated region
    $region106: #{han_forward.1} parent=1 // pred_check
      _
    $region107: #{han_forward.1} parent=1 // pred_check_branch
      %6053 = sbr.rel (0) target = $region109
    $region108: #{han_forward.1} parent=1 // pred_region
      _
    $region109: #{han_forward.1} parent=1 // pred_fallthru
      _
    // Predicated region
    $region110: #{han_forward.1} parent=1 // pred_check
      _
    $region111: #{han_forward.1} parent=1 // pred_check_branch
      %6055 = sbr.rel (0) target = $region113
    $region112: #{han_forward.1} parent=1 // pred_region
      %6057 = dma.done [#allocation6], 16
    $region113: #{han_forward.1} parent=1 // pred_fallthru
      _
    // Predicated region
    $region114: #{han_forward.1} parent=1 // pred_check
      _
    $region115: #{han_forward.1} parent=1 // pred_check_branch
      %6059 = sbr.rel (0) target = $region117
    $region116: #{han_forward.1} parent=1 // pred_region
      _
    $region117: #{han_forward.1} parent=1 // pred_fallthru
      _
    // Predicated region
    $region118: #{han_forward.1} parent=1 // pred_check
      _
    $region119: #{han_forward.1} parent=1 // pred_check_branch
      %6061 = sbr.rel (0) target = $region121
    $region120: #{han_forward.1} parent=1 // pred_region
      _
    $region121: #{han_forward.1} parent=1 // pred_fallthru
      _
    %6062 = vsyncpa [#allocation5], 1
    %6063 = vsyncpa [#allocation8], 1
    %6064 = vsyncpa [#allocation11], 1
    %6065 = vsyncpa [#allocation14], 1
    %6066 = vsyncpa [#allocation6], 1

</llo_original>
